<compile_context>
chip_gen: v6e
topology: v6e:2x2x1
jax: 0.10.0
libtpu: 0.0.40
codegen_flags: <defaults>
</compile_context>

<pallas_src>
import functools

import jax
import jax.numpy as jnp
from jax.experimental import pallas as pl
from jax.experimental.pallas import tpu as pltpu

BN_EPS = 1e-5
CP = 128                      # lane-padded channel width (one full vreg lane row)


def _vmem_spec():
    return pl.BlockSpec(memory_space=pltpu.MemorySpace.VMEM)


# --------------------------------------------------------------------------- #
# In-kernel helpers (traced inside the Pallas body)
# --------------------------------------------------------------------------- #
def _bn(y, mask, inv_m, gamma, beta, *, relu):
    """Training-mode BatchNorm2d folded to a per-channel scale/shift.

    y: (Mp, CP) f32 at padded spatial resolution; `mask` (Mp, 1) zeroes the border
    rows so statistics run over exactly the N*H*W interior elements. Centered
    two-pass variance avoids the E[y^2] - mean^2 cancellation blow-up.
    """
    mean = jnp.sum(y * mask, axis=0, keepdims=True) * inv_m
    d = (y - mean) * mask
    var = jnp.sum(d * d, axis=0, keepdims=True) * inv_m
    scale = gamma * jax.lax.rsqrt(var + BN_EPS)
    shift = beta - mean * scale
    out = y * scale + shift
    return jnp.maximum(out, 0.0) if relu else out


def _mxu(a_bf16, w_bf16):
    """bf16 MXU matmul with f32 accumulation."""
    return jnp.dot(a_bf16, w_bf16, preferred_element_type=jnp.float32)


# --------------------------------------------------------------------------- #
# Fused per-block kernel
# --------------------------------------------------------------------------- #
def _bottleneck_se_kernel(n, ho, wo, pad_rows, downsample, *refs):
    """Whole BottleneckBlockSE in one invocation, all intermediates in VMEM."""
    if downsample:
        (x_ref, mask_ref, pool_ref, bcast_ref,
         w1_ref, g1_ref, b1_ref,
         w2_ref, g2_ref, b2_ref,
         w3_ref, g3_ref, b3_ref,
         sew1_ref, sew2_ref,
         wsc_ref, gsc_ref, bsc_ref,
         o_ref, y1p_ref, acc_ref) = refs
    else:
        (x_ref, mask_ref, pool_ref, bcast_ref,
         w1_ref, g1_ref, b1_ref,
         w2_ref, g2_ref, b2_ref,
         w3_ref, g3_ref, b3_ref,
         sew1_ref, sew2_ref,
         o_ref, y1p_ref, acc_ref) = refs

    wp = wo + 2
    m_pad = n * (ho + 2) * wp
    inv_m = 1.0 / float(n * ho * wo)

    mask = mask_ref[...]                                    # (Mp, 1) interior mask
    x = x_ref[...]                                          # (Mp, CP) zero-padded slab
    xb = x.astype(jnp.bfloat16)

    # conv1 (1x1, stride folded into the slab) + BN1 + ReLU. Re-zero the spatial
    # border (the BN shift makes it nonzero) so it is valid zero padding for conv2.
    y1 = _bn(_mxu(xb, w1_ref[...]), mask, inv_m, g1_ref[...], b1_ref[...],
             relu=True) * mask

    # Shortcut branch reads the same input slab: 1x1 (stride-2) conv + BN, or identity.
    if downsample:
        sc = _bn(_mxu(xb, wsc_ref[...]), mask, inv_m, gsc_ref[...], bsc_ref[...],
                 relu=False)
    else:
        sc = x

    # conv2 (3x3, stride 1, pad 1): write y1 once into a row-extended VMEM scratch,
    # then take the 9 taps as contiguous row-window slices (no per-tap strided
    # gather / reshape) and accumulate 9 MXU matmuls into a VMEM accumulator.
    # Border output rows see wrong values but are masked out everywhere below.
    y1p_ref[pl.ds(0, pad_rows), :] = jnp.zeros((pad_rows, CP), jnp.float32)
    y1p_ref[pl.ds(pad_rows + m_pad, pad_rows), :] = jnp.zeros((pad_rows, CP), jnp.float32)
    y1p_ref[pl.ds(pad_rows, m_pad), :] = y1
    for kh in range(3):
        for kw in range(3):
            k = kh * 3 + kw
            start = pad_rows + (kh - 1) * wp + (kw - 1)     # static row offset
            tap = y1p_ref[pl.ds(start, m_pad), :].astype(jnp.bfloat16)
            contrib = _mxu(tap, w2_ref[k])
            if k == 0:
                acc_ref[...] = contrib
            else:
                acc_ref[...] += contrib
    y2 = _bn(acc_ref[...], mask, inv_m, g2_ref[...], b2_ref[...], relu=True)

    # conv3 (1x1) + BN3 (no ReLU before SE).
    y3 = _bn(_mxu(y2.astype(jnp.bfloat16), w3_ref[...]), mask, inv_m,
             g3_ref[...], b3_ref[...], relu=False)

    # SElayer, kept 2-D end to end: masked per-image average pool as an MXU matmul,
    # FC -> ReLU -> FC -> Sigmoid (tiny, f32), broadcast back to rows via a one-hot
    # matmul instead of a 3-D reshape/broadcast.
    pooled = jnp.dot(pool_ref[...], y3, preferred_element_type=jnp.float32)     # (N, CP)
    hid = jnp.maximum(jnp.dot(pooled, sew1_ref[...],
                              preferred_element_type=jnp.float32), 0.0)
    gate = jax.nn.sigmoid(jnp.dot(hid, sew2_ref[...],
                                  preferred_element_type=jnp.float32))          # (N, CP)
    gate_rows = jnp.dot(bcast_ref[...], gate, preferred_element_type=jnp.float32)

    # Residual add + block ReLU; re-zero the border so the output slab chains
    # directly into the next (stride-1) block as its already-padded input.
    o_ref[...] = jnp.maximum(y3 * gate_rows + sc, 0.0) * mask


# --------------------------------------------------------------------------- #
# Host-side plumbing
# --------------------------------------------------------------------------- #
def _geometry(n, ho, wo):
    """Interior mask, masked per-image average-pool matrix and image one-hot matrix
    for a (N*(Ho+2)*(Wo+2), CP) padded slab."""
    hp, wp = ho + 2, wo + 2
    hwp = hp * wp
    m_pad = n * hwp
    r = jnp.arange(m_pad, dtype=jnp.int32)
    rem = r % hwp
    h = rem // wp
    w = rem % wp
    interior = ((h >= 1) & (h <= ho) & (w >= 1) & (w <= wo)).astype(jnp.float32)
    mask = interior.reshape(m_pad, 1)
    onehot = (r[:, None] // hwp ==
              jnp.arange(n, dtype=jnp.int32)[None, :]).astype(jnp.float32)      # (Mp, N)
    pool = (onehot * mask).T * (1.0 / float(ho * wo))                           # (N, Mp)
    return mask, pool, onehot


def _block_forward(slab, q, n, ho, wo):
    downsample = 'wsc' in q
    hp, wp = ho + 2, wo + 2
    m_pad = n * hp * wp
    pad_rows = ((wp + 1 + 7) // 8) * 8          # row head/tail pad for the tap window
    mask, pool_mat, bcast_mat = _geometry(n, ho, wo)

    args = [slab, mask, pool_mat, bcast_mat,
            q['w1'], q['g1'], q['b1'],
            q['w2'], q['g2'], q['b2'],
            q['w3'], q['g3'], q['b3'],
            q['sew1'], q['sew2']]
    if downsample:
        args += [q['wsc'], q['gsc'], q['bsc']]

    kernel = functools.partial(_bottleneck_se_kernel, n, ho, wo, pad_rows, downsample)
    return pl.pallas_call(
        kernel,
        out_shape=jax.ShapeDtypeStruct((m_pad, CP), jnp.float32),
        in_specs=[_vmem_spec()] * len(args),
        out_specs=_vmem_spec(),
        scratch_shapes=[pltpu.VMEM((m_pad + 2 * pad_rows, CP), jnp.float32),  # padded y1
                        pltpu.VMEM((m_pad, CP), jnp.float32)],                # conv2 acc
    )(*args)


def _pad2(a, rows, cols):
    return jnp.pad(a, ((0, rows - a.shape[0]), (0, cols - a.shape[1])))


def _padvec(v):
    return _pad2(v.reshape(1, -1), 1, CP)


def prepare_block_params(p):
    """PyTorch-shaped params -> matmul layout, lane-padded to CP=128, conv weights
    pre-cast to bf16 once (outside the per-forward path). gamma/beta padded with
    zeros so padded channels stay exactly zero through the whole block.
    Conv biases are dropped: they cancel exactly under the following BN's mean
    subtraction, so the forward output is identical."""
    hidden = p['conv1_w'].shape[0]
    q = {
        'w1': _pad2(p['conv1_w'][:, :, 0, 0].T, CP, CP).astype(jnp.bfloat16),
        'g1': _padvec(p['bn1_g']), 'b1': _padvec(p['bn1_b']),
        'w2': jnp.pad(jnp.transpose(p['conv2_w'], (2, 3, 1, 0)).reshape(9, hidden, hidden),
                      ((0, 0), (0, CP - hidden), (0, CP - hidden))).astype(jnp.bfloat16),
        'g2': _padvec(p['bn2_g']), 'b2': _padvec(p['bn2_b']),
        'w3': _pad2(p['conv3_w'][:, :, 0, 0].T, CP, CP).astype(jnp.bfloat16),
        'g3': _padvec(p['bn3_g']), 'b3': _padvec(p['bn3_b']),
        # SE linears stay f32 (tiny matmuls, better parity with the reference).
        'sew1': _pad2(p['se_w1'].T, CP, CP),
        'sew2': _pad2(p['se_w2'].T, CP, CP),
    }
    if 'sc_w' in p:
        q['wsc'] = _pad2(p['sc_w'][:, :, 0, 0].T, CP, CP).astype(jnp.bfloat16)
        q['gsc'] = _padvec(p['sc_bn_g'])
        q['bsc'] = _padvec(p['sc_bn_b'])
    return q


def _to_slab(x_nhwc):
    n, h, w, c = x_nhwc.shape
    xp = jnp.pad(x_nhwc, ((0, 0), (1, 1), (1, 1), (0, CP - c)))
    return xp.reshape(n * (h + 2) * (w + 2), CP)


def _from_slab(slab, n, ho, wo, c):
    return slab.reshape(n, ho + 2, wo + 2, CP)[:, 1:-1, 1:-1, :c]


@functools.partial(jax.jit, static_argnames=("out_channels",))
def stacked_bottleneck_block_se(x_nchw, blocks, *, out_channels):
    """StackedBottleneckBlockSE forward. Input/output NCHW like the PyTorch module."""
    x = jnp.transpose(x_nchw, (0, 2, 3, 1))                   # NCHW -> NHWC
    n = x.shape[0]
    slab, ho, wo = None, None, None
    for q in blocks:
        downsample = 'wsc' in q
        if slab is None or downsample:
            if slab is not None:                               # (unused in this module)
                x = _from_slab(slab, n, ho, wo, CP)
            stride = 2 if downsample else 1
            xs = x[:, ::stride, ::stride, :]                   # 1x1 stride-s subsample
            ho, wo = xs.shape[1], xs.shape[2]
            slab = _to_slab(xs)
        # Stride-1 blocks consume the previous block's output slab directly
        # (already spatially zero-padded and lane-padded): zero host relayout.
        slab = _block_forward(slab, q, n, ho, wo)
    out = _from_slab(slab, n, ho, wo, out_channels)
    return jnp.transpose(out, (0, 3, 1, 2))                    # NHWC -> NCHW


# --------------------------------------------------------------------------- #
# Deterministic parameter construction (matches module __init__ shapes).
# --------------------------------------------------------------------------- #
def init_block_params(key, cin, hidden, cout, reduction=16):
    ks = jax.random.split(key, 12)
    p = {
        'conv1_w': 0.1 * jax.random.normal(ks[0], (hidden, cin, 1, 1), jnp.float32),
        'bn1_g': 1.0 + 0.1 * jax.random.normal(ks[1], (hidden,), jnp.float32),
        'bn1_b': 0.1 * jax.random.normal(ks[2], (hidden,), jnp.float32),
        'conv2_w': 0.1 * jax.random.normal(ks[3], (hidden, hidden, 3, 3), jnp.float32),
        'bn2_g': 1.0 + 0.1 * jax.random.normal(ks[4], (hidden,), jnp.float32),
        'bn2_b': 0.1 * jax.random.normal(ks[5], (hidden,), jnp.float32),
        'conv3_w': 0.1 * jax.random.normal(ks[6], (cout, hidden, 1, 1), jnp.float32),
        'bn3_g': 1.0 + 0.1 * jax.random.normal(ks[7], (cout,), jnp.float32),
        'bn3_b': 0.1 * jax.random.normal(ks[8], (cout,), jnp.float32),
        # SElayer linears (bias=False): (cout//r, cout) and (cout, cout//r)
        'se_w1': 0.1 * jax.random.normal(ks[9], (cout // reduction, cout), jnp.float32),
        'se_w2': 0.1 * jax.random.normal(ks[10], (cout, cout // reduction), jnp.float32),
    }
    if cin != cout:
        ks2 = jax.random.split(ks[11], 3)
        p['sc_w'] = 0.1 * jax.random.normal(ks2[0], (cout, cin, 1, 1), jnp.float32)
        p['sc_bn_g'] = 1.0 + 0.1 * jax.random.normal(ks2[1], (cout,), jnp.float32)
        p['sc_bn_b'] = 0.1 * jax.random.normal(ks2[2], (cout,), jnp.float32)
    return p


if __name__ == "__main__":
    # StackedBottleneckBlockSE(in_channels=4, hidden_channels=8, stack_counts=2)
    IN_C, HIDDEN_C, STACK = 4, 8, 2
    OUT_C = HIDDEN_C * 4                                       # 32

    key = jax.random.PRNGKey(0)
    kx, kb1, kb2 = jax.random.split(key, 3)

    # NCHW input, same as the PyTorch module.
    x = jax.random.normal(kx, (2, IN_C, 16, 16), jnp.float32)

    raw_params = [init_block_params(kb1, IN_C, HIDDEN_C, OUT_C),   # downsample block
                  init_block_params(kb2, OUT_C, HIDDEN_C, OUT_C)]  # identity block
    blocks = [prepare_block_params(p) for p in raw_params]        # once, outside forward

    out = stacked_bottleneck_block_se(x, blocks, out_channels=OUT_C)
    out = jax.block_until_ready(out)

    assert out.shape == (2, OUT_C, 8, 8), out.shape
    assert bool(jnp.all(jnp.isfinite(out)))
    assert bool(jnp.all(out >= 0.0))                              # final ReLU
    print("KERNEL_OK")
</pallas_src>

<mosaic_0001>
module attributes {stable_mosaic.version = 11 : i64} {
  func.func @_bottleneck_se_kernel(%arg0: memref<200x128xf32, #tpu.memory_space<vmem>>, %arg1: memref<200x1xf32, #tpu.memory_space<vmem>>, %arg2: memref<2x200xf32, #tpu.memory_space<vmem>>, %arg3: memref<200x2xf32, #tpu.memory_space<vmem>>, %arg4: memref<128x128xbf16, #tpu.memory_space<vmem>>, %arg5: memref<1x128xf32, #tpu.memory_space<vmem>>, %arg6: memref<1x128xf32, #tpu.memory_space<vmem>>, %arg7: memref<9x128x128xbf16, #tpu.memory_space<vmem>>, %arg8: memref<1x128xf32, #tpu.memory_space<vmem>>, %arg9: memref<1x128xf32, #tpu.memory_space<vmem>>, %arg10: memref<128x128xbf16, #tpu.memory_space<vmem>>, %arg11: memref<1x128xf32, #tpu.memory_space<vmem>>, %arg12: memref<1x128xf32, #tpu.memory_space<vmem>>, %arg13: memref<128x128xf32, #tpu.memory_space<vmem>>, %arg14: memref<128x128xf32, #tpu.memory_space<vmem>>, %arg15: memref<200x128xf32, #tpu.memory_space<vmem>>, %arg16: memref<232x128xf32, #tpu.memory_space<vmem>>, %arg17: memref<200x128xf32, #tpu.memory_space<vmem>>) attributes {dimension_semantics = [], scalar_prefetch = 0 : i64, scratch_operands = 2 : i64, tpu.core_type = #tpu.core_type<tc>} {
    %c0 = arith.constant 0 : index
    %c0_0 = arith.constant 0 : index
    %0 = vector.load %arg1[%c0, %c0_0] : memref<200x1xf32, #tpu.memory_space<vmem>>, vector<200x1xf32>
    %c0_1 = arith.constant 0 : index
    %c0_2 = arith.constant 0 : index
    %1 = vector.load %arg0[%c0_1, %c0_2] : memref<200x128xf32, #tpu.memory_space<vmem>>, vector<200x128xf32>
    %2 = arith.truncf %1 : vector<200x128xf32> to vector<200x128xbf16>
    %c0_3 = arith.constant 0 : index
    %c0_4 = arith.constant 0 : index
    %3 = vector.load %arg4[%c0_3, %c0_4] : memref<128x128xbf16, #tpu.memory_space<vmem>>, vector<128x128xbf16>
    %cst = arith.constant dense<0.000000e+00> : vector<200x128xf32>
    %4 = tpu.matmul %2, %3, %cst {dimension_numbers = #tpu.dot_dimension_numbers<[1], [0], [0], [1], [0, 0, 1, 1], [], []>} : vector<200x128xbf16>, vector<128x128xbf16>, vector<200x128xf32> -> vector<200x128xf32>
    %c0_5 = arith.constant 0 : index
    %c0_6 = arith.constant 0 : index
    %5 = vector.load %arg5[%c0_5, %c0_6] : memref<1x128xf32, #tpu.memory_space<vmem>>, vector<1x128xf32>
    %c0_7 = arith.constant 0 : index
    %c0_8 = arith.constant 0 : index
    %6 = vector.load %arg6[%c0_7, %c0_8] : memref<1x128xf32, #tpu.memory_space<vmem>>, vector<1x128xf32>
    %7 = vector.broadcast %0 : vector<200x1xf32> to vector<200x128xf32>
    %8 = arith.mulf %4, %7 : vector<200x128xf32>
    %cst_9 = arith.constant dense<0.000000e+00> : vector<128xf32>
    %9 = vector.multi_reduction <add>, %8, %cst_9 [0] : vector<200x128xf32> to vector<128xf32>
    %10 = vector.shape_cast %9 : vector<128xf32> to vector<1x128xf32>
    %cst_10 = arith.constant 7.812500e-03 : f32
    %11 = vector.broadcast %cst_10 : f32 to vector<1x128xf32>
    %12 = arith.mulf %10, %11 : vector<1x128xf32>
    %13 = vector.broadcast %12 : vector<1x128xf32> to vector<200x128xf32>
    %14 = arith.subf %4, %13 : vector<200x128xf32>
    %15 = vector.broadcast %0 : vector<200x1xf32> to vector<200x128xf32>
    %16 = arith.mulf %14, %15 : vector<200x128xf32>
    %17 = arith.mulf %16, %16 : vector<200x128xf32>
    %cst_11 = arith.constant dense<0.000000e+00> : vector<128xf32>
    %18 = vector.multi_reduction <add>, %17, %cst_11 [0] : vector<200x128xf32> to vector<128xf32>
    %19 = vector.shape_cast %18 : vector<128xf32> to vector<1x128xf32>
    %cst_12 = arith.constant 7.812500e-03 : f32
    %20 = vector.broadcast %cst_12 : f32 to vector<1x128xf32>
    %21 = arith.mulf %19, %20 : vector<1x128xf32>
    %cst_13 = arith.constant 9.99999974E-6 : f32
    %22 = vector.broadcast %cst_13 : f32 to vector<1x128xf32>
    %23 = arith.addf %21, %22 : vector<1x128xf32>
    %24 = math.rsqrt %23 : vector<1x128xf32>
    %25 = arith.mulf %5, %24 : vector<1x128xf32>
    %26 = arith.mulf %12, %25 : vector<1x128xf32>
    %27 = arith.subf %6, %26 : vector<1x128xf32>
    %28 = vector.broadcast %25 : vector<1x128xf32> to vector<200x128xf32>
    %29 = arith.mulf %4, %28 : vector<200x128xf32>
    %30 = vector.broadcast %27 : vector<1x128xf32> to vector<200x128xf32>
    %31 = arith.addf %29, %30 : vector<200x128xf32>
    %cst_14 = arith.constant 0.000000e+00 : f32
    %32 = vector.broadcast %cst_14 : f32 to vector<200x128xf32>
    %33 = arith.maximumf %31, %32 : vector<200x128xf32>
    %34 = vector.broadcast %0 : vector<200x1xf32> to vector<200x128xf32>
    %35 = arith.mulf %33, %34 : vector<200x128xf32>
    %cst_15 = arith.constant 0.000000e+00 : f32
    %36 = vector.broadcast %cst_15 : f32 to vector<16x128xf32>
    %c0_16 = arith.constant 0 : index
    %c0_17 = arith.constant 0 : index
    %37 = vector.load %arg16[%c0_16, %c0_17] : memref<232x128xf32, #tpu.memory_space<vmem>>, vector<16x128xf32>
    tpu.vector_store %arg16[%c0_16, %c0_17], %36 {strides = array<i32>} : memref<232x128xf32, #tpu.memory_space<vmem>>, vector<16x128xf32>,
    %cst_18 = arith.constant 0.000000e+00 : f32
    %38 = vector.broadcast %cst_18 : f32 to vector<16x128xf32>
    %c216 = arith.constant 216 : index
    %c0_19 = arith.constant 0 : index
    %39 = vector.load %arg16[%c216, %c0_19] : memref<232x128xf32, #tpu.memory_space<vmem>>, vector<16x128xf32>
    tpu.vector_store %arg16[%c216, %c0_19], %38 {strides = array<i32>} : memref<232x128xf32, #tpu.memory_space<vmem>>, vector<16x128xf32>,
    %c16 = arith.constant 16 : index
    %c0_20 = arith.constant 0 : index
    %40 = vector.load %arg16[%c16, %c0_20] : memref<232x128xf32, #tpu.memory_space<vmem>>, vector<200x128xf32>
    tpu.vector_store %arg16[%c16, %c0_20], %35 {strides = array<i32>} : memref<232x128xf32, #tpu.memory_space<vmem>>, vector<200x128xf32>,
    %c5 = arith.constant 5 : index
    %c0_21 = arith.constant 0 : index
    %41 = vector.load %arg16[%c5, %c0_21] : memref<232x128xf32, #tpu.memory_space<vmem>>, vector<200x128xf32>
    %42 = arith.truncf %41 : vector<200x128xf32> to vector<200x128xbf16>
    %c0_22 = arith.constant 0 : index
    %c0_23 = arith.constant 0 : index
    %c0_24 = arith.constant 0 : index
    %43 = vector.load %arg7[%c0_22, %c0_23, %c0_24] : memref<9x128x128xbf16, #tpu.memory_space<vmem>>, vector<1x128x128xbf16>
    %44 = vector.shape_cast %43 : vector<1x128x128xbf16> to vector<128x128xbf16>
    %cst_25 = arith.constant dense<0.000000e+00> : vector<200x128xf32>
    %45 = tpu.matmul %42, %44, %cst_25 {dimension_numbers = #tpu.dot_dimension_numbers<[1], [0], [0], [1], [0, 0, 1, 1], [], []>} : vector<200x128xbf16>, vector<128x128xbf16>, vector<200x128xf32> -> vector<200x128xf32>
    %c0_26 = arith.constant 0 : index
    %c0_27 = arith.constant 0 : index
    %46 = vector.load %arg17[%c0_26, %c0_27] : memref<200x128xf32, #tpu.memory_space<vmem>>, vector<200x128xf32>
    tpu.vector_store %arg17[%c0_26, %c0_27], %45 {strides = array<i32>} : memref<200x128xf32, #tpu.memory_space<vmem>>, vector<200x128xf32>,
    %c6 = arith.constant 6 : index
    %c0_28 = arith.constant 0 : index
    %47 = vector.load %arg16[%c6, %c0_28] : memref<232x128xf32, #tpu.memory_space<vmem>>, vector<200x128xf32>
    %48 = arith.truncf %47 : vector<200x128xf32> to vector<200x128xbf16>
    %c1 = arith.constant 1 : index
    %c0_29 = arith.constant 0 : index
    %c0_30 = arith.constant 0 : index
    %49 = vector.load %arg7[%c1, %c0_29, %c0_30] : memref<9x128x128xbf16, #tpu.memory_space<vmem>>, vector<1x128x128xbf16>
    %50 = vector.shape_cast %49 : vector<1x128x128xbf16> to vector<128x128xbf16>
    %cst_31 = arith.constant dense<0.000000e+00> : vector<200x128xf32>
    %51 = tpu.matmul %48, %50, %cst_31 {dimension_numbers = #tpu.dot_dimension_numbers<[1], [0], [0], [1], [0, 0, 1, 1], [], []>} : vector<200x128xbf16>, vector<128x128xbf16>, vector<200x128xf32> -> vector<200x128xf32>
    %c0_32 = arith.constant 0 : index
    %c0_33 = arith.constant 0 : index
    %52 = vector.load %arg17[%c0_32, %c0_33] : memref<200x128xf32, #tpu.memory_space<vmem>>, vector<200x128xf32>
    %53 = arith.addf %52, %51 : vector<200x128xf32>
    %c0_34 = arith.constant 0 : index
    %c0_35 = arith.constant 0 : index
    %54 = vector.load %arg17[%c0_34, %c0_35] : memref<200x128xf32, #tpu.memory_space<vmem>>, vector<200x128xf32>
    tpu.vector_store %arg17[%c0_34, %c0_35], %53 {strides = array<i32>} : memref<200x128xf32, #tpu.memory_space<vmem>>, vector<200x128xf32>,
    %c7 = arith.constant 7 : index
    %c0_36 = arith.constant 0 : index
    %55 = vector.load %arg16[%c7, %c0_36] : memref<232x128xf32, #tpu.memory_space<vmem>>, vector<200x128xf32>
    %56 = arith.truncf %55 : vector<200x128xf32> to vector<200x128xbf16>
    %c2 = arith.constant 2 : index
    %c0_37 = arith.constant 0 : index
    %c0_38 = arith.constant 0 : index
    %57 = vector.load %arg7[%c2, %c0_37, %c0_38] : memref<9x128x128xbf16, #tpu.memory_space<vmem>>, vector<1x128x128xbf16>
    %58 = vector.shape_cast %57 : vector<1x128x128xbf16> to vector<128x128xbf16>
    %cst_39 = arith.constant dense<0.000000e+00> : vector<200x128xf32>
    %59 = tpu.matmul %56, %58, %cst_39 {dimension_numbers = #tpu.dot_dimension_numbers<[1], [0], [0], [1], [0, 0, 1, 1], [], []>} : vector<200x128xbf16>, vector<128x128xbf16>, vector<200x128xf32> -> vector<200x128xf32>
    %c0_40 = arith.constant 0 : index
    %c0_41 = arith.constant 0 : index
    %60 = vector.load %arg17[%c0_40, %c0_41] : memref<200x128xf32, #tpu.memory_space<vmem>>, vector<200x128xf32>
    %61 = arith.addf %60, %59 : vector<200x128xf32>
    %c0_42 = arith.constant 0 : index
    %c0_43 = arith.constant 0 : index
    %62 = vector.load %arg17[%c0_42, %c0_43] : memref<200x128xf32, #tpu.memory_space<vmem>>, vector<200x128xf32>
    tpu.vector_store %arg17[%c0_42, %c0_43], %61 {strides = array<i32>} : memref<200x128xf32, #tpu.memory_space<vmem>>, vector<200x128xf32>,
    %c15 = arith.constant 15 : index
    %c0_44 = arith.constant 0 : index
    %63 = vector.load %arg16[%c15, %c0_44] : memref<232x128xf32, #tpu.memory_space<vmem>>, vector<200x128xf32>
    %64 = arith.truncf %63 : vector<200x128xf32> to vector<200x128xbf16>
    %c3 = arith.constant 3 : index
    %c0_45 = arith.constant 0 : index
    %c0_46 = arith.constant 0 : index
    %65 = vector.load %arg7[%c3, %c0_45, %c0_46] : memref<9x128x128xbf16, #tpu.memory_space<vmem>>, vector<1x128x128xbf16>
    %66 = vector.shape_cast %65 : vector<1x128x128xbf16> to vector<128x128xbf16>
    %cst_47 = arith.constant dense<0.000000e+00> : vector<200x128xf32>
    %67 = tpu.matmul %64, %66, %cst_47 {dimension_numbers = #tpu.dot_dimension_numbers<[1], [0], [0], [1], [0, 0, 1, 1], [], []>} : vector<200x128xbf16>, vector<128x128xbf16>, vector<200x128xf32> -> vector<200x128xf32>
    %c0_48 = arith.constant 0 : index
    %c0_49 = arith.constant 0 : index
    %68 = vector.load %arg17[%c0_48, %c0_49] : memref<200x128xf32, #tpu.memory_space<vmem>>, vector<200x128xf32>
    %69 = arith.addf %68, %67 : vector<200x128xf32>
    %c0_50 = arith.constant 0 : index
    %c0_51 = arith.constant 0 : index
    %70 = vector.load %arg17[%c0_50, %c0_51] : memref<200x128xf32, #tpu.memory_space<vmem>>, vector<200x128xf32>
    tpu.vector_store %arg17[%c0_50, %c0_51], %69 {strides = array<i32>} : memref<200x128xf32, #tpu.memory_space<vmem>>, vector<200x128xf32>,
    %c16_52 = arith.constant 16 : index
    %c0_53 = arith.constant 0 : index
    %71 = vector.load %arg16[%c16_52, %c0_53] : memref<232x128xf32, #tpu.memory_space<vmem>>, vector<200x128xf32>
    %72 = arith.truncf %71 : vector<200x128xf32> to vector<200x128xbf16>
    %c4 = arith.constant 4 : index
    %c0_54 = arith.constant 0 : index
    %c0_55 = arith.constant 0 : index
    %73 = vector.load %arg7[%c4, %c0_54, %c0_55] : memref<9x128x128xbf16, #tpu.memory_space<vmem>>, vector<1x128x128xbf16>
    %74 = vector.shape_cast %73 : vector<1x128x128xbf16> to vector<128x128xbf16>
    %cst_56 = arith.constant dense<0.000000e+00> : vector<200x128xf32>
    %75 = tpu.matmul %72, %74, %cst_56 {dimension_numbers = #tpu.dot_dimension_numbers<[1], [0], [0], [1], [0, 0, 1, 1], [], []>} : vector<200x128xbf16>, vector<128x128xbf16>, vector<200x128xf32> -> vector<200x128xf32>
    %c0_57 = arith.constant 0 : index
    %c0_58 = arith.constant 0 : index
    %76 = vector.load %arg17[%c0_57, %c0_58] : memref<200x128xf32, #tpu.memory_space<vmem>>, vector<200x128xf32>
    %77 = arith.addf %76, %75 : vector<200x128xf32>
    %c0_59 = arith.constant 0 : index
    %c0_60 = arith.constant 0 : index
    %78 = vector.load %arg17[%c0_59, %c0_60] : memref<200x128xf32, #tpu.memory_space<vmem>>, vector<200x128xf32>
    tpu.vector_store %arg17[%c0_59, %c0_60], %77 {strides = array<i32>} : memref<200x128xf32, #tpu.memory_space<vmem>>, vector<200x128xf32>,
    %c17 = arith.constant 17 : index
    %c0_61 = arith.constant 0 : index
    %79 = vector.load %arg16[%c17, %c0_61] : memref<232x128xf32, #tpu.memory_space<vmem>>, vector<200x128xf32>
    %80 = arith.truncf %79 : vector<200x128xf32> to vector<200x128xbf16>
    %c5_62 = arith.constant 5 : index
    %c0_63 = arith.constant 0 : index
    %c0_64 = arith.constant 0 : index
    %81 = vector.load %arg7[%c5_62, %c0_63, %c0_64] : memref<9x128x128xbf16, #tpu.memory_space<vmem>>, vector<1x128x128xbf16>
    %82 = vector.shape_cast %81 : vector<1x128x128xbf16> to vector<128x128xbf16>
    %cst_65 = arith.constant dense<0.000000e+00> : vector<200x128xf32>
    %83 = tpu.matmul %80, %82, %cst_65 {dimension_numbers = #tpu.dot_dimension_numbers<[1], [0], [0], [1], [0, 0, 1, 1], [], []>} : vector<200x128xbf16>, vector<128x128xbf16>, vector<200x128xf32> -> vector<200x128xf32>
    %c0_66 = arith.constant 0 : index
    %c0_67 = arith.constant 0 : index
    %84 = vector.load %arg17[%c0_66, %c0_67] : memref<200x128xf32, #tpu.memory_space<vmem>>, vector<200x128xf32>
    %85 = arith.addf %84, %83 : vector<200x128xf32>
    %c0_68 = arith.constant 0 : index
    %c0_69 = arith.constant 0 : index
    %86 = vector.load %arg17[%c0_68, %c0_69] : memref<200x128xf32, #tpu.memory_space<vmem>>, vector<200x128xf32>
    tpu.vector_store %arg17[%c0_68, %c0_69], %85 {strides = array<i32>} : memref<200x128xf32, #tpu.memory_space<vmem>>, vector<200x128xf32>,
    %c25 = arith.constant 25 : index
    %c0_70 = arith.constant 0 : index
    %87 = vector.load %arg16[%c25, %c0_70] : memref<232x128xf32, #tpu.memory_space<vmem>>, vector<200x128xf32>
    %88 = arith.truncf %87 : vector<200x128xf32> to vector<200x128xbf16>
    %c6_71 = arith.constant 6 : index
    %c0_72 = arith.constant 0 : index
    %c0_73 = arith.constant 0 : index
    %89 = vector.load %arg7[%c6_71, %c0_72, %c0_73] : memref<9x128x128xbf16, #tpu.memory_space<vmem>>, vector<1x128x128xbf16>
    %90 = vector.shape_cast %89 : vector<1x128x128xbf16> to vector<128x128xbf16>
    %cst_74 = arith.constant dense<0.000000e+00> : vector<200x128xf32>
    %91 = tpu.matmul %88, %90, %cst_74 {dimension_numbers = #tpu.dot_dimension_numbers<[1], [0], [0], [1], [0, 0, 1, 1], [], []>} : vector<200x128xbf16>, vector<128x128xbf16>, vector<200x128xf32> -> vector<200x128xf32>
    %c0_75 = arith.constant 0 : index
    %c0_76 = arith.constant 0 : index
    %92 = vector.load %arg17[%c0_75, %c0_76] : memref<200x128xf32, #tpu.memory_space<vmem>>, vector<200x128xf32>
    %93 = arith.addf %92, %91 : vector<200x128xf32>
    %c0_77 = arith.constant 0 : index
    %c0_78 = arith.constant 0 : index
    %94 = vector.load %arg17[%c0_77, %c0_78] : memref<200x128xf32, #tpu.memory_space<vmem>>, vector<200x128xf32>
    tpu.vector_store %arg17[%c0_77, %c0_78], %93 {strides = array<i32>} : memref<200x128xf32, #tpu.memory_space<vmem>>, vector<200x128xf32>,
    %c26 = arith.constant 26 : index
    %c0_79 = arith.constant 0 : index
    %95 = vector.load %arg16[%c26, %c0_79] : memref<232x128xf32, #tpu.memory_space<vmem>>, vector<200x128xf32>
    %96 = arith.truncf %95 : vector<200x128xf32> to vector<200x128xbf16>
    %c7_80 = arith.constant 7 : index
    %c0_81 = arith.constant 0 : index
    %c0_82 = arith.constant 0 : index
    %97 = vector.load %arg7[%c7_80, %c0_81, %c0_82] : memref<9x128x128xbf16, #tpu.memory_space<vmem>>, vector<1x128x128xbf16>
    %98 = vector.shape_cast %97 : vector<1x128x128xbf16> to vector<128x128xbf16>
    %cst_83 = arith.constant dense<0.000000e+00> : vector<200x128xf32>
    %99 = tpu.matmul %96, %98, %cst_83 {dimension_numbers = #tpu.dot_dimension_numbers<[1], [0], [0], [1], [0, 0, 1, 1], [], []>} : vector<200x128xbf16>, vector<128x128xbf16>, vector<200x128xf32> -> vector<200x128xf32>
    %c0_84 = arith.constant 0 : index
    %c0_85 = arith.constant 0 : index
    %100 = vector.load %arg17[%c0_84, %c0_85] : memref<200x128xf32, #tpu.memory_space<vmem>>, vector<200x128xf32>
    %101 = arith.addf %100, %99 : vector<200x128xf32>
    %c0_86 = arith.constant 0 : index
    %c0_87 = arith.constant 0 : index
    %102 = vector.load %arg17[%c0_86, %c0_87] : memref<200x128xf32, #tpu.memory_space<vmem>>, vector<200x128xf32>
    tpu.vector_store %arg17[%c0_86, %c0_87], %101 {strides = array<i32>} : memref<200x128xf32, #tpu.memory_space<vmem>>, vector<200x128xf32>,
    %c27 = arith.constant 27 : index
    %c0_88 = arith.constant 0 : index
    %103 = vector.load %arg16[%c27, %c0_88] : memref<232x128xf32, #tpu.memory_space<vmem>>, vector<200x128xf32>
    %104 = arith.truncf %103 : vector<200x128xf32> to vector<200x128xbf16>
    %c8 = arith.constant 8 : index
    %c0_89 = arith.constant 0 : index
    %c0_90 = arith.constant 0 : index
    %105 = vector.load %arg7[%c8, %c0_89, %c0_90] : memref<9x128x128xbf16, #tpu.memory_space<vmem>>, vector<1x128x128xbf16>
    %106 = vector.shape_cast %105 : vector<1x128x128xbf16> to vector<128x128xbf16>
    %cst_91 = arith.constant dense<0.000000e+00> : vector<200x128xf32>
    %107 = tpu.matmul %104, %106, %cst_91 {dimension_numbers = #tpu.dot_dimension_numbers<[1], [0], [0], [1], [0, 0, 1, 1], [], []>} : vector<200x128xbf16>, vector<128x128xbf16>, vector<200x128xf32> -> vector<200x128xf32>
    %c0_92 = arith.constant 0 : index
    %c0_93 = arith.constant 0 : index
    %108 = vector.load %arg17[%c0_92, %c0_93] : memref<200x128xf32, #tpu.memory_space<vmem>>, vector<200x128xf32>
    %109 = arith.addf %108, %107 : vector<200x128xf32>
    %c0_94 = arith.constant 0 : index
    %c0_95 = arith.constant 0 : index
    %110 = vector.load %arg17[%c0_94, %c0_95] : memref<200x128xf32, #tpu.memory_space<vmem>>, vector<200x128xf32>
    tpu.vector_store %arg17[%c0_94, %c0_95], %109 {strides = array<i32>} : memref<200x128xf32, #tpu.memory_space<vmem>>, vector<200x128xf32>,
    %c0_96 = arith.constant 0 : index
    %c0_97 = arith.constant 0 : index
    %111 = vector.load %arg17[%c0_96, %c0_97] : memref<200x128xf32, #tpu.memory_space<vmem>>, vector<200x128xf32>
    %c0_98 = arith.constant 0 : index
    %c0_99 = arith.constant 0 : index
    %112 = vector.load %arg8[%c0_98, %c0_99] : memref<1x128xf32, #tpu.memory_space<vmem>>, vector<1x128xf32>
    %c0_100 = arith.constant 0 : index
    %c0_101 = arith.constant 0 : index
    %113 = vector.load %arg9[%c0_100, %c0_101] : memref<1x128xf32, #tpu.memory_space<vmem>>, vector<1x128xf32>
    %114 = vector.broadcast %0 : vector<200x1xf32> to vector<200x128xf32>
    %115 = arith.mulf %111, %114 : vector<200x128xf32>
    %cst_102 = arith.constant dense<0.000000e+00> : vector<128xf32>
    %116 = vector.multi_reduction <add>, %115, %cst_102 [0] : vector<200x128xf32> to vector<128xf32>
    %117 = vector.shape_cast %116 : vector<128xf32> to vector<1x128xf32>
    %cst_103 = arith.constant 7.812500e-03 : f32
    %118 = vector.broadcast %cst_103 : f32 to vector<1x128xf32>
    %119 = arith.mulf %117, %118 : vector<1x128xf32>
    %120 = vector.broadcast %119 : vector<1x128xf32> to vector<200x128xf32>
    %121 = arith.subf %111, %120 : vector<200x128xf32>
    %122 = vector.broadcast %0 : vector<200x1xf32> to vector<200x128xf32>
    %123 = arith.mulf %121, %122 : vector<200x128xf32>
    %124 = arith.mulf %123, %123 : vector<200x128xf32>
    %cst_104 = arith.constant dense<0.000000e+00> : vector<128xf32>
    %125 = vector.multi_reduction <add>, %124, %cst_104 [0] : vector<200x128xf32> to vector<128xf32>
    %126 = vector.shape_cast %125 : vector<128xf32> to vector<1x128xf32>
    %cst_105 = arith.constant 7.812500e-03 : f32
    %127 = vector.broadcast %cst_105 : f32 to vector<1x128xf32>
    %128 = arith.mulf %126, %127 : vector<1x128xf32>
    %cst_106 = arith.constant 9.99999974E-6 : f32
    %129 = vector.broadcast %cst_106 : f32 to vector<1x128xf32>
    %130 = arith.addf %128, %129 : vector<1x128xf32>
    %131 = math.rsqrt %130 : vector<1x128xf32>
    %132 = arith.mulf %112, %131 : vector<1x128xf32>
    %133 = arith.mulf %119, %132 : vector<1x128xf32>
    %134 = arith.subf %113, %133 : vector<1x128xf32>
    %135 = vector.broadcast %132 : vector<1x128xf32> to vector<200x128xf32>
    %136 = arith.mulf %111, %135 : vector<200x128xf32>
    %137 = vector.broadcast %134 : vector<1x128xf32> to vector<200x128xf32>
    %138 = arith.addf %136, %137 : vector<200x128xf32>
    %cst_107 = arith.constant 0.000000e+00 : f32
    %139 = vector.broadcast %cst_107 : f32 to vector<200x128xf32>
    %140 = arith.maximumf %138, %139 : vector<200x128xf32>
    %141 = arith.truncf %140 : vector<200x128xf32> to vector<200x128xbf16>
    %c0_108 = arith.constant 0 : index
    %c0_109 = arith.constant 0 : index
    %142 = vector.load %arg10[%c0_108, %c0_109] : memref<128x128xbf16, #tpu.memory_space<vmem>>, vector<128x128xbf16>
    %cst_110 = arith.constant dense<0.000000e+00> : vector<200x128xf32>
    %143 = tpu.matmul %141, %142, %cst_110 {dimension_numbers = #tpu.dot_dimension_numbers<[1], [0], [0], [1], [0, 0, 1, 1], [], []>} : vector<200x128xbf16>, vector<128x128xbf16>, vector<200x128xf32> -> vector<200x128xf32>
    %c0_111 = arith.constant 0 : index
    %c0_112 = arith.constant 0 : index
    %144 = vector.load %arg11[%c0_111, %c0_112] : memref<1x128xf32, #tpu.memory_space<vmem>>, vector<1x128xf32>
    %c0_113 = arith.constant 0 : index
    %c0_114 = arith.constant 0 : index
    %145 = vector.load %arg12[%c0_113, %c0_114] : memref<1x128xf32, #tpu.memory_space<vmem>>, vector<1x128xf32>
    %146 = vector.broadcast %0 : vector<200x1xf32> to vector<200x128xf32>
    %147 = arith.mulf %143, %146 : vector<200x128xf32>
    %cst_115 = arith.constant dense<0.000000e+00> : vector<128xf32>
    %148 = vector.multi_reduction <add>, %147, %cst_115 [0] : vector<200x128xf32> to vector<128xf32>
    %149 = vector.shape_cast %148 : vector<128xf32> to vector<1x128xf32>
    %cst_116 = arith.constant 7.812500e-03 : f32
    %150 = vector.broadcast %cst_116 : f32 to vector<1x128xf32>
    %151 = arith.mulf %149, %150 : vector<1x128xf32>
    %152 = vector.broadcast %151 : vector<1x128xf32> to vector<200x128xf32>
    %153 = arith.subf %143, %152 : vector<200x128xf32>
    %154 = vector.broadcast %0 : vector<200x1xf32> to vector<200x128xf32>
    %155 = arith.mulf %153, %154 : vector<200x128xf32>
    %156 = arith.mulf %155, %155 : vector<200x128xf32>
    %cst_117 = arith.constant dense<0.000000e+00> : vector<128xf32>
    %157 = vector.multi_reduction <add>, %156, %cst_117 [0] : vector<200x128xf32> to vector<128xf32>
    %158 = vector.shape_cast %157 : vector<128xf32> to vector<1x128xf32>
    %cst_118 = arith.constant 7.812500e-03 : f32
    %159 = vector.broadcast %cst_118 : f32 to vector<1x128xf32>
    %160 = arith.mulf %158, %159 : vector<1x128xf32>
    %cst_119 = arith.constant 9.99999974E-6 : f32
    %161 = vector.broadcast %cst_119 : f32 to vector<1x128xf32>
    %162 = arith.addf %160, %161 : vector<1x128xf32>
    %163 = math.rsqrt %162 : vector<1x128xf32>
    %164 = arith.mulf %144, %163 : vector<1x128xf32>
    %165 = arith.mulf %151, %164 : vector<1x128xf32>
    %166 = arith.subf %145, %165 : vector<1x128xf32>
    %167 = vector.broadcast %164 : vector<1x128xf32> to vector<200x128xf32>
    %168 = arith.mulf %143, %167 : vector<200x128xf32>
    %169 = vector.broadcast %166 : vector<1x128xf32> to vector<200x128xf32>
    %170 = arith.addf %168, %169 : vector<200x128xf32>
    %c0_120 = arith.constant 0 : index
    %c0_121 = arith.constant 0 : index
    %171 = vector.load %arg2[%c0_120, %c0_121] : memref<2x200xf32, #tpu.memory_space<vmem>>, vector<2x200xf32>
    %cst_122 = arith.constant dense<0.000000e+00> : vector<2x128xf32>
    %172 = tpu.matmul %171, %170, %cst_122 {dimension_numbers = #tpu.dot_dimension_numbers<[1], [0], [0], [1], [0, 0, 1, 1], [], []>} : vector<2x200xf32>, vector<200x128xf32>, vector<2x128xf32> -> vector<2x128xf32>
    %c0_123 = arith.constant 0 : index
    %c0_124 = arith.constant 0 : index
    %173 = vector.load %arg13[%c0_123, %c0_124] : memref<128x128xf32, #tpu.memory_space<vmem>>, vector<128x128xf32>
    %cst_125 = arith.constant dense<0.000000e+00> : vector<2x128xf32>
    %174 = tpu.matmul %172, %173, %cst_125 {dimension_numbers = #tpu.dot_dimension_numbers<[1], [0], [0], [1], [0, 0, 1, 1], [], []>} : vector<2x128xf32>, vector<128x128xf32>, vector<2x128xf32> -> vector<2x128xf32>
    %cst_126 = arith.constant 0.000000e+00 : f32
    %175 = vector.broadcast %cst_126 : f32 to vector<2x128xf32>
    %176 = arith.maximumf %174, %175 : vector<2x128xf32>
    %c0_127 = arith.constant 0 : index
    %c0_128 = arith.constant 0 : index
    %177 = vector.load %arg14[%c0_127, %c0_128] : memref<128x128xf32, #tpu.memory_space<vmem>>, vector<128x128xf32>
    %cst_129 = arith.constant dense<0.000000e+00> : vector<2x128xf32>
    %178 = tpu.matmul %176, %177, %cst_129 {dimension_numbers = #tpu.dot_dimension_numbers<[1], [0], [0], [1], [0, 0, 1, 1], [], []>} : vector<2x128xf32>, vector<128x128xf32>, vector<2x128xf32> -> vector<2x128xf32>
    %179 = arith.negf %178 : vector<2x128xf32>
    %180 = math.exp %179 : vector<2x128xf32>
    %cst_130 = arith.constant 1.000000e+00 : f32
    %181 = vector.broadcast %cst_130 : f32 to vector<2x128xf32>
    %182 = arith.addf %181, %180 : vector<2x128xf32>
    %183 = arith.divf %181, %182 : vector<2x128xf32>
    %c0_131 = arith.constant 0 : index
    %c0_132 = arith.constant 0 : index
    %184 = vector.load %arg3[%c0_131, %c0_132] : memref<200x2xf32, #tpu.memory_space<vmem>>, vector<200x2xf32>
    %cst_133 = arith.constant dense<0.000000e+00> : vector<200x128xf32>
    %185 = tpu.matmul %184, %183, %cst_133 {dimension_numbers = #tpu.dot_dimension_numbers<[1], [0], [0], [1], [0, 0, 1, 1], [], []>} : vector<200x2xf32>, vector<2x128xf32>, vector<200x128xf32> -> vector<200x128xf32>
    %186 = arith.mulf %170, %185 : vector<200x128xf32>
    %187 = arith.addf %186, %1 : vector<200x128xf32>
    %cst_134 = arith.constant 0.000000e+00 : f32
    %188 = vector.broadcast %cst_134 : f32 to vector<200x128xf32>
    %189 = arith.maximumf %187, %188 : vector<200x128xf32>
    %190 = vector.broadcast %0 : vector<200x1xf32> to vector<200x128xf32>
    %191 = arith.mulf %189, %190 : vector<200x128xf32>
    %c0_135 = arith.constant 0 : index
    %c0_136 = arith.constant 0 : index
    %192 = vector.load %arg15[%c0_135, %c0_136] : memref<200x128xf32, #tpu.memory_space<vmem>>, vector<200x128xf32>
    tpu.vector_store %arg15[%c0_135, %c0_136], %191 {strides = array<i32>} : memref<200x128xf32, #tpu.memory_space<vmem>>, vector<200x128xf32>,
    return
  }
}

module attributes {stable_mosaic.version = 11 : i64} {
  func.func @_bottleneck_se_kernel(%arg0: memref<200x128xf32, #tpu.memory_space<vmem>>, %arg1: memref<200x1xf32, #tpu.memory_space<vmem>>, %arg2: memref<2x200xf32, #tpu.memory_space<vmem>>, %arg3: memref<200x2xf32, #tpu.memory_space<vmem>>, %arg4: memref<128x128xbf16, #tpu.memory_space<vmem>>, %arg5: memref<1x128xf32, #tpu.memory_space<vmem>>, %arg6: memref<1x128xf32, #tpu.memory_space<vmem>>, %arg7: memref<9x128x128xbf16, #tpu.memory_space<vmem>>, %arg8: memref<1x128xf32, #tpu.memory_space<vmem>>, %arg9: memref<1x128xf32, #tpu.memory_space<vmem>>, %arg10: memref<128x128xbf16, #tpu.memory_space<vmem>>, %arg11: memref<1x128xf32, #tpu.memory_space<vmem>>, %arg12: memref<1x128xf32, #tpu.memory_space<vmem>>, %arg13: memref<128x128xf32, #tpu.memory_space<vmem>>, %arg14: memref<128x128xf32, #tpu.memory_space<vmem>>, %arg15: memref<128x128xbf16, #tpu.memory_space<vmem>>, %arg16: memref<1x128xf32, #tpu.memory_space<vmem>>, %arg17: memref<1x128xf32, #tpu.memory_space<vmem>>, %arg18: memref<200x128xf32, #tpu.memory_space<vmem>>, %arg19: memref<232x128xf32, #tpu.memory_space<vmem>>, %arg20: memref<200x128xf32, #tpu.memory_space<vmem>>) attributes {dimension_semantics = [], scalar_prefetch = 0 : i64, scratch_operands = 2 : i64, tpu.core_type = #tpu.core_type<tc>} {
    %c0 = arith.constant 0 : index
    %c0_0 = arith.constant 0 : index
    %0 = vector.load %arg1[%c0, %c0_0] : memref<200x1xf32, #tpu.memory_space<vmem>>, vector<200x1xf32>
    %c0_1 = arith.constant 0 : index
    %c0_2 = arith.constant 0 : index
    %1 = vector.load %arg0[%c0_1, %c0_2] : memref<200x128xf32, #tpu.memory_space<vmem>>, vector<200x128xf32>
    %2 = arith.truncf %1 : vector<200x128xf32> to vector<200x128xbf16>
    %c0_3 = arith.constant 0 : index
    %c0_4 = arith.constant 0 : index
    %3 = vector.load %arg4[%c0_3, %c0_4] : memref<128x128xbf16, #tpu.memory_space<vmem>>, vector<128x128xbf16>
    %cst = arith.constant dense<0.000000e+00> : vector<200x128xf32>
    %4 = tpu.matmul %2, %3, %cst {dimension_numbers = #tpu.dot_dimension_numbers<[1], [0], [0], [1], [0, 0, 1, 1], [], []>} : vector<200x128xbf16>, vector<128x128xbf16>, vector<200x128xf32> -> vector<200x128xf32>
    %c0_5 = arith.constant 0 : index
    %c0_6 = arith.constant 0 : index
    %5 = vector.load %arg5[%c0_5, %c0_6] : memref<1x128xf32, #tpu.memory_space<vmem>>, vector<1x128xf32>
    %c0_7 = arith.constant 0 : index
    %c0_8 = arith.constant 0 : index
    %6 = vector.load %arg6[%c0_7, %c0_8] : memref<1x128xf32, #tpu.memory_space<vmem>>, vector<1x128xf32>
    %7 = vector.broadcast %0 : vector<200x1xf32> to vector<200x128xf32>
    %8 = arith.mulf %4, %7 : vector<200x128xf32>
    %cst_9 = arith.constant dense<0.000000e+00> : vector<128xf32>
    %9 = vector.multi_reduction <add>, %8, %cst_9 [0] : vector<200x128xf32> to vector<128xf32>
    %10 = vector.shape_cast %9 : vector<128xf32> to vector<1x128xf32>
    %cst_10 = arith.constant 7.812500e-03 : f32
    %11 = vector.broadcast %cst_10 : f32 to vector<1x128xf32>
    %12 = arith.mulf %10, %11 : vector<1x128xf32>
    %13 = vector.broadcast %12 : vector<1x128xf32> to vector<200x128xf32>
    %14 = arith.subf %4, %13 : vector<200x128xf32>
    %15 = vector.broadcast %0 : vector<200x1xf32> to vector<200x128xf32>
    %16 = arith.mulf %14, %15 : vector<200x128xf32>
    %17 = arith.mulf %16, %16 : vector<200x128xf32>
    %cst_11 = arith.constant dense<0.000000e+00> : vector<128xf32>
    %18 = vector.multi_reduction <add>, %17, %cst_11 [0] : vector<200x128xf32> to vector<128xf32>
    %19 = vector.shape_cast %18 : vector<128xf32> to vector<1x128xf32>
    %cst_12 = arith.constant 7.812500e-03 : f32
    %20 = vector.broadcast %cst_12 : f32 to vector<1x128xf32>
    %21 = arith.mulf %19, %20 : vector<1x128xf32>
    %cst_13 = arith.constant 9.99999974E-6 : f32
    %22 = vector.broadcast %cst_13 : f32 to vector<1x128xf32>
    %23 = arith.addf %21, %22 : vector<1x128xf32>
    %24 = math.rsqrt %23 : vector<1x128xf32>
    %25 = arith.mulf %5, %24 : vector<1x128xf32>
    %26 = arith.mulf %12, %25 : vector<1x128xf32>
    %27 = arith.subf %6, %26 : vector<1x128xf32>
    %28 = vector.broadcast %25 : vector<1x128xf32> to vector<200x128xf32>
    %29 = arith.mulf %4, %28 : vector<200x128xf32>
    %30 = vector.broadcast %27 : vector<1x128xf32> to vector<200x128xf32>
    %31 = arith.addf %29, %30 : vector<200x128xf32>
    %cst_14 = arith.constant 0.000000e+00 : f32
    %32 = vector.broadcast %cst_14 : f32 to vector<200x128xf32>
    %33 = arith.maximumf %31, %32 : vector<200x128xf32>
    %34 = vector.broadcast %0 : vector<200x1xf32> to vector<200x128xf32>
    %35 = arith.mulf %33, %34 : vector<200x128xf32>
    %c0_15 = arith.constant 0 : index
    %c0_16 = arith.constant 0 : index
    %36 = vector.load %arg15[%c0_15, %c0_16] : memref<128x128xbf16, #tpu.memory_space<vmem>>, vector<128x128xbf16>
    %cst_17 = arith.constant dense<0.000000e+00> : vector<200x128xf32>
    %37 = tpu.matmul %2, %36, %cst_17 {dimension_numbers = #tpu.dot_dimension_numbers<[1], [0], [0], [1], [0, 0, 1, 1], [], []>} : vector<200x128xbf16>, vector<128x128xbf16>, vector<200x128xf32> -> vector<200x128xf32>
    %c0_18 = arith.constant 0 : index
    %c0_19 = arith.constant 0 : index
    %38 = vector.load %arg16[%c0_18, %c0_19] : memref<1x128xf32, #tpu.memory_space<vmem>>, vector<1x128xf32>
    %c0_20 = arith.constant 0 : index
    %c0_21 = arith.constant 0 : index
    %39 = vector.load %arg17[%c0_20, %c0_21] : memref<1x128xf32, #tpu.memory_space<vmem>>, vector<1x128xf32>
    %40 = vector.broadcast %0 : vector<200x1xf32> to vector<200x128xf32>
    %41 = arith.mulf %37, %40 : vector<200x128xf32>
    %cst_22 = arith.constant dense<0.000000e+00> : vector<128xf32>
    %42 = vector.multi_reduction <add>, %41, %cst_22 [0] : vector<200x128xf32> to vector<128xf32>
    %43 = vector.shape_cast %42 : vector<128xf32> to vector<1x128xf32>
    %cst_23 = arith.constant 7.812500e-03 : f32
    %44 = vector.broadcast %cst_23 : f32 to vector<1x128xf32>
    %45 = arith.mulf %43, %44 : vector<1x128xf32>
    %46 = vector.broadcast %45 : vector<1x128xf32> to vector<200x128xf32>
    %47 = arith.subf %37, %46 : vector<200x128xf32>
    %48 = vector.broadcast %0 : vector<200x1xf32> to vector<200x128xf32>
    %49 = arith.mulf %47, %48 : vector<200x128xf32>
    %50 = arith.mulf %49, %49 : vector<200x128xf32>
    %cst_24 = arith.constant dense<0.000000e+00> : vector<128xf32>
    %51 = vector.multi_reduction <add>, %50, %cst_24 [0] : vector<200x128xf32> to vector<128xf32>
    %52 = vector.shape_cast %51 : vector<128xf32> to vector<1x128xf32>
    %cst_25 = arith.constant 7.812500e-03 : f32
    %53 = vector.broadcast %cst_25 : f32 to vector<1x128xf32>
    %54 = arith.mulf %52, %53 : vector<1x128xf32>
    %cst_26 = arith.constant 9.99999974E-6 : f32
    %55 = vector.broadcast %cst_26 : f32 to vector<1x128xf32>
    %56 = arith.addf %54, %55 : vector<1x128xf32>
    %57 = math.rsqrt %56 : vector<1x128xf32>
    %58 = arith.mulf %38, %57 : vector<1x128xf32>
    %59 = arith.mulf %45, %58 : vector<1x128xf32>
    %60 = arith.subf %39, %59 : vector<1x128xf32>
    %61 = vector.broadcast %58 : vector<1x128xf32> to vector<200x128xf32>
    %62 = arith.mulf %37, %61 : vector<200x128xf32>
    %63 = vector.broadcast %60 : vector<1x128xf32> to vector<200x128xf32>
    %64 = arith.addf %62, %63 : vector<200x128xf32>
    %cst_27 = arith.constant 0.000000e+00 : f32
    %65 = vector.broadcast %cst_27 : f32 to vector<16x128xf32>
    %c0_28 = arith.constant 0 : index
    %c0_29 = arith.constant 0 : index
    %66 = vector.load %arg19[%c0_28, %c0_29] : memref<232x128xf32, #tpu.memory_space<vmem>>, vector<16x128xf32>
    tpu.vector_store %arg19[%c0_28, %c0_29], %65 {strides = array<i32>} : memref<232x128xf32, #tpu.memory_space<vmem>>, vector<16x128xf32>,
    %cst_30 = arith.constant 0.000000e+00 : f32
    %67 = vector.broadcast %cst_30 : f32 to vector<16x128xf32>
    %c216 = arith.constant 216 : index
    %c0_31 = arith.constant 0 : index
    %68 = vector.load %arg19[%c216, %c0_31] : memref<232x128xf32, #tpu.memory_space<vmem>>, vector<16x128xf32>
    tpu.vector_store %arg19[%c216, %c0_31], %67 {strides = array<i32>} : memref<232x128xf32, #tpu.memory_space<vmem>>, vector<16x128xf32>,
    %c16 = arith.constant 16 : index
    %c0_32 = arith.constant 0 : index
    %69 = vector.load %arg19[%c16, %c0_32] : memref<232x128xf32, #tpu.memory_space<vmem>>, vector<200x128xf32>
    tpu.vector_store %arg19[%c16, %c0_32], %35 {strides = array<i32>} : memref<232x128xf32, #tpu.memory_space<vmem>>, vector<200x128xf32>,
    %c5 = arith.constant 5 : index
    %c0_33 = arith.constant 0 : index
    %70 = vector.load %arg19[%c5, %c0_33] : memref<232x128xf32, #tpu.memory_space<vmem>>, vector<200x128xf32>
    %71 = arith.truncf %70 : vector<200x128xf32> to vector<200x128xbf16>
    %c0_34 = arith.constant 0 : index
    %c0_35 = arith.constant 0 : index
    %c0_36 = arith.constant 0 : index
    %72 = vector.load %arg7[%c0_34, %c0_35, %c0_36] : memref<9x128x128xbf16, #tpu.memory_space<vmem>>, vector<1x128x128xbf16>
    %73 = vector.shape_cast %72 : vector<1x128x128xbf16> to vector<128x128xbf16>
    %cst_37 = arith.constant dense<0.000000e+00> : vector<200x128xf32>
    %74 = tpu.matmul %71, %73, %cst_37 {dimension_numbers = #tpu.dot_dimension_numbers<[1], [0], [0], [1], [0, 0, 1, 1], [], []>} : vector<200x128xbf16>, vector<128x128xbf16>, vector<200x128xf32> -> vector<200x128xf32>
    %c0_38 = arith.constant 0 : index
    %c0_39 = arith.constant 0 : index
    %75 = vector.load %arg20[%c0_38, %c0_39] : memref<200x128xf32, #tpu.memory_space<vmem>>, vector<200x128xf32>
    tpu.vector_store %arg20[%c0_38, %c0_39], %74 {strides = array<i32>} : memref<200x128xf32, #tpu.memory_space<vmem>>, vector<200x128xf32>,
    %c6 = arith.constant 6 : index
    %c0_40 = arith.constant 0 : index
    %76 = vector.load %arg19[%c6, %c0_40] : memref<232x128xf32, #tpu.memory_space<vmem>>, vector<200x128xf32>
    %77 = arith.truncf %76 : vector<200x128xf32> to vector<200x128xbf16>
    %c1 = arith.constant 1 : index
    %c0_41 = arith.constant 0 : index
    %c0_42 = arith.constant 0 : index
    %78 = vector.load %arg7[%c1, %c0_41, %c0_42] : memref<9x128x128xbf16, #tpu.memory_space<vmem>>, vector<1x128x128xbf16>
    %79 = vector.shape_cast %78 : vector<1x128x128xbf16> to vector<128x128xbf16>
    %cst_43 = arith.constant dense<0.000000e+00> : vector<200x128xf32>
    %80 = tpu.matmul %77, %79, %cst_43 {dimension_numbers = #tpu.dot_dimension_numbers<[1], [0], [0], [1], [0, 0, 1, 1], [], []>} : vector<200x128xbf16>, vector<128x128xbf16>, vector<200x128xf32> -> vector<200x128xf32>
    %c0_44 = arith.constant 0 : index
    %c0_45 = arith.constant 0 : index
    %81 = vector.load %arg20[%c0_44, %c0_45] : memref<200x128xf32, #tpu.memory_space<vmem>>, vector<200x128xf32>
    %82 = arith.addf %81, %80 : vector<200x128xf32>
    %c0_46 = arith.constant 0 : index
    %c0_47 = arith.constant 0 : index
    %83 = vector.load %arg20[%c0_46, %c0_47] : memref<200x128xf32, #tpu.memory_space<vmem>>, vector<200x128xf32>
    tpu.vector_store %arg20[%c0_46, %c0_47], %82 {strides = array<i32>} : memref<200x128xf32, #tpu.memory_space<vmem>>, vector<200x128xf32>,
    %c7 = arith.constant 7 : index
    %c0_48 = arith.constant 0 : index
    %84 = vector.load %arg19[%c7, %c0_48] : memref<232x128xf32, #tpu.memory_space<vmem>>, vector<200x128xf32>
    %85 = arith.truncf %84 : vector<200x128xf32> to vector<200x128xbf16>
    %c2 = arith.constant 2 : index
    %c0_49 = arith.constant 0 : index
    %c0_50 = arith.constant 0 : index
    %86 = vector.load %arg7[%c2, %c0_49, %c0_50] : memref<9x128x128xbf16, #tpu.memory_space<vmem>>, vector<1x128x128xbf16>
    %87 = vector.shape_cast %86 : vector<1x128x128xbf16> to vector<128x128xbf16>
    %cst_51 = arith.constant dense<0.000000e+00> : vector<200x128xf32>
    %88 = tpu.matmul %85, %87, %cst_51 {dimension_numbers = #tpu.dot_dimension_numbers<[1], [0], [0], [1], [0, 0, 1, 1], [], []>} : vector<200x128xbf16>, vector<128x128xbf16>, vector<200x128xf32> -> vector<200x128xf32>
    %c0_52 = arith.constant 0 : index
    %c0_53 = arith.constant 0 : index
    %89 = vector.load %arg20[%c0_52, %c0_53] : memref<200x128xf32, #tpu.memory_space<vmem>>, vector<200x128xf32>
    %90 = arith.addf %89, %88 : vector<200x128xf32>
    %c0_54 = arith.constant 0 : index
    %c0_55 = arith.constant 0 : index
    %91 = vector.load %arg20[%c0_54, %c0_55] : memref<200x128xf32, #tpu.memory_space<vmem>>, vector<200x128xf32>
    tpu.vector_store %arg20[%c0_54, %c0_55], %90 {strides = array<i32>} : memref<200x128xf32, #tpu.memory_space<vmem>>, vector<200x128xf32>,
    %c15 = arith.constant 15 : index
    %c0_56 = arith.constant 0 : index
    %92 = vector.load %arg19[%c15, %c0_56] : memref<232x128xf32, #tpu.memory_space<vmem>>, vector<200x128xf32>
    %93 = arith.truncf %92 : vector<200x128xf32> to vector<200x128xbf16>
    %c3 = arith.constant 3 : index
    %c0_57 = arith.constant 0 : index
    %c0_58 = arith.constant 0 : index
    %94 = vector.load %arg7[%c3, %c0_57, %c0_58] : memref<9x128x128xbf16, #tpu.memory_space<vmem>>, vector<1x128x128xbf16>
    %95 = vector.shape_cast %94 : vector<1x128x128xbf16> to vector<128x128xbf16>
    %cst_59 = arith.constant dense<0.000000e+00> : vector<200x128xf32>
    %96 = tpu.matmul %93, %95, %cst_59 {dimension_numbers = #tpu.dot_dimension_numbers<[1], [0], [0], [1], [0, 0, 1, 1], [], []>} : vector<200x128xbf16>, vector<128x128xbf16>, vector<200x128xf32> -> vector<200x128xf32>
    %c0_60 = arith.constant 0 : index
    %c0_61 = arith.constant 0 : index
    %97 = vector.load %arg20[%c0_60, %c0_61] : memref<200x128xf32, #tpu.memory_space<vmem>>, vector<200x128xf32>
    %98 = arith.addf %97, %96 : vector<200x128xf32>
    %c0_62 = arith.constant 0 : index
    %c0_63 = arith.constant 0 : index
    %99 = vector.load %arg20[%c0_62, %c0_63] : memref<200x128xf32, #tpu.memory_space<vmem>>, vector<200x128xf32>
    tpu.vector_store %arg20[%c0_62, %c0_63], %98 {strides = array<i32>} : memref<200x128xf32, #tpu.memory_space<vmem>>, vector<200x128xf32>,
    %c16_64 = arith.constant 16 : index
    %c0_65 = arith.constant 0 : index
    %100 = vector.load %arg19[%c16_64, %c0_65] : memref<232x128xf32, #tpu.memory_space<vmem>>, vector<200x128xf32>
    %101 = arith.truncf %100 : vector<200x128xf32> to vector<200x128xbf16>
    %c4 = arith.constant 4 : index
    %c0_66 = arith.constant 0 : index
    %c0_67 = arith.constant 0 : index
    %102 = vector.load %arg7[%c4, %c0_66, %c0_67] : memref<9x128x128xbf16, #tpu.memory_space<vmem>>, vector<1x128x128xbf16>
    %103 = vector.shape_cast %102 : vector<1x128x128xbf16> to vector<128x128xbf16>
    %cst_68 = arith.constant dense<0.000000e+00> : vector<200x128xf32>
    %104 = tpu.matmul %101, %103, %cst_68 {dimension_numbers = #tpu.dot_dimension_numbers<[1], [0], [0], [1], [0, 0, 1, 1], [], []>} : vector<200x128xbf16>, vector<128x128xbf16>, vector<200x128xf32> -> vector<200x128xf32>
    %c0_69 = arith.constant 0 : index
    %c0_70 = arith.constant 0 : index
    %105 = vector.load %arg20[%c0_69, %c0_70] : memref<200x128xf32, #tpu.memory_space<vmem>>, vector<200x128xf32>
    %106 = arith.addf %105, %104 : vector<200x128xf32>
    %c0_71 = arith.constant 0 : index
    %c0_72 = arith.constant 0 : index
    %107 = vector.load %arg20[%c0_71, %c0_72] : memref<200x128xf32, #tpu.memory_space<vmem>>, vector<200x128xf32>
    tpu.vector_store %arg20[%c0_71, %c0_72], %106 {strides = array<i32>} : memref<200x128xf32, #tpu.memory_space<vmem>>, vector<200x128xf32>,
    %c17 = arith.constant 17 : index
    %c0_73 = arith.constant 0 : index
    %108 = vector.load %arg19[%c17, %c0_73] : memref<232x128xf32, #tpu.memory_space<vmem>>, vector<200x128xf32>
    %109 = arith.truncf %108 : vector<200x128xf32> to vector<200x128xbf16>
    %c5_74 = arith.constant 5 : index
    %c0_75 = arith.constant 0 : index
    %c0_76 = arith.constant 0 : index
    %110 = vector.load %arg7[%c5_74, %c0_75, %c0_76] : memref<9x128x128xbf16, #tpu.memory_space<vmem>>, vector<1x128x128xbf16>
    %111 = vector.shape_cast %110 : vector<1x128x128xbf16> to vector<128x128xbf16>
    %cst_77 = arith.constant dense<0.000000e+00> : vector<200x128xf32>
    %112 = tpu.matmul %109, %111, %cst_77 {dimension_numbers = #tpu.dot_dimension_numbers<[1], [0], [0], [1], [0, 0, 1, 1], [], []>} : vector<200x128xbf16>, vector<128x128xbf16>, vector<200x128xf32> -> vector<200x128xf32>
    %c0_78 = arith.constant 0 : index
    %c0_79 = arith.constant 0 : index
    %113 = vector.load %arg20[%c0_78, %c0_79] : memref<200x128xf32, #tpu.memory_space<vmem>>, vector<200x128xf32>
    %114 = arith.addf %113, %112 : vector<200x128xf32>
    %c0_80 = arith.constant 0 : index
    %c0_81 = arith.constant 0 : index
    %115 = vector.load %arg20[%c0_80, %c0_81] : memref<200x128xf32, #tpu.memory_space<vmem>>, vector<200x128xf32>
    tpu.vector_store %arg20[%c0_80, %c0_81], %114 {strides = array<i32>} : memref<200x128xf32, #tpu.memory_space<vmem>>, vector<200x128xf32>,
    %c25 = arith.constant 25 : index
    %c0_82 = arith.constant 0 : index
    %116 = vector.load %arg19[%c25, %c0_82] : memref<232x128xf32, #tpu.memory_space<vmem>>, vector<200x128xf32>
    %117 = arith.truncf %116 : vector<200x128xf32> to vector<200x128xbf16>
    %c6_83 = arith.constant 6 : index
    %c0_84 = arith.constant 0 : index
    %c0_85 = arith.constant 0 : index
    %118 = vector.load %arg7[%c6_83, %c0_84, %c0_85] : memref<9x128x128xbf16, #tpu.memory_space<vmem>>, vector<1x128x128xbf16>
    %119 = vector.shape_cast %118 : vector<1x128x128xbf16> to vector<128x128xbf16>
    %cst_86 = arith.constant dense<0.000000e+00> : vector<200x128xf32>
    %120 = tpu.matmul %117, %119, %cst_86 {dimension_numbers = #tpu.dot_dimension_numbers<[1], [0], [0], [1], [0, 0, 1, 1], [], []>} : vector<200x128xbf16>, vector<128x128xbf16>, vector<200x128xf32> -> vector<200x128xf32>
    %c0_87 = arith.constant 0 : index
    %c0_88 = arith.constant 0 : index
    %121 = vector.load %arg20[%c0_87, %c0_88] : memref<200x128xf32, #tpu.memory_space<vmem>>, vector<200x128xf32>
    %122 = arith.addf %121, %120 : vector<200x128xf32>
    %c0_89 = arith.constant 0 : index
    %c0_90 = arith.constant 0 : index
    %123 = vector.load %arg20[%c0_89, %c0_90] : memref<200x128xf32, #tpu.memory_space<vmem>>, vector<200x128xf32>
    tpu.vector_store %arg20[%c0_89, %c0_90], %122 {strides = array<i32>} : memref<200x128xf32, #tpu.memory_space<vmem>>, vector<200x128xf32>,
    %c26 = arith.constant 26 : index
    %c0_91 = arith.constant 0 : index
    %124 = vector.load %arg19[%c26, %c0_91] : memref<232x128xf32, #tpu.memory_space<vmem>>, vector<200x128xf32>
    %125 = arith.truncf %124 : vector<200x128xf32> to vector<200x128xbf16>
    %c7_92 = arith.constant 7 : index
    %c0_93 = arith.constant 0 : index
    %c0_94 = arith.constant 0 : index
    %126 = vector.load %arg7[%c7_92, %c0_93, %c0_94] : memref<9x128x128xbf16, #tpu.memory_space<vmem>>, vector<1x128x128xbf16>
    %127 = vector.shape_cast %126 : vector<1x128x128xbf16> to vector<128x128xbf16>
    %cst_95 = arith.constant dense<0.000000e+00> : vector<200x128xf32>
    %128 = tpu.matmul %125, %127, %cst_95 {dimension_numbers = #tpu.dot_dimension_numbers<[1], [0], [0], [1], [0, 0, 1, 1], [], []>} : vector<200x128xbf16>, vector<128x128xbf16>, vector<200x128xf32> -> vector<200x128xf32>
    %c0_96 = arith.constant 0 : index
    %c0_97 = arith.constant 0 : index
    %129 = vector.load %arg20[%c0_96, %c0_97] : memref<200x128xf32, #tpu.memory_space<vmem>>, vector<200x128xf32>
    %130 = arith.addf %129, %128 : vector<200x128xf32>
    %c0_98 = arith.constant 0 : index
    %c0_99 = arith.constant 0 : index
    %131 = vector.load %arg20[%c0_98, %c0_99] : memref<200x128xf32, #tpu.memory_space<vmem>>, vector<200x128xf32>
    tpu.vector_store %arg20[%c0_98, %c0_99], %130 {strides = array<i32>} : memref<200x128xf32, #tpu.memory_space<vmem>>, vector<200x128xf32>,
    %c27 = arith.constant 27 : index
    %c0_100 = arith.constant 0 : index
    %132 = vector.load %arg19[%c27, %c0_100] : memref<232x128xf32, #tpu.memory_space<vmem>>, vector<200x128xf32>
    %133 = arith.truncf %132 : vector<200x128xf32> to vector<200x128xbf16>
    %c8 = arith.constant 8 : index
    %c0_101 = arith.constant 0 : index
    %c0_102 = arith.constant 0 : index
    %134 = vector.load %arg7[%c8, %c0_101, %c0_102] : memref<9x128x128xbf16, #tpu.memory_space<vmem>>, vector<1x128x128xbf16>
    %135 = vector.shape_cast %134 : vector<1x128x128xbf16> to vector<128x128xbf16>
    %cst_103 = arith.constant dense<0.000000e+00> : vector<200x128xf32>
    %136 = tpu.matmul %133, %135, %cst_103 {dimension_numbers = #tpu.dot_dimension_numbers<[1], [0], [0], [1], [0, 0, 1, 1], [], []>} : vector<200x128xbf16>, vector<128x128xbf16>, vector<200x128xf32> -> vector<200x128xf32>
    %c0_104 = arith.constant 0 : index
    %c0_105 = arith.constant 0 : index
    %137 = vector.load %arg20[%c0_104, %c0_105] : memref<200x128xf32, #tpu.memory_space<vmem>>, vector<200x128xf32>
    %138 = arith.addf %137, %136 : vector<200x128xf32>
    %c0_106 = arith.constant 0 : index
    %c0_107 = arith.constant 0 : index
    %139 = vector.load %arg20[%c0_106, %c0_107] : memref<200x128xf32, #tpu.memory_space<vmem>>, vector<200x128xf32>
    tpu.vector_store %arg20[%c0_106, %c0_107], %138 {strides = array<i32>} : memref<200x128xf32, #tpu.memory_space<vmem>>, vector<200x128xf32>,
    %c0_108 = arith.constant 0 : index
    %c0_109 = arith.constant 0 : index
    %140 = vector.load %arg20[%c0_108, %c0_109] : memref<200x128xf32, #tpu.memory_space<vmem>>, vector<200x128xf32>
    %c0_110 = arith.constant 0 : index
    %c0_111 = arith.constant 0 : index
    %141 = vector.load %arg8[%c0_110, %c0_111] : memref<1x128xf32, #tpu.memory_space<vmem>>, vector<1x128xf32>
    %c0_112 = arith.constant 0 : index
    %c0_113 = arith.constant 0 : index
    %142 = vector.load %arg9[%c0_112, %c0_113] : memref<1x128xf32, #tpu.memory_space<vmem>>, vector<1x128xf32>
    %143 = vector.broadcast %0 : vector<200x1xf32> to vector<200x128xf32>
    %144 = arith.mulf %140, %143 : vector<200x128xf32>
    %cst_114 = arith.constant dense<0.000000e+00> : vector<128xf32>
    %145 = vector.multi_reduction <add>, %144, %cst_114 [0] : vector<200x128xf32> to vector<128xf32>
    %146 = vector.shape_cast %145 : vector<128xf32> to vector<1x128xf32>
    %cst_115 = arith.constant 7.812500e-03 : f32
    %147 = vector.broadcast %cst_115 : f32 to vector<1x128xf32>
    %148 = arith.mulf %146, %147 : vector<1x128xf32>
    %149 = vector.broadcast %148 : vector<1x128xf32> to vector<200x128xf32>
    %150 = arith.subf %140, %149 : vector<200x128xf32>
    %151 = vector.broadcast %0 : vector<200x1xf32> to vector<200x128xf32>
    %152 = arith.mulf %150, %151 : vector<200x128xf32>
    %153 = arith.mulf %152, %152 : vector<200x128xf32>
    %cst_116 = arith.constant dense<0.000000e+00> : vector<128xf32>
    %154 = vector.multi_reduction <add>, %153, %cst_116 [0] : vector<200x128xf32> to vector<128xf32>
    %155 = vector.shape_cast %154 : vector<128xf32> to vector<1x128xf32>
    %cst_117 = arith.constant 7.812500e-03 : f32
    %156 = vector.broadcast %cst_117 : f32 to vector<1x128xf32>
    %157 = arith.mulf %155, %156 : vector<1x128xf32>
    %cst_118 = arith.constant 9.99999974E-6 : f32
    %158 = vector.broadcast %cst_118 : f32 to vector<1x128xf32>
    %159 = arith.addf %157, %158 : vector<1x128xf32>
    %160 = math.rsqrt %159 : vector<1x128xf32>
    %161 = arith.mulf %141, %160 : vector<1x128xf32>
    %162 = arith.mulf %148, %161 : vector<1x128xf32>
    %163 = arith.subf %142, %162 : vector<1x128xf32>
    %164 = vector.broadcast %161 : vector<1x128xf32> to vector<200x128xf32>
    %165 = arith.mulf %140, %164 : vector<200x128xf32>
    %166 = vector.broadcast %163 : vector<1x128xf32> to vector<200x128xf32>
    %167 = arith.addf %165, %166 : vector<200x128xf32>
    %cst_119 = arith.constant 0.000000e+00 : f32
    %168 = vector.broadcast %cst_119 : f32 to vector<200x128xf32>
    %169 = arith.maximumf %167, %168 : vector<200x128xf32>
    %170 = arith.truncf %169 : vector<200x128xf32> to vector<200x128xbf16>
    %c0_120 = arith.constant 0 : index
    %c0_121 = arith.constant 0 : index
    %171 = vector.load %arg10[%c0_120, %c0_121] : memref<128x128xbf16, #tpu.memory_space<vmem>>, vector<128x128xbf16>
    %cst_122 = arith.constant dense<0.000000e+00> : vector<200x128xf32>
    %172 = tpu.matmul %170, %171, %cst_122 {dimension_numbers = #tpu.dot_dimension_numbers<[1], [0], [0], [1], [0, 0, 1, 1], [], []>} : vector<200x128xbf16>, vector<128x128xbf16>, vector<200x128xf32> -> vector<200x128xf32>
    %c0_123 = arith.constant 0 : index
    %c0_124 = arith.constant 0 : index
    %173 = vector.load %arg11[%c0_123, %c0_124] : memref<1x128xf32, #tpu.memory_space<vmem>>, vector<1x128xf32>
    %c0_125 = arith.constant 0 : index
    %c0_126 = arith.constant 0 : index
    %174 = vector.load %arg12[%c0_125, %c0_126] : memref<1x128xf32, #tpu.memory_space<vmem>>, vector<1x128xf32>
    %175 = vector.broadcast %0 : vector<200x1xf32> to vector<200x128xf32>
    %176 = arith.mulf %172, %175 : vector<200x128xf32>
    %cst_127 = arith.constant dense<0.000000e+00> : vector<128xf32>
    %177 = vector.multi_reduction <add>, %176, %cst_127 [0] : vector<200x128xf32> to vector<128xf32>
    %178 = vector.shape_cast %177 : vector<128xf32> to vector<1x128xf32>
    %cst_128 = arith.constant 7.812500e-03 : f32
    %179 = vector.broadcast %cst_128 : f32 to vector<1x128xf32>
    %180 = arith.mulf %178, %179 : vector<1x128xf32>
    %181 = vector.broadcast %180 : vector<1x128xf32> to vector<200x128xf32>
    %182 = arith.subf %172, %181 : vector<200x128xf32>
    %183 = vector.broadcast %0 : vector<200x1xf32> to vector<200x128xf32>
    %184 = arith.mulf %182, %183 : vector<200x128xf32>
    %185 = arith.mulf %184, %184 : vector<200x128xf32>
    %cst_129 = arith.constant dense<0.000000e+00> : vector<128xf32>
    %186 = vector.multi_reduction <add>, %185, %cst_129 [0] : vector<200x128xf32> to vector<128xf32>
    %187 = vector.shape_cast %186 : vector<128xf32> to vector<1x128xf32>
    %cst_130 = arith.constant 7.812500e-03 : f32
    %188 = vector.broadcast %cst_130 : f32 to vector<1x128xf32>
    %189 = arith.mulf %187, %188 : vector<1x128xf32>
    %cst_131 = arith.constant 9.99999974E-6 : f32
    %190 = vector.broadcast %cst_131 : f32 to vector<1x128xf32>
    %191 = arith.addf %189, %190 : vector<1x128xf32>
    %192 = math.rsqrt %191 : vector<1x128xf32>
    %193 = arith.mulf %173, %192 : vector<1x128xf32>
    %194 = arith.mulf %180, %193 : vector<1x128xf32>
    %195 = arith.subf %174, %194 : vector<1x128xf32>
    %196 = vector.broadcast %193 : vector<1x128xf32> to vector<200x128xf32>
    %197 = arith.mulf %172, %196 : vector<200x128xf32>
    %198 = vector.broadcast %195 : vector<1x128xf32> to vector<200x128xf32>
    %199 = arith.addf %197, %198 : vector<200x128xf32>
    %c0_132 = arith.constant 0 : index
    %c0_133 = arith.constant 0 : index
    %200 = vector.load %arg2[%c0_132, %c0_133] : memref<2x200xf32, #tpu.memory_space<vmem>>, vector<2x200xf32>
    %cst_134 = arith.constant dense<0.000000e+00> : vector<2x128xf32>
    %201 = tpu.matmul %200, %199, %cst_134 {dimension_numbers = #tpu.dot_dimension_numbers<[1], [0], [0], [1], [0, 0, 1, 1], [], []>} : vector<2x200xf32>, vector<200x128xf32>, vector<2x128xf32> -> vector<2x128xf32>
    %c0_135 = arith.constant 0 : index
    %c0_136 = arith.constant 0 : index
    %202 = vector.load %arg13[%c0_135, %c0_136] : memref<128x128xf32, #tpu.memory_space<vmem>>, vector<128x128xf32>
    %cst_137 = arith.constant dense<0.000000e+00> : vector<2x128xf32>
    %203 = tpu.matmul %201, %202, %cst_137 {dimension_numbers = #tpu.dot_dimension_numbers<[1], [0], [0], [1], [0, 0, 1, 1], [], []>} : vector<2x128xf32>, vector<128x128xf32>, vector<2x128xf32> -> vector<2x128xf32>
    %cst_138 = arith.constant 0.000000e+00 : f32
    %204 = vector.broadcast %cst_138 : f32 to vector<2x128xf32>
    %205 = arith.maximumf %203, %204 : vector<2x128xf32>
    %c0_139 = arith.constant 0 : index
    %c0_140 = arith.constant 0 : index
    %206 = vector.load %arg14[%c0_139, %c0_140] : memref<128x128xf32, #tpu.memory_space<vmem>>, vector<128x128xf32>
    %cst_141 = arith.constant dense<0.000000e+00> : vector<2x128xf32>
    %207 = tpu.matmul %205, %206, %cst_141 {dimension_numbers = #tpu.dot_dimension_numbers<[1], [0], [0], [1], [0, 0, 1, 1], [], []>} : vector<2x128xf32>, vector<128x128xf32>, vector<2x128xf32> -> vector<2x128xf32>
    %208 = arith.negf %207 : vector<2x128xf32>
    %209 = math.exp %208 : vector<2x128xf32>
    %cst_142 = arith.constant 1.000000e+00 : f32
    %210 = vector.broadcast %cst_142 : f32 to vector<2x128xf32>
    %211 = arith.addf %210, %209 : vector<2x128xf32>
    %212 = arith.divf %210, %211 : vector<2x128xf32>
    %c0_143 = arith.constant 0 : index
    %c0_144 = arith.constant 0 : index
    %213 = vector.load %arg3[%c0_143, %c0_144] : memref<200x2xf32, #tpu.memory_space<vmem>>, vector<200x2xf32>
    %cst_145 = arith.constant dense<0.000000e+00> : vector<200x128xf32>
    %214 = tpu.matmul %213, %212, %cst_145 {dimension_numbers = #tpu.dot_dimension_numbers<[1], [0], [0], [1], [0, 0, 1, 1], [], []>} : vector<200x2xf32>, vector<2x128xf32>, vector<200x128xf32> -> vector<200x128xf32>
    %215 = arith.mulf %199, %214 : vector<200x128xf32>
    %216 = arith.addf %215, %64 : vector<200x128xf32>
    %cst_146 = arith.constant 0.000000e+00 : f32
    %217 = vector.broadcast %cst_146 : f32 to vector<200x128xf32>
    %218 = arith.maximumf %216, %217 : vector<200x128xf32>
    %219 = vector.broadcast %0 : vector<200x1xf32> to vector<200x128xf32>
    %220 = arith.mulf %218, %219 : vector<200x128xf32>
    %c0_147 = arith.constant 0 : index
    %c0_148 = arith.constant 0 : index
    %221 = vector.load %arg18[%c0_147, %c0_148] : memref<200x128xf32, #tpu.memory_space<vmem>>, vector<200x128xf32>
    tpu.vector_store %arg18[%c0_147, %c0_148], %220 {strides = array<i32>} : memref<200x128xf32, #tpu.memory_space<vmem>>, vector<200x128xf32>,
    return
  }
}

</mosaic_0001>

<llo_original>
// kernel: stacked_bottleneck_block_se.3
$region0: #{stacked_bottleneck_block_se.3}
  #allocation0 [shape = 'u32[]', space=smem, size = 0x4, offset = 0x4, fixed_abs, tag = 'smem constant byte address 0x4 - core index']
  #allocation1 [shape = 'u32[144,128]{1,0:T(1,128)}', space=vmem, size = 0x12000, scoped, tag = 'internal scratch']
  #allocation2 [shape = 'f32[232,128]{1,0:T(8,128)}', space=vmem, size = 0x1d000, scoped, tag = 'scratch operand']
  #allocation3 [shape = 'f32[200,128]{1,0:T(8,128)}', space=vmem, size = 0x19000, scoped, tag = 'scratch operand']
  %s0 = inlined_call_operand.vmem [shape: f32[200,128], index: 0, kind: input, shape index: {}]
  %s1 = inlined_call_operand.vmem [shape: f32[200,1], index: 1, kind: input, shape index: {}]
  %s2 = inlined_call_operand.vmem [shape: f32[2,200], index: 2, kind: input, shape index: {}]
  %s3 = inlined_call_operand.vmem [shape: f32[200,2], index: 3, kind: input, shape index: {}]
  %s4 = inlined_call_operand.vmem [shape: bf16[128,128], index: 4, kind: input, shape index: {}]
  %s5 = inlined_call_operand.vmem [shape: f32[1,128], index: 5, kind: input, shape index: {}]
  %s6 = inlined_call_operand.vmem [shape: f32[1,128], index: 6, kind: input, shape index: {}]
  %s7 = inlined_call_operand.vmem [shape: bf16[9,128,128], index: 7, kind: input, shape index: {}]
  %s8 = inlined_call_operand.vmem [shape: f32[1,128], index: 8, kind: input, shape index: {}]
  %s9 = inlined_call_operand.vmem [shape: f32[1,128], index: 9, kind: input, shape index: {}]
  %s10 = inlined_call_operand.vmem [shape: bf16[128,128], index: 10, kind: input, shape index: {}]
  %s11 = inlined_call_operand.vmem [shape: f32[1,128], index: 11, kind: input, shape index: {}]
  %s12 = inlined_call_operand.vmem [shape: f32[1,128], index: 12, kind: input, shape index: {}]
  %s13 = inlined_call_operand.vmem [shape: f32[128,128], index: 13, kind: input, shape index: {}]
  %s14 = inlined_call_operand.vmem [shape: f32[128,128], index: 14, kind: input, shape index: {}]
  %s15 = inlined_call_operand.vmem [shape: f32[200,128], index: 15, kind: output, shape index: {}]
  %s16 = sld [smem:[#allocation0]]
  $region70: #{stacked_bottleneck_block_se.3} parent=0
    _
  %s18 = ssub.s32 1, %s16
  %s19 = scalar_select 0, %s18, %s16
  // Predicated region
  $region2: #{stacked_bottleneck_block_se.3} parent=0 // pred_check
    _
  $region3: #{stacked_bottleneck_block_se.3} parent=0 // pred_check_branch
    %21 = sbr.rel (0) target = $region5
  $region4: #{stacked_bottleneck_block_se.3} parent=0 // pred_region
    _
  $region5: #{stacked_bottleneck_block_se.3} parent=0 // pred_fallthru
    _
  // Predicated region
  $region6: #{stacked_bottleneck_block_se.3} parent=0 // pred_check
    _
  $region7: #{stacked_bottleneck_block_se.3} parent=0 // pred_check_branch
    %23 = sbr.rel (0) target = $region9
  $region8: #{stacked_bottleneck_block_se.3} parent=0 // pred_region
    _
  $region9: #{stacked_bottleneck_block_se.3} parent=0 // pred_fallthru
    _
  // Predicated region
  $region10: #{stacked_bottleneck_block_se.3} parent=0 // pred_check
    _
  $region11: #{stacked_bottleneck_block_se.3} parent=0 // pred_check_branch
    %25 = sbr.rel (0) target = $region13
  $region12: #{stacked_bottleneck_block_se.3} parent=0 // pred_region
    _
  $region13: #{stacked_bottleneck_block_se.3} parent=0 // pred_fallthru
    _
  // Predicated region
  $region14: #{stacked_bottleneck_block_se.3} parent=0 // pred_check
    _
  $region15: #{stacked_bottleneck_block_se.3} parent=0 // pred_check_branch
    %27 = sbr.rel (0) target = $region17
  $region16: #{stacked_bottleneck_block_se.3} parent=0 // pred_region
    _
  $region17: #{stacked_bottleneck_block_se.3} parent=0 // pred_fallthru
    _
  // Predicated region
  $region18: #{stacked_bottleneck_block_se.3} parent=0 // pred_check
    _
  $region19: #{stacked_bottleneck_block_se.3} parent=0 // pred_check_branch
    %29 = sbr.rel (0) target = $region21
  $region20: #{stacked_bottleneck_block_se.3} parent=0 // pred_region
    _
  $region21: #{stacked_bottleneck_block_se.3} parent=0 // pred_fallthru
    _
  // Predicated region
  $region22: #{stacked_bottleneck_block_se.3} parent=0 // pred_check
    _
  $region23: #{stacked_bottleneck_block_se.3} parent=0 // pred_check_branch
    %31 = sbr.rel (0) target = $region25
  $region24: #{stacked_bottleneck_block_se.3} parent=0 // pred_region
    _
  $region25: #{stacked_bottleneck_block_se.3} parent=0 // pred_fallthru
    _
  // Predicated region
  $region26: #{stacked_bottleneck_block_se.3} parent=0 // pred_check
    _
  $region27: #{stacked_bottleneck_block_se.3} parent=0 // pred_check_branch
    %33 = sbr.rel (0) target = $region29
  $region28: #{stacked_bottleneck_block_se.3} parent=0 // pred_region
    _
  $region29: #{stacked_bottleneck_block_se.3} parent=0 // pred_fallthru
    _
  // Predicated region
  $region30: #{stacked_bottleneck_block_se.3} parent=0 // pred_check
    _
  $region31: #{stacked_bottleneck_block_se.3} parent=0 // pred_check_branch
    %35 = sbr.rel (0) target = $region33
  $region32: #{stacked_bottleneck_block_se.3} parent=0 // pred_region
    _
  $region33: #{stacked_bottleneck_block_se.3} parent=0 // pred_fallthru
    _
  // Predicated region
  $region34: #{stacked_bottleneck_block_se.3} parent=0 // pred_check
    _
  $region35: #{stacked_bottleneck_block_se.3} parent=0 // pred_check_branch
    %37 = sbr.rel (0) target = $region37
  $region36: #{stacked_bottleneck_block_se.3} parent=0 // pred_region
    _
  $region37: #{stacked_bottleneck_block_se.3} parent=0 // pred_fallthru
    _
  // Predicated region
  $region38: #{stacked_bottleneck_block_se.3} parent=0 // pred_check
    _
  $region39: #{stacked_bottleneck_block_se.3} parent=0 // pred_check_branch
    %39 = sbr.rel (0) target = $region41
  $region40: #{stacked_bottleneck_block_se.3} parent=0 // pred_region
    _
  $region41: #{stacked_bottleneck_block_se.3} parent=0 // pred_fallthru
    _
  // Predicated region
  $region42: #{stacked_bottleneck_block_se.3} parent=0 // pred_check
    _
  $region43: #{stacked_bottleneck_block_se.3} parent=0 // pred_check_branch
    %41 = sbr.rel (0) target = $region45
  $region44: #{stacked_bottleneck_block_se.3} parent=0 // pred_region
    _
  $region45: #{stacked_bottleneck_block_se.3} parent=0 // pred_fallthru
    _
  // Predicated region
  $region46: #{stacked_bottleneck_block_se.3} parent=0 // pred_check
    _
  $region47: #{stacked_bottleneck_block_se.3} parent=0 // pred_check_branch
    %43 = sbr.rel (0) target = $region49
  $region48: #{stacked_bottleneck_block_se.3} parent=0 // pred_region
    _
  $region49: #{stacked_bottleneck_block_se.3} parent=0 // pred_fallthru
    _
  // Predicated region
  $region50: #{stacked_bottleneck_block_se.3} parent=0 // pred_check
    _
  $region51: #{stacked_bottleneck_block_se.3} parent=0 // pred_check_branch
    %45 = sbr.rel (0) target = $region53
  $region52: #{stacked_bottleneck_block_se.3} parent=0 // pred_region
    _
  $region53: #{stacked_bottleneck_block_se.3} parent=0 // pred_fallthru
    _
  // Predicated region
  $region54: #{stacked_bottleneck_block_se.3} parent=0 // pred_check
    _
  $region55: #{stacked_bottleneck_block_se.3} parent=0 // pred_check_branch
    %47 = sbr.rel (0) target = $region57
  $region56: #{stacked_bottleneck_block_se.3} parent=0 // pred_region
    _
  $region57: #{stacked_bottleneck_block_se.3} parent=0 // pred_fallthru
    _
  // Predicated region
  $region58: #{stacked_bottleneck_block_se.3} parent=0 // pred_check
    _
  $region59: #{stacked_bottleneck_block_se.3} parent=0 // pred_check_branch
    %49 = sbr.rel (0) target = $region61
  $region60: #{stacked_bottleneck_block_se.3} parent=0 // pred_region
    _
  $region61: #{stacked_bottleneck_block_se.3} parent=0 // pred_fallthru
    _
  %v51 = vld [vmem:[%s1] sm:$0xff]
  %v52 = vld [vmem:[%s1 + $0x8] sm:$0xff]
  %v53 = vld [vmem:[%s1 + $0x10] sm:$0xff]
  %v54 = vld [vmem:[%s1 + $0x18] sm:$0xff]
  %v55 = vld [vmem:[%s1 + $0x20] sm:$0xff]
  %v56 = vld [vmem:[%s1 + $0x28] sm:$0xff]
  %v57 = vld [vmem:[%s1 + $0x30] sm:$0xff]
  %v58 = vld [vmem:[%s1 + $0x38] sm:$0xff]
  %v59 = vld [vmem:[%s1 + $0x40] sm:$0xff]
  %v60 = vld [vmem:[%s1 + $0x48] sm:$0xff]
  %v61 = vld [vmem:[%s1 + $0x50] sm:$0xff]
  %v62 = vld [vmem:[%s1 + $0x58] sm:$0xff]
  %v63 = vld [vmem:[%s1 + $0x60] sm:$0xff]
  %v64 = vld [vmem:[%s1 + $0x68] sm:$0xff]
  %v65 = vld [vmem:[%s1 + $0x70] sm:$0xff]
  %v66 = vld [vmem:[%s1 + $0x78] sm:$0xff]
  %v67 = vld [vmem:[%s1 + $0x80] sm:$0xff]
  %v68 = vld [vmem:[%s1 + $0x88] sm:$0xff]
  %v69 = vld [vmem:[%s1 + $0x90] sm:$0xff]
  %v70 = vld [vmem:[%s1 + $0x98] sm:$0xff]
  %v71 = vld [vmem:[%s1 + $0xa0] sm:$0xff]
  %v72 = vld [vmem:[%s1 + $0xa8] sm:$0xff]
  %v73 = vld [vmem:[%s1 + $0xb0] sm:$0xff]
  %v74 = vld [vmem:[%s1 + $0xb8] sm:$0xff]
  %v75 = vld [vmem:[%s1 + $0xc0] sm:$0xff]
  %v76 = vld [vmem:[%s0] sm:$0xff]
  %v77 = vld [vmem:[%s0 + $0x8] sm:$0xff]
  %v78 = vld [vmem:[%s0 + $0x10] sm:$0xff]
  %v79 = vld [vmem:[%s0 + $0x18] sm:$0xff]
  %v80 = vld [vmem:[%s0 + $0x20] sm:$0xff]
  %v81 = vld [vmem:[%s0 + $0x28] sm:$0xff]
  %v82 = vld [vmem:[%s0 + $0x30] sm:$0xff]
  %v83 = vld [vmem:[%s0 + $0x38] sm:$0xff]
  %v84 = vld [vmem:[%s0 + $0x40] sm:$0xff]
  %v85 = vld [vmem:[%s0 + $0x48] sm:$0xff]
  %v86 = vld [vmem:[%s0 + $0x50] sm:$0xff]
  %v87 = vld [vmem:[%s0 + $0x58] sm:$0xff]
  %v88 = vld [vmem:[%s0 + $0x60] sm:$0xff]
  %v89 = vld [vmem:[%s0 + $0x68] sm:$0xff]
  %v90 = vld [vmem:[%s0 + $0x70] sm:$0xff]
  %v91 = vld [vmem:[%s0 + $0x78] sm:$0xff]
  %v92 = vld [vmem:[%s0 + $0x80] sm:$0xff]
  %v93 = vld [vmem:[%s0 + $0x88] sm:$0xff]
  %v94 = vld [vmem:[%s0 + $0x90] sm:$0xff]
  %v95 = vld [vmem:[%s0 + $0x98] sm:$0xff]
  %v96 = vld [vmem:[%s0 + $0xa0] sm:$0xff]
  %v97 = vld [vmem:[%s0 + $0xa8] sm:$0xff]
  %v98 = vld [vmem:[%s0 + $0xb0] sm:$0xff]
  %v99 = vld [vmem:[%s0 + $0xb8] sm:$0xff]
  %v100 = vld [vmem:[%s0 + $0xc0] sm:$0xff]
  %v101 = vpack.c.bf16 %v77, %v76
  %v102 = vpack.c.bf16 %v79, %v78
  %v103 = vpack.c.bf16 %v81, %v80
  %v104 = vpack.c.bf16 %v83, %v82
  %v105 = vpack.c.bf16 %v85, %v84
  %v106 = vpack.c.bf16 %v87, %v86
  %v107 = vpack.c.bf16 %v89, %v88
  %v108 = vpack.c.bf16 %v91, %v90
  %v109 = vpack.c.bf16 %v93, %v92
  %v110 = vpack.c.bf16 %v95, %v94
  %v111 = vpack.c.bf16 %v97, %v96
  %v112 = vpack.c.bf16 %v99, %v98
  %v113 = vpack.c.bf16 %v100, %v100
  %v114 = vld [vmem:[%s4] sm:$0xf]
  %v115 = vld [vmem:[%s4 + $0x4] sm:$0xf]
  %v116 = vld [vmem:[%s4 + $0x8] sm:$0xf]
  %v117 = vld [vmem:[%s4 + $0xc] sm:$0xf]
  %v118 = vld [vmem:[%s4 + $0x10] sm:$0xf]
  %v119 = vld [vmem:[%s4 + $0x14] sm:$0xf]
  %v120 = vld [vmem:[%s4 + $0x18] sm:$0xf]
  %v121 = vld [vmem:[%s4 + $0x1c] sm:$0xf]
  %v122 = vld [vmem:[%s4 + $0x20] sm:$0xf]
  %v123 = vld [vmem:[%s4 + $0x24] sm:$0xf]
  %v124 = vld [vmem:[%s4 + $0x28] sm:$0xf]
  %v125 = vld [vmem:[%s4 + $0x2c] sm:$0xf]
  %v126 = vld [vmem:[%s4 + $0x30] sm:$0xf]
  %v127 = vld [vmem:[%s4 + $0x34] sm:$0xf]
  %v128 = vld [vmem:[%s4 + $0x38] sm:$0xf]
  %v129 = vld [vmem:[%s4 + $0x3c] sm:$0xf]
  %v146 = vunpack.c.l.b16 %v114
  %v147 = vunpack.c.l.b16 %v115
  %v148 = vunpack.c.l.b16 %v116
  %v149 = vunpack.c.l.b16 %v117
  %v150 = vunpack.c.l.b16 %v118
  %v151 = vunpack.c.l.b16 %v119
  %v152 = vunpack.c.l.b16 %v120
  %v153 = vunpack.c.l.b16 %v121
  %v154 = vunpack.c.l.b16 %v122
  %v155 = vunpack.c.l.b16 %v123
  %v156 = vunpack.c.l.b16 %v124
  %v157 = vunpack.c.l.b16 %v125
  %v158 = vunpack.c.l.b16 %v126
  %v159 = vunpack.c.l.b16 %v127
  %v160 = vunpack.c.l.b16 %v128
  %v161 = vunpack.c.l.b16 %v129
  %v162 = vpack.c.b16 %v147, %v146
  %v163 = vpack.c.b16 %v149, %v148
  %v164 = vpack.c.b16 %v151, %v150
  %v165 = vpack.c.b16 %v153, %v152
  %v166 = vpack.c.b16 %v155, %v154
  %v167 = vpack.c.b16 %v157, %v156
  %v168 = vpack.c.b16 %v159, %v158
  %v169 = vpack.c.b16 %v161, %v160
  %178 = vmatprep.subr.bf16.mxu0 0
  %179 = vmatpush1.bf16.msra.mxu0 %v169
  %180 = vmatprep.subr.bf16.mxu0 0
  %181 = vmatpush1.bf16.msra.mxu0 %v168
  %182 = vmatprep.subr.bf16.mxu0 0
  %183 = vmatpush1.bf16.msra.mxu0 %v167
  %184 = vmatprep.subr.bf16.mxu0 0
  %185 = vmatpush1.bf16.msra.mxu0 %v166
  %186 = vmatprep.subr.bf16.mxu0 0
  %187 = vmatpush1.bf16.msra.mxu0 %v165
  %188 = vmatprep.subr.bf16.mxu0 0
  %189 = vmatpush1.bf16.msra.mxu0 %v164
  %190 = vmatprep.subr.bf16.mxu0 0
  %191 = vmatpush1.bf16.msra.mxu0 %v163
  %192 = vmatprep.subr.bf16.mxu0 0
  %193 = vmatpush1.bf16.msra.mxu0 %v162
  %194 = vmatprep.subr.bf16.mxu0 0
  %195 = vmatpush2.bf16.msra.mxu0 0
  %196 = vmatprep.subr.bf16.mxu0 0
  %197 = vmatpush2.bf16.msra.mxu0 0
  %198 = vmatprep.subr.bf16.mxu0 0
  %199 = vmatpush2.bf16.msra.mxu0 0
  %200 = vmatprep.subr.bf16.mxu0 0
  %201 = vmatpush2.bf16.msra.mxu0 0
  %202 = vmatprep.subr.bf16.mxu0 0
  %203 = vmatpush2.bf16.msra.mxu0 0
  %204 = vmatprep.subr.bf16.mxu0 0
  %205 = vmatpush2.bf16.msra.mxu0 0
  %206 = vmatprep.subr.bf16.mxu0 0
  %207 = vmatpush2.bf16.msra.mxu0 0
  %208 = vmatprep.subr.bf16.mxu0 0
  %209 = vmatpush2.bf16.msra.mxu0 0
  %210 = vmatprep.mubr.bf16.mxu0 0
  %211 = vmatmul.mubr.bf16.gmra.mxu0 %v101
  %v212 = vpop.f32.mrf.mxu0
  %v213 = vadd.f32 0.0, %v212
  %v214 = vpop.f32.mrf.mxu0
  %v215 = vpop.f32.mrf.mxu0
  %v216 = vadd.f32 0.0, %v215
  %v217 = vpop.f32.mrf.mxu0
  %218 = vmatprep.mubr.bf16.mxu0 0
  %219 = vmatmul.mubr.bf16.gmra.mxu0 %v102
  %v220 = vpop.f32.mrf.mxu0
  %v221 = vadd.f32 0.0, %v220
  %v222 = vpop.f32.mrf.mxu0
  %v223 = vpop.f32.mrf.mxu0
  %v224 = vadd.f32 0.0, %v223
  %v225 = vpop.f32.mrf.mxu0
  %226 = vmatprep.mubr.bf16.mxu0 0
  %227 = vmatmul.mubr.bf16.gmra.mxu0 %v103
  %v228 = vpop.f32.mrf.mxu0
  %v229 = vadd.f32 0.0, %v228
  %v230 = vpop.f32.mrf.mxu0
  %v231 = vpop.f32.mrf.mxu0
  %v232 = vadd.f32 0.0, %v231
  %v233 = vpop.f32.mrf.mxu0
  %234 = vmatprep.mubr.bf16.mxu0 0
  %235 = vmatmul.mubr.bf16.gmra.mxu0 %v104
  %v236 = vpop.f32.mrf.mxu0
  %v237 = vadd.f32 0.0, %v236
  %v238 = vpop.f32.mrf.mxu0
  %v239 = vpop.f32.mrf.mxu0
  %v240 = vadd.f32 0.0, %v239
  %v241 = vpop.f32.mrf.mxu0
  %242 = vmatprep.mubr.bf16.mxu0 0
  %243 = vmatmul.mubr.bf16.gmra.mxu0 %v105
  %v244 = vpop.f32.mrf.mxu0
  %v245 = vadd.f32 0.0, %v244
  %v246 = vpop.f32.mrf.mxu0
  %v247 = vpop.f32.mrf.mxu0
  %v248 = vadd.f32 0.0, %v247
  %v249 = vpop.f32.mrf.mxu0
  %250 = vmatprep.mubr.bf16.mxu0 0
  %251 = vmatmul.mubr.bf16.gmra.mxu0 %v106
  %v252 = vpop.f32.mrf.mxu0
  %v253 = vadd.f32 0.0, %v252
  %v254 = vpop.f32.mrf.mxu0
  %v255 = vpop.f32.mrf.mxu0
  %v256 = vadd.f32 0.0, %v255
  %v257 = vpop.f32.mrf.mxu0
  %258 = vmatprep.mubr.bf16.mxu0 0
  %259 = vmatmul.mubr.bf16.gmra.mxu0 %v107
  %v260 = vpop.f32.mrf.mxu0
  %v261 = vadd.f32 0.0, %v260
  %v262 = vpop.f32.mrf.mxu0
  %v263 = vpop.f32.mrf.mxu0
  %v264 = vadd.f32 0.0, %v263
  %v265 = vpop.f32.mrf.mxu0
  %266 = vmatprep.mubr.bf16.mxu0 0
  %267 = vmatmul.mubr.bf16.gmra.mxu0 %v108
  %v268 = vpop.f32.mrf.mxu0
  %v269 = vadd.f32 0.0, %v268
  %v270 = vpop.f32.mrf.mxu0
  %v271 = vpop.f32.mrf.mxu0
  %v272 = vadd.f32 0.0, %v271
  %v273 = vpop.f32.mrf.mxu0
  %274 = vmatprep.mubr.bf16.mxu0 0
  %275 = vmatmul.mubr.bf16.gmra.mxu0 %v109
  %v276 = vpop.f32.mrf.mxu0
  %v277 = vadd.f32 0.0, %v276
  %v278 = vpop.f32.mrf.mxu0
  %v279 = vpop.f32.mrf.mxu0
  %v280 = vadd.f32 0.0, %v279
  %v281 = vpop.f32.mrf.mxu0
  %282 = vmatprep.mubr.bf16.mxu0 0
  %283 = vmatmul.mubr.bf16.gmra.mxu0 %v110
  %v284 = vpop.f32.mrf.mxu0
  %v285 = vadd.f32 0.0, %v284
  %v286 = vpop.f32.mrf.mxu0
  %v287 = vpop.f32.mrf.mxu0
  %v288 = vadd.f32 0.0, %v287
  %v289 = vpop.f32.mrf.mxu0
  %290 = vmatprep.mubr.bf16.mxu0 0
  %291 = vmatmul.mubr.bf16.gmra.mxu0 %v111
  %v292 = vpop.f32.mrf.mxu0
  %v293 = vadd.f32 0.0, %v292
  %v294 = vpop.f32.mrf.mxu0
  %v295 = vpop.f32.mrf.mxu0
  %v296 = vadd.f32 0.0, %v295
  %v297 = vpop.f32.mrf.mxu0
  %298 = vmatprep.mubr.bf16.mxu0 0
  %299 = vmatmul.mubr.bf16.gmra.mxu0 %v112
  %v300 = vpop.f32.mrf.mxu0
  %v301 = vadd.f32 0.0, %v300
  %v302 = vpop.f32.mrf.mxu0
  %v303 = vpop.f32.mrf.mxu0
  %v304 = vadd.f32 0.0, %v303
  %v305 = vpop.f32.mrf.mxu0
  %306 = vmatprep.mubr.bf16.mxu0 0
  %307 = vmatmul.mubr.bf16.gmra.mxu0 %v113
  %v308 = vpop.f32.mrf.mxu0
  %v309 = vadd.f32 0.0, %v308
  %v310 = vpop.f32.mrf.mxu0
  %v311 = vpop.f32.mrf.mxu0
  %v312 = vpop.f32.mrf.mxu0
  %313 = vdwg.mxu0
  %v314 = vld [vmem:[%s5] sm:$0x1]
  %v315 = vld [vmem:[%s6] sm:$0x1]
  %317 = vset.pattern.permute.xlu0 0
  %318 = vperm.xlu0 %317, %v51
  %v319 = vpop.permute.xlu0 %318
  %322 = vset.pattern.permute.xlu0 0
  %323 = vperm.xlu0 %322, %v52
  %v324 = vpop.permute.xlu0 %323
  %327 = vset.pattern.permute.xlu0 0
  %328 = vperm.xlu0 %327, %v53
  %v329 = vpop.permute.xlu0 %328
  %332 = vset.pattern.permute.xlu0 0
  %333 = vperm.xlu0 %332, %v54
  %v334 = vpop.permute.xlu0 %333
  %337 = vset.pattern.permute.xlu0 0
  %338 = vperm.xlu0 %337, %v55
  %v339 = vpop.permute.xlu0 %338
  %342 = vset.pattern.permute.xlu0 0
  %343 = vperm.xlu0 %342, %v56
  %v344 = vpop.permute.xlu0 %343
  %347 = vset.pattern.permute.xlu0 0
  %348 = vperm.xlu0 %347, %v57
  %v349 = vpop.permute.xlu0 %348
  %352 = vset.pattern.permute.xlu0 0
  %353 = vperm.xlu0 %352, %v58
  %v354 = vpop.permute.xlu0 %353
  %357 = vset.pattern.permute.xlu0 0
  %358 = vperm.xlu0 %357, %v59
  %v359 = vpop.permute.xlu0 %358
  %362 = vset.pattern.permute.xlu0 0
  %363 = vperm.xlu0 %362, %v60
  %v364 = vpop.permute.xlu0 %363
  %367 = vset.pattern.permute.xlu0 0
  %368 = vperm.xlu0 %367, %v61
  %v369 = vpop.permute.xlu0 %368
  %372 = vset.pattern.permute.xlu0 0
  %373 = vperm.xlu0 %372, %v62
  %v374 = vpop.permute.xlu0 %373
  %377 = vset.pattern.permute.xlu0 0
  %378 = vperm.xlu0 %377, %v63
  %v379 = vpop.permute.xlu0 %378
  %382 = vset.pattern.permute.xlu0 0
  %383 = vperm.xlu0 %382, %v64
  %v384 = vpop.permute.xlu0 %383
  %387 = vset.pattern.permute.xlu0 0
  %388 = vperm.xlu0 %387, %v65
  %v389 = vpop.permute.xlu0 %388
  %392 = vset.pattern.permute.xlu0 0
  %393 = vperm.xlu0 %392, %v66
  %v394 = vpop.permute.xlu0 %393
  %397 = vset.pattern.permute.xlu0 0
  %398 = vperm.xlu0 %397, %v67
  %v399 = vpop.permute.xlu0 %398
  %402 = vset.pattern.permute.xlu0 0
  %403 = vperm.xlu0 %402, %v68
  %v404 = vpop.permute.xlu0 %403
  %407 = vset.pattern.permute.xlu0 0
  %408 = vperm.xlu0 %407, %v69
  %v409 = vpop.permute.xlu0 %408
  %412 = vset.pattern.permute.xlu0 0
  %413 = vperm.xlu0 %412, %v70
  %v414 = vpop.permute.xlu0 %413
  %417 = vset.pattern.permute.xlu0 0
  %418 = vperm.xlu0 %417, %v71
  %v419 = vpop.permute.xlu0 %418
  %422 = vset.pattern.permute.xlu0 0
  %423 = vperm.xlu0 %422, %v72
  %v424 = vpop.permute.xlu0 %423
  %427 = vset.pattern.permute.xlu0 0
  %428 = vperm.xlu0 %427, %v73
  %v429 = vpop.permute.xlu0 %428
  %432 = vset.pattern.permute.xlu0 0
  %433 = vperm.xlu0 %432, %v74
  %v434 = vpop.permute.xlu0 %433
  %437 = vset.pattern.permute.xlu0 0
  %438 = vperm.xlu0 %437, %v75
  %v439 = vpop.permute.xlu0 %438
  %v441 = vmul.f32 %v213, %v319
  %v442 = vmul.f32 %v216, %v324
  %v443 = vmul.f32 %v221, %v329
  %v444 = vmul.f32 %v224, %v334
  %v445 = vmul.f32 %v229, %v339
  %v446 = vmul.f32 %v232, %v344
  %v447 = vmul.f32 %v237, %v349
  %v448 = vmul.f32 %v240, %v354
  %v449 = vmul.f32 %v245, %v359
  %v450 = vmul.f32 %v248, %v364
  %v451 = vmul.f32 %v253, %v369
  %v452 = vmul.f32 %v256, %v374
  %v453 = vmul.f32 %v261, %v379
  %v454 = vmul.f32 %v264, %v384
  %v455 = vmul.f32 %v269, %v389
  %v456 = vmul.f32 %v272, %v394
  %v457 = vmul.f32 %v277, %v399
  %v458 = vmul.f32 %v280, %v404
  %v459 = vmul.f32 %v285, %v409
  %v460 = vmul.f32 %v288, %v414
  %v461 = vmul.f32 %v293, %v419
  %v462 = vmul.f32 %v296, %v424
  %v463 = vmul.f32 %v301, %v429
  %v464 = vmul.f32 %v304, %v434
  %v465 = vmul.f32 %v309, %v439
  %v466 = vadd.f32 %v441, %v442
  %v467 = vadd.f32 %v466, %v443
  %v468 = vadd.f32 %v467, %v444
  %v469 = vadd.f32 %v468, %v445
  %v470 = vadd.f32 %v469, %v446
  %v471 = vadd.f32 %v470, %v447
  %v472 = vadd.f32 %v471, %v448
  %v473 = vadd.f32 %v472, %v449
  %v474 = vadd.f32 %v473, %v450
  %v475 = vadd.f32 %v474, %v451
  %v476 = vadd.f32 %v475, %v452
  %v477 = vadd.f32 %v476, %v453
  %v478 = vadd.f32 %v477, %v454
  %v479 = vadd.f32 %v478, %v455
  %v480 = vadd.f32 %v479, %v456
  %v481 = vadd.f32 %v480, %v457
  %v482 = vadd.f32 %v481, %v458
  %v483 = vadd.f32 %v482, %v459
  %v484 = vadd.f32 %v483, %v460
  %v485 = vadd.f32 %v484, %v461
  %v486 = vadd.f32 %v485, %v462
  %v487 = vadd.f32 %v486, %v463
  %v488 = vadd.f32 %v487, %v464
  %v489 = vadd.f32 %v488, %v465
  %v490 = vrot.slane %v489, 4
  %v491 = vadd.f32 %v489, %v490
  %v492 = vrot.slane %v491, 2
  %v493 = vadd.f32 %v491, %v492
  %v494 = vrot.slane %v493, 1
  %v495 = vadd.f32 %v493, %v494
  %v496 = vmul.f32 %v495, 0.0078125
  %v497 = vsub.f32 %v213, %v496
  %v498 = vsub.f32 %v216, %v496
  %v499 = vsub.f32 %v221, %v496
  %v500 = vsub.f32 %v224, %v496
  %v501 = vsub.f32 %v229, %v496
  %v502 = vsub.f32 %v232, %v496
  %v503 = vsub.f32 %v237, %v496
  %v504 = vsub.f32 %v240, %v496
  %v505 = vsub.f32 %v245, %v496
  %v506 = vsub.f32 %v248, %v496
  %v507 = vsub.f32 %v253, %v496
  %v508 = vsub.f32 %v256, %v496
  %v509 = vsub.f32 %v261, %v496
  %v510 = vsub.f32 %v264, %v496
  %v511 = vsub.f32 %v269, %v496
  %v512 = vsub.f32 %v272, %v496
  %v513 = vsub.f32 %v277, %v496
  %v514 = vsub.f32 %v280, %v496
  %v515 = vsub.f32 %v285, %v496
  %v516 = vsub.f32 %v288, %v496
  %v517 = vsub.f32 %v293, %v496
  %v518 = vsub.f32 %v296, %v496
  %v519 = vsub.f32 %v301, %v496
  %v520 = vsub.f32 %v304, %v496
  %v521 = vsub.f32 %v309, %v496
  %v522 = vmul.f32 %v497, %v319
  %v523 = vmul.f32 %v498, %v324
  %v524 = vmul.f32 %v499, %v329
  %v525 = vmul.f32 %v500, %v334
  %v526 = vmul.f32 %v501, %v339
  %v527 = vmul.f32 %v502, %v344
  %v528 = vmul.f32 %v503, %v349
  %v529 = vmul.f32 %v504, %v354
  %v530 = vmul.f32 %v505, %v359
  %v531 = vmul.f32 %v506, %v364
  %v532 = vmul.f32 %v507, %v369
  %v533 = vmul.f32 %v508, %v374
  %v534 = vmul.f32 %v509, %v379
  %v535 = vmul.f32 %v510, %v384
  %v536 = vmul.f32 %v511, %v389
  %v537 = vmul.f32 %v512, %v394
  %v538 = vmul.f32 %v513, %v399
  %v539 = vmul.f32 %v514, %v404
  %v540 = vmul.f32 %v515, %v409
  %v541 = vmul.f32 %v516, %v414
  %v542 = vmul.f32 %v517, %v419
  %v543 = vmul.f32 %v518, %v424
  %v544 = vmul.f32 %v519, %v429
  %v545 = vmul.f32 %v520, %v434
  %v546 = vmul.f32 %v521, %v439
  %v547 = vmul.f32 %v522, %v522
  %v548 = vmul.f32 %v523, %v523
  %v549 = vmul.f32 %v524, %v524
  %v550 = vmul.f32 %v525, %v525
  %v551 = vmul.f32 %v526, %v526
  %v552 = vmul.f32 %v527, %v527
  %v553 = vmul.f32 %v528, %v528
  %v554 = vmul.f32 %v529, %v529
  %v555 = vmul.f32 %v530, %v530
  %v556 = vmul.f32 %v531, %v531
  %v557 = vmul.f32 %v532, %v532
  %v558 = vmul.f32 %v533, %v533
  %v559 = vmul.f32 %v534, %v534
  %v560 = vmul.f32 %v535, %v535
  %v561 = vmul.f32 %v536, %v536
  %v562 = vmul.f32 %v537, %v537
  %v563 = vmul.f32 %v538, %v538
  %v564 = vmul.f32 %v539, %v539
  %v565 = vmul.f32 %v540, %v540
  %v566 = vmul.f32 %v541, %v541
  %v567 = vmul.f32 %v542, %v542
  %v568 = vmul.f32 %v543, %v543
  %v569 = vmul.f32 %v544, %v544
  %v570 = vmul.f32 %v545, %v545
  %v571 = vmul.f32 %v546, %v546
  %v572 = vadd.f32 %v547, %v548
  %v573 = vadd.f32 %v572, %v549
  %v574 = vadd.f32 %v573, %v550
  %v575 = vadd.f32 %v574, %v551
  %v576 = vadd.f32 %v575, %v552
  %v577 = vadd.f32 %v576, %v553
  %v578 = vadd.f32 %v577, %v554
  %v579 = vadd.f32 %v578, %v555
  %v580 = vadd.f32 %v579, %v556
  %v581 = vadd.f32 %v580, %v557
  %v582 = vadd.f32 %v581, %v558
  %v583 = vadd.f32 %v582, %v559
  %v584 = vadd.f32 %v583, %v560
  %v585 = vadd.f32 %v584, %v561
  %v586 = vadd.f32 %v585, %v562
  %v587 = vadd.f32 %v586, %v563
  %v588 = vadd.f32 %v587, %v564
  %v589 = vadd.f32 %v588, %v565
  %v590 = vadd.f32 %v589, %v566
  %v591 = vadd.f32 %v590, %v567
  %v592 = vadd.f32 %v591, %v568
  %v593 = vadd.f32 %v592, %v569
  %v594 = vadd.f32 %v593, %v570
  %v595 = vadd.f32 %v594, %v571
  %v596 = vrot.slane %v595, 4
  %v597 = vadd.f32 %v595, %v596
  %v598 = vrot.slane %v597, 2
  %v599 = vadd.f32 %v597, %v598
  %v600 = vrot.slane %v599, 1
  %v601 = vadd.f32 %v599, %v600
  %v602 = vmul.f32 %v601, 0.0078125
  %v603 = vadd.f32 %v602, 1e-05
  %v604 = vrsqrt.pop %v603
  %v605 = vmul.f32 %v314, %v604
  %v606 = vmul.f32 %v496, %v605
  %v607 = vsub.f32 %v315, %v606
  %v609 = vlaneseq
  %v610 = vshrl.u32 %v609, 7
  %v611 = vsub.s32 0, %v610
  %v612 = vrot.slane %v605, %v611
  %v614 = vmul.f32 %v213, %v612
  %v615 = vmul.f32 %v216, %v612
  %v616 = vmul.f32 %v221, %v612
  %v617 = vmul.f32 %v224, %v612
  %v618 = vmul.f32 %v229, %v612
  %v619 = vmul.f32 %v232, %v612
  %v620 = vmul.f32 %v237, %v612
  %v621 = vmul.f32 %v240, %v612
  %v622 = vmul.f32 %v245, %v612
  %v623 = vmul.f32 %v248, %v612
  %v624 = vmul.f32 %v253, %v612
  %v625 = vmul.f32 %v256, %v612
  %v626 = vmul.f32 %v261, %v612
  %v627 = vmul.f32 %v264, %v612
  %v628 = vmul.f32 %v269, %v612
  %v629 = vmul.f32 %v272, %v612
  %v630 = vmul.f32 %v277, %v612
  %v631 = vmul.f32 %v280, %v612
  %v632 = vmul.f32 %v285, %v612
  %v633 = vmul.f32 %v288, %v612
  %v634 = vmul.f32 %v293, %v612
  %v635 = vmul.f32 %v296, %v612
  %v636 = vmul.f32 %v301, %v612
  %v637 = vmul.f32 %v304, %v612
  %v638 = vmul.f32 %v309, %v612
  %v640 = vlaneseq
  %v641 = vshrl.u32 %v640, 7
  %v642 = vsub.s32 0, %v641
  %v643 = vrot.slane %v607, %v642
  %v645 = vadd.f32 %v614, %v643
  %v646 = vadd.f32 %v615, %v643
  %v647 = vadd.f32 %v616, %v643
  %v648 = vadd.f32 %v617, %v643
  %v649 = vadd.f32 %v618, %v643
  %v650 = vadd.f32 %v619, %v643
  %v651 = vadd.f32 %v620, %v643
  %v652 = vadd.f32 %v621, %v643
  %v653 = vadd.f32 %v622, %v643
  %v654 = vadd.f32 %v623, %v643
  %v655 = vadd.f32 %v624, %v643
  %v656 = vadd.f32 %v625, %v643
  %v657 = vadd.f32 %v626, %v643
  %v658 = vadd.f32 %v627, %v643
  %v659 = vadd.f32 %v628, %v643
  %v660 = vadd.f32 %v629, %v643
  %v661 = vadd.f32 %v630, %v643
  %v662 = vadd.f32 %v631, %v643
  %v663 = vadd.f32 %v632, %v643
  %v664 = vadd.f32 %v633, %v643
  %v665 = vadd.f32 %v634, %v643
  %v666 = vadd.f32 %v635, %v643
  %v667 = vadd.f32 %v636, %v643
  %v668 = vadd.f32 %v637, %v643
  %v669 = vadd.f32 %v638, %v643
  %v670 = vmax.f32 %v645, 0.0
  %v671 = vmax.f32 %v646, 0.0
  %v672 = vmax.f32 %v647, 0.0
  %v673 = vmax.f32 %v648, 0.0
  %v674 = vmax.f32 %v649, 0.0
  %v675 = vmax.f32 %v650, 0.0
  %v676 = vmax.f32 %v651, 0.0
  %v677 = vmax.f32 %v652, 0.0
  %v678 = vmax.f32 %v653, 0.0
  %v679 = vmax.f32 %v654, 0.0
  %v680 = vmax.f32 %v655, 0.0
  %v681 = vmax.f32 %v656, 0.0
  %v682 = vmax.f32 %v657, 0.0
  %v683 = vmax.f32 %v658, 0.0
  %v684 = vmax.f32 %v659, 0.0
  %v685 = vmax.f32 %v660, 0.0
  %v686 = vmax.f32 %v661, 0.0
  %v687 = vmax.f32 %v662, 0.0
  %v688 = vmax.f32 %v663, 0.0
  %v689 = vmax.f32 %v664, 0.0
  %v690 = vmax.f32 %v665, 0.0
  %v691 = vmax.f32 %v666, 0.0
  %v692 = vmax.f32 %v667, 0.0
  %v693 = vmax.f32 %v668, 0.0
  %v694 = vmax.f32 %v669, 0.0
  %v695 = vmul.f32 %v670, %v319
  %v696 = vmul.f32 %v671, %v324
  %v697 = vmul.f32 %v672, %v329
  %v698 = vmul.f32 %v673, %v334
  %v699 = vmul.f32 %v674, %v339
  %v700 = vmul.f32 %v675, %v344
  %v701 = vmul.f32 %v676, %v349
  %v702 = vmul.f32 %v677, %v354
  %v703 = vmul.f32 %v678, %v359
  %v704 = vmul.f32 %v679, %v364
  %v705 = vmul.f32 %v680, %v369
  %v706 = vmul.f32 %v681, %v374
  %v707 = vmul.f32 %v682, %v379
  %v708 = vmul.f32 %v683, %v384
  %v709 = vmul.f32 %v684, %v389
  %v710 = vmul.f32 %v685, %v394
  %v711 = vmul.f32 %v686, %v399
  %v712 = vmul.f32 %v687, %v404
  %v713 = vmul.f32 %v688, %v409
  %v714 = vmul.f32 %v689, %v414
  %v715 = vmul.f32 %v690, %v419
  %v716 = vmul.f32 %v691, %v424
  %v717 = vmul.f32 %v692, %v429
  %v718 = vmul.f32 %v693, %v434
  %v719 = vmul.f32 %v694, %v439
  %720 = vst [vmem:[#allocation2] sm:$0xff] 0.0
  %721 = vst [vmem:[#allocation2 + $0x8] sm:$0xff] 0.0
  %722 = vst [vmem:[#allocation2 + $0xd8] sm:$0xff] 0.0
  %723 = vst [vmem:[#allocation2 + $0xe0] sm:$0xff] 0.0
  %724 = vst [vmem:[#allocation2 + $0x10] sm:$0xff] %v695
  %725 = vst [vmem:[#allocation2 + $0x18] sm:$0xff] %v696
  %726 = vst [vmem:[#allocation2 + $0x20] sm:$0xff] %v697
  %727 = vst [vmem:[#allocation2 + $0x28] sm:$0xff] %v698
  %728 = vst [vmem:[#allocation2 + $0x30] sm:$0xff] %v699
  %729 = vst [vmem:[#allocation2 + $0x38] sm:$0xff] %v700
  %730 = vst [vmem:[#allocation2 + $0x40] sm:$0xff] %v701
  %731 = vst [vmem:[#allocation2 + $0x48] sm:$0xff] %v702
  %732 = vst [vmem:[#allocation2 + $0x50] sm:$0xff] %v703
  %733 = vst [vmem:[#allocation2 + $0x58] sm:$0xff] %v704
  %734 = vst [vmem:[#allocation2 + $0x60] sm:$0xff] %v705
  %735 = vst [vmem:[#allocation2 + $0x68] sm:$0xff] %v706
  %736 = vst [vmem:[#allocation2 + $0x70] sm:$0xff] %v707
  %737 = vst [vmem:[#allocation2 + $0x78] sm:$0xff] %v708
  %738 = vst [vmem:[#allocation2 + $0x80] sm:$0xff] %v709
  %739 = vst [vmem:[#allocation2 + $0x88] sm:$0xff] %v710
  %740 = vst [vmem:[#allocation2 + $0x90] sm:$0xff] %v711
  %741 = vst [vmem:[#allocation2 + $0x98] sm:$0xff] %v712
  %742 = vst [vmem:[#allocation2 + $0xa0] sm:$0xff] %v713
  %743 = vst [vmem:[#allocation2 + $0xa8] sm:$0xff] %v714
  %744 = vst [vmem:[#allocation2 + $0xb0] sm:$0xff] %v715
  %745 = vst [vmem:[#allocation2 + $0xb8] sm:$0xff] %v716
  %746 = vst [vmem:[#allocation2 + $0xc0] sm:$0xff] %v717
  %747 = vst [vmem:[#allocation2 + $0xc8] sm:$0xff] %v718
  %748 = vst [vmem:[#allocation2 + $0xd0] sm:$0xff] %v719
  %v749 = vld [vmem:[#allocation2 + $0x5] sm:$0xff]
  %v750 = vld [vmem:[#allocation2 + $0xd] sm:$0xff]
  %v751 = vld [vmem:[#allocation2 + $0x15] sm:$0xff]
  %v752 = vld [vmem:[#allocation2 + $0x1d] sm:$0xff]
  %v753 = vld [vmem:[#allocation2 + $0x25] sm:$0xff]
  %v754 = vld [vmem:[#allocation2 + $0x2d] sm:$0xff]
  %v755 = vld [vmem:[#allocation2 + $0x35] sm:$0xff]
  %v756 = vld [vmem:[#allocation2 + $0x3d] sm:$0xff]
  %v757 = vld [vmem:[#allocation2 + $0x45] sm:$0xff]
  %v758 = vld [vmem:[#allocation2 + $0x4d] sm:$0xff]
  %v759 = vld [vmem:[#allocation2 + $0x55] sm:$0xff]
  %v760 = vld [vmem:[#allocation2 + $0x5d] sm:$0xff]
  %v761 = vld [vmem:[#allocation2 + $0x65] sm:$0xff]
  %v762 = vld [vmem:[#allocation2 + $0x6d] sm:$0xff]
  %v763 = vld [vmem:[#allocation2 + $0x75] sm:$0xff]
  %v764 = vld [vmem:[#allocation2 + $0x7d] sm:$0xff]
  %v765 = vld [vmem:[#allocation2 + $0x85] sm:$0xff]
  %v766 = vld [vmem:[#allocation2 + $0x8d] sm:$0xff]
  %v767 = vld [vmem:[#allocation2 + $0x95] sm:$0xff]
  %v768 = vld [vmem:[#allocation2 + $0x9d] sm:$0xff]
  %v769 = vld [vmem:[#allocation2 + $0xa5] sm:$0xff]
  %v770 = vld [vmem:[#allocation2 + $0xad] sm:$0xff]
  %v771 = vld [vmem:[#allocation2 + $0xb5] sm:$0xff]
  %v772 = vld [vmem:[#allocation2 + $0xbd] sm:$0xff]
  %v773 = vld [vmem:[#allocation2 + $0xc5] sm:$0xff]
  %v774 = vpack.c.bf16 %v750, %v749
  %v775 = vpack.c.bf16 %v752, %v751
  %v776 = vpack.c.bf16 %v754, %v753
  %v777 = vpack.c.bf16 %v756, %v755
  %v778 = vpack.c.bf16 %v758, %v757
  %v779 = vpack.c.bf16 %v760, %v759
  %v780 = vpack.c.bf16 %v762, %v761
  %v781 = vpack.c.bf16 %v764, %v763
  %v782 = vpack.c.bf16 %v766, %v765
  %v783 = vpack.c.bf16 %v768, %v767
  %v784 = vpack.c.bf16 %v770, %v769
  %v785 = vpack.c.bf16 %v772, %v771
  %v786 = vpack.c.bf16 %v773, %v773
  %v787 = vld [vmem:[%s7] sm:$0xf]
  %v788 = vld [vmem:[%s7 + $0x4] sm:$0xf]
  %v789 = vld [vmem:[%s7 + $0x8] sm:$0xf]
  %v790 = vld [vmem:[%s7 + $0xc] sm:$0xf]
  %v791 = vld [vmem:[%s7 + $0x10] sm:$0xf]
  %v792 = vld [vmem:[%s7 + $0x14] sm:$0xf]
  %v793 = vld [vmem:[%s7 + $0x18] sm:$0xf]
  %v794 = vld [vmem:[%s7 + $0x1c] sm:$0xf]
  %v795 = vld [vmem:[%s7 + $0x20] sm:$0xf]
  %v796 = vld [vmem:[%s7 + $0x24] sm:$0xf]
  %v797 = vld [vmem:[%s7 + $0x28] sm:$0xf]
  %v798 = vld [vmem:[%s7 + $0x2c] sm:$0xf]
  %v799 = vld [vmem:[%s7 + $0x30] sm:$0xf]
  %v800 = vld [vmem:[%s7 + $0x34] sm:$0xf]
  %v801 = vld [vmem:[%s7 + $0x38] sm:$0xf]
  %v802 = vld [vmem:[%s7 + $0x3c] sm:$0xf]
  %v819 = vunpack.c.l.b16 %v787
  %v820 = vunpack.c.l.b16 %v788
  %v821 = vunpack.c.l.b16 %v789
  %v822 = vunpack.c.l.b16 %v790
  %v823 = vunpack.c.l.b16 %v791
  %v824 = vunpack.c.l.b16 %v792
  %v825 = vunpack.c.l.b16 %v793
  %v826 = vunpack.c.l.b16 %v794
  %v827 = vunpack.c.l.b16 %v795
  %v828 = vunpack.c.l.b16 %v796
  %v829 = vunpack.c.l.b16 %v797
  %v830 = vunpack.c.l.b16 %v798
  %v831 = vunpack.c.l.b16 %v799
  %v832 = vunpack.c.l.b16 %v800
  %v833 = vunpack.c.l.b16 %v801
  %v834 = vunpack.c.l.b16 %v802
  %v835 = vpack.c.b16 %v820, %v819
  %v836 = vpack.c.b16 %v822, %v821
  %v837 = vpack.c.b16 %v824, %v823
  %v838 = vpack.c.b16 %v826, %v825
  %v839 = vpack.c.b16 %v828, %v827
  %v840 = vpack.c.b16 %v830, %v829
  %v841 = vpack.c.b16 %v832, %v831
  %v842 = vpack.c.b16 %v834, %v833
  %851 = vmatprep.subr.bf16.mxu0 0
  %852 = vmatpush1.bf16.msra.mxu0 %v842
  %853 = vmatprep.subr.bf16.mxu0 0
  %854 = vmatpush1.bf16.msra.mxu0 %v841
  %855 = vmatprep.subr.bf16.mxu0 0
  %856 = vmatpush1.bf16.msra.mxu0 %v840
  %857 = vmatprep.subr.bf16.mxu0 0
  %858 = vmatpush1.bf16.msra.mxu0 %v839
  %859 = vmatprep.subr.bf16.mxu0 0
  %860 = vmatpush1.bf16.msra.mxu0 %v838
  %861 = vmatprep.subr.bf16.mxu0 0
  %862 = vmatpush1.bf16.msra.mxu0 %v837
  %863 = vmatprep.subr.bf16.mxu0 0
  %864 = vmatpush1.bf16.msra.mxu0 %v836
  %865 = vmatprep.subr.bf16.mxu0 0
  %866 = vmatpush1.bf16.msra.mxu0 %v835
  %867 = vmatprep.subr.bf16.mxu0 0
  %868 = vmatpush2.bf16.msra.mxu0 0
  %869 = vmatprep.subr.bf16.mxu0 0
  %870 = vmatpush2.bf16.msra.mxu0 0
  %871 = vmatprep.subr.bf16.mxu0 0
  %872 = vmatpush2.bf16.msra.mxu0 0
  %873 = vmatprep.subr.bf16.mxu0 0
  %874 = vmatpush2.bf16.msra.mxu0 0
  %875 = vmatprep.subr.bf16.mxu0 0
  %876 = vmatpush2.bf16.msra.mxu0 0
  %877 = vmatprep.subr.bf16.mxu0 0
  %878 = vmatpush2.bf16.msra.mxu0 0
  %879 = vmatprep.subr.bf16.mxu0 0
  %880 = vmatpush2.bf16.msra.mxu0 0
  %881 = vmatprep.subr.bf16.mxu0 0
  %882 = vmatpush2.bf16.msra.mxu0 0
  %883 = vmatprep.mubr.bf16.mxu0 0
  %884 = vmatmul.mubr.bf16.gmra.mxu0 %v774
  %v885 = vpop.f32.mrf.mxu0
  %v886 = vadd.f32 0.0, %v885
  %v887 = vpop.f32.mrf.mxu0
  %v888 = vpop.f32.mrf.mxu0
  %v889 = vadd.f32 0.0, %v888
  %v890 = vpop.f32.mrf.mxu0
  %891 = vmatprep.mubr.bf16.mxu0 0
  %892 = vmatmul.mubr.bf16.gmra.mxu0 %v775
  %v893 = vpop.f32.mrf.mxu0
  %v894 = vadd.f32 0.0, %v893
  %v895 = vpop.f32.mrf.mxu0
  %v896 = vpop.f32.mrf.mxu0
  %v897 = vadd.f32 0.0, %v896
  %v898 = vpop.f32.mrf.mxu0
  %899 = vmatprep.mubr.bf16.mxu0 0
  %900 = vmatmul.mubr.bf16.gmra.mxu0 %v776
  %v901 = vpop.f32.mrf.mxu0
  %v902 = vadd.f32 0.0, %v901
  %v903 = vpop.f32.mrf.mxu0
  %v904 = vpop.f32.mrf.mxu0
  %v905 = vadd.f32 0.0, %v904
  %v906 = vpop.f32.mrf.mxu0
  %907 = vmatprep.mubr.bf16.mxu0 0
  %908 = vmatmul.mubr.bf16.gmra.mxu0 %v777
  %v909 = vpop.f32.mrf.mxu0
  %v910 = vadd.f32 0.0, %v909
  %v911 = vpop.f32.mrf.mxu0
  %v912 = vpop.f32.mrf.mxu0
  %v913 = vadd.f32 0.0, %v912
  %v914 = vpop.f32.mrf.mxu0
  %915 = vmatprep.mubr.bf16.mxu0 0
  %916 = vmatmul.mubr.bf16.gmra.mxu0 %v778
  %v917 = vpop.f32.mrf.mxu0
  %v918 = vadd.f32 0.0, %v917
  %v919 = vpop.f32.mrf.mxu0
  %v920 = vpop.f32.mrf.mxu0
  %v921 = vadd.f32 0.0, %v920
  %v922 = vpop.f32.mrf.mxu0
  %923 = vmatprep.mubr.bf16.mxu0 0
  %924 = vmatmul.mubr.bf16.gmra.mxu0 %v779
  %v925 = vpop.f32.mrf.mxu0
  %v926 = vadd.f32 0.0, %v925
  %v927 = vpop.f32.mrf.mxu0
  %v928 = vpop.f32.mrf.mxu0
  %v929 = vadd.f32 0.0, %v928
  %v930 = vpop.f32.mrf.mxu0
  %931 = vmatprep.mubr.bf16.mxu0 0
  %932 = vmatmul.mubr.bf16.gmra.mxu0 %v780
  %v933 = vpop.f32.mrf.mxu0
  %v934 = vadd.f32 0.0, %v933
  %v935 = vpop.f32.mrf.mxu0
  %v936 = vpop.f32.mrf.mxu0
  %v937 = vadd.f32 0.0, %v936
  %v938 = vpop.f32.mrf.mxu0
  %939 = vmatprep.mubr.bf16.mxu0 0
  %940 = vmatmul.mubr.bf16.gmra.mxu0 %v781
  %v941 = vpop.f32.mrf.mxu0
  %v942 = vadd.f32 0.0, %v941
  %v943 = vpop.f32.mrf.mxu0
  %v944 = vpop.f32.mrf.mxu0
  %v945 = vadd.f32 0.0, %v944
  %v946 = vpop.f32.mrf.mxu0
  %947 = vmatprep.mubr.bf16.mxu0 0
  %948 = vmatmul.mubr.bf16.gmra.mxu0 %v782
  %v949 = vpop.f32.mrf.mxu0
  %v950 = vadd.f32 0.0, %v949
  %v951 = vpop.f32.mrf.mxu0
  %v952 = vpop.f32.mrf.mxu0
  %v953 = vadd.f32 0.0, %v952
  %v954 = vpop.f32.mrf.mxu0
  %955 = vmatprep.mubr.bf16.mxu0 0
  %956 = vmatmul.mubr.bf16.gmra.mxu0 %v783
  %v957 = vpop.f32.mrf.mxu0
  %v958 = vadd.f32 0.0, %v957
  %v959 = vpop.f32.mrf.mxu0
  %v960 = vpop.f32.mrf.mxu0
  %v961 = vadd.f32 0.0, %v960
  %v962 = vpop.f32.mrf.mxu0
  %963 = vmatprep.mubr.bf16.mxu0 0
  %964 = vmatmul.mubr.bf16.gmra.mxu0 %v784
  %v965 = vpop.f32.mrf.mxu0
  %v966 = vadd.f32 0.0, %v965
  %v967 = vpop.f32.mrf.mxu0
  %v968 = vpop.f32.mrf.mxu0
  %v969 = vadd.f32 0.0, %v968
  %v970 = vpop.f32.mrf.mxu0
  %971 = vmatprep.mubr.bf16.mxu0 0
  %972 = vmatmul.mubr.bf16.gmra.mxu0 %v785
  %v973 = vpop.f32.mrf.mxu0
  %v974 = vadd.f32 0.0, %v973
  %v975 = vpop.f32.mrf.mxu0
  %v976 = vpop.f32.mrf.mxu0
  %v977 = vadd.f32 0.0, %v976
  %v978 = vpop.f32.mrf.mxu0
  %979 = vmatprep.mubr.bf16.mxu0 0
  %980 = vmatmul.mubr.bf16.gmra.mxu0 %v786
  %v981 = vpop.f32.mrf.mxu0
  %v982 = vadd.f32 0.0, %v981
  %v983 = vpop.f32.mrf.mxu0
  %v984 = vpop.f32.mrf.mxu0
  %v985 = vpop.f32.mrf.mxu0
  %986 = vdwg.mxu0
  %987 = vst [vmem:[#allocation3] sm:$0xff] %v886
  %988 = vst [vmem:[#allocation3 + $0x8] sm:$0xff] %v889
  %989 = vst [vmem:[#allocation3 + $0x10] sm:$0xff] %v894
  %990 = vst [vmem:[#allocation3 + $0x18] sm:$0xff] %v897
  %991 = vst [vmem:[#allocation3 + $0x20] sm:$0xff] %v902
  %992 = vst [vmem:[#allocation3 + $0x28] sm:$0xff] %v905
  %993 = vst [vmem:[#allocation3 + $0x30] sm:$0xff] %v910
  %994 = vst [vmem:[#allocation3 + $0x38] sm:$0xff] %v913
  %995 = vst [vmem:[#allocation3 + $0x40] sm:$0xff] %v918
  %996 = vst [vmem:[#allocation3 + $0x48] sm:$0xff] %v921
  %997 = vst [vmem:[#allocation3 + $0x50] sm:$0xff] %v926
  %998 = vst [vmem:[#allocation3 + $0x58] sm:$0xff] %v929
  %999 = vst [vmem:[#allocation3 + $0x60] sm:$0xff] %v934
  %1000 = vst [vmem:[#allocation3 + $0x68] sm:$0xff] %v937
  %1001 = vst [vmem:[#allocation3 + $0x70] sm:$0xff] %v942
  %1002 = vst [vmem:[#allocation3 + $0x78] sm:$0xff] %v945
  %1003 = vst [vmem:[#allocation3 + $0x80] sm:$0xff] %v950
  %1004 = vst [vmem:[#allocation3 + $0x88] sm:$0xff] %v953
  %1005 = vst [vmem:[#allocation3 + $0x90] sm:$0xff] %v958
  %1006 = vst [vmem:[#allocation3 + $0x98] sm:$0xff] %v961
  %1007 = vst [vmem:[#allocation3 + $0xa0] sm:$0xff] %v966
  %1008 = vst [vmem:[#allocation3 + $0xa8] sm:$0xff] %v969
  %1009 = vst [vmem:[#allocation3 + $0xb0] sm:$0xff] %v974
  %1010 = vst [vmem:[#allocation3 + $0xb8] sm:$0xff] %v977
  %1011 = vst [vmem:[#allocation3 + $0xc0] sm:$0xff] %v982
  %v1012 = vld [vmem:[#allocation2 + $0x6] sm:$0xff]
  %v1013 = vld [vmem:[#allocation2 + $0xe] sm:$0xff]
  %v1014 = vld [vmem:[#allocation2 + $0x16] sm:$0xff]
  %v1015 = vld [vmem:[#allocation2 + $0x1e] sm:$0xff]
  %v1016 = vld [vmem:[#allocation2 + $0x26] sm:$0xff]
  %v1017 = vld [vmem:[#allocation2 + $0x2e] sm:$0xff]
  %v1018 = vld [vmem:[#allocation2 + $0x36] sm:$0xff]
  %v1019 = vld [vmem:[#allocation2 + $0x3e] sm:$0xff]
  %v1020 = vld [vmem:[#allocation2 + $0x46] sm:$0xff]
  %v1021 = vld [vmem:[#allocation2 + $0x4e] sm:$0xff]
  %v1022 = vld [vmem:[#allocation2 + $0x56] sm:$0xff]
  %v1023 = vld [vmem:[#allocation2 + $0x5e] sm:$0xff]
  %v1024 = vld [vmem:[#allocation2 + $0x66] sm:$0xff]
  %v1025 = vld [vmem:[#allocation2 + $0x6e] sm:$0xff]
  %v1026 = vld [vmem:[#allocation2 + $0x76] sm:$0xff]
  %v1027 = vld [vmem:[#allocation2 + $0x7e] sm:$0xff]
  %v1028 = vld [vmem:[#allocation2 + $0x86] sm:$0xff]
  %v1029 = vld [vmem:[#allocation2 + $0x8e] sm:$0xff]
  %v1030 = vld [vmem:[#allocation2 + $0x96] sm:$0xff]
  %v1031 = vld [vmem:[#allocation2 + $0x9e] sm:$0xff]
  %v1032 = vld [vmem:[#allocation2 + $0xa6] sm:$0xff]
  %v1033 = vld [vmem:[#allocation2 + $0xae] sm:$0xff]
  %v1034 = vld [vmem:[#allocation2 + $0xb6] sm:$0xff]
  %v1035 = vld [vmem:[#allocation2 + $0xbe] sm:$0xff]
  %v1036 = vld [vmem:[#allocation2 + $0xc6] sm:$0xff]
  %v1037 = vpack.c.bf16 %v1013, %v1012
  %v1038 = vpack.c.bf16 %v1015, %v1014
  %v1039 = vpack.c.bf16 %v1017, %v1016
  %v1040 = vpack.c.bf16 %v1019, %v1018
  %v1041 = vpack.c.bf16 %v1021, %v1020
  %v1042 = vpack.c.bf16 %v1023, %v1022
  %v1043 = vpack.c.bf16 %v1025, %v1024
  %v1044 = vpack.c.bf16 %v1027, %v1026
  %v1045 = vpack.c.bf16 %v1029, %v1028
  %v1046 = vpack.c.bf16 %v1031, %v1030
  %v1047 = vpack.c.bf16 %v1033, %v1032
  %v1048 = vpack.c.bf16 %v1035, %v1034
  %v1049 = vpack.c.bf16 %v1036, %v1036
  %s1050 = scalar_lea.vmem %s7, 64
  %v1051 = vld [vmem:[%s1050] sm:$0xf]
  %v1052 = vld [vmem:[%s1050 + $0x4] sm:$0xf]
  %v1053 = vld [vmem:[%s1050 + $0x8] sm:$0xf]
  %v1054 = vld [vmem:[%s1050 + $0xc] sm:$0xf]
  %v1055 = vld [vmem:[%s1050 + $0x10] sm:$0xf]
  %v1056 = vld [vmem:[%s1050 + $0x14] sm:$0xf]
  %v1057 = vld [vmem:[%s1050 + $0x18] sm:$0xf]
  %v1058 = vld [vmem:[%s1050 + $0x1c] sm:$0xf]
  %v1059 = vld [vmem:[%s1050 + $0x20] sm:$0xf]
  %v1060 = vld [vmem:[%s1050 + $0x24] sm:$0xf]
  %v1061 = vld [vmem:[%s1050 + $0x28] sm:$0xf]
  %v1062 = vld [vmem:[%s1050 + $0x2c] sm:$0xf]
  %v1063 = vld [vmem:[%s1050 + $0x30] sm:$0xf]
  %v1064 = vld [vmem:[%s1050 + $0x34] sm:$0xf]
  %v1065 = vld [vmem:[%s1050 + $0x38] sm:$0xf]
  %v1066 = vld [vmem:[%s1050 + $0x3c] sm:$0xf]
  %v1083 = vunpack.c.l.b16 %v1051
  %v1084 = vunpack.c.l.b16 %v1052
  %v1085 = vunpack.c.l.b16 %v1053
  %v1086 = vunpack.c.l.b16 %v1054
  %v1087 = vunpack.c.l.b16 %v1055
  %v1088 = vunpack.c.l.b16 %v1056
  %v1089 = vunpack.c.l.b16 %v1057
  %v1090 = vunpack.c.l.b16 %v1058
  %v1091 = vunpack.c.l.b16 %v1059
  %v1092 = vunpack.c.l.b16 %v1060
  %v1093 = vunpack.c.l.b16 %v1061
  %v1094 = vunpack.c.l.b16 %v1062
  %v1095 = vunpack.c.l.b16 %v1063
  %v1096 = vunpack.c.l.b16 %v1064
  %v1097 = vunpack.c.l.b16 %v1065
  %v1098 = vunpack.c.l.b16 %v1066
  %v1099 = vpack.c.b16 %v1084, %v1083
  %v1100 = vpack.c.b16 %v1086, %v1085
  %v1101 = vpack.c.b16 %v1088, %v1087
  %v1102 = vpack.c.b16 %v1090, %v1089
  %v1103 = vpack.c.b16 %v1092, %v1091
  %v1104 = vpack.c.b16 %v1094, %v1093
  %v1105 = vpack.c.b16 %v1096, %v1095
  %v1106 = vpack.c.b16 %v1098, %v1097
  %1115 = vmatprep.subr.bf16.mxu0 0
  %1116 = vmatpush1.bf16.msra.mxu0 %v1106
  %1117 = vmatprep.subr.bf16.mxu0 0
  %1118 = vmatpush1.bf16.msra.mxu0 %v1105
  %1119 = vmatprep.subr.bf16.mxu0 0
  %1120 = vmatpush1.bf16.msra.mxu0 %v1104
  %1121 = vmatprep.subr.bf16.mxu0 0
  %1122 = vmatpush1.bf16.msra.mxu0 %v1103
  %1123 = vmatprep.subr.bf16.mxu0 0
  %1124 = vmatpush1.bf16.msra.mxu0 %v1102
  %1125 = vmatprep.subr.bf16.mxu0 0
  %1126 = vmatpush1.bf16.msra.mxu0 %v1101
  %1127 = vmatprep.subr.bf16.mxu0 0
  %1128 = vmatpush1.bf16.msra.mxu0 %v1100
  %1129 = vmatprep.subr.bf16.mxu0 0
  %1130 = vmatpush1.bf16.msra.mxu0 %v1099
  %1131 = vmatprep.subr.bf16.mxu0 0
  %1132 = vmatpush2.bf16.msra.mxu0 0
  %1133 = vmatprep.subr.bf16.mxu0 0
  %1134 = vmatpush2.bf16.msra.mxu0 0
  %1135 = vmatprep.subr.bf16.mxu0 0
  %1136 = vmatpush2.bf16.msra.mxu0 0
  %1137 = vmatprep.subr.bf16.mxu0 0
  %1138 = vmatpush2.bf16.msra.mxu0 0
  %1139 = vmatprep.subr.bf16.mxu0 0
  %1140 = vmatpush2.bf16.msra.mxu0 0
  %1141 = vmatprep.subr.bf16.mxu0 0
  %1142 = vmatpush2.bf16.msra.mxu0 0
  %1143 = vmatprep.subr.bf16.mxu0 0
  %1144 = vmatpush2.bf16.msra.mxu0 0
  %1145 = vmatprep.subr.bf16.mxu0 0
  %1146 = vmatpush2.bf16.msra.mxu0 0
  %1147 = vmatprep.mubr.bf16.mxu0 0
  %1148 = vmatmul.mubr.bf16.gmra.mxu0 %v1037
  %v1149 = vpop.f32.mrf.mxu0
  %v1150 = vadd.f32 0.0, %v1149
  %v1151 = vpop.f32.mrf.mxu0
  %v1152 = vpop.f32.mrf.mxu0
  %v1153 = vadd.f32 0.0, %v1152
  %v1154 = vpop.f32.mrf.mxu0
  %1155 = vmatprep.mubr.bf16.mxu0 0
  %1156 = vmatmul.mubr.bf16.gmra.mxu0 %v1038
  %v1157 = vpop.f32.mrf.mxu0
  %v1158 = vadd.f32 0.0, %v1157
  %v1159 = vpop.f32.mrf.mxu0
  %v1160 = vpop.f32.mrf.mxu0
  %v1161 = vadd.f32 0.0, %v1160
  %v1162 = vpop.f32.mrf.mxu0
  %1163 = vmatprep.mubr.bf16.mxu0 0
  %1164 = vmatmul.mubr.bf16.gmra.mxu0 %v1039
  %v1165 = vpop.f32.mrf.mxu0
  %v1166 = vadd.f32 0.0, %v1165
  %v1167 = vpop.f32.mrf.mxu0
  %v1168 = vpop.f32.mrf.mxu0
  %v1169 = vadd.f32 0.0, %v1168
  %v1170 = vpop.f32.mrf.mxu0
  %1171 = vmatprep.mubr.bf16.mxu0 0
  %1172 = vmatmul.mubr.bf16.gmra.mxu0 %v1040
  %v1173 = vpop.f32.mrf.mxu0
  %v1174 = vadd.f32 0.0, %v1173
  %v1175 = vpop.f32.mrf.mxu0
  %v1176 = vpop.f32.mrf.mxu0
  %v1177 = vadd.f32 0.0, %v1176
  %v1178 = vpop.f32.mrf.mxu0
  %1179 = vmatprep.mubr.bf16.mxu0 0
  %1180 = vmatmul.mubr.bf16.gmra.mxu0 %v1041
  %v1181 = vpop.f32.mrf.mxu0
  %v1182 = vadd.f32 0.0, %v1181
  %v1183 = vpop.f32.mrf.mxu0
  %v1184 = vpop.f32.mrf.mxu0
  %v1185 = vadd.f32 0.0, %v1184
  %v1186 = vpop.f32.mrf.mxu0
  %1187 = vmatprep.mubr.bf16.mxu0 0
  %1188 = vmatmul.mubr.bf16.gmra.mxu0 %v1042
  %v1189 = vpop.f32.mrf.mxu0
  %v1190 = vadd.f32 0.0, %v1189
  %v1191 = vpop.f32.mrf.mxu0
  %v1192 = vpop.f32.mrf.mxu0
  %v1193 = vadd.f32 0.0, %v1192
  %v1194 = vpop.f32.mrf.mxu0
  %1195 = vmatprep.mubr.bf16.mxu0 0
  %1196 = vmatmul.mubr.bf16.gmra.mxu0 %v1043
  %v1197 = vpop.f32.mrf.mxu0
  %v1198 = vadd.f32 0.0, %v1197
  %v1199 = vpop.f32.mrf.mxu0
  %v1200 = vpop.f32.mrf.mxu0
  %v1201 = vadd.f32 0.0, %v1200
  %v1202 = vpop.f32.mrf.mxu0
  %1203 = vmatprep.mubr.bf16.mxu0 0
  %1204 = vmatmul.mubr.bf16.gmra.mxu0 %v1044
  %v1205 = vpop.f32.mrf.mxu0
  %v1206 = vadd.f32 0.0, %v1205
  %v1207 = vpop.f32.mrf.mxu0
  %v1208 = vpop.f32.mrf.mxu0
  %v1209 = vadd.f32 0.0, %v1208
  %v1210 = vpop.f32.mrf.mxu0
  %1211 = vmatprep.mubr.bf16.mxu0 0
  %1212 = vmatmul.mubr.bf16.gmra.mxu0 %v1045
  %v1213 = vpop.f32.mrf.mxu0
  %v1214 = vadd.f32 0.0, %v1213
  %v1215 = vpop.f32.mrf.mxu0
  %v1216 = vpop.f32.mrf.mxu0
  %v1217 = vadd.f32 0.0, %v1216
  %v1218 = vpop.f32.mrf.mxu0
  %1219 = vmatprep.mubr.bf16.mxu0 0
  %1220 = vmatmul.mubr.bf16.gmra.mxu0 %v1046
  %v1221 = vpop.f32.mrf.mxu0
  %v1222 = vadd.f32 0.0, %v1221
  %v1223 = vpop.f32.mrf.mxu0
  %v1224 = vpop.f32.mrf.mxu0
  %v1225 = vadd.f32 0.0, %v1224
  %v1226 = vpop.f32.mrf.mxu0
  %1227 = vmatprep.mubr.bf16.mxu0 0
  %1228 = vmatmul.mubr.bf16.gmra.mxu0 %v1047
  %v1229 = vpop.f32.mrf.mxu0
  %v1230 = vadd.f32 0.0, %v1229
  %v1231 = vpop.f32.mrf.mxu0
  %v1232 = vpop.f32.mrf.mxu0
  %v1233 = vadd.f32 0.0, %v1232
  %v1234 = vpop.f32.mrf.mxu0
  %1235 = vmatprep.mubr.bf16.mxu0 0
  %1236 = vmatmul.mubr.bf16.gmra.mxu0 %v1048
  %v1237 = vpop.f32.mrf.mxu0
  %v1238 = vadd.f32 0.0, %v1237
  %v1239 = vpop.f32.mrf.mxu0
  %v1240 = vpop.f32.mrf.mxu0
  %v1241 = vadd.f32 0.0, %v1240
  %v1242 = vpop.f32.mrf.mxu0
  %1243 = vmatprep.mubr.bf16.mxu0 0
  %1244 = vmatmul.mubr.bf16.gmra.mxu0 %v1049
  %v1245 = vpop.f32.mrf.mxu0
  %v1246 = vadd.f32 0.0, %v1245
  %v1247 = vpop.f32.mrf.mxu0
  %v1248 = vpop.f32.mrf.mxu0
  %v1249 = vpop.f32.mrf.mxu0
  %1250 = vdwg.mxu0
  %v1251 = vld [vmem:[#allocation3] sm:$0xff]
  %v1252 = vld [vmem:[#allocation3 + $0x8] sm:$0xff]
  %v1253 = vld [vmem:[#allocation3 + $0x10] sm:$0xff]
  %v1254 = vld [vmem:[#allocation3 + $0x18] sm:$0xff]
  %v1255 = vld [vmem:[#allocation3 + $0x20] sm:$0xff]
  %v1256 = vld [vmem:[#allocation3 + $0x28] sm:$0xff]
  %v1257 = vld [vmem:[#allocation3 + $0x30] sm:$0xff]
  %v1258 = vld [vmem:[#allocation3 + $0x38] sm:$0xff]
  %v1259 = vld [vmem:[#allocation3 + $0x40] sm:$0xff]
  %v1260 = vld [vmem:[#allocation3 + $0x48] sm:$0xff]
  %v1261 = vld [vmem:[#allocation3 + $0x50] sm:$0xff]
  %v1262 = vld [vmem:[#allocation3 + $0x58] sm:$0xff]
  %v1263 = vld [vmem:[#allocation3 + $0x60] sm:$0xff]
  %v1264 = vld [vmem:[#allocation3 + $0x68] sm:$0xff]
  %v1265 = vld [vmem:[#allocation3 + $0x70] sm:$0xff]
  %v1266 = vld [vmem:[#allocation3 + $0x78] sm:$0xff]
  %v1267 = vld [vmem:[#allocation3 + $0x80] sm:$0xff]
  %v1268 = vld [vmem:[#allocation3 + $0x88] sm:$0xff]
  %v1269 = vld [vmem:[#allocation3 + $0x90] sm:$0xff]
  %v1270 = vld [vmem:[#allocation3 + $0x98] sm:$0xff]
  %v1271 = vld [vmem:[#allocation3 + $0xa0] sm:$0xff]
  %v1272 = vld [vmem:[#allocation3 + $0xa8] sm:$0xff]
  %v1273 = vld [vmem:[#allocation3 + $0xb0] sm:$0xff]
  %v1274 = vld [vmem:[#allocation3 + $0xb8] sm:$0xff]
  %v1275 = vld [vmem:[#allocation3 + $0xc0] sm:$0xff]
  %v1276 = vadd.f32 %v1251, %v1150
  %v1277 = vadd.f32 %v1252, %v1153
  %v1278 = vadd.f32 %v1253, %v1158
  %v1279 = vadd.f32 %v1254, %v1161
  %v1280 = vadd.f32 %v1255, %v1166
  %v1281 = vadd.f32 %v1256, %v1169
  %v1282 = vadd.f32 %v1257, %v1174
  %v1283 = vadd.f32 %v1258, %v1177
  %v1284 = vadd.f32 %v1259, %v1182
  %v1285 = vadd.f32 %v1260, %v1185
  %v1286 = vadd.f32 %v1261, %v1190
  %v1287 = vadd.f32 %v1262, %v1193
  %v1288 = vadd.f32 %v1263, %v1198
  %v1289 = vadd.f32 %v1264, %v1201
  %v1290 = vadd.f32 %v1265, %v1206
  %v1291 = vadd.f32 %v1266, %v1209
  %v1292 = vadd.f32 %v1267, %v1214
  %v1293 = vadd.f32 %v1268, %v1217
  %v1294 = vadd.f32 %v1269, %v1222
  %v1295 = vadd.f32 %v1270, %v1225
  %v1296 = vadd.f32 %v1271, %v1230
  %v1297 = vadd.f32 %v1272, %v1233
  %v1298 = vadd.f32 %v1273, %v1238
  %v1299 = vadd.f32 %v1274, %v1241
  %v1300 = vadd.f32 %v1275, %v1246
  %1301 = vst [vmem:[#allocation3] sm:$0xff] %v1276
  %1302 = vst [vmem:[#allocation3 + $0x8] sm:$0xff] %v1277
  %1303 = vst [vmem:[#allocation3 + $0x10] sm:$0xff] %v1278
  %1304 = vst [vmem:[#allocation3 + $0x18] sm:$0xff] %v1279
  %1305 = vst [vmem:[#allocation3 + $0x20] sm:$0xff] %v1280
  %1306 = vst [vmem:[#allocation3 + $0x28] sm:$0xff] %v1281
  %1307 = vst [vmem:[#allocation3 + $0x30] sm:$0xff] %v1282
  %1308 = vst [vmem:[#allocation3 + $0x38] sm:$0xff] %v1283
  %1309 = vst [vmem:[#allocation3 + $0x40] sm:$0xff] %v1284
  %1310 = vst [vmem:[#allocation3 + $0x48] sm:$0xff] %v1285
  %1311 = vst [vmem:[#allocation3 + $0x50] sm:$0xff] %v1286
  %1312 = vst [vmem:[#allocation3 + $0x58] sm:$0xff] %v1287
  %1313 = vst [vmem:[#allocation3 + $0x60] sm:$0xff] %v1288
  %1314 = vst [vmem:[#allocation3 + $0x68] sm:$0xff] %v1289
  %1315 = vst [vmem:[#allocation3 + $0x70] sm:$0xff] %v1290
  %1316 = vst [vmem:[#allocation3 + $0x78] sm:$0xff] %v1291
  %1317 = vst [vmem:[#allocation3 + $0x80] sm:$0xff] %v1292
  %1318 = vst [vmem:[#allocation3 + $0x88] sm:$0xff] %v1293
  %1319 = vst [vmem:[#allocation3 + $0x90] sm:$0xff] %v1294
  %1320 = vst [vmem:[#allocation3 + $0x98] sm:$0xff] %v1295
  %1321 = vst [vmem:[#allocation3 + $0xa0] sm:$0xff] %v1296
  %1322 = vst [vmem:[#allocation3 + $0xa8] sm:$0xff] %v1297
  %1323 = vst [vmem:[#allocation3 + $0xb0] sm:$0xff] %v1298
  %1324 = vst [vmem:[#allocation3 + $0xb8] sm:$0xff] %v1299
  %1325 = vst [vmem:[#allocation3 + $0xc0] sm:$0xff] %v1300
  %v1326 = vld [vmem:[#allocation2 + $0x7] sm:$0xff]
  %v1327 = vld [vmem:[#allocation2 + $0xf] sm:$0xff]
  %v1328 = vld [vmem:[#allocation2 + $0x17] sm:$0xff]
  %v1329 = vld [vmem:[#allocation2 + $0x1f] sm:$0xff]
  %v1330 = vld [vmem:[#allocation2 + $0x27] sm:$0xff]
  %v1331 = vld [vmem:[#allocation2 + $0x2f] sm:$0xff]
  %v1332 = vld [vmem:[#allocation2 + $0x37] sm:$0xff]
  %v1333 = vld [vmem:[#allocation2 + $0x3f] sm:$0xff]
  %v1334 = vld [vmem:[#allocation2 + $0x47] sm:$0xff]
  %v1335 = vld [vmem:[#allocation2 + $0x4f] sm:$0xff]
  %v1336 = vld [vmem:[#allocation2 + $0x57] sm:$0xff]
  %v1337 = vld [vmem:[#allocation2 + $0x5f] sm:$0xff]
  %v1338 = vld [vmem:[#allocation2 + $0x67] sm:$0xff]
  %v1339 = vld [vmem:[#allocation2 + $0x6f] sm:$0xff]
  %v1340 = vld [vmem:[#allocation2 + $0x77] sm:$0xff]
  %v1341 = vld [vmem:[#allocation2 + $0x7f] sm:$0xff]
  %v1342 = vld [vmem:[#allocation2 + $0x87] sm:$0xff]
  %v1343 = vld [vmem:[#allocation2 + $0x8f] sm:$0xff]
  %v1344 = vld [vmem:[#allocation2 + $0x97] sm:$0xff]
  %v1345 = vld [vmem:[#allocation2 + $0x9f] sm:$0xff]
  %v1346 = vld [vmem:[#allocation2 + $0xa7] sm:$0xff]
  %v1347 = vld [vmem:[#allocation2 + $0xaf] sm:$0xff]
  %v1348 = vld [vmem:[#allocation2 + $0xb7] sm:$0xff]
  %v1349 = vld [vmem:[#allocation2 + $0xbf] sm:$0xff]
  %v1350 = vld [vmem:[#allocation2 + $0xc7] sm:$0xff]
  %v1351 = vpack.c.bf16 %v1327, %v1326
  %v1352 = vpack.c.bf16 %v1329, %v1328
  %v1353 = vpack.c.bf16 %v1331, %v1330
  %v1354 = vpack.c.bf16 %v1333, %v1332
  %v1355 = vpack.c.bf16 %v1335, %v1334
  %v1356 = vpack.c.bf16 %v1337, %v1336
  %v1357 = vpack.c.bf16 %v1339, %v1338
  %v1358 = vpack.c.bf16 %v1341, %v1340
  %v1359 = vpack.c.bf16 %v1343, %v1342
  %v1360 = vpack.c.bf16 %v1345, %v1344
  %v1361 = vpack.c.bf16 %v1347, %v1346
  %v1362 = vpack.c.bf16 %v1349, %v1348
  %v1363 = vpack.c.bf16 %v1350, %v1350
  %s1364 = scalar_lea.vmem %s7, 128
  %v1365 = vld [vmem:[%s1364] sm:$0xf]
  %v1366 = vld [vmem:[%s1364 + $0x4] sm:$0xf]
  %v1367 = vld [vmem:[%s1364 + $0x8] sm:$0xf]
  %v1368 = vld [vmem:[%s1364 + $0xc] sm:$0xf]
  %v1369 = vld [vmem:[%s1364 + $0x10] sm:$0xf]
  %v1370 = vld [vmem:[%s1364 + $0x14] sm:$0xf]
  %v1371 = vld [vmem:[%s1364 + $0x18] sm:$0xf]
  %v1372 = vld [vmem:[%s1364 + $0x1c] sm:$0xf]
  %v1373 = vld [vmem:[%s1364 + $0x20] sm:$0xf]
  %v1374 = vld [vmem:[%s1364 + $0x24] sm:$0xf]
  %v1375 = vld [vmem:[%s1364 + $0x28] sm:$0xf]
  %v1376 = vld [vmem:[%s1364 + $0x2c] sm:$0xf]
  %v1377 = vld [vmem:[%s1364 + $0x30] sm:$0xf]
  %v1378 = vld [vmem:[%s1364 + $0x34] sm:$0xf]
  %v1379 = vld [vmem:[%s1364 + $0x38] sm:$0xf]
  %v1380 = vld [vmem:[%s1364 + $0x3c] sm:$0xf]
  %v1397 = vunpack.c.l.b16 %v1365
  %v1398 = vunpack.c.l.b16 %v1366
  %v1399 = vunpack.c.l.b16 %v1367
  %v1400 = vunpack.c.l.b16 %v1368
  %v1401 = vunpack.c.l.b16 %v1369
  %v1402 = vunpack.c.l.b16 %v1370
  %v1403 = vunpack.c.l.b16 %v1371
  %v1404 = vunpack.c.l.b16 %v1372
  %v1405 = vunpack.c.l.b16 %v1373
  %v1406 = vunpack.c.l.b16 %v1374
  %v1407 = vunpack.c.l.b16 %v1375
  %v1408 = vunpack.c.l.b16 %v1376
  %v1409 = vunpack.c.l.b16 %v1377
  %v1410 = vunpack.c.l.b16 %v1378
  %v1411 = vunpack.c.l.b16 %v1379
  %v1412 = vunpack.c.l.b16 %v1380
  %v1413 = vpack.c.b16 %v1398, %v1397
  %v1414 = vpack.c.b16 %v1400, %v1399
  %v1415 = vpack.c.b16 %v1402, %v1401
  %v1416 = vpack.c.b16 %v1404, %v1403
  %v1417 = vpack.c.b16 %v1406, %v1405
  %v1418 = vpack.c.b16 %v1408, %v1407
  %v1419 = vpack.c.b16 %v1410, %v1409
  %v1420 = vpack.c.b16 %v1412, %v1411
  %1429 = vmatprep.subr.bf16.mxu0 0
  %1430 = vmatpush1.bf16.msra.mxu0 %v1420
  %1431 = vmatprep.subr.bf16.mxu0 0
  %1432 = vmatpush1.bf16.msra.mxu0 %v1419
  %1433 = vmatprep.subr.bf16.mxu0 0
  %1434 = vmatpush1.bf16.msra.mxu0 %v1418
  %1435 = vmatprep.subr.bf16.mxu0 0
  %1436 = vmatpush1.bf16.msra.mxu0 %v1417
  %1437 = vmatprep.subr.bf16.mxu0 0
  %1438 = vmatpush1.bf16.msra.mxu0 %v1416
  %1439 = vmatprep.subr.bf16.mxu0 0
  %1440 = vmatpush1.bf16.msra.mxu0 %v1415
  %1441 = vmatprep.subr.bf16.mxu0 0
  %1442 = vmatpush1.bf16.msra.mxu0 %v1414
  %1443 = vmatprep.subr.bf16.mxu0 0
  %1444 = vmatpush1.bf16.msra.mxu0 %v1413
  %1445 = vmatprep.subr.bf16.mxu0 0
  %1446 = vmatpush2.bf16.msra.mxu0 0
  %1447 = vmatprep.subr.bf16.mxu0 0
  %1448 = vmatpush2.bf16.msra.mxu0 0
  %1449 = vmatprep.subr.bf16.mxu0 0
  %1450 = vmatpush2.bf16.msra.mxu0 0
  %1451 = vmatprep.subr.bf16.mxu0 0
  %1452 = vmatpush2.bf16.msra.mxu0 0
  %1453 = vmatprep.subr.bf16.mxu0 0
  %1454 = vmatpush2.bf16.msra.mxu0 0
  %1455 = vmatprep.subr.bf16.mxu0 0
  %1456 = vmatpush2.bf16.msra.mxu0 0
  %1457 = vmatprep.subr.bf16.mxu0 0
  %1458 = vmatpush2.bf16.msra.mxu0 0
  %1459 = vmatprep.subr.bf16.mxu0 0
  %1460 = vmatpush2.bf16.msra.mxu0 0
  %1461 = vmatprep.mubr.bf16.mxu0 0
  %1462 = vmatmul.mubr.bf16.gmra.mxu0 %v1351
  %v1463 = vpop.f32.mrf.mxu0
  %v1464 = vadd.f32 0.0, %v1463
  %v1465 = vpop.f32.mrf.mxu0
  %v1466 = vpop.f32.mrf.mxu0
  %v1467 = vadd.f32 0.0, %v1466
  %v1468 = vpop.f32.mrf.mxu0
  %1469 = vmatprep.mubr.bf16.mxu0 0
  %1470 = vmatmul.mubr.bf16.gmra.mxu0 %v1352
  %v1471 = vpop.f32.mrf.mxu0
  %v1472 = vadd.f32 0.0, %v1471
  %v1473 = vpop.f32.mrf.mxu0
  %v1474 = vpop.f32.mrf.mxu0
  %v1475 = vadd.f32 0.0, %v1474
  %v1476 = vpop.f32.mrf.mxu0
  %1477 = vmatprep.mubr.bf16.mxu0 0
  %1478 = vmatmul.mubr.bf16.gmra.mxu0 %v1353
  %v1479 = vpop.f32.mrf.mxu0
  %v1480 = vadd.f32 0.0, %v1479
  %v1481 = vpop.f32.mrf.mxu0
  %v1482 = vpop.f32.mrf.mxu0
  %v1483 = vadd.f32 0.0, %v1482
  %v1484 = vpop.f32.mrf.mxu0
  %1485 = vmatprep.mubr.bf16.mxu0 0
  %1486 = vmatmul.mubr.bf16.gmra.mxu0 %v1354
  %v1487 = vpop.f32.mrf.mxu0
  %v1488 = vadd.f32 0.0, %v1487
  %v1489 = vpop.f32.mrf.mxu0
  %v1490 = vpop.f32.mrf.mxu0
  %v1491 = vadd.f32 0.0, %v1490
  %v1492 = vpop.f32.mrf.mxu0
  %1493 = vmatprep.mubr.bf16.mxu0 0
  %1494 = vmatmul.mubr.bf16.gmra.mxu0 %v1355
  %v1495 = vpop.f32.mrf.mxu0
  %v1496 = vadd.f32 0.0, %v1495
  %v1497 = vpop.f32.mrf.mxu0
  %v1498 = vpop.f32.mrf.mxu0
  %v1499 = vadd.f32 0.0, %v1498
  %v1500 = vpop.f32.mrf.mxu0
  %1501 = vmatprep.mubr.bf16.mxu0 0
  %1502 = vmatmul.mubr.bf16.gmra.mxu0 %v1356
  %v1503 = vpop.f32.mrf.mxu0
  %v1504 = vadd.f32 0.0, %v1503
  %v1505 = vpop.f32.mrf.mxu0
  %v1506 = vpop.f32.mrf.mxu0
  %v1507 = vadd.f32 0.0, %v1506
  %v1508 = vpop.f32.mrf.mxu0
  %1509 = vmatprep.mubr.bf16.mxu0 0
  %1510 = vmatmul.mubr.bf16.gmra.mxu0 %v1357
  %v1511 = vpop.f32.mrf.mxu0
  %v1512 = vadd.f32 0.0, %v1511
  %v1513 = vpop.f32.mrf.mxu0
  %v1514 = vpop.f32.mrf.mxu0
  %v1515 = vadd.f32 0.0, %v1514
  %v1516 = vpop.f32.mrf.mxu0
  %1517 = vmatprep.mubr.bf16.mxu0 0
  %1518 = vmatmul.mubr.bf16.gmra.mxu0 %v1358
  %v1519 = vpop.f32.mrf.mxu0
  %v1520 = vadd.f32 0.0, %v1519
  %v1521 = vpop.f32.mrf.mxu0
  %v1522 = vpop.f32.mrf.mxu0
  %v1523 = vadd.f32 0.0, %v1522
  %v1524 = vpop.f32.mrf.mxu0
  %1525 = vmatprep.mubr.bf16.mxu0 0
  %1526 = vmatmul.mubr.bf16.gmra.mxu0 %v1359
  %v1527 = vpop.f32.mrf.mxu0
  %v1528 = vadd.f32 0.0, %v1527
  %v1529 = vpop.f32.mrf.mxu0
  %v1530 = vpop.f32.mrf.mxu0
  %v1531 = vadd.f32 0.0, %v1530
  %v1532 = vpop.f32.mrf.mxu0
  %1533 = vmatprep.mubr.bf16.mxu0 0
  %1534 = vmatmul.mubr.bf16.gmra.mxu0 %v1360
  %v1535 = vpop.f32.mrf.mxu0
  %v1536 = vadd.f32 0.0, %v1535
  %v1537 = vpop.f32.mrf.mxu0
  %v1538 = vpop.f32.mrf.mxu0
  %v1539 = vadd.f32 0.0, %v1538
  %v1540 = vpop.f32.mrf.mxu0
  %1541 = vmatprep.mubr.bf16.mxu0 0
  %1542 = vmatmul.mubr.bf16.gmra.mxu0 %v1361
  %v1543 = vpop.f32.mrf.mxu0
  %v1544 = vadd.f32 0.0, %v1543
  %v1545 = vpop.f32.mrf.mxu0
  %v1546 = vpop.f32.mrf.mxu0
  %v1547 = vadd.f32 0.0, %v1546
  %v1548 = vpop.f32.mrf.mxu0
  %1549 = vmatprep.mubr.bf16.mxu0 0
  %1550 = vmatmul.mubr.bf16.gmra.mxu0 %v1362
  %v1551 = vpop.f32.mrf.mxu0
  %v1552 = vadd.f32 0.0, %v1551
  %v1553 = vpop.f32.mrf.mxu0
  %v1554 = vpop.f32.mrf.mxu0
  %v1555 = vadd.f32 0.0, %v1554
  %v1556 = vpop.f32.mrf.mxu0
  %1557 = vmatprep.mubr.bf16.mxu0 0
  %1558 = vmatmul.mubr.bf16.gmra.mxu0 %v1363
  %v1559 = vpop.f32.mrf.mxu0
  %v1560 = vadd.f32 0.0, %v1559
  %v1561 = vpop.f32.mrf.mxu0
  %v1562 = vpop.f32.mrf.mxu0
  %v1563 = vpop.f32.mrf.mxu0
  %1564 = vdwg.mxu0
  %v1565 = vld [vmem:[#allocation3] sm:$0xff]
  %v1566 = vld [vmem:[#allocation3 + $0x8] sm:$0xff]
  %v1567 = vld [vmem:[#allocation3 + $0x10] sm:$0xff]
  %v1568 = vld [vmem:[#allocation3 + $0x18] sm:$0xff]
  %v1569 = vld [vmem:[#allocation3 + $0x20] sm:$0xff]
  %v1570 = vld [vmem:[#allocation3 + $0x28] sm:$0xff]
  %v1571 = vld [vmem:[#allocation3 + $0x30] sm:$0xff]
  %v1572 = vld [vmem:[#allocation3 + $0x38] sm:$0xff]
  %v1573 = vld [vmem:[#allocation3 + $0x40] sm:$0xff]
  %v1574 = vld [vmem:[#allocation3 + $0x48] sm:$0xff]
  %v1575 = vld [vmem:[#allocation3 + $0x50] sm:$0xff]
  %v1576 = vld [vmem:[#allocation3 + $0x58] sm:$0xff]
  %v1577 = vld [vmem:[#allocation3 + $0x60] sm:$0xff]
  %v1578 = vld [vmem:[#allocation3 + $0x68] sm:$0xff]
  %v1579 = vld [vmem:[#allocation3 + $0x70] sm:$0xff]
  %v1580 = vld [vmem:[#allocation3 + $0x78] sm:$0xff]
  %v1581 = vld [vmem:[#allocation3 + $0x80] sm:$0xff]
  %v1582 = vld [vmem:[#allocation3 + $0x88] sm:$0xff]
  %v1583 = vld [vmem:[#allocation3 + $0x90] sm:$0xff]
  %v1584 = vld [vmem:[#allocation3 + $0x98] sm:$0xff]
  %v1585 = vld [vmem:[#allocation3 + $0xa0] sm:$0xff]
  %v1586 = vld [vmem:[#allocation3 + $0xa8] sm:$0xff]
  %v1587 = vld [vmem:[#allocation3 + $0xb0] sm:$0xff]
  %v1588 = vld [vmem:[#allocation3 + $0xb8] sm:$0xff]
  %v1589 = vld [vmem:[#allocation3 + $0xc0] sm:$0xff]
  %v1590 = vadd.f32 %v1565, %v1464
  %v1591 = vadd.f32 %v1566, %v1467
  %v1592 = vadd.f32 %v1567, %v1472
  %v1593 = vadd.f32 %v1568, %v1475
  %v1594 = vadd.f32 %v1569, %v1480
  %v1595 = vadd.f32 %v1570, %v1483
  %v1596 = vadd.f32 %v1571, %v1488
  %v1597 = vadd.f32 %v1572, %v1491
  %v1598 = vadd.f32 %v1573, %v1496
  %v1599 = vadd.f32 %v1574, %v1499
  %v1600 = vadd.f32 %v1575, %v1504
  %v1601 = vadd.f32 %v1576, %v1507
  %v1602 = vadd.f32 %v1577, %v1512
  %v1603 = vadd.f32 %v1578, %v1515
  %v1604 = vadd.f32 %v1579, %v1520
  %v1605 = vadd.f32 %v1580, %v1523
  %v1606 = vadd.f32 %v1581, %v1528
  %v1607 = vadd.f32 %v1582, %v1531
  %v1608 = vadd.f32 %v1583, %v1536
  %v1609 = vadd.f32 %v1584, %v1539
  %v1610 = vadd.f32 %v1585, %v1544
  %v1611 = vadd.f32 %v1586, %v1547
  %v1612 = vadd.f32 %v1587, %v1552
  %v1613 = vadd.f32 %v1588, %v1555
  %v1614 = vadd.f32 %v1589, %v1560
  %1615 = vst [vmem:[#allocation3] sm:$0xff] %v1590
  %1616 = vst [vmem:[#allocation3 + $0x8] sm:$0xff] %v1591
  %1617 = vst [vmem:[#allocation3 + $0x10] sm:$0xff] %v1592
  %1618 = vst [vmem:[#allocation3 + $0x18] sm:$0xff] %v1593
  %1619 = vst [vmem:[#allocation3 + $0x20] sm:$0xff] %v1594
  %1620 = vst [vmem:[#allocation3 + $0x28] sm:$0xff] %v1595
  %1621 = vst [vmem:[#allocation3 + $0x30] sm:$0xff] %v1596
  %1622 = vst [vmem:[#allocation3 + $0x38] sm:$0xff] %v1597
  %1623 = vst [vmem:[#allocation3 + $0x40] sm:$0xff] %v1598
  %1624 = vst [vmem:[#allocation3 + $0x48] sm:$0xff] %v1599
  %1625 = vst [vmem:[#allocation3 + $0x50] sm:$0xff] %v1600
  %1626 = vst [vmem:[#allocation3 + $0x58] sm:$0xff] %v1601
  %1627 = vst [vmem:[#allocation3 + $0x60] sm:$0xff] %v1602
  %1628 = vst [vmem:[#allocation3 + $0x68] sm:$0xff] %v1603
  %1629 = vst [vmem:[#allocation3 + $0x70] sm:$0xff] %v1604
  %1630 = vst [vmem:[#allocation3 + $0x78] sm:$0xff] %v1605
  %1631 = vst [vmem:[#allocation3 + $0x80] sm:$0xff] %v1606
  %1632 = vst [vmem:[#allocation3 + $0x88] sm:$0xff] %v1607
  %1633 = vst [vmem:[#allocation3 + $0x90] sm:$0xff] %v1608
  %1634 = vst [vmem:[#allocation3 + $0x98] sm:$0xff] %v1609
  %1635 = vst [vmem:[#allocation3 + $0xa0] sm:$0xff] %v1610
  %1636 = vst [vmem:[#allocation3 + $0xa8] sm:$0xff] %v1611
  %1637 = vst [vmem:[#allocation3 + $0xb0] sm:$0xff] %v1612
  %1638 = vst [vmem:[#allocation3 + $0xb8] sm:$0xff] %v1613
  %1639 = vst [vmem:[#allocation3 + $0xc0] sm:$0xff] %v1614
  %v1640 = vld [vmem:[#allocation2 + $0xf] sm:$0xff]
  %v1641 = vld [vmem:[#allocation2 + $0x17] sm:$0xff]
  %v1642 = vld [vmem:[#allocation2 + $0x1f] sm:$0xff]
  %v1643 = vld [vmem:[#allocation2 + $0x27] sm:$0xff]
  %v1644 = vld [vmem:[#allocation2 + $0x2f] sm:$0xff]
  %v1645 = vld [vmem:[#allocation2 + $0x37] sm:$0xff]
  %v1646 = vld [vmem:[#allocation2 + $0x3f] sm:$0xff]
  %v1647 = vld [vmem:[#allocation2 + $0x47] sm:$0xff]
  %v1648 = vld [vmem:[#allocation2 + $0x4f] sm:$0xff]
  %v1649 = vld [vmem:[#allocation2 + $0x57] sm:$0xff]
  %v1650 = vld [vmem:[#allocation2 + $0x5f] sm:$0xff]
  %v1651 = vld [vmem:[#allocation2 + $0x67] sm:$0xff]
  %v1652 = vld [vmem:[#allocation2 + $0x6f] sm:$0xff]
  %v1653 = vld [vmem:[#allocation2 + $0x77] sm:$0xff]
  %v1654 = vld [vmem:[#allocation2 + $0x7f] sm:$0xff]
  %v1655 = vld [vmem:[#allocation2 + $0x87] sm:$0xff]
  %v1656 = vld [vmem:[#allocation2 + $0x8f] sm:$0xff]
  %v1657 = vld [vmem:[#allocation2 + $0x97] sm:$0xff]
  %v1658 = vld [vmem:[#allocation2 + $0x9f] sm:$0xff]
  %v1659 = vld [vmem:[#allocation2 + $0xa7] sm:$0xff]
  %v1660 = vld [vmem:[#allocation2 + $0xaf] sm:$0xff]
  %v1661 = vld [vmem:[#allocation2 + $0xb7] sm:$0xff]
  %v1662 = vld [vmem:[#allocation2 + $0xbf] sm:$0xff]
  %v1663 = vld [vmem:[#allocation2 + $0xc7] sm:$0xff]
  %v1664 = vld [vmem:[#allocation2 + $0xcf] sm:$0xff]
  %v1665 = vpack.c.bf16 %v1641, %v1640
  %v1666 = vpack.c.bf16 %v1643, %v1642
  %v1667 = vpack.c.bf16 %v1645, %v1644
  %v1668 = vpack.c.bf16 %v1647, %v1646
  %v1669 = vpack.c.bf16 %v1649, %v1648
  %v1670 = vpack.c.bf16 %v1651, %v1650
  %v1671 = vpack.c.bf16 %v1653, %v1652
  %v1672 = vpack.c.bf16 %v1655, %v1654
  %v1673 = vpack.c.bf16 %v1657, %v1656
  %v1674 = vpack.c.bf16 %v1659, %v1658
  %v1675 = vpack.c.bf16 %v1661, %v1660
  %v1676 = vpack.c.bf16 %v1663, %v1662
  %v1677 = vpack.c.bf16 %v1664, %v1664
  %s1678 = scalar_lea.vmem %s7, 192
  %v1679 = vld [vmem:[%s1678] sm:$0xf]
  %v1680 = vld [vmem:[%s1678 + $0x4] sm:$0xf]
  %v1681 = vld [vmem:[%s1678 + $0x8] sm:$0xf]
  %v1682 = vld [vmem:[%s1678 + $0xc] sm:$0xf]
  %v1683 = vld [vmem:[%s1678 + $0x10] sm:$0xf]
  %v1684 = vld [vmem:[%s1678 + $0x14] sm:$0xf]
  %v1685 = vld [vmem:[%s1678 + $0x18] sm:$0xf]
  %v1686 = vld [vmem:[%s1678 + $0x1c] sm:$0xf]
  %v1687 = vld [vmem:[%s1678 + $0x20] sm:$0xf]
  %v1688 = vld [vmem:[%s1678 + $0x24] sm:$0xf]
  %v1689 = vld [vmem:[%s1678 + $0x28] sm:$0xf]
  %v1690 = vld [vmem:[%s1678 + $0x2c] sm:$0xf]
  %v1691 = vld [vmem:[%s1678 + $0x30] sm:$0xf]
  %v1692 = vld [vmem:[%s1678 + $0x34] sm:$0xf]
  %v1693 = vld [vmem:[%s1678 + $0x38] sm:$0xf]
  %v1694 = vld [vmem:[%s1678 + $0x3c] sm:$0xf]
  %v1711 = vunpack.c.l.b16 %v1679
  %v1712 = vunpack.c.l.b16 %v1680
  %v1713 = vunpack.c.l.b16 %v1681
  %v1714 = vunpack.c.l.b16 %v1682
  %v1715 = vunpack.c.l.b16 %v1683
  %v1716 = vunpack.c.l.b16 %v1684
  %v1717 = vunpack.c.l.b16 %v1685
  %v1718 = vunpack.c.l.b16 %v1686
  %v1719 = vunpack.c.l.b16 %v1687
  %v1720 = vunpack.c.l.b16 %v1688
  %v1721 = vunpack.c.l.b16 %v1689
  %v1722 = vunpack.c.l.b16 %v1690
  %v1723 = vunpack.c.l.b16 %v1691
  %v1724 = vunpack.c.l.b16 %v1692
  %v1725 = vunpack.c.l.b16 %v1693
  %v1726 = vunpack.c.l.b16 %v1694
  %v1727 = vpack.c.b16 %v1712, %v1711
  %v1728 = vpack.c.b16 %v1714, %v1713
  %v1729 = vpack.c.b16 %v1716, %v1715
  %v1730 = vpack.c.b16 %v1718, %v1717
  %v1731 = vpack.c.b16 %v1720, %v1719
  %v1732 = vpack.c.b16 %v1722, %v1721
  %v1733 = vpack.c.b16 %v1724, %v1723
  %v1734 = vpack.c.b16 %v1726, %v1725
  %1743 = vmatprep.subr.bf16.mxu0 0
  %1744 = vmatpush1.bf16.msra.mxu0 %v1734
  %1745 = vmatprep.subr.bf16.mxu0 0
  %1746 = vmatpush1.bf16.msra.mxu0 %v1733
  %1747 = vmatprep.subr.bf16.mxu0 0
  %1748 = vmatpush1.bf16.msra.mxu0 %v1732
  %1749 = vmatprep.subr.bf16.mxu0 0
  %1750 = vmatpush1.bf16.msra.mxu0 %v1731
  %1751 = vmatprep.subr.bf16.mxu0 0
  %1752 = vmatpush1.bf16.msra.mxu0 %v1730
  %1753 = vmatprep.subr.bf16.mxu0 0
  %1754 = vmatpush1.bf16.msra.mxu0 %v1729
  %1755 = vmatprep.subr.bf16.mxu0 0
  %1756 = vmatpush1.bf16.msra.mxu0 %v1728
  %1757 = vmatprep.subr.bf16.mxu0 0
  %1758 = vmatpush1.bf16.msra.mxu0 %v1727
  %1759 = vmatprep.subr.bf16.mxu0 0
  %1760 = vmatpush2.bf16.msra.mxu0 0
  %1761 = vmatprep.subr.bf16.mxu0 0
  %1762 = vmatpush2.bf16.msra.mxu0 0
  %1763 = vmatprep.subr.bf16.mxu0 0
  %1764 = vmatpush2.bf16.msra.mxu0 0
  %1765 = vmatprep.subr.bf16.mxu0 0
  %1766 = vmatpush2.bf16.msra.mxu0 0
  %1767 = vmatprep.subr.bf16.mxu0 0
  %1768 = vmatpush2.bf16.msra.mxu0 0
  %1769 = vmatprep.subr.bf16.mxu0 0
  %1770 = vmatpush2.bf16.msra.mxu0 0
  %1771 = vmatprep.subr.bf16.mxu0 0
  %1772 = vmatpush2.bf16.msra.mxu0 0
  %1773 = vmatprep.subr.bf16.mxu0 0
  %1774 = vmatpush2.bf16.msra.mxu0 0
  %1775 = vmatprep.mubr.bf16.mxu0 0
  %1776 = vmatmul.mubr.bf16.gmra.mxu0 %v1665
  %v1777 = vpop.f32.mrf.mxu0
  %v1778 = vadd.f32 0.0, %v1777
  %v1779 = vpop.f32.mrf.mxu0
  %v1780 = vpop.f32.mrf.mxu0
  %v1781 = vadd.f32 0.0, %v1780
  %v1782 = vpop.f32.mrf.mxu0
  %1783 = vmatprep.mubr.bf16.mxu0 0
  %1784 = vmatmul.mubr.bf16.gmra.mxu0 %v1666
  %v1785 = vpop.f32.mrf.mxu0
  %v1786 = vadd.f32 0.0, %v1785
  %v1787 = vpop.f32.mrf.mxu0
  %v1788 = vpop.f32.mrf.mxu0
  %v1789 = vadd.f32 0.0, %v1788
  %v1790 = vpop.f32.mrf.mxu0
  %1791 = vmatprep.mubr.bf16.mxu0 0
  %1792 = vmatmul.mubr.bf16.gmra.mxu0 %v1667
  %v1793 = vpop.f32.mrf.mxu0
  %v1794 = vadd.f32 0.0, %v1793
  %v1795 = vpop.f32.mrf.mxu0
  %v1796 = vpop.f32.mrf.mxu0
  %v1797 = vadd.f32 0.0, %v1796
  %v1798 = vpop.f32.mrf.mxu0
  %1799 = vmatprep.mubr.bf16.mxu0 0
  %1800 = vmatmul.mubr.bf16.gmra.mxu0 %v1668
  %v1801 = vpop.f32.mrf.mxu0
  %v1802 = vadd.f32 0.0, %v1801
  %v1803 = vpop.f32.mrf.mxu0
  %v1804 = vpop.f32.mrf.mxu0
  %v1805 = vadd.f32 0.0, %v1804
  %v1806 = vpop.f32.mrf.mxu0
  %1807 = vmatprep.mubr.bf16.mxu0 0
  %1808 = vmatmul.mubr.bf16.gmra.mxu0 %v1669
  %v1809 = vpop.f32.mrf.mxu0
  %v1810 = vadd.f32 0.0, %v1809
  %v1811 = vpop.f32.mrf.mxu0
  %v1812 = vpop.f32.mrf.mxu0
  %v1813 = vadd.f32 0.0, %v1812
  %v1814 = vpop.f32.mrf.mxu0
  %1815 = vmatprep.mubr.bf16.mxu0 0
  %1816 = vmatmul.mubr.bf16.gmra.mxu0 %v1670
  %v1817 = vpop.f32.mrf.mxu0
  %v1818 = vadd.f32 0.0, %v1817
  %v1819 = vpop.f32.mrf.mxu0
  %v1820 = vpop.f32.mrf.mxu0
  %v1821 = vadd.f32 0.0, %v1820
  %v1822 = vpop.f32.mrf.mxu0
  %1823 = vmatprep.mubr.bf16.mxu0 0
  %1824 = vmatmul.mubr.bf16.gmra.mxu0 %v1671
  %v1825 = vpop.f32.mrf.mxu0
  %v1826 = vadd.f32 0.0, %v1825
  %v1827 = vpop.f32.mrf.mxu0
  %v1828 = vpop.f32.mrf.mxu0
  %v1829 = vadd.f32 0.0, %v1828
  %v1830 = vpop.f32.mrf.mxu0
  %1831 = vmatprep.mubr.bf16.mxu0 0
  %1832 = vmatmul.mubr.bf16.gmra.mxu0 %v1672
  %v1833 = vpop.f32.mrf.mxu0
  %v1834 = vadd.f32 0.0, %v1833
  %v1835 = vpop.f32.mrf.mxu0
  %v1836 = vpop.f32.mrf.mxu0
  %v1837 = vadd.f32 0.0, %v1836
  %v1838 = vpop.f32.mrf.mxu0
  %1839 = vmatprep.mubr.bf16.mxu0 0
  %1840 = vmatmul.mubr.bf16.gmra.mxu0 %v1673
  %v1841 = vpop.f32.mrf.mxu0
  %v1842 = vadd.f32 0.0, %v1841
  %v1843 = vpop.f32.mrf.mxu0
  %v1844 = vpop.f32.mrf.mxu0
  %v1845 = vadd.f32 0.0, %v1844
  %v1846 = vpop.f32.mrf.mxu0
  %1847 = vmatprep.mubr.bf16.mxu0 0
  %1848 = vmatmul.mubr.bf16.gmra.mxu0 %v1674
  %v1849 = vpop.f32.mrf.mxu0
  %v1850 = vadd.f32 0.0, %v1849
  %v1851 = vpop.f32.mrf.mxu0
  %v1852 = vpop.f32.mrf.mxu0
  %v1853 = vadd.f32 0.0, %v1852
  %v1854 = vpop.f32.mrf.mxu0
  %1855 = vmatprep.mubr.bf16.mxu0 0
  %1856 = vmatmul.mubr.bf16.gmra.mxu0 %v1675
  %v1857 = vpop.f32.mrf.mxu0
  %v1858 = vadd.f32 0.0, %v1857
  %v1859 = vpop.f32.mrf.mxu0
  %v1860 = vpop.f32.mrf.mxu0
  %v1861 = vadd.f32 0.0, %v1860
  %v1862 = vpop.f32.mrf.mxu0
  %1863 = vmatprep.mubr.bf16.mxu0 0
  %1864 = vmatmul.mubr.bf16.gmra.mxu0 %v1676
  %v1865 = vpop.f32.mrf.mxu0
  %v1866 = vadd.f32 0.0, %v1865
  %v1867 = vpop.f32.mrf.mxu0
  %v1868 = vpop.f32.mrf.mxu0
  %v1869 = vadd.f32 0.0, %v1868
  %v1870 = vpop.f32.mrf.mxu0
  %1871 = vmatprep.mubr.bf16.mxu0 0
  %1872 = vmatmul.mubr.bf16.gmra.mxu0 %v1677
  %v1873 = vpop.f32.mrf.mxu0
  %v1874 = vadd.f32 0.0, %v1873
  %v1875 = vpop.f32.mrf.mxu0
  %v1876 = vpop.f32.mrf.mxu0
  %v1877 = vpop.f32.mrf.mxu0
  %1878 = vdwg.mxu0
  %v1879 = vld [vmem:[#allocation3] sm:$0xff]
  %v1880 = vld [vmem:[#allocation3 + $0x8] sm:$0xff]
  %v1881 = vld [vmem:[#allocation3 + $0x10] sm:$0xff]
  %v1882 = vld [vmem:[#allocation3 + $0x18] sm:$0xff]
  %v1883 = vld [vmem:[#allocation3 + $0x20] sm:$0xff]
  %v1884 = vld [vmem:[#allocation3 + $0x28] sm:$0xff]
  %v1885 = vld [vmem:[#allocation3 + $0x30] sm:$0xff]
  %v1886 = vld [vmem:[#allocation3 + $0x38] sm:$0xff]
  %v1887 = vld [vmem:[#allocation3 + $0x40] sm:$0xff]
  %v1888 = vld [vmem:[#allocation3 + $0x48] sm:$0xff]
  %v1889 = vld [vmem:[#allocation3 + $0x50] sm:$0xff]
  %v1890 = vld [vmem:[#allocation3 + $0x58] sm:$0xff]
  %v1891 = vld [vmem:[#allocation3 + $0x60] sm:$0xff]
  %v1892 = vld [vmem:[#allocation3 + $0x68] sm:$0xff]
  %v1893 = vld [vmem:[#allocation3 + $0x70] sm:$0xff]
  %v1894 = vld [vmem:[#allocation3 + $0x78] sm:$0xff]
  %v1895 = vld [vmem:[#allocation3 + $0x80] sm:$0xff]
  %v1896 = vld [vmem:[#allocation3 + $0x88] sm:$0xff]
  %v1897 = vld [vmem:[#allocation3 + $0x90] sm:$0xff]
  %v1898 = vld [vmem:[#allocation3 + $0x98] sm:$0xff]
  %v1899 = vld [vmem:[#allocation3 + $0xa0] sm:$0xff]
  %v1900 = vld [vmem:[#allocation3 + $0xa8] sm:$0xff]
  %v1901 = vld [vmem:[#allocation3 + $0xb0] sm:$0xff]
  %v1902 = vld [vmem:[#allocation3 + $0xb8] sm:$0xff]
  %v1903 = vld [vmem:[#allocation3 + $0xc0] sm:$0xff]
  %v1904 = vadd.f32 %v1879, %v1778
  %v1905 = vadd.f32 %v1880, %v1781
  %v1906 = vadd.f32 %v1881, %v1786
  %v1907 = vadd.f32 %v1882, %v1789
  %v1908 = vadd.f32 %v1883, %v1794
  %v1909 = vadd.f32 %v1884, %v1797
  %v1910 = vadd.f32 %v1885, %v1802
  %v1911 = vadd.f32 %v1886, %v1805
  %v1912 = vadd.f32 %v1887, %v1810
  %v1913 = vadd.f32 %v1888, %v1813
  %v1914 = vadd.f32 %v1889, %v1818
  %v1915 = vadd.f32 %v1890, %v1821
  %v1916 = vadd.f32 %v1891, %v1826
  %v1917 = vadd.f32 %v1892, %v1829
  %v1918 = vadd.f32 %v1893, %v1834
  %v1919 = vadd.f32 %v1894, %v1837
  %v1920 = vadd.f32 %v1895, %v1842
  %v1921 = vadd.f32 %v1896, %v1845
  %v1922 = vadd.f32 %v1897, %v1850
  %v1923 = vadd.f32 %v1898, %v1853
  %v1924 = vadd.f32 %v1899, %v1858
  %v1925 = vadd.f32 %v1900, %v1861
  %v1926 = vadd.f32 %v1901, %v1866
  %v1927 = vadd.f32 %v1902, %v1869
  %v1928 = vadd.f32 %v1903, %v1874
  %1929 = vst [vmem:[#allocation3] sm:$0xff] %v1904
  %1930 = vst [vmem:[#allocation3 + $0x8] sm:$0xff] %v1905
  %1931 = vst [vmem:[#allocation3 + $0x10] sm:$0xff] %v1906
  %1932 = vst [vmem:[#allocation3 + $0x18] sm:$0xff] %v1907
  %1933 = vst [vmem:[#allocation3 + $0x20] sm:$0xff] %v1908
  %1934 = vst [vmem:[#allocation3 + $0x28] sm:$0xff] %v1909
  %1935 = vst [vmem:[#allocation3 + $0x30] sm:$0xff] %v1910
  %1936 = vst [vmem:[#allocation3 + $0x38] sm:$0xff] %v1911
  %1937 = vst [vmem:[#allocation3 + $0x40] sm:$0xff] %v1912
  %1938 = vst [vmem:[#allocation3 + $0x48] sm:$0xff] %v1913
  %1939 = vst [vmem:[#allocation3 + $0x50] sm:$0xff] %v1914
  %1940 = vst [vmem:[#allocation3 + $0x58] sm:$0xff] %v1915
  %1941 = vst [vmem:[#allocation3 + $0x60] sm:$0xff] %v1916
  %1942 = vst [vmem:[#allocation3 + $0x68] sm:$0xff] %v1917
  %1943 = vst [vmem:[#allocation3 + $0x70] sm:$0xff] %v1918
  %1944 = vst [vmem:[#allocation3 + $0x78] sm:$0xff] %v1919
  %1945 = vst [vmem:[#allocation3 + $0x80] sm:$0xff] %v1920
  %1946 = vst [vmem:[#allocation3 + $0x88] sm:$0xff] %v1921
  %1947 = vst [vmem:[#allocation3 + $0x90] sm:$0xff] %v1922
  %1948 = vst [vmem:[#allocation3 + $0x98] sm:$0xff] %v1923
  %1949 = vst [vmem:[#allocation3 + $0xa0] sm:$0xff] %v1924
  %1950 = vst [vmem:[#allocation3 + $0xa8] sm:$0xff] %v1925
  %1951 = vst [vmem:[#allocation3 + $0xb0] sm:$0xff] %v1926
  %1952 = vst [vmem:[#allocation3 + $0xb8] sm:$0xff] %v1927
  %1953 = vst [vmem:[#allocation3 + $0xc0] sm:$0xff] %v1928
  %v1954 = vld [vmem:[#allocation2 + $0x10] sm:$0xff]
  %v1955 = vld [vmem:[#allocation2 + $0x18] sm:$0xff]
  %v1956 = vld [vmem:[#allocation2 + $0x20] sm:$0xff]
  %v1957 = vld [vmem:[#allocation2 + $0x28] sm:$0xff]
  %v1958 = vld [vmem:[#allocation2 + $0x30] sm:$0xff]
  %v1959 = vld [vmem:[#allocation2 + $0x38] sm:$0xff]
  %v1960 = vld [vmem:[#allocation2 + $0x40] sm:$0xff]
  %v1961 = vld [vmem:[#allocation2 + $0x48] sm:$0xff]
  %v1962 = vld [vmem:[#allocation2 + $0x50] sm:$0xff]
  %v1963 = vld [vmem:[#allocation2 + $0x58] sm:$0xff]
  %v1964 = vld [vmem:[#allocation2 + $0x60] sm:$0xff]
  %v1965 = vld [vmem:[#allocation2 + $0x68] sm:$0xff]
  %v1966 = vld [vmem:[#allocation2 + $0x70] sm:$0xff]
  %v1967 = vld [vmem:[#allocation2 + $0x78] sm:$0xff]
  %v1968 = vld [vmem:[#allocation2 + $0x80] sm:$0xff]
  %v1969 = vld [vmem:[#allocation2 + $0x88] sm:$0xff]
  %v1970 = vld [vmem:[#allocation2 + $0x90] sm:$0xff]
  %v1971 = vld [vmem:[#allocation2 + $0x98] sm:$0xff]
  %v1972 = vld [vmem:[#allocation2 + $0xa0] sm:$0xff]
  %v1973 = vld [vmem:[#allocation2 + $0xa8] sm:$0xff]
  %v1974 = vld [vmem:[#allocation2 + $0xb0] sm:$0xff]
  %v1975 = vld [vmem:[#allocation2 + $0xb8] sm:$0xff]
  %v1976 = vld [vmem:[#allocation2 + $0xc0] sm:$0xff]
  %v1977 = vld [vmem:[#allocation2 + $0xc8] sm:$0xff]
  %v1978 = vld [vmem:[#allocation2 + $0xd0] sm:$0xff]
  %v1979 = vpack.c.bf16 %v1955, %v1954
  %v1980 = vpack.c.bf16 %v1957, %v1956
  %v1981 = vpack.c.bf16 %v1959, %v1958
  %v1982 = vpack.c.bf16 %v1961, %v1960
  %v1983 = vpack.c.bf16 %v1963, %v1962
  %v1984 = vpack.c.bf16 %v1965, %v1964
  %v1985 = vpack.c.bf16 %v1967, %v1966
  %v1986 = vpack.c.bf16 %v1969, %v1968
  %v1987 = vpack.c.bf16 %v1971, %v1970
  %v1988 = vpack.c.bf16 %v1973, %v1972
  %v1989 = vpack.c.bf16 %v1975, %v1974
  %v1990 = vpack.c.bf16 %v1977, %v1976
  %v1991 = vpack.c.bf16 %v1978, %v1978
  %s1992 = scalar_lea.vmem %s7, 256
  %v1993 = vld [vmem:[%s1992] sm:$0xf]
  %v1994 = vld [vmem:[%s1992 + $0x4] sm:$0xf]
  %v1995 = vld [vmem:[%s1992 + $0x8] sm:$0xf]
  %v1996 = vld [vmem:[%s1992 + $0xc] sm:$0xf]
  %v1997 = vld [vmem:[%s1992 + $0x10] sm:$0xf]
  %v1998 = vld [vmem:[%s1992 + $0x14] sm:$0xf]
  %v1999 = vld [vmem:[%s1992 + $0x18] sm:$0xf]
  %v2000 = vld [vmem:[%s1992 + $0x1c] sm:$0xf]
  %v2001 = vld [vmem:[%s1992 + $0x20] sm:$0xf]
  %v2002 = vld [vmem:[%s1992 + $0x24] sm:$0xf]
  %v2003 = vld [vmem:[%s1992 + $0x28] sm:$0xf]
  %v2004 = vld [vmem:[%s1992 + $0x2c] sm:$0xf]
  %v2005 = vld [vmem:[%s1992 + $0x30] sm:$0xf]
  %v2006 = vld [vmem:[%s1992 + $0x34] sm:$0xf]
  %v2007 = vld [vmem:[%s1992 + $0x38] sm:$0xf]
  %v2008 = vld [vmem:[%s1992 + $0x3c] sm:$0xf]
  %v2025 = vunpack.c.l.b16 %v1993
  %v2026 = vunpack.c.l.b16 %v1994
  %v2027 = vunpack.c.l.b16 %v1995
  %v2028 = vunpack.c.l.b16 %v1996
  %v2029 = vunpack.c.l.b16 %v1997
  %v2030 = vunpack.c.l.b16 %v1998
  %v2031 = vunpack.c.l.b16 %v1999
  %v2032 = vunpack.c.l.b16 %v2000
  %v2033 = vunpack.c.l.b16 %v2001
  %v2034 = vunpack.c.l.b16 %v2002
  %v2035 = vunpack.c.l.b16 %v2003
  %v2036 = vunpack.c.l.b16 %v2004
  %v2037 = vunpack.c.l.b16 %v2005
  %v2038 = vunpack.c.l.b16 %v2006
  %v2039 = vunpack.c.l.b16 %v2007
  %v2040 = vunpack.c.l.b16 %v2008
  %v2041 = vpack.c.b16 %v2026, %v2025
  %v2042 = vpack.c.b16 %v2028, %v2027
  %v2043 = vpack.c.b16 %v2030, %v2029
  %v2044 = vpack.c.b16 %v2032, %v2031
  %v2045 = vpack.c.b16 %v2034, %v2033
  %v2046 = vpack.c.b16 %v2036, %v2035
  %v2047 = vpack.c.b16 %v2038, %v2037
  %v2048 = vpack.c.b16 %v2040, %v2039
  %2057 = vmatprep.subr.bf16.mxu0 0
  %2058 = vmatpush1.bf16.msra.mxu0 %v2048
  %2059 = vmatprep.subr.bf16.mxu0 0
  %2060 = vmatpush1.bf16.msra.mxu0 %v2047
  %2061 = vmatprep.subr.bf16.mxu0 0
  %2062 = vmatpush1.bf16.msra.mxu0 %v2046
  %2063 = vmatprep.subr.bf16.mxu0 0
  %2064 = vmatpush1.bf16.msra.mxu0 %v2045
  %2065 = vmatprep.subr.bf16.mxu0 0
  %2066 = vmatpush1.bf16.msra.mxu0 %v2044
  %2067 = vmatprep.subr.bf16.mxu0 0
  %2068 = vmatpush1.bf16.msra.mxu0 %v2043
  %2069 = vmatprep.subr.bf16.mxu0 0
  %2070 = vmatpush1.bf16.msra.mxu0 %v2042
  %2071 = vmatprep.subr.bf16.mxu0 0
  %2072 = vmatpush1.bf16.msra.mxu0 %v2041
  %2073 = vmatprep.subr.bf16.mxu0 0
  %2074 = vmatpush2.bf16.msra.mxu0 0
  %2075 = vmatprep.subr.bf16.mxu0 0
  %2076 = vmatpush2.bf16.msra.mxu0 0
  %2077 = vmatprep.subr.bf16.mxu0 0
  %2078 = vmatpush2.bf16.msra.mxu0 0
  %2079 = vmatprep.subr.bf16.mxu0 0
  %2080 = vmatpush2.bf16.msra.mxu0 0
  %2081 = vmatprep.subr.bf16.mxu0 0
  %2082 = vmatpush2.bf16.msra.mxu0 0
  %2083 = vmatprep.subr.bf16.mxu0 0
  %2084 = vmatpush2.bf16.msra.mxu0 0
  %2085 = vmatprep.subr.bf16.mxu0 0
  %2086 = vmatpush2.bf16.msra.mxu0 0
  %2087 = vmatprep.subr.bf16.mxu0 0
  %2088 = vmatpush2.bf16.msra.mxu0 0
  %2089 = vmatprep.mubr.bf16.mxu0 0
  %2090 = vmatmul.mubr.bf16.gmra.mxu0 %v1979
  %v2091 = vpop.f32.mrf.mxu0
  %v2092 = vadd.f32 0.0, %v2091
  %v2093 = vpop.f32.mrf.mxu0
  %v2094 = vpop.f32.mrf.mxu0
  %v2095 = vadd.f32 0.0, %v2094
  %v2096 = vpop.f32.mrf.mxu0
  %2097 = vmatprep.mubr.bf16.mxu0 0
  %2098 = vmatmul.mubr.bf16.gmra.mxu0 %v1980
  %v2099 = vpop.f32.mrf.mxu0
  %v2100 = vadd.f32 0.0, %v2099
  %v2101 = vpop.f32.mrf.mxu0
  %v2102 = vpop.f32.mrf.mxu0
  %v2103 = vadd.f32 0.0, %v2102
  %v2104 = vpop.f32.mrf.mxu0
  %2105 = vmatprep.mubr.bf16.mxu0 0
  %2106 = vmatmul.mubr.bf16.gmra.mxu0 %v1981
  %v2107 = vpop.f32.mrf.mxu0
  %v2108 = vadd.f32 0.0, %v2107
  %v2109 = vpop.f32.mrf.mxu0
  %v2110 = vpop.f32.mrf.mxu0
  %v2111 = vadd.f32 0.0, %v2110
  %v2112 = vpop.f32.mrf.mxu0
  %2113 = vmatprep.mubr.bf16.mxu0 0
  %2114 = vmatmul.mubr.bf16.gmra.mxu0 %v1982
  %v2115 = vpop.f32.mrf.mxu0
  %v2116 = vadd.f32 0.0, %v2115
  %v2117 = vpop.f32.mrf.mxu0
  %v2118 = vpop.f32.mrf.mxu0
  %v2119 = vadd.f32 0.0, %v2118
  %v2120 = vpop.f32.mrf.mxu0
  %2121 = vmatprep.mubr.bf16.mxu0 0
  %2122 = vmatmul.mubr.bf16.gmra.mxu0 %v1983
  %v2123 = vpop.f32.mrf.mxu0
  %v2124 = vadd.f32 0.0, %v2123
  %v2125 = vpop.f32.mrf.mxu0
  %v2126 = vpop.f32.mrf.mxu0
  %v2127 = vadd.f32 0.0, %v2126
  %v2128 = vpop.f32.mrf.mxu0
  %2129 = vmatprep.mubr.bf16.mxu0 0
  %2130 = vmatmul.mubr.bf16.gmra.mxu0 %v1984
  %v2131 = vpop.f32.mrf.mxu0
  %v2132 = vadd.f32 0.0, %v2131
  %v2133 = vpop.f32.mrf.mxu0
  %v2134 = vpop.f32.mrf.mxu0
  %v2135 = vadd.f32 0.0, %v2134
  %v2136 = vpop.f32.mrf.mxu0
  %2137 = vmatprep.mubr.bf16.mxu0 0
  %2138 = vmatmul.mubr.bf16.gmra.mxu0 %v1985
  %v2139 = vpop.f32.mrf.mxu0
  %v2140 = vadd.f32 0.0, %v2139
  %v2141 = vpop.f32.mrf.mxu0
  %v2142 = vpop.f32.mrf.mxu0
  %v2143 = vadd.f32 0.0, %v2142
  %v2144 = vpop.f32.mrf.mxu0
  %2145 = vmatprep.mubr.bf16.mxu0 0
  %2146 = vmatmul.mubr.bf16.gmra.mxu0 %v1986
  %v2147 = vpop.f32.mrf.mxu0
  %v2148 = vadd.f32 0.0, %v2147
  %v2149 = vpop.f32.mrf.mxu0
  %v2150 = vpop.f32.mrf.mxu0
  %v2151 = vadd.f32 0.0, %v2150
  %v2152 = vpop.f32.mrf.mxu0
  %2153 = vmatprep.mubr.bf16.mxu0 0
  %2154 = vmatmul.mubr.bf16.gmra.mxu0 %v1987
  %v2155 = vpop.f32.mrf.mxu0
  %v2156 = vadd.f32 0.0, %v2155
  %v2157 = vpop.f32.mrf.mxu0
  %v2158 = vpop.f32.mrf.mxu0
  %v2159 = vadd.f32 0.0, %v2158
  %v2160 = vpop.f32.mrf.mxu0
  %2161 = vmatprep.mubr.bf16.mxu0 0
  %2162 = vmatmul.mubr.bf16.gmra.mxu0 %v1988
  %v2163 = vpop.f32.mrf.mxu0
  %v2164 = vadd.f32 0.0, %v2163
  %v2165 = vpop.f32.mrf.mxu0
  %v2166 = vpop.f32.mrf.mxu0
  %v2167 = vadd.f32 0.0, %v2166
  %v2168 = vpop.f32.mrf.mxu0
  %2169 = vmatprep.mubr.bf16.mxu0 0
  %2170 = vmatmul.mubr.bf16.gmra.mxu0 %v1989
  %v2171 = vpop.f32.mrf.mxu0
  %v2172 = vadd.f32 0.0, %v2171
  %v2173 = vpop.f32.mrf.mxu0
  %v2174 = vpop.f32.mrf.mxu0
  %v2175 = vadd.f32 0.0, %v2174
  %v2176 = vpop.f32.mrf.mxu0
  %2177 = vmatprep.mubr.bf16.mxu0 0
  %2178 = vmatmul.mubr.bf16.gmra.mxu0 %v1990
  %v2179 = vpop.f32.mrf.mxu0
  %v2180 = vadd.f32 0.0, %v2179
  %v2181 = vpop.f32.mrf.mxu0
  %v2182 = vpop.f32.mrf.mxu0
  %v2183 = vadd.f32 0.0, %v2182
  %v2184 = vpop.f32.mrf.mxu0
  %2185 = vmatprep.mubr.bf16.mxu0 0
  %2186 = vmatmul.mubr.bf16.gmra.mxu0 %v1991
  %v2187 = vpop.f32.mrf.mxu0
  %v2188 = vadd.f32 0.0, %v2187
  %v2189 = vpop.f32.mrf.mxu0
  %v2190 = vpop.f32.mrf.mxu0
  %v2191 = vpop.f32.mrf.mxu0
  %2192 = vdwg.mxu0
  %v2193 = vld [vmem:[#allocation3] sm:$0xff]
  %v2194 = vld [vmem:[#allocation3 + $0x8] sm:$0xff]
  %v2195 = vld [vmem:[#allocation3 + $0x10] sm:$0xff]
  %v2196 = vld [vmem:[#allocation3 + $0x18] sm:$0xff]
  %v2197 = vld [vmem:[#allocation3 + $0x20] sm:$0xff]
  %v2198 = vld [vmem:[#allocation3 + $0x28] sm:$0xff]
  %v2199 = vld [vmem:[#allocation3 + $0x30] sm:$0xff]
  %v2200 = vld [vmem:[#allocation3 + $0x38] sm:$0xff]
  %v2201 = vld [vmem:[#allocation3 + $0x40] sm:$0xff]
  %v2202 = vld [vmem:[#allocation3 + $0x48] sm:$0xff]
  %v2203 = vld [vmem:[#allocation3 + $0x50] sm:$0xff]
  %v2204 = vld [vmem:[#allocation3 + $0x58] sm:$0xff]
  %v2205 = vld [vmem:[#allocation3 + $0x60] sm:$0xff]
  %v2206 = vld [vmem:[#allocation3 + $0x68] sm:$0xff]
  %v2207 = vld [vmem:[#allocation3 + $0x70] sm:$0xff]
  %v2208 = vld [vmem:[#allocation3 + $0x78] sm:$0xff]
  %v2209 = vld [vmem:[#allocation3 + $0x80] sm:$0xff]
  %v2210 = vld [vmem:[#allocation3 + $0x88] sm:$0xff]
  %v2211 = vld [vmem:[#allocation3 + $0x90] sm:$0xff]
  %v2212 = vld [vmem:[#allocation3 + $0x98] sm:$0xff]
  %v2213 = vld [vmem:[#allocation3 + $0xa0] sm:$0xff]
  %v2214 = vld [vmem:[#allocation3 + $0xa8] sm:$0xff]
  %v2215 = vld [vmem:[#allocation3 + $0xb0] sm:$0xff]
  %v2216 = vld [vmem:[#allocation3 + $0xb8] sm:$0xff]
  %v2217 = vld [vmem:[#allocation3 + $0xc0] sm:$0xff]
  %v2218 = vadd.f32 %v2193, %v2092
  %v2219 = vadd.f32 %v2194, %v2095
  %v2220 = vadd.f32 %v2195, %v2100
  %v2221 = vadd.f32 %v2196, %v2103
  %v2222 = vadd.f32 %v2197, %v2108
  %v2223 = vadd.f32 %v2198, %v2111
  %v2224 = vadd.f32 %v2199, %v2116
  %v2225 = vadd.f32 %v2200, %v2119
  %v2226 = vadd.f32 %v2201, %v2124
  %v2227 = vadd.f32 %v2202, %v2127
  %v2228 = vadd.f32 %v2203, %v2132
  %v2229 = vadd.f32 %v2204, %v2135
  %v2230 = vadd.f32 %v2205, %v2140
  %v2231 = vadd.f32 %v2206, %v2143
  %v2232 = vadd.f32 %v2207, %v2148
  %v2233 = vadd.f32 %v2208, %v2151
  %v2234 = vadd.f32 %v2209, %v2156
  %v2235 = vadd.f32 %v2210, %v2159
  %v2236 = vadd.f32 %v2211, %v2164
  %v2237 = vadd.f32 %v2212, %v2167
  %v2238 = vadd.f32 %v2213, %v2172
  %v2239 = vadd.f32 %v2214, %v2175
  %v2240 = vadd.f32 %v2215, %v2180
  %v2241 = vadd.f32 %v2216, %v2183
  %v2242 = vadd.f32 %v2217, %v2188
  %2243 = vst [vmem:[#allocation3] sm:$0xff] %v2218
  %2244 = vst [vmem:[#allocation3 + $0x8] sm:$0xff] %v2219
  %2245 = vst [vmem:[#allocation3 + $0x10] sm:$0xff] %v2220
  %2246 = vst [vmem:[#allocation3 + $0x18] sm:$0xff] %v2221
  %2247 = vst [vmem:[#allocation3 + $0x20] sm:$0xff] %v2222
  %2248 = vst [vmem:[#allocation3 + $0x28] sm:$0xff] %v2223
  %2249 = vst [vmem:[#allocation3 + $0x30] sm:$0xff] %v2224
  %2250 = vst [vmem:[#allocation3 + $0x38] sm:$0xff] %v2225
  %2251 = vst [vmem:[#allocation3 + $0x40] sm:$0xff] %v2226
  %2252 = vst [vmem:[#allocation3 + $0x48] sm:$0xff] %v2227
  %2253 = vst [vmem:[#allocation3 + $0x50] sm:$0xff] %v2228
  %2254 = vst [vmem:[#allocation3 + $0x58] sm:$0xff] %v2229
  %2255 = vst [vmem:[#allocation3 + $0x60] sm:$0xff] %v2230
  %2256 = vst [vmem:[#allocation3 + $0x68] sm:$0xff] %v2231
  %2257 = vst [vmem:[#allocation3 + $0x70] sm:$0xff] %v2232
  %2258 = vst [vmem:[#allocation3 + $0x78] sm:$0xff] %v2233
  %2259 = vst [vmem:[#allocation3 + $0x80] sm:$0xff] %v2234
  %2260 = vst [vmem:[#allocation3 + $0x88] sm:$0xff] %v2235
  %2261 = vst [vmem:[#allocation3 + $0x90] sm:$0xff] %v2236
  %2262 = vst [vmem:[#allocation3 + $0x98] sm:$0xff] %v2237
  %2263 = vst [vmem:[#allocation3 + $0xa0] sm:$0xff] %v2238
  %2264 = vst [vmem:[#allocation3 + $0xa8] sm:$0xff] %v2239
  %2265 = vst [vmem:[#allocation3 + $0xb0] sm:$0xff] %v2240
  %2266 = vst [vmem:[#allocation3 + $0xb8] sm:$0xff] %v2241
  %2267 = vst [vmem:[#allocation3 + $0xc0] sm:$0xff] %v2242
  %v2268 = vld [vmem:[#allocation2 + $0x11] sm:$0xff]
  %v2269 = vld [vmem:[#allocation2 + $0x19] sm:$0xff]
  %v2270 = vld [vmem:[#allocation2 + $0x21] sm:$0xff]
  %v2271 = vld [vmem:[#allocation2 + $0x29] sm:$0xff]
  %v2272 = vld [vmem:[#allocation2 + $0x31] sm:$0xff]
  %v2273 = vld [vmem:[#allocation2 + $0x39] sm:$0xff]
  %v2274 = vld [vmem:[#allocation2 + $0x41] sm:$0xff]
  %v2275 = vld [vmem:[#allocation2 + $0x49] sm:$0xff]
  %v2276 = vld [vmem:[#allocation2 + $0x51] sm:$0xff]
  %v2277 = vld [vmem:[#allocation2 + $0x59] sm:$0xff]
  %v2278 = vld [vmem:[#allocation2 + $0x61] sm:$0xff]
  %v2279 = vld [vmem:[#allocation2 + $0x69] sm:$0xff]
  %v2280 = vld [vmem:[#allocation2 + $0x71] sm:$0xff]
  %v2281 = vld [vmem:[#allocation2 + $0x79] sm:$0xff]
  %v2282 = vld [vmem:[#allocation2 + $0x81] sm:$0xff]
  %v2283 = vld [vmem:[#allocation2 + $0x89] sm:$0xff]
  %v2284 = vld [vmem:[#allocation2 + $0x91] sm:$0xff]
  %v2285 = vld [vmem:[#allocation2 + $0x99] sm:$0xff]
  %v2286 = vld [vmem:[#allocation2 + $0xa1] sm:$0xff]
  %v2287 = vld [vmem:[#allocation2 + $0xa9] sm:$0xff]
  %v2288 = vld [vmem:[#allocation2 + $0xb1] sm:$0xff]
  %v2289 = vld [vmem:[#allocation2 + $0xb9] sm:$0xff]
  %v2290 = vld [vmem:[#allocation2 + $0xc1] sm:$0xff]
  %v2291 = vld [vmem:[#allocation2 + $0xc9] sm:$0xff]
  %v2292 = vld [vmem:[#allocation2 + $0xd1] sm:$0xff]
  %v2293 = vpack.c.bf16 %v2269, %v2268
  %v2294 = vpack.c.bf16 %v2271, %v2270
  %v2295 = vpack.c.bf16 %v2273, %v2272
  %v2296 = vpack.c.bf16 %v2275, %v2274
  %v2297 = vpack.c.bf16 %v2277, %v2276
  %v2298 = vpack.c.bf16 %v2279, %v2278
  %v2299 = vpack.c.bf16 %v2281, %v2280
  %v2300 = vpack.c.bf16 %v2283, %v2282
  %v2301 = vpack.c.bf16 %v2285, %v2284
  %v2302 = vpack.c.bf16 %v2287, %v2286
  %v2303 = vpack.c.bf16 %v2289, %v2288
  %v2304 = vpack.c.bf16 %v2291, %v2290
  %v2305 = vpack.c.bf16 %v2292, %v2292
  %s2306 = scalar_lea.vmem %s7, 320
  %v2307 = vld [vmem:[%s2306] sm:$0xf]
  %v2308 = vld [vmem:[%s2306 + $0x4] sm:$0xf]
  %v2309 = vld [vmem:[%s2306 + $0x8] sm:$0xf]
  %v2310 = vld [vmem:[%s2306 + $0xc] sm:$0xf]
  %v2311 = vld [vmem:[%s2306 + $0x10] sm:$0xf]
  %v2312 = vld [vmem:[%s2306 + $0x14] sm:$0xf]
  %v2313 = vld [vmem:[%s2306 + $0x18] sm:$0xf]
  %v2314 = vld [vmem:[%s2306 + $0x1c] sm:$0xf]
  %v2315 = vld [vmem:[%s2306 + $0x20] sm:$0xf]
  %v2316 = vld [vmem:[%s2306 + $0x24] sm:$0xf]
  %v2317 = vld [vmem:[%s2306 + $0x28] sm:$0xf]
  %v2318 = vld [vmem:[%s2306 + $0x2c] sm:$0xf]
  %v2319 = vld [vmem:[%s2306 + $0x30] sm:$0xf]
  %v2320 = vld [vmem:[%s2306 + $0x34] sm:$0xf]
  %v2321 = vld [vmem:[%s2306 + $0x38] sm:$0xf]
  %v2322 = vld [vmem:[%s2306 + $0x3c] sm:$0xf]
  %v2339 = vunpack.c.l.b16 %v2307
  %v2340 = vunpack.c.l.b16 %v2308
  %v2341 = vunpack.c.l.b16 %v2309
  %v2342 = vunpack.c.l.b16 %v2310
  %v2343 = vunpack.c.l.b16 %v2311
  %v2344 = vunpack.c.l.b16 %v2312
  %v2345 = vunpack.c.l.b16 %v2313
  %v2346 = vunpack.c.l.b16 %v2314
  %v2347 = vunpack.c.l.b16 %v2315
  %v2348 = vunpack.c.l.b16 %v2316
  %v2349 = vunpack.c.l.b16 %v2317
  %v2350 = vunpack.c.l.b16 %v2318
  %v2351 = vunpack.c.l.b16 %v2319
  %v2352 = vunpack.c.l.b16 %v2320
  %v2353 = vunpack.c.l.b16 %v2321
  %v2354 = vunpack.c.l.b16 %v2322
  %v2355 = vpack.c.b16 %v2340, %v2339
  %v2356 = vpack.c.b16 %v2342, %v2341
  %v2357 = vpack.c.b16 %v2344, %v2343
  %v2358 = vpack.c.b16 %v2346, %v2345
  %v2359 = vpack.c.b16 %v2348, %v2347
  %v2360 = vpack.c.b16 %v2350, %v2349
  %v2361 = vpack.c.b16 %v2352, %v2351
  %v2362 = vpack.c.b16 %v2354, %v2353
  %2371 = vmatprep.subr.bf16.mxu0 0
  %2372 = vmatpush1.bf16.msra.mxu0 %v2362
  %2373 = vmatprep.subr.bf16.mxu0 0
  %2374 = vmatpush1.bf16.msra.mxu0 %v2361
  %2375 = vmatprep.subr.bf16.mxu0 0
  %2376 = vmatpush1.bf16.msra.mxu0 %v2360
  %2377 = vmatprep.subr.bf16.mxu0 0
  %2378 = vmatpush1.bf16.msra.mxu0 %v2359
  %2379 = vmatprep.subr.bf16.mxu0 0
  %2380 = vmatpush1.bf16.msra.mxu0 %v2358
  %2381 = vmatprep.subr.bf16.mxu0 0
  %2382 = vmatpush1.bf16.msra.mxu0 %v2357
  %2383 = vmatprep.subr.bf16.mxu0 0
  %2384 = vmatpush1.bf16.msra.mxu0 %v2356
  %2385 = vmatprep.subr.bf16.mxu0 0
  %2386 = vmatpush1.bf16.msra.mxu0 %v2355
  %2387 = vmatprep.subr.bf16.mxu0 0
  %2388 = vmatpush2.bf16.msra.mxu0 0
  %2389 = vmatprep.subr.bf16.mxu0 0
  %2390 = vmatpush2.bf16.msra.mxu0 0
  %2391 = vmatprep.subr.bf16.mxu0 0
  %2392 = vmatpush2.bf16.msra.mxu0 0
  %2393 = vmatprep.subr.bf16.mxu0 0
  %2394 = vmatpush2.bf16.msra.mxu0 0
  %2395 = vmatprep.subr.bf16.mxu0 0
  %2396 = vmatpush2.bf16.msra.mxu0 0
  %2397 = vmatprep.subr.bf16.mxu0 0
  %2398 = vmatpush2.bf16.msra.mxu0 0
  %2399 = vmatprep.subr.bf16.mxu0 0
  %2400 = vmatpush2.bf16.msra.mxu0 0
  %2401 = vmatprep.subr.bf16.mxu0 0
  %2402 = vmatpush2.bf16.msra.mxu0 0
  %2403 = vmatprep.mubr.bf16.mxu0 0
  %2404 = vmatmul.mubr.bf16.gmra.mxu0 %v2293
  %v2405 = vpop.f32.mrf.mxu0
  %v2406 = vadd.f32 0.0, %v2405
  %v2407 = vpop.f32.mrf.mxu0
  %v2408 = vpop.f32.mrf.mxu0
  %v2409 = vadd.f32 0.0, %v2408
  %v2410 = vpop.f32.mrf.mxu0
  %2411 = vmatprep.mubr.bf16.mxu0 0
  %2412 = vmatmul.mubr.bf16.gmra.mxu0 %v2294
  %v2413 = vpop.f32.mrf.mxu0
  %v2414 = vadd.f32 0.0, %v2413
  %v2415 = vpop.f32.mrf.mxu0
  %v2416 = vpop.f32.mrf.mxu0
  %v2417 = vadd.f32 0.0, %v2416
  %v2418 = vpop.f32.mrf.mxu0
  %2419 = vmatprep.mubr.bf16.mxu0 0
  %2420 = vmatmul.mubr.bf16.gmra.mxu0 %v2295
  %v2421 = vpop.f32.mrf.mxu0
  %v2422 = vadd.f32 0.0, %v2421
  %v2423 = vpop.f32.mrf.mxu0
  %v2424 = vpop.f32.mrf.mxu0
  %v2425 = vadd.f32 0.0, %v2424
  %v2426 = vpop.f32.mrf.mxu0
  %2427 = vmatprep.mubr.bf16.mxu0 0
  %2428 = vmatmul.mubr.bf16.gmra.mxu0 %v2296
  %v2429 = vpop.f32.mrf.mxu0
  %v2430 = vadd.f32 0.0, %v2429
  %v2431 = vpop.f32.mrf.mxu0
  %v2432 = vpop.f32.mrf.mxu0
  %v2433 = vadd.f32 0.0, %v2432
  %v2434 = vpop.f32.mrf.mxu0
  %2435 = vmatprep.mubr.bf16.mxu0 0
  %2436 = vmatmul.mubr.bf16.gmra.mxu0 %v2297
  %v2437 = vpop.f32.mrf.mxu0
  %v2438 = vadd.f32 0.0, %v2437
  %v2439 = vpop.f32.mrf.mxu0
  %v2440 = vpop.f32.mrf.mxu0
  %v2441 = vadd.f32 0.0, %v2440
  %v2442 = vpop.f32.mrf.mxu0
  %2443 = vmatprep.mubr.bf16.mxu0 0
  %2444 = vmatmul.mubr.bf16.gmra.mxu0 %v2298
  %v2445 = vpop.f32.mrf.mxu0
  %v2446 = vadd.f32 0.0, %v2445
  %v2447 = vpop.f32.mrf.mxu0
  %v2448 = vpop.f32.mrf.mxu0
  %v2449 = vadd.f32 0.0, %v2448
  %v2450 = vpop.f32.mrf.mxu0
  %2451 = vmatprep.mubr.bf16.mxu0 0
  %2452 = vmatmul.mubr.bf16.gmra.mxu0 %v2299
  %v2453 = vpop.f32.mrf.mxu0
  %v2454 = vadd.f32 0.0, %v2453
  %v2455 = vpop.f32.mrf.mxu0
  %v2456 = vpop.f32.mrf.mxu0
  %v2457 = vadd.f32 0.0, %v2456
  %v2458 = vpop.f32.mrf.mxu0
  %2459 = vmatprep.mubr.bf16.mxu0 0
  %2460 = vmatmul.mubr.bf16.gmra.mxu0 %v2300
  %v2461 = vpop.f32.mrf.mxu0
  %v2462 = vadd.f32 0.0, %v2461
  %v2463 = vpop.f32.mrf.mxu0
  %v2464 = vpop.f32.mrf.mxu0
  %v2465 = vadd.f32 0.0, %v2464
  %v2466 = vpop.f32.mrf.mxu0
  %2467 = vmatprep.mubr.bf16.mxu0 0
  %2468 = vmatmul.mubr.bf16.gmra.mxu0 %v2301
  %v2469 = vpop.f32.mrf.mxu0
  %v2470 = vadd.f32 0.0, %v2469
  %v2471 = vpop.f32.mrf.mxu0
  %v2472 = vpop.f32.mrf.mxu0
  %v2473 = vadd.f32 0.0, %v2472
  %v2474 = vpop.f32.mrf.mxu0
  %2475 = vmatprep.mubr.bf16.mxu0 0
  %2476 = vmatmul.mubr.bf16.gmra.mxu0 %v2302
  %v2477 = vpop.f32.mrf.mxu0
  %v2478 = vadd.f32 0.0, %v2477
  %v2479 = vpop.f32.mrf.mxu0
  %v2480 = vpop.f32.mrf.mxu0
  %v2481 = vadd.f32 0.0, %v2480
  %v2482 = vpop.f32.mrf.mxu0
  %2483 = vmatprep.mubr.bf16.mxu0 0
  %2484 = vmatmul.mubr.bf16.gmra.mxu0 %v2303
  %v2485 = vpop.f32.mrf.mxu0
  %v2486 = vadd.f32 0.0, %v2485
  %v2487 = vpop.f32.mrf.mxu0
  %v2488 = vpop.f32.mrf.mxu0
  %v2489 = vadd.f32 0.0, %v2488
  %v2490 = vpop.f32.mrf.mxu0
  %2491 = vmatprep.mubr.bf16.mxu0 0
  %2492 = vmatmul.mubr.bf16.gmra.mxu0 %v2304
  %v2493 = vpop.f32.mrf.mxu0
  %v2494 = vadd.f32 0.0, %v2493
  %v2495 = vpop.f32.mrf.mxu0
  %v2496 = vpop.f32.mrf.mxu0
  %v2497 = vadd.f32 0.0, %v2496
  %v2498 = vpop.f32.mrf.mxu0
  %2499 = vmatprep.mubr.bf16.mxu0 0
  %2500 = vmatmul.mubr.bf16.gmra.mxu0 %v2305
  %v2501 = vpop.f32.mrf.mxu0
  %v2502 = vadd.f32 0.0, %v2501
  %v2503 = vpop.f32.mrf.mxu0
  %v2504 = vpop.f32.mrf.mxu0
  %v2505 = vpop.f32.mrf.mxu0
  %2506 = vdwg.mxu0
  %v2507 = vld [vmem:[#allocation3] sm:$0xff]
  %v2508 = vld [vmem:[#allocation3 + $0x8] sm:$0xff]
  %v2509 = vld [vmem:[#allocation3 + $0x10] sm:$0xff]
  %v2510 = vld [vmem:[#allocation3 + $0x18] sm:$0xff]
  %v2511 = vld [vmem:[#allocation3 + $0x20] sm:$0xff]
  %v2512 = vld [vmem:[#allocation3 + $0x28] sm:$0xff]
  %v2513 = vld [vmem:[#allocation3 + $0x30] sm:$0xff]
  %v2514 = vld [vmem:[#allocation3 + $0x38] sm:$0xff]
  %v2515 = vld [vmem:[#allocation3 + $0x40] sm:$0xff]
  %v2516 = vld [vmem:[#allocation3 + $0x48] sm:$0xff]
  %v2517 = vld [vmem:[#allocation3 + $0x50] sm:$0xff]
  %v2518 = vld [vmem:[#allocation3 + $0x58] sm:$0xff]
  %v2519 = vld [vmem:[#allocation3 + $0x60] sm:$0xff]
  %v2520 = vld [vmem:[#allocation3 + $0x68] sm:$0xff]
  %v2521 = vld [vmem:[#allocation3 + $0x70] sm:$0xff]
  %v2522 = vld [vmem:[#allocation3 + $0x78] sm:$0xff]
  %v2523 = vld [vmem:[#allocation3 + $0x80] sm:$0xff]
  %v2524 = vld [vmem:[#allocation3 + $0x88] sm:$0xff]
  %v2525 = vld [vmem:[#allocation3 + $0x90] sm:$0xff]
  %v2526 = vld [vmem:[#allocation3 + $0x98] sm:$0xff]
  %v2527 = vld [vmem:[#allocation3 + $0xa0] sm:$0xff]
  %v2528 = vld [vmem:[#allocation3 + $0xa8] sm:$0xff]
  %v2529 = vld [vmem:[#allocation3 + $0xb0] sm:$0xff]
  %v2530 = vld [vmem:[#allocation3 + $0xb8] sm:$0xff]
  %v2531 = vld [vmem:[#allocation3 + $0xc0] sm:$0xff]
  %v2532 = vadd.f32 %v2507, %v2406
  %v2533 = vadd.f32 %v2508, %v2409
  %v2534 = vadd.f32 %v2509, %v2414
  %v2535 = vadd.f32 %v2510, %v2417
  %v2536 = vadd.f32 %v2511, %v2422
  %v2537 = vadd.f32 %v2512, %v2425
  %v2538 = vadd.f32 %v2513, %v2430
  %v2539 = vadd.f32 %v2514, %v2433
  %v2540 = vadd.f32 %v2515, %v2438
  %v2541 = vadd.f32 %v2516, %v2441
  %v2542 = vadd.f32 %v2517, %v2446
  %v2543 = vadd.f32 %v2518, %v2449
  %v2544 = vadd.f32 %v2519, %v2454
  %v2545 = vadd.f32 %v2520, %v2457
  %v2546 = vadd.f32 %v2521, %v2462
  %v2547 = vadd.f32 %v2522, %v2465
  %v2548 = vadd.f32 %v2523, %v2470
  %v2549 = vadd.f32 %v2524, %v2473
  %v2550 = vadd.f32 %v2525, %v2478
  %v2551 = vadd.f32 %v2526, %v2481
  %v2552 = vadd.f32 %v2527, %v2486
  %v2553 = vadd.f32 %v2528, %v2489
  %v2554 = vadd.f32 %v2529, %v2494
  %v2555 = vadd.f32 %v2530, %v2497
  %v2556 = vadd.f32 %v2531, %v2502
  %2557 = vst [vmem:[#allocation3] sm:$0xff] %v2532
  %2558 = vst [vmem:[#allocation3 + $0x8] sm:$0xff] %v2533
  %2559 = vst [vmem:[#allocation3 + $0x10] sm:$0xff] %v2534
  %2560 = vst [vmem:[#allocation3 + $0x18] sm:$0xff] %v2535
  %2561 = vst [vmem:[#allocation3 + $0x20] sm:$0xff] %v2536
  %2562 = vst [vmem:[#allocation3 + $0x28] sm:$0xff] %v2537
  %2563 = vst [vmem:[#allocation3 + $0x30] sm:$0xff] %v2538
  %2564 = vst [vmem:[#allocation3 + $0x38] sm:$0xff] %v2539
  %2565 = vst [vmem:[#allocation3 + $0x40] sm:$0xff] %v2540
  %2566 = vst [vmem:[#allocation3 + $0x48] sm:$0xff] %v2541
  %2567 = vst [vmem:[#allocation3 + $0x50] sm:$0xff] %v2542
  %2568 = vst [vmem:[#allocation3 + $0x58] sm:$0xff] %v2543
  %2569 = vst [vmem:[#allocation3 + $0x60] sm:$0xff] %v2544
  %2570 = vst [vmem:[#allocation3 + $0x68] sm:$0xff] %v2545
  %2571 = vst [vmem:[#allocation3 + $0x70] sm:$0xff] %v2546
  %2572 = vst [vmem:[#allocation3 + $0x78] sm:$0xff] %v2547
  %2573 = vst [vmem:[#allocation3 + $0x80] sm:$0xff] %v2548
  %2574 = vst [vmem:[#allocation3 + $0x88] sm:$0xff] %v2549
  %2575 = vst [vmem:[#allocation3 + $0x90] sm:$0xff] %v2550
  %2576 = vst [vmem:[#allocation3 + $0x98] sm:$0xff] %v2551
  %2577 = vst [vmem:[#allocation3 + $0xa0] sm:$0xff] %v2552
  %2578 = vst [vmem:[#allocation3 + $0xa8] sm:$0xff] %v2553
  %2579 = vst [vmem:[#allocation3 + $0xb0] sm:$0xff] %v2554
  %2580 = vst [vmem:[#allocation3 + $0xb8] sm:$0xff] %v2555
  %2581 = vst [vmem:[#allocation3 + $0xc0] sm:$0xff] %v2556
  %v2582 = vld [vmem:[#allocation2 + $0x19] sm:$0xff]
  %v2583 = vld [vmem:[#allocation2 + $0x21] sm:$0xff]
  %v2584 = vld [vmem:[#allocation2 + $0x29] sm:$0xff]
  %v2585 = vld [vmem:[#allocation2 + $0x31] sm:$0xff]
  %v2586 = vld [vmem:[#allocation2 + $0x39] sm:$0xff]
  %v2587 = vld [vmem:[#allocation2 + $0x41] sm:$0xff]
  %v2588 = vld [vmem:[#allocation2 + $0x49] sm:$0xff]
  %v2589 = vld [vmem:[#allocation2 + $0x51] sm:$0xff]
  %v2590 = vld [vmem:[#allocation2 + $0x59] sm:$0xff]
  %v2591 = vld [vmem:[#allocation2 + $0x61] sm:$0xff]
  %v2592 = vld [vmem:[#allocation2 + $0x69] sm:$0xff]
  %v2593 = vld [vmem:[#allocation2 + $0x71] sm:$0xff]
  %v2594 = vld [vmem:[#allocation2 + $0x79] sm:$0xff]
  %v2595 = vld [vmem:[#allocation2 + $0x81] sm:$0xff]
  %v2596 = vld [vmem:[#allocation2 + $0x89] sm:$0xff]
  %v2597 = vld [vmem:[#allocation2 + $0x91] sm:$0xff]
  %v2598 = vld [vmem:[#allocation2 + $0x99] sm:$0xff]
  %v2599 = vld [vmem:[#allocation2 + $0xa1] sm:$0xff]
  %v2600 = vld [vmem:[#allocation2 + $0xa9] sm:$0xff]
  %v2601 = vld [vmem:[#allocation2 + $0xb1] sm:$0xff]
  %v2602 = vld [vmem:[#allocation2 + $0xb9] sm:$0xff]
  %v2603 = vld [vmem:[#allocation2 + $0xc1] sm:$0xff]
  %v2604 = vld [vmem:[#allocation2 + $0xc9] sm:$0xff]
  %v2605 = vld [vmem:[#allocation2 + $0xd1] sm:$0xff]
  %v2606 = vld [vmem:[#allocation2 + $0xd9] sm:$0xff]
  %v2607 = vpack.c.bf16 %v2583, %v2582
  %v2608 = vpack.c.bf16 %v2585, %v2584
  %v2609 = vpack.c.bf16 %v2587, %v2586
  %v2610 = vpack.c.bf16 %v2589, %v2588
  %v2611 = vpack.c.bf16 %v2591, %v2590
  %v2612 = vpack.c.bf16 %v2593, %v2592
  %v2613 = vpack.c.bf16 %v2595, %v2594
  %v2614 = vpack.c.bf16 %v2597, %v2596
  %v2615 = vpack.c.bf16 %v2599, %v2598
  %v2616 = vpack.c.bf16 %v2601, %v2600
  %v2617 = vpack.c.bf16 %v2603, %v2602
  %v2618 = vpack.c.bf16 %v2605, %v2604
  %v2619 = vpack.c.bf16 %v2606, %v2606
  %s2620 = scalar_lea.vmem %s7, 384
  %v2621 = vld [vmem:[%s2620] sm:$0xf]
  %v2622 = vld [vmem:[%s2620 + $0x4] sm:$0xf]
  %v2623 = vld [vmem:[%s2620 + $0x8] sm:$0xf]
  %v2624 = vld [vmem:[%s2620 + $0xc] sm:$0xf]
  %v2625 = vld [vmem:[%s2620 + $0x10] sm:$0xf]
  %v2626 = vld [vmem:[%s2620 + $0x14] sm:$0xf]
  %v2627 = vld [vmem:[%s2620 + $0x18] sm:$0xf]
  %v2628 = vld [vmem:[%s2620 + $0x1c] sm:$0xf]
  %v2629 = vld [vmem:[%s2620 + $0x20] sm:$0xf]
  %v2630 = vld [vmem:[%s2620 + $0x24] sm:$0xf]
  %v2631 = vld [vmem:[%s2620 + $0x28] sm:$0xf]
  %v2632 = vld [vmem:[%s2620 + $0x2c] sm:$0xf]
  %v2633 = vld [vmem:[%s2620 + $0x30] sm:$0xf]
  %v2634 = vld [vmem:[%s2620 + $0x34] sm:$0xf]
  %v2635 = vld [vmem:[%s2620 + $0x38] sm:$0xf]
  %v2636 = vld [vmem:[%s2620 + $0x3c] sm:$0xf]
  %v2653 = vunpack.c.l.b16 %v2621
  %v2654 = vunpack.c.l.b16 %v2622
  %v2655 = vunpack.c.l.b16 %v2623
  %v2656 = vunpack.c.l.b16 %v2624
  %v2657 = vunpack.c.l.b16 %v2625
  %v2658 = vunpack.c.l.b16 %v2626
  %v2659 = vunpack.c.l.b16 %v2627
  %v2660 = vunpack.c.l.b16 %v2628
  %v2661 = vunpack.c.l.b16 %v2629
  %v2662 = vunpack.c.l.b16 %v2630
  %v2663 = vunpack.c.l.b16 %v2631
  %v2664 = vunpack.c.l.b16 %v2632
  %v2665 = vunpack.c.l.b16 %v2633
  %v2666 = vunpack.c.l.b16 %v2634
  %v2667 = vunpack.c.l.b16 %v2635
  %v2668 = vunpack.c.l.b16 %v2636
  %v2669 = vpack.c.b16 %v2654, %v2653
  %v2670 = vpack.c.b16 %v2656, %v2655
  %v2671 = vpack.c.b16 %v2658, %v2657
  %v2672 = vpack.c.b16 %v2660, %v2659
  %v2673 = vpack.c.b16 %v2662, %v2661
  %v2674 = vpack.c.b16 %v2664, %v2663
  %v2675 = vpack.c.b16 %v2666, %v2665
  %v2676 = vpack.c.b16 %v2668, %v2667
  %2685 = vmatprep.subr.bf16.mxu0 0
  %2686 = vmatpush1.bf16.msra.mxu0 %v2676
  %2687 = vmatprep.subr.bf16.mxu0 0
  %2688 = vmatpush1.bf16.msra.mxu0 %v2675
  %2689 = vmatprep.subr.bf16.mxu0 0
  %2690 = vmatpush1.bf16.msra.mxu0 %v2674
  %2691 = vmatprep.subr.bf16.mxu0 0
  %2692 = vmatpush1.bf16.msra.mxu0 %v2673
  %2693 = vmatprep.subr.bf16.mxu0 0
  %2694 = vmatpush1.bf16.msra.mxu0 %v2672
  %2695 = vmatprep.subr.bf16.mxu0 0
  %2696 = vmatpush1.bf16.msra.mxu0 %v2671
  %2697 = vmatprep.subr.bf16.mxu0 0
  %2698 = vmatpush1.bf16.msra.mxu0 %v2670
  %2699 = vmatprep.subr.bf16.mxu0 0
  %2700 = vmatpush1.bf16.msra.mxu0 %v2669
  %2701 = vmatprep.subr.bf16.mxu0 0
  %2702 = vmatpush2.bf16.msra.mxu0 0
  %2703 = vmatprep.subr.bf16.mxu0 0
  %2704 = vmatpush2.bf16.msra.mxu0 0
  %2705 = vmatprep.subr.bf16.mxu0 0
  %2706 = vmatpush2.bf16.msra.mxu0 0
  %2707 = vmatprep.subr.bf16.mxu0 0
  %2708 = vmatpush2.bf16.msra.mxu0 0
  %2709 = vmatprep.subr.bf16.mxu0 0
  %2710 = vmatpush2.bf16.msra.mxu0 0
  %2711 = vmatprep.subr.bf16.mxu0 0
  %2712 = vmatpush2.bf16.msra.mxu0 0
  %2713 = vmatprep.subr.bf16.mxu0 0
  %2714 = vmatpush2.bf16.msra.mxu0 0
  %2715 = vmatprep.subr.bf16.mxu0 0
  %2716 = vmatpush2.bf16.msra.mxu0 0
  %2717 = vmatprep.mubr.bf16.mxu0 0
  %2718 = vmatmul.mubr.bf16.gmra.mxu0 %v2607
  %v2719 = vpop.f32.mrf.mxu0
  %v2720 = vadd.f32 0.0, %v2719
  %v2721 = vpop.f32.mrf.mxu0
  %v2722 = vpop.f32.mrf.mxu0
  %v2723 = vadd.f32 0.0, %v2722
  %v2724 = vpop.f32.mrf.mxu0
  %2725 = vmatprep.mubr.bf16.mxu0 0
  %2726 = vmatmul.mubr.bf16.gmra.mxu0 %v2608
  %v2727 = vpop.f32.mrf.mxu0
  %v2728 = vadd.f32 0.0, %v2727
  %v2729 = vpop.f32.mrf.mxu0
  %v2730 = vpop.f32.mrf.mxu0
  %v2731 = vadd.f32 0.0, %v2730
  %v2732 = vpop.f32.mrf.mxu0
  %2733 = vmatprep.mubr.bf16.mxu0 0
  %2734 = vmatmul.mubr.bf16.gmra.mxu0 %v2609
  %v2735 = vpop.f32.mrf.mxu0
  %v2736 = vadd.f32 0.0, %v2735
  %v2737 = vpop.f32.mrf.mxu0
  %v2738 = vpop.f32.mrf.mxu0
  %v2739 = vadd.f32 0.0, %v2738
  %v2740 = vpop.f32.mrf.mxu0
  %2741 = vmatprep.mubr.bf16.mxu0 0
  %2742 = vmatmul.mubr.bf16.gmra.mxu0 %v2610
  %v2743 = vpop.f32.mrf.mxu0
  %v2744 = vadd.f32 0.0, %v2743
  %v2745 = vpop.f32.mrf.mxu0
  %v2746 = vpop.f32.mrf.mxu0
  %v2747 = vadd.f32 0.0, %v2746
  %v2748 = vpop.f32.mrf.mxu0
  %2749 = vmatprep.mubr.bf16.mxu0 0
  %2750 = vmatmul.mubr.bf16.gmra.mxu0 %v2611
  %v2751 = vpop.f32.mrf.mxu0
  %v2752 = vadd.f32 0.0, %v2751
  %v2753 = vpop.f32.mrf.mxu0
  %v2754 = vpop.f32.mrf.mxu0
  %v2755 = vadd.f32 0.0, %v2754
  %v2756 = vpop.f32.mrf.mxu0
  %2757 = vmatprep.mubr.bf16.mxu0 0
  %2758 = vmatmul.mubr.bf16.gmra.mxu0 %v2612
  %v2759 = vpop.f32.mrf.mxu0
  %v2760 = vadd.f32 0.0, %v2759
  %v2761 = vpop.f32.mrf.mxu0
  %v2762 = vpop.f32.mrf.mxu0
  %v2763 = vadd.f32 0.0, %v2762
  %v2764 = vpop.f32.mrf.mxu0
  %2765 = vmatprep.mubr.bf16.mxu0 0
  %2766 = vmatmul.mubr.bf16.gmra.mxu0 %v2613
  %v2767 = vpop.f32.mrf.mxu0
  %v2768 = vadd.f32 0.0, %v2767
  %v2769 = vpop.f32.mrf.mxu0
  %v2770 = vpop.f32.mrf.mxu0
  %v2771 = vadd.f32 0.0, %v2770
  %v2772 = vpop.f32.mrf.mxu0
  %2773 = vmatprep.mubr.bf16.mxu0 0
  %2774 = vmatmul.mubr.bf16.gmra.mxu0 %v2614
  %v2775 = vpop.f32.mrf.mxu0
  %v2776 = vadd.f32 0.0, %v2775
  %v2777 = vpop.f32.mrf.mxu0
  %v2778 = vpop.f32.mrf.mxu0
  %v2779 = vadd.f32 0.0, %v2778
  %v2780 = vpop.f32.mrf.mxu0
  %2781 = vmatprep.mubr.bf16.mxu0 0
  %2782 = vmatmul.mubr.bf16.gmra.mxu0 %v2615
  %v2783 = vpop.f32.mrf.mxu0
  %v2784 = vadd.f32 0.0, %v2783
  %v2785 = vpop.f32.mrf.mxu0
  %v2786 = vpop.f32.mrf.mxu0
  %v2787 = vadd.f32 0.0, %v2786
  %v2788 = vpop.f32.mrf.mxu0
  %2789 = vmatprep.mubr.bf16.mxu0 0
  %2790 = vmatmul.mubr.bf16.gmra.mxu0 %v2616
  %v2791 = vpop.f32.mrf.mxu0
  %v2792 = vadd.f32 0.0, %v2791
  %v2793 = vpop.f32.mrf.mxu0
  %v2794 = vpop.f32.mrf.mxu0
  %v2795 = vadd.f32 0.0, %v2794
  %v2796 = vpop.f32.mrf.mxu0
  %2797 = vmatprep.mubr.bf16.mxu0 0
  %2798 = vmatmul.mubr.bf16.gmra.mxu0 %v2617
  %v2799 = vpop.f32.mrf.mxu0
  %v2800 = vadd.f32 0.0, %v2799
  %v2801 = vpop.f32.mrf.mxu0
  %v2802 = vpop.f32.mrf.mxu0
  %v2803 = vadd.f32 0.0, %v2802
  %v2804 = vpop.f32.mrf.mxu0
  %2805 = vmatprep.mubr.bf16.mxu0 0
  %2806 = vmatmul.mubr.bf16.gmra.mxu0 %v2618
  %v2807 = vpop.f32.mrf.mxu0
  %v2808 = vadd.f32 0.0, %v2807
  %v2809 = vpop.f32.mrf.mxu0
  %v2810 = vpop.f32.mrf.mxu0
  %v2811 = vadd.f32 0.0, %v2810
  %v2812 = vpop.f32.mrf.mxu0
  %2813 = vmatprep.mubr.bf16.mxu0 0
  %2814 = vmatmul.mubr.bf16.gmra.mxu0 %v2619
  %v2815 = vpop.f32.mrf.mxu0
  %v2816 = vadd.f32 0.0, %v2815
  %v2817 = vpop.f32.mrf.mxu0
  %v2818 = vpop.f32.mrf.mxu0
  %v2819 = vpop.f32.mrf.mxu0
  %2820 = vdwg.mxu0
  %v2821 = vld [vmem:[#allocation3] sm:$0xff]
  %v2822 = vld [vmem:[#allocation3 + $0x8] sm:$0xff]
  %v2823 = vld [vmem:[#allocation3 + $0x10] sm:$0xff]
  %v2824 = vld [vmem:[#allocation3 + $0x18] sm:$0xff]
  %v2825 = vld [vmem:[#allocation3 + $0x20] sm:$0xff]
  %v2826 = vld [vmem:[#allocation3 + $0x28] sm:$0xff]
  %v2827 = vld [vmem:[#allocation3 + $0x30] sm:$0xff]
  %v2828 = vld [vmem:[#allocation3 + $0x38] sm:$0xff]
  %v2829 = vld [vmem:[#allocation3 + $0x40] sm:$0xff]
  %v2830 = vld [vmem:[#allocation3 + $0x48] sm:$0xff]
  %v2831 = vld [vmem:[#allocation3 + $0x50] sm:$0xff]
  %v2832 = vld [vmem:[#allocation3 + $0x58] sm:$0xff]
  %v2833 = vld [vmem:[#allocation3 + $0x60] sm:$0xff]
  %v2834 = vld [vmem:[#allocation3 + $0x68] sm:$0xff]
  %v2835 = vld [vmem:[#allocation3 + $0x70] sm:$0xff]
  %v2836 = vld [vmem:[#allocation3 + $0x78] sm:$0xff]
  %v2837 = vld [vmem:[#allocation3 + $0x80] sm:$0xff]
  %v2838 = vld [vmem:[#allocation3 + $0x88] sm:$0xff]
  %v2839 = vld [vmem:[#allocation3 + $0x90] sm:$0xff]
  %v2840 = vld [vmem:[#allocation3 + $0x98] sm:$0xff]
  %v2841 = vld [vmem:[#allocation3 + $0xa0] sm:$0xff]
  %v2842 = vld [vmem:[#allocation3 + $0xa8] sm:$0xff]
  %v2843 = vld [vmem:[#allocation3 + $0xb0] sm:$0xff]
  %v2844 = vld [vmem:[#allocation3 + $0xb8] sm:$0xff]
  %v2845 = vld [vmem:[#allocation3 + $0xc0] sm:$0xff]
  %v2846 = vadd.f32 %v2821, %v2720
  %v2847 = vadd.f32 %v2822, %v2723
  %v2848 = vadd.f32 %v2823, %v2728
  %v2849 = vadd.f32 %v2824, %v2731
  %v2850 = vadd.f32 %v2825, %v2736
  %v2851 = vadd.f32 %v2826, %v2739
  %v2852 = vadd.f32 %v2827, %v2744
  %v2853 = vadd.f32 %v2828, %v2747
  %v2854 = vadd.f32 %v2829, %v2752
  %v2855 = vadd.f32 %v2830, %v2755
  %v2856 = vadd.f32 %v2831, %v2760
  %v2857 = vadd.f32 %v2832, %v2763
  %v2858 = vadd.f32 %v2833, %v2768
  %v2859 = vadd.f32 %v2834, %v2771
  %v2860 = vadd.f32 %v2835, %v2776
  %v2861 = vadd.f32 %v2836, %v2779
  %v2862 = vadd.f32 %v2837, %v2784
  %v2863 = vadd.f32 %v2838, %v2787
  %v2864 = vadd.f32 %v2839, %v2792
  %v2865 = vadd.f32 %v2840, %v2795
  %v2866 = vadd.f32 %v2841, %v2800
  %v2867 = vadd.f32 %v2842, %v2803
  %v2868 = vadd.f32 %v2843, %v2808
  %v2869 = vadd.f32 %v2844, %v2811
  %v2870 = vadd.f32 %v2845, %v2816
  %2871 = vst [vmem:[#allocation3] sm:$0xff] %v2846
  %2872 = vst [vmem:[#allocation3 + $0x8] sm:$0xff] %v2847
  %2873 = vst [vmem:[#allocation3 + $0x10] sm:$0xff] %v2848
  %2874 = vst [vmem:[#allocation3 + $0x18] sm:$0xff] %v2849
  %2875 = vst [vmem:[#allocation3 + $0x20] sm:$0xff] %v2850
  %2876 = vst [vmem:[#allocation3 + $0x28] sm:$0xff] %v2851
  %2877 = vst [vmem:[#allocation3 + $0x30] sm:$0xff] %v2852
  %2878 = vst [vmem:[#allocation3 + $0x38] sm:$0xff] %v2853
  %2879 = vst [vmem:[#allocation3 + $0x40] sm:$0xff] %v2854
  %2880 = vst [vmem:[#allocation3 + $0x48] sm:$0xff] %v2855
  %2881 = vst [vmem:[#allocation3 + $0x50] sm:$0xff] %v2856
  %2882 = vst [vmem:[#allocation3 + $0x58] sm:$0xff] %v2857
  %2883 = vst [vmem:[#allocation3 + $0x60] sm:$0xff] %v2858
  %2884 = vst [vmem:[#allocation3 + $0x68] sm:$0xff] %v2859
  %2885 = vst [vmem:[#allocation3 + $0x70] sm:$0xff] %v2860
  %2886 = vst [vmem:[#allocation3 + $0x78] sm:$0xff] %v2861
  %2887 = vst [vmem:[#allocation3 + $0x80] sm:$0xff] %v2862
  %2888 = vst [vmem:[#allocation3 + $0x88] sm:$0xff] %v2863
  %2889 = vst [vmem:[#allocation3 + $0x90] sm:$0xff] %v2864
  %2890 = vst [vmem:[#allocation3 + $0x98] sm:$0xff] %v2865
  %2891 = vst [vmem:[#allocation3 + $0xa0] sm:$0xff] %v2866
  %2892 = vst [vmem:[#allocation3 + $0xa8] sm:$0xff] %v2867
  %2893 = vst [vmem:[#allocation3 + $0xb0] sm:$0xff] %v2868
  %2894 = vst [vmem:[#allocation3 + $0xb8] sm:$0xff] %v2869
  %2895 = vst [vmem:[#allocation3 + $0xc0] sm:$0xff] %v2870
  %v2896 = vld [vmem:[#allocation2 + $0x1a] sm:$0xff]
  %v2897 = vld [vmem:[#allocation2 + $0x22] sm:$0xff]
  %v2898 = vld [vmem:[#allocation2 + $0x2a] sm:$0xff]
  %v2899 = vld [vmem:[#allocation2 + $0x32] sm:$0xff]
  %v2900 = vld [vmem:[#allocation2 + $0x3a] sm:$0xff]
  %v2901 = vld [vmem:[#allocation2 + $0x42] sm:$0xff]
  %v2902 = vld [vmem:[#allocation2 + $0x4a] sm:$0xff]
  %v2903 = vld [vmem:[#allocation2 + $0x52] sm:$0xff]
  %v2904 = vld [vmem:[#allocation2 + $0x5a] sm:$0xff]
  %v2905 = vld [vmem:[#allocation2 + $0x62] sm:$0xff]
  %v2906 = vld [vmem:[#allocation2 + $0x6a] sm:$0xff]
  %v2907 = vld [vmem:[#allocation2 + $0x72] sm:$0xff]
  %v2908 = vld [vmem:[#allocation2 + $0x7a] sm:$0xff]
  %v2909 = vld [vmem:[#allocation2 + $0x82] sm:$0xff]
  %v2910 = vld [vmem:[#allocation2 + $0x8a] sm:$0xff]
  %v2911 = vld [vmem:[#allocation2 + $0x92] sm:$0xff]
  %v2912 = vld [vmem:[#allocation2 + $0x9a] sm:$0xff]
  %v2913 = vld [vmem:[#allocation2 + $0xa2] sm:$0xff]
  %v2914 = vld [vmem:[#allocation2 + $0xaa] sm:$0xff]
  %v2915 = vld [vmem:[#allocation2 + $0xb2] sm:$0xff]
  %v2916 = vld [vmem:[#allocation2 + $0xba] sm:$0xff]
  %v2917 = vld [vmem:[#allocation2 + $0xc2] sm:$0xff]
  %v2918 = vld [vmem:[#allocation2 + $0xca] sm:$0xff]
  %v2919 = vld [vmem:[#allocation2 + $0xd2] sm:$0xff]
  %v2920 = vld [vmem:[#allocation2 + $0xda] sm:$0xff]
  %v2921 = vpack.c.bf16 %v2897, %v2896
  %v2922 = vpack.c.bf16 %v2899, %v2898
  %v2923 = vpack.c.bf16 %v2901, %v2900
  %v2924 = vpack.c.bf16 %v2903, %v2902
  %v2925 = vpack.c.bf16 %v2905, %v2904
  %v2926 = vpack.c.bf16 %v2907, %v2906
  %v2927 = vpack.c.bf16 %v2909, %v2908
  %v2928 = vpack.c.bf16 %v2911, %v2910
  %v2929 = vpack.c.bf16 %v2913, %v2912
  %v2930 = vpack.c.bf16 %v2915, %v2914
  %v2931 = vpack.c.bf16 %v2917, %v2916
  %v2932 = vpack.c.bf16 %v2919, %v2918
  %v2933 = vpack.c.bf16 %v2920, %v2920
  %s2934 = scalar_lea.vmem %s7, 448
  %v2935 = vld [vmem:[%s2934] sm:$0xf]
  %v2936 = vld [vmem:[%s2934 + $0x4] sm:$0xf]
  %v2937 = vld [vmem:[%s2934 + $0x8] sm:$0xf]
  %v2938 = vld [vmem:[%s2934 + $0xc] sm:$0xf]
  %v2939 = vld [vmem:[%s2934 + $0x10] sm:$0xf]
  %v2940 = vld [vmem:[%s2934 + $0x14] sm:$0xf]
  %v2941 = vld [vmem:[%s2934 + $0x18] sm:$0xf]
  %v2942 = vld [vmem:[%s2934 + $0x1c] sm:$0xf]
  %v2943 = vld [vmem:[%s2934 + $0x20] sm:$0xf]
  %v2944 = vld [vmem:[%s2934 + $0x24] sm:$0xf]
  %v2945 = vld [vmem:[%s2934 + $0x28] sm:$0xf]
  %v2946 = vld [vmem:[%s2934 + $0x2c] sm:$0xf]
  %v2947 = vld [vmem:[%s2934 + $0x30] sm:$0xf]
  %v2948 = vld [vmem:[%s2934 + $0x34] sm:$0xf]
  %v2949 = vld [vmem:[%s2934 + $0x38] sm:$0xf]
  %v2950 = vld [vmem:[%s2934 + $0x3c] sm:$0xf]
  %v2967 = vunpack.c.l.b16 %v2935
  %v2968 = vunpack.c.l.b16 %v2936
  %v2969 = vunpack.c.l.b16 %v2937
  %v2970 = vunpack.c.l.b16 %v2938
  %v2971 = vunpack.c.l.b16 %v2939
  %v2972 = vunpack.c.l.b16 %v2940
  %v2973 = vunpack.c.l.b16 %v2941
  %v2974 = vunpack.c.l.b16 %v2942
  %v2975 = vunpack.c.l.b16 %v2943
  %v2976 = vunpack.c.l.b16 %v2944
  %v2977 = vunpack.c.l.b16 %v2945
  %v2978 = vunpack.c.l.b16 %v2946
  %v2979 = vunpack.c.l.b16 %v2947
  %v2980 = vunpack.c.l.b16 %v2948
  %v2981 = vunpack.c.l.b16 %v2949
  %v2982 = vunpack.c.l.b16 %v2950
  %v2983 = vpack.c.b16 %v2968, %v2967
  %v2984 = vpack.c.b16 %v2970, %v2969
  %v2985 = vpack.c.b16 %v2972, %v2971
  %v2986 = vpack.c.b16 %v2974, %v2973
  %v2987 = vpack.c.b16 %v2976, %v2975
  %v2988 = vpack.c.b16 %v2978, %v2977
  %v2989 = vpack.c.b16 %v2980, %v2979
  %v2990 = vpack.c.b16 %v2982, %v2981
  %2999 = vmatprep.subr.bf16.mxu0 0
  %3000 = vmatpush1.bf16.msra.mxu0 %v2990
  %3001 = vmatprep.subr.bf16.mxu0 0
  %3002 = vmatpush1.bf16.msra.mxu0 %v2989
  %3003 = vmatprep.subr.bf16.mxu0 0
  %3004 = vmatpush1.bf16.msra.mxu0 %v2988
  %3005 = vmatprep.subr.bf16.mxu0 0
  %3006 = vmatpush1.bf16.msra.mxu0 %v2987
  %3007 = vmatprep.subr.bf16.mxu0 0
  %3008 = vmatpush1.bf16.msra.mxu0 %v2986
  %3009 = vmatprep.subr.bf16.mxu0 0
  %3010 = vmatpush1.bf16.msra.mxu0 %v2985
  %3011 = vmatprep.subr.bf16.mxu0 0
  %3012 = vmatpush1.bf16.msra.mxu0 %v2984
  %3013 = vmatprep.subr.bf16.mxu0 0
  %3014 = vmatpush1.bf16.msra.mxu0 %v2983
  %3015 = vmatprep.subr.bf16.mxu0 0
  %3016 = vmatpush2.bf16.msra.mxu0 0
  %3017 = vmatprep.subr.bf16.mxu0 0
  %3018 = vmatpush2.bf16.msra.mxu0 0
  %3019 = vmatprep.subr.bf16.mxu0 0
  %3020 = vmatpush2.bf16.msra.mxu0 0
  %3021 = vmatprep.subr.bf16.mxu0 0
  %3022 = vmatpush2.bf16.msra.mxu0 0
  %3023 = vmatprep.subr.bf16.mxu0 0
  %3024 = vmatpush2.bf16.msra.mxu0 0
  %3025 = vmatprep.subr.bf16.mxu0 0
  %3026 = vmatpush2.bf16.msra.mxu0 0
  %3027 = vmatprep.subr.bf16.mxu0 0
  %3028 = vmatpush2.bf16.msra.mxu0 0
  %3029 = vmatprep.subr.bf16.mxu0 0
  %3030 = vmatpush2.bf16.msra.mxu0 0
  %3031 = vmatprep.mubr.bf16.mxu0 0
  %3032 = vmatmul.mubr.bf16.gmra.mxu0 %v2921
  %v3033 = vpop.f32.mrf.mxu0
  %v3034 = vadd.f32 0.0, %v3033
  %v3035 = vpop.f32.mrf.mxu0
  %v3036 = vpop.f32.mrf.mxu0
  %v3037 = vadd.f32 0.0, %v3036
  %v3038 = vpop.f32.mrf.mxu0
  %3039 = vmatprep.mubr.bf16.mxu0 0
  %3040 = vmatmul.mubr.bf16.gmra.mxu0 %v2922
  %v3041 = vpop.f32.mrf.mxu0
  %v3042 = vadd.f32 0.0, %v3041
  %v3043 = vpop.f32.mrf.mxu0
  %v3044 = vpop.f32.mrf.mxu0
  %v3045 = vadd.f32 0.0, %v3044
  %v3046 = vpop.f32.mrf.mxu0
  %3047 = vmatprep.mubr.bf16.mxu0 0
  %3048 = vmatmul.mubr.bf16.gmra.mxu0 %v2923
  %v3049 = vpop.f32.mrf.mxu0
  %v3050 = vadd.f32 0.0, %v3049
  %v3051 = vpop.f32.mrf.mxu0
  %v3052 = vpop.f32.mrf.mxu0
  %v3053 = vadd.f32 0.0, %v3052
  %v3054 = vpop.f32.mrf.mxu0
  %3055 = vmatprep.mubr.bf16.mxu0 0
  %3056 = vmatmul.mubr.bf16.gmra.mxu0 %v2924
  %v3057 = vpop.f32.mrf.mxu0
  %v3058 = vadd.f32 0.0, %v3057
  %v3059 = vpop.f32.mrf.mxu0
  %v3060 = vpop.f32.mrf.mxu0
  %v3061 = vadd.f32 0.0, %v3060
  %v3062 = vpop.f32.mrf.mxu0
  %3063 = vmatprep.mubr.bf16.mxu0 0
  %3064 = vmatmul.mubr.bf16.gmra.mxu0 %v2925
  %v3065 = vpop.f32.mrf.mxu0
  %v3066 = vadd.f32 0.0, %v3065
  %v3067 = vpop.f32.mrf.mxu0
  %v3068 = vpop.f32.mrf.mxu0
  %v3069 = vadd.f32 0.0, %v3068
  %v3070 = vpop.f32.mrf.mxu0
  %3071 = vmatprep.mubr.bf16.mxu0 0
  %3072 = vmatmul.mubr.bf16.gmra.mxu0 %v2926
  %v3073 = vpop.f32.mrf.mxu0
  %v3074 = vadd.f32 0.0, %v3073
  %v3075 = vpop.f32.mrf.mxu0
  %v3076 = vpop.f32.mrf.mxu0
  %v3077 = vadd.f32 0.0, %v3076
  %v3078 = vpop.f32.mrf.mxu0
  %3079 = vmatprep.mubr.bf16.mxu0 0
  %3080 = vmatmul.mubr.bf16.gmra.mxu0 %v2927
  %v3081 = vpop.f32.mrf.mxu0
  %v3082 = vadd.f32 0.0, %v3081
  %v3083 = vpop.f32.mrf.mxu0
  %v3084 = vpop.f32.mrf.mxu0
  %v3085 = vadd.f32 0.0, %v3084
  %v3086 = vpop.f32.mrf.mxu0
  %3087 = vmatprep.mubr.bf16.mxu0 0
  %3088 = vmatmul.mubr.bf16.gmra.mxu0 %v2928
  %v3089 = vpop.f32.mrf.mxu0
  %v3090 = vadd.f32 0.0, %v3089
  %v3091 = vpop.f32.mrf.mxu0
  %v3092 = vpop.f32.mrf.mxu0
  %v3093 = vadd.f32 0.0, %v3092
  %v3094 = vpop.f32.mrf.mxu0
  %3095 = vmatprep.mubr.bf16.mxu0 0
  %3096 = vmatmul.mubr.bf16.gmra.mxu0 %v2929
  %v3097 = vpop.f32.mrf.mxu0
  %v3098 = vadd.f32 0.0, %v3097
  %v3099 = vpop.f32.mrf.mxu0
  %v3100 = vpop.f32.mrf.mxu0
  %v3101 = vadd.f32 0.0, %v3100
  %v3102 = vpop.f32.mrf.mxu0
  %3103 = vmatprep.mubr.bf16.mxu0 0
  %3104 = vmatmul.mubr.bf16.gmra.mxu0 %v2930
  %v3105 = vpop.f32.mrf.mxu0
  %v3106 = vadd.f32 0.0, %v3105
  %v3107 = vpop.f32.mrf.mxu0
  %v3108 = vpop.f32.mrf.mxu0
  %v3109 = vadd.f32 0.0, %v3108
  %v3110 = vpop.f32.mrf.mxu0
  %3111 = vmatprep.mubr.bf16.mxu0 0
  %3112 = vmatmul.mubr.bf16.gmra.mxu0 %v2931
  %v3113 = vpop.f32.mrf.mxu0
  %v3114 = vadd.f32 0.0, %v3113
  %v3115 = vpop.f32.mrf.mxu0
  %v3116 = vpop.f32.mrf.mxu0
  %v3117 = vadd.f32 0.0, %v3116
  %v3118 = vpop.f32.mrf.mxu0
  %3119 = vmatprep.mubr.bf16.mxu0 0
  %3120 = vmatmul.mubr.bf16.gmra.mxu0 %v2932
  %v3121 = vpop.f32.mrf.mxu0
  %v3122 = vadd.f32 0.0, %v3121
  %v3123 = vpop.f32.mrf.mxu0
  %v3124 = vpop.f32.mrf.mxu0
  %v3125 = vadd.f32 0.0, %v3124
  %v3126 = vpop.f32.mrf.mxu0
  %3127 = vmatprep.mubr.bf16.mxu0 0
  %3128 = vmatmul.mubr.bf16.gmra.mxu0 %v2933
  %v3129 = vpop.f32.mrf.mxu0
  %v3130 = vadd.f32 0.0, %v3129
  %v3131 = vpop.f32.mrf.mxu0
  %v3132 = vpop.f32.mrf.mxu0
  %v3133 = vpop.f32.mrf.mxu0
  %3134 = vdwg.mxu0
  %v3135 = vld [vmem:[#allocation3] sm:$0xff]
  %v3136 = vld [vmem:[#allocation3 + $0x8] sm:$0xff]
  %v3137 = vld [vmem:[#allocation3 + $0x10] sm:$0xff]
  %v3138 = vld [vmem:[#allocation3 + $0x18] sm:$0xff]
  %v3139 = vld [vmem:[#allocation3 + $0x20] sm:$0xff]
  %v3140 = vld [vmem:[#allocation3 + $0x28] sm:$0xff]
  %v3141 = vld [vmem:[#allocation3 + $0x30] sm:$0xff]
  %v3142 = vld [vmem:[#allocation3 + $0x38] sm:$0xff]
  %v3143 = vld [vmem:[#allocation3 + $0x40] sm:$0xff]
  %v3144 = vld [vmem:[#allocation3 + $0x48] sm:$0xff]
  %v3145 = vld [vmem:[#allocation3 + $0x50] sm:$0xff]
  %v3146 = vld [vmem:[#allocation3 + $0x58] sm:$0xff]
  %v3147 = vld [vmem:[#allocation3 + $0x60] sm:$0xff]
  %v3148 = vld [vmem:[#allocation3 + $0x68] sm:$0xff]
  %v3149 = vld [vmem:[#allocation3 + $0x70] sm:$0xff]
  %v3150 = vld [vmem:[#allocation3 + $0x78] sm:$0xff]
  %v3151 = vld [vmem:[#allocation3 + $0x80] sm:$0xff]
  %v3152 = vld [vmem:[#allocation3 + $0x88] sm:$0xff]
  %v3153 = vld [vmem:[#allocation3 + $0x90] sm:$0xff]
  %v3154 = vld [vmem:[#allocation3 + $0x98] sm:$0xff]
  %v3155 = vld [vmem:[#allocation3 + $0xa0] sm:$0xff]
  %v3156 = vld [vmem:[#allocation3 + $0xa8] sm:$0xff]
  %v3157 = vld [vmem:[#allocation3 + $0xb0] sm:$0xff]
  %v3158 = vld [vmem:[#allocation3 + $0xb8] sm:$0xff]
  %v3159 = vld [vmem:[#allocation3 + $0xc0] sm:$0xff]
  %v3160 = vadd.f32 %v3135, %v3034
  %v3161 = vadd.f32 %v3136, %v3037
  %v3162 = vadd.f32 %v3137, %v3042
  %v3163 = vadd.f32 %v3138, %v3045
  %v3164 = vadd.f32 %v3139, %v3050
  %v3165 = vadd.f32 %v3140, %v3053
  %v3166 = vadd.f32 %v3141, %v3058
  %v3167 = vadd.f32 %v3142, %v3061
  %v3168 = vadd.f32 %v3143, %v3066
  %v3169 = vadd.f32 %v3144, %v3069
  %v3170 = vadd.f32 %v3145, %v3074
  %v3171 = vadd.f32 %v3146, %v3077
  %v3172 = vadd.f32 %v3147, %v3082
  %v3173 = vadd.f32 %v3148, %v3085
  %v3174 = vadd.f32 %v3149, %v3090
  %v3175 = vadd.f32 %v3150, %v3093
  %v3176 = vadd.f32 %v3151, %v3098
  %v3177 = vadd.f32 %v3152, %v3101
  %v3178 = vadd.f32 %v3153, %v3106
  %v3179 = vadd.f32 %v3154, %v3109
  %v3180 = vadd.f32 %v3155, %v3114
  %v3181 = vadd.f32 %v3156, %v3117
  %v3182 = vadd.f32 %v3157, %v3122
  %v3183 = vadd.f32 %v3158, %v3125
  %v3184 = vadd.f32 %v3159, %v3130
  %3185 = vst [vmem:[#allocation3] sm:$0xff] %v3160
  %3186 = vst [vmem:[#allocation3 + $0x8] sm:$0xff] %v3161
  %3187 = vst [vmem:[#allocation3 + $0x10] sm:$0xff] %v3162
  %3188 = vst [vmem:[#allocation3 + $0x18] sm:$0xff] %v3163
  %3189 = vst [vmem:[#allocation3 + $0x20] sm:$0xff] %v3164
  %3190 = vst [vmem:[#allocation3 + $0x28] sm:$0xff] %v3165
  %3191 = vst [vmem:[#allocation3 + $0x30] sm:$0xff] %v3166
  %3192 = vst [vmem:[#allocation3 + $0x38] sm:$0xff] %v3167
  %3193 = vst [vmem:[#allocation3 + $0x40] sm:$0xff] %v3168
  %3194 = vst [vmem:[#allocation3 + $0x48] sm:$0xff] %v3169
  %3195 = vst [vmem:[#allocation3 + $0x50] sm:$0xff] %v3170
  %3196 = vst [vmem:[#allocation3 + $0x58] sm:$0xff] %v3171
  %3197 = vst [vmem:[#allocation3 + $0x60] sm:$0xff] %v3172
  %3198 = vst [vmem:[#allocation3 + $0x68] sm:$0xff] %v3173
  %3199 = vst [vmem:[#allocation3 + $0x70] sm:$0xff] %v3174
  %3200 = vst [vmem:[#allocation3 + $0x78] sm:$0xff] %v3175
  %3201 = vst [vmem:[#allocation3 + $0x80] sm:$0xff] %v3176
  %3202 = vst [vmem:[#allocation3 + $0x88] sm:$0xff] %v3177
  %3203 = vst [vmem:[#allocation3 + $0x90] sm:$0xff] %v3178
  %3204 = vst [vmem:[#allocation3 + $0x98] sm:$0xff] %v3179
  %3205 = vst [vmem:[#allocation3 + $0xa0] sm:$0xff] %v3180
  %3206 = vst [vmem:[#allocation3 + $0xa8] sm:$0xff] %v3181
  %3207 = vst [vmem:[#allocation3 + $0xb0] sm:$0xff] %v3182
  %3208 = vst [vmem:[#allocation3 + $0xb8] sm:$0xff] %v3183
  %3209 = vst [vmem:[#allocation3 + $0xc0] sm:$0xff] %v3184
  %v3210 = vld [vmem:[#allocation2 + $0x1b] sm:$0xff]
  %v3211 = vld [vmem:[#allocation2 + $0x23] sm:$0xff]
  %v3212 = vld [vmem:[#allocation2 + $0x2b] sm:$0xff]
  %v3213 = vld [vmem:[#allocation2 + $0x33] sm:$0xff]
  %v3214 = vld [vmem:[#allocation2 + $0x3b] sm:$0xff]
  %v3215 = vld [vmem:[#allocation2 + $0x43] sm:$0xff]
  %v3216 = vld [vmem:[#allocation2 + $0x4b] sm:$0xff]
  %v3217 = vld [vmem:[#allocation2 + $0x53] sm:$0xff]
  %v3218 = vld [vmem:[#allocation2 + $0x5b] sm:$0xff]
  %v3219 = vld [vmem:[#allocation2 + $0x63] sm:$0xff]
  %v3220 = vld [vmem:[#allocation2 + $0x6b] sm:$0xff]
  %v3221 = vld [vmem:[#allocation2 + $0x73] sm:$0xff]
  %v3222 = vld [vmem:[#allocation2 + $0x7b] sm:$0xff]
  %v3223 = vld [vmem:[#allocation2 + $0x83] sm:$0xff]
  %v3224 = vld [vmem:[#allocation2 + $0x8b] sm:$0xff]
  %v3225 = vld [vmem:[#allocation2 + $0x93] sm:$0xff]
  %v3226 = vld [vmem:[#allocation2 + $0x9b] sm:$0xff]
  %v3227 = vld [vmem:[#allocation2 + $0xa3] sm:$0xff]
  %v3228 = vld [vmem:[#allocation2 + $0xab] sm:$0xff]
  %v3229 = vld [vmem:[#allocation2 + $0xb3] sm:$0xff]
  %v3230 = vld [vmem:[#allocation2 + $0xbb] sm:$0xff]
  %v3231 = vld [vmem:[#allocation2 + $0xc3] sm:$0xff]
  %v3232 = vld [vmem:[#allocation2 + $0xcb] sm:$0xff]
  %v3233 = vld [vmem:[#allocation2 + $0xd3] sm:$0xff]
  %v3234 = vld [vmem:[#allocation2 + $0xdb] sm:$0xff]
  %v3235 = vpack.c.bf16 %v3211, %v3210
  %v3236 = vpack.c.bf16 %v3213, %v3212
  %v3237 = vpack.c.bf16 %v3215, %v3214
  %v3238 = vpack.c.bf16 %v3217, %v3216
  %v3239 = vpack.c.bf16 %v3219, %v3218
  %v3240 = vpack.c.bf16 %v3221, %v3220
  %v3241 = vpack.c.bf16 %v3223, %v3222
  %v3242 = vpack.c.bf16 %v3225, %v3224
  %v3243 = vpack.c.bf16 %v3227, %v3226
  %v3244 = vpack.c.bf16 %v3229, %v3228
  %v3245 = vpack.c.bf16 %v3231, %v3230
  %v3246 = vpack.c.bf16 %v3233, %v3232
  %v3247 = vpack.c.bf16 %v3234, %v3234
  %s3248 = scalar_lea.vmem %s7, 512
  %v3249 = vld [vmem:[%s3248] sm:$0xf]
  %v3250 = vld [vmem:[%s3248 + $0x4] sm:$0xf]
  %v3251 = vld [vmem:[%s3248 + $0x8] sm:$0xf]
  %v3252 = vld [vmem:[%s3248 + $0xc] sm:$0xf]
  %v3253 = vld [vmem:[%s3248 + $0x10] sm:$0xf]
  %v3254 = vld [vmem:[%s3248 + $0x14] sm:$0xf]
  %v3255 = vld [vmem:[%s3248 + $0x18] sm:$0xf]
  %v3256 = vld [vmem:[%s3248 + $0x1c] sm:$0xf]
  %v3257 = vld [vmem:[%s3248 + $0x20] sm:$0xf]
  %v3258 = vld [vmem:[%s3248 + $0x24] sm:$0xf]
  %v3259 = vld [vmem:[%s3248 + $0x28] sm:$0xf]
  %v3260 = vld [vmem:[%s3248 + $0x2c] sm:$0xf]
  %v3261 = vld [vmem:[%s3248 + $0x30] sm:$0xf]
  %v3262 = vld [vmem:[%s3248 + $0x34] sm:$0xf]
  %v3263 = vld [vmem:[%s3248 + $0x38] sm:$0xf]
  %v3264 = vld [vmem:[%s3248 + $0x3c] sm:$0xf]
  %v3281 = vunpack.c.l.b16 %v3249
  %v3282 = vunpack.c.l.b16 %v3250
  %v3283 = vunpack.c.l.b16 %v3251
  %v3284 = vunpack.c.l.b16 %v3252
  %v3285 = vunpack.c.l.b16 %v3253
  %v3286 = vunpack.c.l.b16 %v3254
  %v3287 = vunpack.c.l.b16 %v3255
  %v3288 = vunpack.c.l.b16 %v3256
  %v3289 = vunpack.c.l.b16 %v3257
  %v3290 = vunpack.c.l.b16 %v3258
  %v3291 = vunpack.c.l.b16 %v3259
  %v3292 = vunpack.c.l.b16 %v3260
  %v3293 = vunpack.c.l.b16 %v3261
  %v3294 = vunpack.c.l.b16 %v3262
  %v3295 = vunpack.c.l.b16 %v3263
  %v3296 = vunpack.c.l.b16 %v3264
  %v3297 = vpack.c.b16 %v3282, %v3281
  %v3298 = vpack.c.b16 %v3284, %v3283
  %v3299 = vpack.c.b16 %v3286, %v3285
  %v3300 = vpack.c.b16 %v3288, %v3287
  %v3301 = vpack.c.b16 %v3290, %v3289
  %v3302 = vpack.c.b16 %v3292, %v3291
  %v3303 = vpack.c.b16 %v3294, %v3293
  %v3304 = vpack.c.b16 %v3296, %v3295
  %3313 = vmatprep.subr.bf16.mxu0 0
  %3314 = vmatpush1.bf16.msra.mxu0 %v3304
  %3315 = vmatprep.subr.bf16.mxu0 0
  %3316 = vmatpush1.bf16.msra.mxu0 %v3303
  %3317 = vmatprep.subr.bf16.mxu0 0
  %3318 = vmatpush1.bf16.msra.mxu0 %v3302
  %3319 = vmatprep.subr.bf16.mxu0 0
  %3320 = vmatpush1.bf16.msra.mxu0 %v3301
  %3321 = vmatprep.subr.bf16.mxu0 0
  %3322 = vmatpush1.bf16.msra.mxu0 %v3300
  %3323 = vmatprep.subr.bf16.mxu0 0
  %3324 = vmatpush1.bf16.msra.mxu0 %v3299
  %3325 = vmatprep.subr.bf16.mxu0 0
  %3326 = vmatpush1.bf16.msra.mxu0 %v3298
  %3327 = vmatprep.subr.bf16.mxu0 0
  %3328 = vmatpush1.bf16.msra.mxu0 %v3297
  %3329 = vmatprep.subr.bf16.mxu0 0
  %3330 = vmatpush2.bf16.msra.mxu0 0
  %3331 = vmatprep.subr.bf16.mxu0 0
  %3332 = vmatpush2.bf16.msra.mxu0 0
  %3333 = vmatprep.subr.bf16.mxu0 0
  %3334 = vmatpush2.bf16.msra.mxu0 0
  %3335 = vmatprep.subr.bf16.mxu0 0
  %3336 = vmatpush2.bf16.msra.mxu0 0
  %3337 = vmatprep.subr.bf16.mxu0 0
  %3338 = vmatpush2.bf16.msra.mxu0 0
  %3339 = vmatprep.subr.bf16.mxu0 0
  %3340 = vmatpush2.bf16.msra.mxu0 0
  %3341 = vmatprep.subr.bf16.mxu0 0
  %3342 = vmatpush2.bf16.msra.mxu0 0
  %3343 = vmatprep.subr.bf16.mxu0 0
  %3344 = vmatpush2.bf16.msra.mxu0 0
  %3345 = vmatprep.mubr.bf16.mxu0 0
  %3346 = vmatmul.mubr.bf16.gmra.mxu0 %v3235
  %v3347 = vpop.f32.mrf.mxu0
  %v3348 = vadd.f32 0.0, %v3347
  %v3349 = vpop.f32.mrf.mxu0
  %v3350 = vpop.f32.mrf.mxu0
  %v3351 = vadd.f32 0.0, %v3350
  %v3352 = vpop.f32.mrf.mxu0
  %3353 = vmatprep.mubr.bf16.mxu0 0
  %3354 = vmatmul.mubr.bf16.gmra.mxu0 %v3236
  %v3355 = vpop.f32.mrf.mxu0
  %v3356 = vadd.f32 0.0, %v3355
  %v3357 = vpop.f32.mrf.mxu0
  %v3358 = vpop.f32.mrf.mxu0
  %v3359 = vadd.f32 0.0, %v3358
  %v3360 = vpop.f32.mrf.mxu0
  %3361 = vmatprep.mubr.bf16.mxu0 0
  %3362 = vmatmul.mubr.bf16.gmra.mxu0 %v3237
  %v3363 = vpop.f32.mrf.mxu0
  %v3364 = vadd.f32 0.0, %v3363
  %v3365 = vpop.f32.mrf.mxu0
  %v3366 = vpop.f32.mrf.mxu0
  %v3367 = vadd.f32 0.0, %v3366
  %v3368 = vpop.f32.mrf.mxu0
  %3369 = vmatprep.mubr.bf16.mxu0 0
  %3370 = vmatmul.mubr.bf16.gmra.mxu0 %v3238
  %v3371 = vpop.f32.mrf.mxu0
  %v3372 = vadd.f32 0.0, %v3371
  %v3373 = vpop.f32.mrf.mxu0
  %v3374 = vpop.f32.mrf.mxu0
  %v3375 = vadd.f32 0.0, %v3374
  %v3376 = vpop.f32.mrf.mxu0
  %3377 = vmatprep.mubr.bf16.mxu0 0
  %3378 = vmatmul.mubr.bf16.gmra.mxu0 %v3239
  %v3379 = vpop.f32.mrf.mxu0
  %v3380 = vadd.f32 0.0, %v3379
  %v3381 = vpop.f32.mrf.mxu0
  %v3382 = vpop.f32.mrf.mxu0
  %v3383 = vadd.f32 0.0, %v3382
  %v3384 = vpop.f32.mrf.mxu0
  %3385 = vmatprep.mubr.bf16.mxu0 0
  %3386 = vmatmul.mubr.bf16.gmra.mxu0 %v3240
  %v3387 = vpop.f32.mrf.mxu0
  %v3388 = vadd.f32 0.0, %v3387
  %v3389 = vpop.f32.mrf.mxu0
  %v3390 = vpop.f32.mrf.mxu0
  %v3391 = vadd.f32 0.0, %v3390
  %v3392 = vpop.f32.mrf.mxu0
  %3393 = vmatprep.mubr.bf16.mxu0 0
  %3394 = vmatmul.mubr.bf16.gmra.mxu0 %v3241
  %v3395 = vpop.f32.mrf.mxu0
  %v3396 = vadd.f32 0.0, %v3395
  %v3397 = vpop.f32.mrf.mxu0
  %v3398 = vpop.f32.mrf.mxu0
  %v3399 = vadd.f32 0.0, %v3398
  %v3400 = vpop.f32.mrf.mxu0
  %3401 = vmatprep.mubr.bf16.mxu0 0
  %3402 = vmatmul.mubr.bf16.gmra.mxu0 %v3242
  %v3403 = vpop.f32.mrf.mxu0
  %v3404 = vadd.f32 0.0, %v3403
  %v3405 = vpop.f32.mrf.mxu0
  %v3406 = vpop.f32.mrf.mxu0
  %v3407 = vadd.f32 0.0, %v3406
  %v3408 = vpop.f32.mrf.mxu0
  %3409 = vmatprep.mubr.bf16.mxu0 0
  %3410 = vmatmul.mubr.bf16.gmra.mxu0 %v3243
  %v3411 = vpop.f32.mrf.mxu0
  %v3412 = vadd.f32 0.0, %v3411
  %v3413 = vpop.f32.mrf.mxu0
  %v3414 = vpop.f32.mrf.mxu0
  %v3415 = vadd.f32 0.0, %v3414
  %v3416 = vpop.f32.mrf.mxu0
  %3417 = vmatprep.mubr.bf16.mxu0 0
  %3418 = vmatmul.mubr.bf16.gmra.mxu0 %v3244
  %v3419 = vpop.f32.mrf.mxu0
  %v3420 = vadd.f32 0.0, %v3419
  %v3421 = vpop.f32.mrf.mxu0
  %v3422 = vpop.f32.mrf.mxu0
  %v3423 = vadd.f32 0.0, %v3422
  %v3424 = vpop.f32.mrf.mxu0
  %3425 = vmatprep.mubr.bf16.mxu0 0
  %3426 = vmatmul.mubr.bf16.gmra.mxu0 %v3245
  %v3427 = vpop.f32.mrf.mxu0
  %v3428 = vadd.f32 0.0, %v3427
  %v3429 = vpop.f32.mrf.mxu0
  %v3430 = vpop.f32.mrf.mxu0
  %v3431 = vadd.f32 0.0, %v3430
  %v3432 = vpop.f32.mrf.mxu0
  %3433 = vmatprep.mubr.bf16.mxu0 0
  %3434 = vmatmul.mubr.bf16.gmra.mxu0 %v3246
  %v3435 = vpop.f32.mrf.mxu0
  %v3436 = vadd.f32 0.0, %v3435
  %v3437 = vpop.f32.mrf.mxu0
  %v3438 = vpop.f32.mrf.mxu0
  %v3439 = vadd.f32 0.0, %v3438
  %v3440 = vpop.f32.mrf.mxu0
  %3441 = vmatprep.mubr.bf16.mxu0 0
  %3442 = vmatmul.mubr.bf16.gmra.mxu0 %v3247
  %v3443 = vpop.f32.mrf.mxu0
  %v3444 = vadd.f32 0.0, %v3443
  %v3445 = vpop.f32.mrf.mxu0
  %v3446 = vpop.f32.mrf.mxu0
  %v3447 = vpop.f32.mrf.mxu0
  %3448 = vdwg.mxu0
  %v3449 = vld [vmem:[#allocation3] sm:$0xff]
  %v3450 = vld [vmem:[#allocation3 + $0x8] sm:$0xff]
  %v3451 = vld [vmem:[#allocation3 + $0x10] sm:$0xff]
  %v3452 = vld [vmem:[#allocation3 + $0x18] sm:$0xff]
  %v3453 = vld [vmem:[#allocation3 + $0x20] sm:$0xff]
  %v3454 = vld [vmem:[#allocation3 + $0x28] sm:$0xff]
  %v3455 = vld [vmem:[#allocation3 + $0x30] sm:$0xff]
  %v3456 = vld [vmem:[#allocation3 + $0x38] sm:$0xff]
  %v3457 = vld [vmem:[#allocation3 + $0x40] sm:$0xff]
  %v3458 = vld [vmem:[#allocation3 + $0x48] sm:$0xff]
  %v3459 = vld [vmem:[#allocation3 + $0x50] sm:$0xff]
  %v3460 = vld [vmem:[#allocation3 + $0x58] sm:$0xff]
  %v3461 = vld [vmem:[#allocation3 + $0x60] sm:$0xff]
  %v3462 = vld [vmem:[#allocation3 + $0x68] sm:$0xff]
  %v3463 = vld [vmem:[#allocation3 + $0x70] sm:$0xff]
  %v3464 = vld [vmem:[#allocation3 + $0x78] sm:$0xff]
  %v3465 = vld [vmem:[#allocation3 + $0x80] sm:$0xff]
  %v3466 = vld [vmem:[#allocation3 + $0x88] sm:$0xff]
  %v3467 = vld [vmem:[#allocation3 + $0x90] sm:$0xff]
  %v3468 = vld [vmem:[#allocation3 + $0x98] sm:$0xff]
  %v3469 = vld [vmem:[#allocation3 + $0xa0] sm:$0xff]
  %v3470 = vld [vmem:[#allocation3 + $0xa8] sm:$0xff]
  %v3471 = vld [vmem:[#allocation3 + $0xb0] sm:$0xff]
  %v3472 = vld [vmem:[#allocation3 + $0xb8] sm:$0xff]
  %v3473 = vld [vmem:[#allocation3 + $0xc0] sm:$0xff]
  %v3474 = vadd.f32 %v3449, %v3348
  %v3475 = vadd.f32 %v3450, %v3351
  %v3476 = vadd.f32 %v3451, %v3356
  %v3477 = vadd.f32 %v3452, %v3359
  %v3478 = vadd.f32 %v3453, %v3364
  %v3479 = vadd.f32 %v3454, %v3367
  %v3480 = vadd.f32 %v3455, %v3372
  %v3481 = vadd.f32 %v3456, %v3375
  %v3482 = vadd.f32 %v3457, %v3380
  %v3483 = vadd.f32 %v3458, %v3383
  %v3484 = vadd.f32 %v3459, %v3388
  %v3485 = vadd.f32 %v3460, %v3391
  %v3486 = vadd.f32 %v3461, %v3396
  %v3487 = vadd.f32 %v3462, %v3399
  %v3488 = vadd.f32 %v3463, %v3404
  %v3489 = vadd.f32 %v3464, %v3407
  %v3490 = vadd.f32 %v3465, %v3412
  %v3491 = vadd.f32 %v3466, %v3415
  %v3492 = vadd.f32 %v3467, %v3420
  %v3493 = vadd.f32 %v3468, %v3423
  %v3494 = vadd.f32 %v3469, %v3428
  %v3495 = vadd.f32 %v3470, %v3431
  %v3496 = vadd.f32 %v3471, %v3436
  %v3497 = vadd.f32 %v3472, %v3439
  %v3498 = vadd.f32 %v3473, %v3444
  %3499 = vst [vmem:[#allocation3] sm:$0xff] %v3474
  %3500 = vst [vmem:[#allocation3 + $0x8] sm:$0xff] %v3475
  %3501 = vst [vmem:[#allocation3 + $0x10] sm:$0xff] %v3476
  %3502 = vst [vmem:[#allocation3 + $0x18] sm:$0xff] %v3477
  %3503 = vst [vmem:[#allocation3 + $0x20] sm:$0xff] %v3478
  %3504 = vst [vmem:[#allocation3 + $0x28] sm:$0xff] %v3479
  %3505 = vst [vmem:[#allocation3 + $0x30] sm:$0xff] %v3480
  %3506 = vst [vmem:[#allocation3 + $0x38] sm:$0xff] %v3481
  %3507 = vst [vmem:[#allocation3 + $0x40] sm:$0xff] %v3482
  %3508 = vst [vmem:[#allocation3 + $0x48] sm:$0xff] %v3483
  %3509 = vst [vmem:[#allocation3 + $0x50] sm:$0xff] %v3484
  %3510 = vst [vmem:[#allocation3 + $0x58] sm:$0xff] %v3485
  %3511 = vst [vmem:[#allocation3 + $0x60] sm:$0xff] %v3486
  %3512 = vst [vmem:[#allocation3 + $0x68] sm:$0xff] %v3487
  %3513 = vst [vmem:[#allocation3 + $0x70] sm:$0xff] %v3488
  %3514 = vst [vmem:[#allocation3 + $0x78] sm:$0xff] %v3489
  %3515 = vst [vmem:[#allocation3 + $0x80] sm:$0xff] %v3490
  %3516 = vst [vmem:[#allocation3 + $0x88] sm:$0xff] %v3491
  %3517 = vst [vmem:[#allocation3 + $0x90] sm:$0xff] %v3492
  %3518 = vst [vmem:[#allocation3 + $0x98] sm:$0xff] %v3493
  %3519 = vst [vmem:[#allocation3 + $0xa0] sm:$0xff] %v3494
  %3520 = vst [vmem:[#allocation3 + $0xa8] sm:$0xff] %v3495
  %3521 = vst [vmem:[#allocation3 + $0xb0] sm:$0xff] %v3496
  %3522 = vst [vmem:[#allocation3 + $0xb8] sm:$0xff] %v3497
  %3523 = vst [vmem:[#allocation3 + $0xc0] sm:$0xff] %v3498
  %v3524 = vld [vmem:[#allocation3] sm:$0xff]
  %v3525 = vld [vmem:[#allocation3 + $0x8] sm:$0xff]
  %v3526 = vld [vmem:[#allocation3 + $0x10] sm:$0xff]
  %v3527 = vld [vmem:[#allocation3 + $0x18] sm:$0xff]
  %v3528 = vld [vmem:[#allocation3 + $0x20] sm:$0xff]
  %v3529 = vld [vmem:[#allocation3 + $0x28] sm:$0xff]
  %v3530 = vld [vmem:[#allocation3 + $0x30] sm:$0xff]
  %v3531 = vld [vmem:[#allocation3 + $0x38] sm:$0xff]
  %v3532 = vld [vmem:[#allocation3 + $0x40] sm:$0xff]
  %v3533 = vld [vmem:[#allocation3 + $0x48] sm:$0xff]
  %v3534 = vld [vmem:[#allocation3 + $0x50] sm:$0xff]
  %v3535 = vld [vmem:[#allocation3 + $0x58] sm:$0xff]
  %v3536 = vld [vmem:[#allocation3 + $0x60] sm:$0xff]
  %v3537 = vld [vmem:[#allocation3 + $0x68] sm:$0xff]
  %v3538 = vld [vmem:[#allocation3 + $0x70] sm:$0xff]
  %v3539 = vld [vmem:[#allocation3 + $0x78] sm:$0xff]
  %v3540 = vld [vmem:[#allocation3 + $0x80] sm:$0xff]
  %v3541 = vld [vmem:[#allocation3 + $0x88] sm:$0xff]
  %v3542 = vld [vmem:[#allocation3 + $0x90] sm:$0xff]
  %v3543 = vld [vmem:[#allocation3 + $0x98] sm:$0xff]
  %v3544 = vld [vmem:[#allocation3 + $0xa0] sm:$0xff]
  %v3545 = vld [vmem:[#allocation3 + $0xa8] sm:$0xff]
  %v3546 = vld [vmem:[#allocation3 + $0xb0] sm:$0xff]
  %v3547 = vld [vmem:[#allocation3 + $0xb8] sm:$0xff]
  %v3548 = vld [vmem:[#allocation3 + $0xc0] sm:$0xff]
  %v3549 = vld [vmem:[%s8] sm:$0x1]
  %v3550 = vld [vmem:[%s9] sm:$0x1]
  %v3551 = vmul.f32 %v3524, %v319
  %v3552 = vmul.f32 %v3525, %v324
  %v3553 = vmul.f32 %v3526, %v329
  %v3554 = vmul.f32 %v3527, %v334
  %v3555 = vmul.f32 %v3528, %v339
  %v3556 = vmul.f32 %v3529, %v344
  %v3557 = vmul.f32 %v3530, %v349
  %v3558 = vmul.f32 %v3531, %v354
  %v3559 = vmul.f32 %v3532, %v359
  %v3560 = vmul.f32 %v3533, %v364
  %v3561 = vmul.f32 %v3534, %v369
  %v3562 = vmul.f32 %v3535, %v374
  %v3563 = vmul.f32 %v3536, %v379
  %v3564 = vmul.f32 %v3537, %v384
  %v3565 = vmul.f32 %v3538, %v389
  %v3566 = vmul.f32 %v3539, %v394
  %v3567 = vmul.f32 %v3540, %v399
  %v3568 = vmul.f32 %v3541, %v404
  %v3569 = vmul.f32 %v3542, %v409
  %v3570 = vmul.f32 %v3543, %v414
  %v3571 = vmul.f32 %v3544, %v419
  %v3572 = vmul.f32 %v3545, %v424
  %v3573 = vmul.f32 %v3546, %v429
  %v3574 = vmul.f32 %v3547, %v434
  %v3575 = vmul.f32 %v3548, %v439
  %v3576 = vadd.f32 %v3551, %v3552
  %v3577 = vadd.f32 %v3576, %v3553
  %v3578 = vadd.f32 %v3577, %v3554
  %v3579 = vadd.f32 %v3578, %v3555
  %v3580 = vadd.f32 %v3579, %v3556
  %v3581 = vadd.f32 %v3580, %v3557
  %v3582 = vadd.f32 %v3581, %v3558
  %v3583 = vadd.f32 %v3582, %v3559
  %v3584 = vadd.f32 %v3583, %v3560
  %v3585 = vadd.f32 %v3584, %v3561
  %v3586 = vadd.f32 %v3585, %v3562
  %v3587 = vadd.f32 %v3586, %v3563
  %v3588 = vadd.f32 %v3587, %v3564
  %v3589 = vadd.f32 %v3588, %v3565
  %v3590 = vadd.f32 %v3589, %v3566
  %v3591 = vadd.f32 %v3590, %v3567
  %v3592 = vadd.f32 %v3591, %v3568
  %v3593 = vadd.f32 %v3592, %v3569
  %v3594 = vadd.f32 %v3593, %v3570
  %v3595 = vadd.f32 %v3594, %v3571
  %v3596 = vadd.f32 %v3595, %v3572
  %v3597 = vadd.f32 %v3596, %v3573
  %v3598 = vadd.f32 %v3597, %v3574
  %v3599 = vadd.f32 %v3598, %v3575
  %v3600 = vrot.slane %v3599, 4
  %v3601 = vadd.f32 %v3599, %v3600
  %v3602 = vrot.slane %v3601, 2
  %v3603 = vadd.f32 %v3601, %v3602
  %v3604 = vrot.slane %v3603, 1
  %v3605 = vadd.f32 %v3603, %v3604
  %v3606 = vmul.f32 %v3605, 0.0078125
  %v3607 = vsub.f32 %v3524, %v3606
  %v3608 = vsub.f32 %v3525, %v3606
  %v3609 = vsub.f32 %v3526, %v3606
  %v3610 = vsub.f32 %v3527, %v3606
  %v3611 = vsub.f32 %v3528, %v3606
  %v3612 = vsub.f32 %v3529, %v3606
  %v3613 = vsub.f32 %v3530, %v3606
  %v3614 = vsub.f32 %v3531, %v3606
  %v3615 = vsub.f32 %v3532, %v3606
  %v3616 = vsub.f32 %v3533, %v3606
  %v3617 = vsub.f32 %v3534, %v3606
  %v3618 = vsub.f32 %v3535, %v3606
  %v3619 = vsub.f32 %v3536, %v3606
  %v3620 = vsub.f32 %v3537, %v3606
  %v3621 = vsub.f32 %v3538, %v3606
  %v3622 = vsub.f32 %v3539, %v3606
  %v3623 = vsub.f32 %v3540, %v3606
  %v3624 = vsub.f32 %v3541, %v3606
  %v3625 = vsub.f32 %v3542, %v3606
  %v3626 = vsub.f32 %v3543, %v3606
  %v3627 = vsub.f32 %v3544, %v3606
  %v3628 = vsub.f32 %v3545, %v3606
  %v3629 = vsub.f32 %v3546, %v3606
  %v3630 = vsub.f32 %v3547, %v3606
  %v3631 = vsub.f32 %v3548, %v3606
  %v3632 = vmul.f32 %v3607, %v319
  %v3633 = vmul.f32 %v3608, %v324
  %v3634 = vmul.f32 %v3609, %v329
  %v3635 = vmul.f32 %v3610, %v334
  %v3636 = vmul.f32 %v3611, %v339
  %v3637 = vmul.f32 %v3612, %v344
  %v3638 = vmul.f32 %v3613, %v349
  %v3639 = vmul.f32 %v3614, %v354
  %v3640 = vmul.f32 %v3615, %v359
  %v3641 = vmul.f32 %v3616, %v364
  %v3642 = vmul.f32 %v3617, %v369
  %v3643 = vmul.f32 %v3618, %v374
  %v3644 = vmul.f32 %v3619, %v379
  %v3645 = vmul.f32 %v3620, %v384
  %v3646 = vmul.f32 %v3621, %v389
  %v3647 = vmul.f32 %v3622, %v394
  %v3648 = vmul.f32 %v3623, %v399
  %v3649 = vmul.f32 %v3624, %v404
  %v3650 = vmul.f32 %v3625, %v409
  %v3651 = vmul.f32 %v3626, %v414
  %v3652 = vmul.f32 %v3627, %v419
  %v3653 = vmul.f32 %v3628, %v424
  %v3654 = vmul.f32 %v3629, %v429
  %v3655 = vmul.f32 %v3630, %v434
  %v3656 = vmul.f32 %v3631, %v439
  %v3657 = vmul.f32 %v3632, %v3632
  %v3658 = vmul.f32 %v3633, %v3633
  %v3659 = vmul.f32 %v3634, %v3634
  %v3660 = vmul.f32 %v3635, %v3635
  %v3661 = vmul.f32 %v3636, %v3636
  %v3662 = vmul.f32 %v3637, %v3637
  %v3663 = vmul.f32 %v3638, %v3638
  %v3664 = vmul.f32 %v3639, %v3639
  %v3665 = vmul.f32 %v3640, %v3640
  %v3666 = vmul.f32 %v3641, %v3641
  %v3667 = vmul.f32 %v3642, %v3642
  %v3668 = vmul.f32 %v3643, %v3643
  %v3669 = vmul.f32 %v3644, %v3644
  %v3670 = vmul.f32 %v3645, %v3645
  %v3671 = vmul.f32 %v3646, %v3646
  %v3672 = vmul.f32 %v3647, %v3647
  %v3673 = vmul.f32 %v3648, %v3648
  %v3674 = vmul.f32 %v3649, %v3649
  %v3675 = vmul.f32 %v3650, %v3650
  %v3676 = vmul.f32 %v3651, %v3651
  %v3677 = vmul.f32 %v3652, %v3652
  %v3678 = vmul.f32 %v3653, %v3653
  %v3679 = vmul.f32 %v3654, %v3654
  %v3680 = vmul.f32 %v3655, %v3655
  %v3681 = vmul.f32 %v3656, %v3656
  %v3682 = vadd.f32 %v3657, %v3658
  %v3683 = vadd.f32 %v3682, %v3659
  %v3684 = vadd.f32 %v3683, %v3660
  %v3685 = vadd.f32 %v3684, %v3661
  %v3686 = vadd.f32 %v3685, %v3662
  %v3687 = vadd.f32 %v3686, %v3663
  %v3688 = vadd.f32 %v3687, %v3664
  %v3689 = vadd.f32 %v3688, %v3665
  %v3690 = vadd.f32 %v3689, %v3666
  %v3691 = vadd.f32 %v3690, %v3667
  %v3692 = vadd.f32 %v3691, %v3668
  %v3693 = vadd.f32 %v3692, %v3669
  %v3694 = vadd.f32 %v3693, %v3670
  %v3695 = vadd.f32 %v3694, %v3671
  %v3696 = vadd.f32 %v3695, %v3672
  %v3697 = vadd.f32 %v3696, %v3673
  %v3698 = vadd.f32 %v3697, %v3674
  %v3699 = vadd.f32 %v3698, %v3675
  %v3700 = vadd.f32 %v3699, %v3676
  %v3701 = vadd.f32 %v3700, %v3677
  %v3702 = vadd.f32 %v3701, %v3678
  %v3703 = vadd.f32 %v3702, %v3679
  %v3704 = vadd.f32 %v3703, %v3680
  %v3705 = vadd.f32 %v3704, %v3681
  %v3706 = vrot.slane %v3705, 4
  %v3707 = vadd.f32 %v3705, %v3706
  %v3708 = vrot.slane %v3707, 2
  %v3709 = vadd.f32 %v3707, %v3708
  %v3710 = vrot.slane %v3709, 1
  %v3711 = vadd.f32 %v3709, %v3710
  %v3712 = vmul.f32 %v3711, 0.0078125
  %v3713 = vadd.f32 %v3712, 1e-05
  %v3714 = vrsqrt.pop %v3713
  %v3715 = vmul.f32 %v3549, %v3714
  %v3716 = vmul.f32 %v3606, %v3715
  %v3717 = vsub.f32 %v3550, %v3716
  %v3719 = vlaneseq
  %v3720 = vshrl.u32 %v3719, 7
  %v3721 = vsub.s32 0, %v3720
  %v3722 = vrot.slane %v3715, %v3721
  %v3724 = vmul.f32 %v3524, %v3722
  %v3725 = vmul.f32 %v3525, %v3722
  %v3726 = vmul.f32 %v3526, %v3722
  %v3727 = vmul.f32 %v3527, %v3722
  %v3728 = vmul.f32 %v3528, %v3722
  %v3729 = vmul.f32 %v3529, %v3722
  %v3730 = vmul.f32 %v3530, %v3722
  %v3731 = vmul.f32 %v3531, %v3722
  %v3732 = vmul.f32 %v3532, %v3722
  %v3733 = vmul.f32 %v3533, %v3722
  %v3734 = vmul.f32 %v3534, %v3722
  %v3735 = vmul.f32 %v3535, %v3722
  %v3736 = vmul.f32 %v3536, %v3722
  %v3737 = vmul.f32 %v3537, %v3722
  %v3738 = vmul.f32 %v3538, %v3722
  %v3739 = vmul.f32 %v3539, %v3722
  %v3740 = vmul.f32 %v3540, %v3722
  %v3741 = vmul.f32 %v3541, %v3722
  %v3742 = vmul.f32 %v3542, %v3722
  %v3743 = vmul.f32 %v3543, %v3722
  %v3744 = vmul.f32 %v3544, %v3722
  %v3745 = vmul.f32 %v3545, %v3722
  %v3746 = vmul.f32 %v3546, %v3722
  %v3747 = vmul.f32 %v3547, %v3722
  %v3748 = vmul.f32 %v3548, %v3722
  %v3750 = vlaneseq
  %v3751 = vshrl.u32 %v3750, 7
  %v3752 = vsub.s32 0, %v3751
  %v3753 = vrot.slane %v3717, %v3752
  %v3755 = vadd.f32 %v3724, %v3753
  %v3756 = vadd.f32 %v3725, %v3753
  %v3757 = vadd.f32 %v3726, %v3753
  %v3758 = vadd.f32 %v3727, %v3753
  %v3759 = vadd.f32 %v3728, %v3753
  %v3760 = vadd.f32 %v3729, %v3753
  %v3761 = vadd.f32 %v3730, %v3753
  %v3762 = vadd.f32 %v3731, %v3753
  %v3763 = vadd.f32 %v3732, %v3753
  %v3764 = vadd.f32 %v3733, %v3753
  %v3765 = vadd.f32 %v3734, %v3753
  %v3766 = vadd.f32 %v3735, %v3753
  %v3767 = vadd.f32 %v3736, %v3753
  %v3768 = vadd.f32 %v3737, %v3753
  %v3769 = vadd.f32 %v3738, %v3753
  %v3770 = vadd.f32 %v3739, %v3753
  %v3771 = vadd.f32 %v3740, %v3753
  %v3772 = vadd.f32 %v3741, %v3753
  %v3773 = vadd.f32 %v3742, %v3753
  %v3774 = vadd.f32 %v3743, %v3753
  %v3775 = vadd.f32 %v3744, %v3753
  %v3776 = vadd.f32 %v3745, %v3753
  %v3777 = vadd.f32 %v3746, %v3753
  %v3778 = vadd.f32 %v3747, %v3753
  %v3779 = vadd.f32 %v3748, %v3753
  %v3780 = vmax.f32 %v3755, 0.0
  %v3781 = vmax.f32 %v3756, 0.0
  %v3782 = vmax.f32 %v3757, 0.0
  %v3783 = vmax.f32 %v3758, 0.0
  %v3784 = vmax.f32 %v3759, 0.0
  %v3785 = vmax.f32 %v3760, 0.0
  %v3786 = vmax.f32 %v3761, 0.0
  %v3787 = vmax.f32 %v3762, 0.0
  %v3788 = vmax.f32 %v3763, 0.0
  %v3789 = vmax.f32 %v3764, 0.0
  %v3790 = vmax.f32 %v3765, 0.0
  %v3791 = vmax.f32 %v3766, 0.0
  %v3792 = vmax.f32 %v3767, 0.0
  %v3793 = vmax.f32 %v3768, 0.0
  %v3794 = vmax.f32 %v3769, 0.0
  %v3795 = vmax.f32 %v3770, 0.0
  %v3796 = vmax.f32 %v3771, 0.0
  %v3797 = vmax.f32 %v3772, 0.0
  %v3798 = vmax.f32 %v3773, 0.0
  %v3799 = vmax.f32 %v3774, 0.0
  %v3800 = vmax.f32 %v3775, 0.0
  %v3801 = vmax.f32 %v3776, 0.0
  %v3802 = vmax.f32 %v3777, 0.0
  %v3803 = vmax.f32 %v3778, 0.0
  %v3804 = vmax.f32 %v3779, 0.0
  %v3805 = vpack.c.bf16 %v3781, %v3780
  %v3806 = vpack.c.bf16 %v3783, %v3782
  %v3807 = vpack.c.bf16 %v3785, %v3784
  %v3808 = vpack.c.bf16 %v3787, %v3786
  %v3809 = vpack.c.bf16 %v3789, %v3788
  %v3810 = vpack.c.bf16 %v3791, %v3790
  %v3811 = vpack.c.bf16 %v3793, %v3792
  %v3812 = vpack.c.bf16 %v3795, %v3794
  %v3813 = vpack.c.bf16 %v3797, %v3796
  %v3814 = vpack.c.bf16 %v3799, %v3798
  %v3815 = vpack.c.bf16 %v3801, %v3800
  %v3816 = vpack.c.bf16 %v3803, %v3802
  %v3817 = vpack.c.bf16 %v3804, %v3804
  %v3818 = vld [vmem:[%s10] sm:$0xf]
  %v3819 = vld [vmem:[%s10 + $0x4] sm:$0xf]
  %v3820 = vld [vmem:[%s10 + $0x8] sm:$0xf]
  %v3821 = vld [vmem:[%s10 + $0xc] sm:$0xf]
  %v3822 = vld [vmem:[%s10 + $0x10] sm:$0xf]
  %v3823 = vld [vmem:[%s10 + $0x14] sm:$0xf]
  %v3824 = vld [vmem:[%s10 + $0x18] sm:$0xf]
  %v3825 = vld [vmem:[%s10 + $0x1c] sm:$0xf]
  %v3826 = vld [vmem:[%s10 + $0x20] sm:$0xf]
  %v3827 = vld [vmem:[%s10 + $0x24] sm:$0xf]
  %v3828 = vld [vmem:[%s10 + $0x28] sm:$0xf]
  %v3829 = vld [vmem:[%s10 + $0x2c] sm:$0xf]
  %v3830 = vld [vmem:[%s10 + $0x30] sm:$0xf]
  %v3831 = vld [vmem:[%s10 + $0x34] sm:$0xf]
  %v3832 = vld [vmem:[%s10 + $0x38] sm:$0xf]
  %v3833 = vld [vmem:[%s10 + $0x3c] sm:$0xf]
  %v3850 = vunpack.c.l.b16 %v3818
  %v3851 = vunpack.c.l.b16 %v3819
  %v3852 = vunpack.c.l.b16 %v3820
  %v3853 = vunpack.c.l.b16 %v3821
  %v3854 = vunpack.c.l.b16 %v3822
  %v3855 = vunpack.c.l.b16 %v3823
  %v3856 = vunpack.c.l.b16 %v3824
  %v3857 = vunpack.c.l.b16 %v3825
  %v3858 = vunpack.c.l.b16 %v3826
  %v3859 = vunpack.c.l.b16 %v3827
  %v3860 = vunpack.c.l.b16 %v3828
  %v3861 = vunpack.c.l.b16 %v3829
  %v3862 = vunpack.c.l.b16 %v3830
  %v3863 = vunpack.c.l.b16 %v3831
  %v3864 = vunpack.c.l.b16 %v3832
  %v3865 = vunpack.c.l.b16 %v3833
  %v3866 = vpack.c.b16 %v3851, %v3850
  %v3867 = vpack.c.b16 %v3853, %v3852
  %v3868 = vpack.c.b16 %v3855, %v3854
  %v3869 = vpack.c.b16 %v3857, %v3856
  %v3870 = vpack.c.b16 %v3859, %v3858
  %v3871 = vpack.c.b16 %v3861, %v3860
  %v3872 = vpack.c.b16 %v3863, %v3862
  %v3873 = vpack.c.b16 %v3865, %v3864
  %3882 = vmatprep.subr.bf16.mxu0 0
  %3883 = vmatpush1.bf16.msra.mxu0 %v3873
  %3884 = vmatprep.subr.bf16.mxu0 0
  %3885 = vmatpush1.bf16.msra.mxu0 %v3872
  %3886 = vmatprep.subr.bf16.mxu0 0
  %3887 = vmatpush1.bf16.msra.mxu0 %v3871
  %3888 = vmatprep.subr.bf16.mxu0 0
  %3889 = vmatpush1.bf16.msra.mxu0 %v3870
  %3890 = vmatprep.subr.bf16.mxu0 0
  %3891 = vmatpush1.bf16.msra.mxu0 %v3869
  %3892 = vmatprep.subr.bf16.mxu0 0
  %3893 = vmatpush1.bf16.msra.mxu0 %v3868
  %3894 = vmatprep.subr.bf16.mxu0 0
  %3895 = vmatpush1.bf16.msra.mxu0 %v3867
  %3896 = vmatprep.subr.bf16.mxu0 0
  %3897 = vmatpush1.bf16.msra.mxu0 %v3866
  %3898 = vmatprep.subr.bf16.mxu0 0
  %3899 = vmatpush2.bf16.msra.mxu0 0
  %3900 = vmatprep.subr.bf16.mxu0 0
  %3901 = vmatpush2.bf16.msra.mxu0 0
  %3902 = vmatprep.subr.bf16.mxu0 0
  %3903 = vmatpush2.bf16.msra.mxu0 0
  %3904 = vmatprep.subr.bf16.mxu0 0
  %3905 = vmatpush2.bf16.msra.mxu0 0
  %3906 = vmatprep.subr.bf16.mxu0 0
  %3907 = vmatpush2.bf16.msra.mxu0 0
  %3908 = vmatprep.subr.bf16.mxu0 0
  %3909 = vmatpush2.bf16.msra.mxu0 0
  %3910 = vmatprep.subr.bf16.mxu0 0
  %3911 = vmatpush2.bf16.msra.mxu0 0
  %3912 = vmatprep.subr.bf16.mxu0 0
  %3913 = vmatpush2.bf16.msra.mxu0 0
  %3914 = vmatprep.mubr.bf16.mxu0 0
  %3915 = vmatmul.mubr.bf16.gmra.mxu0 %v3805
  %v3916 = vpop.f32.mrf.mxu0
  %v3917 = vadd.f32 0.0, %v3916
  %v3918 = vpop.f32.mrf.mxu0
  %v3919 = vpop.f32.mrf.mxu0
  %v3920 = vadd.f32 0.0, %v3919
  %v3921 = vpop.f32.mrf.mxu0
  %3922 = vmatprep.mubr.bf16.mxu0 0
  %3923 = vmatmul.mubr.bf16.gmra.mxu0 %v3806
  %v3924 = vpop.f32.mrf.mxu0
  %v3925 = vadd.f32 0.0, %v3924
  %v3926 = vpop.f32.mrf.mxu0
  %v3927 = vpop.f32.mrf.mxu0
  %v3928 = vadd.f32 0.0, %v3927
  %v3929 = vpop.f32.mrf.mxu0
  %3930 = vmatprep.mubr.bf16.mxu0 0
  %3931 = vmatmul.mubr.bf16.gmra.mxu0 %v3807
  %v3932 = vpop.f32.mrf.mxu0
  %v3933 = vadd.f32 0.0, %v3932
  %v3934 = vpop.f32.mrf.mxu0
  %v3935 = vpop.f32.mrf.mxu0
  %v3936 = vadd.f32 0.0, %v3935
  %v3937 = vpop.f32.mrf.mxu0
  %3938 = vmatprep.mubr.bf16.mxu0 0
  %3939 = vmatmul.mubr.bf16.gmra.mxu0 %v3808
  %v3940 = vpop.f32.mrf.mxu0
  %v3941 = vadd.f32 0.0, %v3940
  %v3942 = vpop.f32.mrf.mxu0
  %v3943 = vpop.f32.mrf.mxu0
  %v3944 = vadd.f32 0.0, %v3943
  %v3945 = vpop.f32.mrf.mxu0
  %3946 = vmatprep.mubr.bf16.mxu0 0
  %3947 = vmatmul.mubr.bf16.gmra.mxu0 %v3809
  %v3948 = vpop.f32.mrf.mxu0
  %v3949 = vadd.f32 0.0, %v3948
  %v3950 = vpop.f32.mrf.mxu0
  %v3951 = vpop.f32.mrf.mxu0
  %v3952 = vadd.f32 0.0, %v3951
  %v3953 = vpop.f32.mrf.mxu0
  %3954 = vmatprep.mubr.bf16.mxu0 0
  %3955 = vmatmul.mubr.bf16.gmra.mxu0 %v3810
  %v3956 = vpop.f32.mrf.mxu0
  %v3957 = vadd.f32 0.0, %v3956
  %v3958 = vpop.f32.mrf.mxu0
  %v3959 = vpop.f32.mrf.mxu0
  %v3960 = vadd.f32 0.0, %v3959
  %v3961 = vpop.f32.mrf.mxu0
  %3962 = vmatprep.mubr.bf16.mxu0 0
  %3963 = vmatmul.mubr.bf16.gmra.mxu0 %v3811
  %v3964 = vpop.f32.mrf.mxu0
  %v3965 = vadd.f32 0.0, %v3964
  %v3966 = vpop.f32.mrf.mxu0
  %v3967 = vpop.f32.mrf.mxu0
  %v3968 = vadd.f32 0.0, %v3967
  %v3969 = vpop.f32.mrf.mxu0
  %3970 = vmatprep.mubr.bf16.mxu0 0
  %3971 = vmatmul.mubr.bf16.gmra.mxu0 %v3812
  %v3972 = vpop.f32.mrf.mxu0
  %v3973 = vadd.f32 0.0, %v3972
  %v3974 = vpop.f32.mrf.mxu0
  %v3975 = vpop.f32.mrf.mxu0
  %v3976 = vadd.f32 0.0, %v3975
  %v3977 = vpop.f32.mrf.mxu0
  %3978 = vmatprep.mubr.bf16.mxu0 0
  %3979 = vmatmul.mubr.bf16.gmra.mxu0 %v3813
  %v3980 = vpop.f32.mrf.mxu0
  %v3981 = vadd.f32 0.0, %v3980
  %v3982 = vpop.f32.mrf.mxu0
  %v3983 = vpop.f32.mrf.mxu0
  %v3984 = vadd.f32 0.0, %v3983
  %v3985 = vpop.f32.mrf.mxu0
  %3986 = vmatprep.mubr.bf16.mxu0 0
  %3987 = vmatmul.mubr.bf16.gmra.mxu0 %v3814
  %v3988 = vpop.f32.mrf.mxu0
  %v3989 = vadd.f32 0.0, %v3988
  %v3990 = vpop.f32.mrf.mxu0
  %v3991 = vpop.f32.mrf.mxu0
  %v3992 = vadd.f32 0.0, %v3991
  %v3993 = vpop.f32.mrf.mxu0
  %3994 = vmatprep.mubr.bf16.mxu0 0
  %3995 = vmatmul.mubr.bf16.gmra.mxu0 %v3815
  %v3996 = vpop.f32.mrf.mxu0
  %v3997 = vadd.f32 0.0, %v3996
  %v3998 = vpop.f32.mrf.mxu0
  %v3999 = vpop.f32.mrf.mxu0
  %v4000 = vadd.f32 0.0, %v3999
  %v4001 = vpop.f32.mrf.mxu0
  %4002 = vmatprep.mubr.bf16.mxu0 0
  %4003 = vmatmul.mubr.bf16.gmra.mxu0 %v3816
  %v4004 = vpop.f32.mrf.mxu0
  %v4005 = vadd.f32 0.0, %v4004
  %v4006 = vpop.f32.mrf.mxu0
  %v4007 = vpop.f32.mrf.mxu0
  %v4008 = vadd.f32 0.0, %v4007
  %v4009 = vpop.f32.mrf.mxu0
  %4010 = vmatprep.mubr.bf16.mxu0 0
  %4011 = vmatmul.mubr.bf16.gmra.mxu0 %v3817
  %v4012 = vpop.f32.mrf.mxu0
  %v4013 = vadd.f32 0.0, %v4012
  %v4014 = vpop.f32.mrf.mxu0
  %v4015 = vpop.f32.mrf.mxu0
  %v4016 = vpop.f32.mrf.mxu0
  %4017 = vdwg.mxu0
  %v4018 = vld [vmem:[%s11] sm:$0x1]
  %v4019 = vld [vmem:[%s12] sm:$0x1]
  %v4020 = vmul.f32 %v3917, %v319
  %v4021 = vmul.f32 %v3920, %v324
  %v4022 = vmul.f32 %v3925, %v329
  %v4023 = vmul.f32 %v3928, %v334
  %v4024 = vmul.f32 %v3933, %v339
  %v4025 = vmul.f32 %v3936, %v344
  %v4026 = vmul.f32 %v3941, %v349
  %v4027 = vmul.f32 %v3944, %v354
  %v4028 = vmul.f32 %v3949, %v359
  %v4029 = vmul.f32 %v3952, %v364
  %v4030 = vmul.f32 %v3957, %v369
  %v4031 = vmul.f32 %v3960, %v374
  %v4032 = vmul.f32 %v3965, %v379
  %v4033 = vmul.f32 %v3968, %v384
  %v4034 = vmul.f32 %v3973, %v389
  %v4035 = vmul.f32 %v3976, %v394
  %v4036 = vmul.f32 %v3981, %v399
  %v4037 = vmul.f32 %v3984, %v404
  %v4038 = vmul.f32 %v3989, %v409
  %v4039 = vmul.f32 %v3992, %v414
  %v4040 = vmul.f32 %v3997, %v419
  %v4041 = vmul.f32 %v4000, %v424
  %v4042 = vmul.f32 %v4005, %v429
  %v4043 = vmul.f32 %v4008, %v434
  %v4044 = vmul.f32 %v4013, %v439
  %v4045 = vadd.f32 %v4020, %v4021
  %v4046 = vadd.f32 %v4045, %v4022
  %v4047 = vadd.f32 %v4046, %v4023
  %v4048 = vadd.f32 %v4047, %v4024
  %v4049 = vadd.f32 %v4048, %v4025
  %v4050 = vadd.f32 %v4049, %v4026
  %v4051 = vadd.f32 %v4050, %v4027
  %v4052 = vadd.f32 %v4051, %v4028
  %v4053 = vadd.f32 %v4052, %v4029
  %v4054 = vadd.f32 %v4053, %v4030
  %v4055 = vadd.f32 %v4054, %v4031
  %v4056 = vadd.f32 %v4055, %v4032
  %v4057 = vadd.f32 %v4056, %v4033
  %v4058 = vadd.f32 %v4057, %v4034
  %v4059 = vadd.f32 %v4058, %v4035
  %v4060 = vadd.f32 %v4059, %v4036
  %v4061 = vadd.f32 %v4060, %v4037
  %v4062 = vadd.f32 %v4061, %v4038
  %v4063 = vadd.f32 %v4062, %v4039
  %v4064 = vadd.f32 %v4063, %v4040
  %v4065 = vadd.f32 %v4064, %v4041
  %v4066 = vadd.f32 %v4065, %v4042
  %v4067 = vadd.f32 %v4066, %v4043
  %v4068 = vadd.f32 %v4067, %v4044
  %v4069 = vrot.slane %v4068, 4
  %v4070 = vadd.f32 %v4068, %v4069
  %v4071 = vrot.slane %v4070, 2
  %v4072 = vadd.f32 %v4070, %v4071
  %v4073 = vrot.slane %v4072, 1
  %v4074 = vadd.f32 %v4072, %v4073
  %v4075 = vmul.f32 %v4074, 0.0078125
  %v4076 = vsub.f32 %v3917, %v4075
  %v4077 = vsub.f32 %v3920, %v4075
  %v4078 = vsub.f32 %v3925, %v4075
  %v4079 = vsub.f32 %v3928, %v4075
  %v4080 = vsub.f32 %v3933, %v4075
  %v4081 = vsub.f32 %v3936, %v4075
  %v4082 = vsub.f32 %v3941, %v4075
  %v4083 = vsub.f32 %v3944, %v4075
  %v4084 = vsub.f32 %v3949, %v4075
  %v4085 = vsub.f32 %v3952, %v4075
  %v4086 = vsub.f32 %v3957, %v4075
  %v4087 = vsub.f32 %v3960, %v4075
  %v4088 = vsub.f32 %v3965, %v4075
  %v4089 = vsub.f32 %v3968, %v4075
  %v4090 = vsub.f32 %v3973, %v4075
  %v4091 = vsub.f32 %v3976, %v4075
  %v4092 = vsub.f32 %v3981, %v4075
  %v4093 = vsub.f32 %v3984, %v4075
  %v4094 = vsub.f32 %v3989, %v4075
  %v4095 = vsub.f32 %v3992, %v4075
  %v4096 = vsub.f32 %v3997, %v4075
  %v4097 = vsub.f32 %v4000, %v4075
  %v4098 = vsub.f32 %v4005, %v4075
  %v4099 = vsub.f32 %v4008, %v4075
  %v4100 = vsub.f32 %v4013, %v4075
  %v4101 = vmul.f32 %v4076, %v319
  %v4102 = vmul.f32 %v4077, %v324
  %v4103 = vmul.f32 %v4078, %v329
  %v4104 = vmul.f32 %v4079, %v334
  %v4105 = vmul.f32 %v4080, %v339
  %v4106 = vmul.f32 %v4081, %v344
  %v4107 = vmul.f32 %v4082, %v349
  %v4108 = vmul.f32 %v4083, %v354
  %v4109 = vmul.f32 %v4084, %v359
  %v4110 = vmul.f32 %v4085, %v364
  %v4111 = vmul.f32 %v4086, %v369
  %v4112 = vmul.f32 %v4087, %v374
  %v4113 = vmul.f32 %v4088, %v379
  %v4114 = vmul.f32 %v4089, %v384
  %v4115 = vmul.f32 %v4090, %v389
  %v4116 = vmul.f32 %v4091, %v394
  %v4117 = vmul.f32 %v4092, %v399
  %v4118 = vmul.f32 %v4093, %v404
  %v4119 = vmul.f32 %v4094, %v409
  %v4120 = vmul.f32 %v4095, %v414
  %v4121 = vmul.f32 %v4096, %v419
  %v4122 = vmul.f32 %v4097, %v424
  %v4123 = vmul.f32 %v4098, %v429
  %v4124 = vmul.f32 %v4099, %v434
  %v4125 = vmul.f32 %v4100, %v439
  %v4126 = vmul.f32 %v4101, %v4101
  %v4127 = vmul.f32 %v4102, %v4102
  %v4128 = vmul.f32 %v4103, %v4103
  %v4129 = vmul.f32 %v4104, %v4104
  %v4130 = vmul.f32 %v4105, %v4105
  %v4131 = vmul.f32 %v4106, %v4106
  %v4132 = vmul.f32 %v4107, %v4107
  %v4133 = vmul.f32 %v4108, %v4108
  %v4134 = vmul.f32 %v4109, %v4109
  %v4135 = vmul.f32 %v4110, %v4110
  %v4136 = vmul.f32 %v4111, %v4111
  %v4137 = vmul.f32 %v4112, %v4112
  %v4138 = vmul.f32 %v4113, %v4113
  %v4139 = vmul.f32 %v4114, %v4114
  %v4140 = vmul.f32 %v4115, %v4115
  %v4141 = vmul.f32 %v4116, %v4116
  %v4142 = vmul.f32 %v4117, %v4117
  %v4143 = vmul.f32 %v4118, %v4118
  %v4144 = vmul.f32 %v4119, %v4119
  %v4145 = vmul.f32 %v4120, %v4120
  %v4146 = vmul.f32 %v4121, %v4121
  %v4147 = vmul.f32 %v4122, %v4122
  %v4148 = vmul.f32 %v4123, %v4123
  %v4149 = vmul.f32 %v4124, %v4124
  %v4150 = vmul.f32 %v4125, %v4125
  %v4151 = vadd.f32 %v4126, %v4127
  %v4152 = vadd.f32 %v4151, %v4128
  %v4153 = vadd.f32 %v4152, %v4129
  %v4154 = vadd.f32 %v4153, %v4130
  %v4155 = vadd.f32 %v4154, %v4131
  %v4156 = vadd.f32 %v4155, %v4132
  %v4157 = vadd.f32 %v4156, %v4133
  %v4158 = vadd.f32 %v4157, %v4134
  %v4159 = vadd.f32 %v4158, %v4135
  %v4160 = vadd.f32 %v4159, %v4136
  %v4161 = vadd.f32 %v4160, %v4137
  %v4162 = vadd.f32 %v4161, %v4138
  %v4163 = vadd.f32 %v4162, %v4139
  %v4164 = vadd.f32 %v4163, %v4140
  %v4165 = vadd.f32 %v4164, %v4141
  %v4166 = vadd.f32 %v4165, %v4142
  %v4167 = vadd.f32 %v4166, %v4143
  %v4168 = vadd.f32 %v4167, %v4144
  %v4169 = vadd.f32 %v4168, %v4145
  %v4170 = vadd.f32 %v4169, %v4146
  %v4171 = vadd.f32 %v4170, %v4147
  %v4172 = vadd.f32 %v4171, %v4148
  %v4173 = vadd.f32 %v4172, %v4149
  %v4174 = vadd.f32 %v4173, %v4150
  %v4175 = vrot.slane %v4174, 4
  %v4176 = vadd.f32 %v4174, %v4175
  %v4177 = vrot.slane %v4176, 2
  %v4178 = vadd.f32 %v4176, %v4177
  %v4179 = vrot.slane %v4178, 1
  %v4180 = vadd.f32 %v4178, %v4179
  %v4181 = vmul.f32 %v4180, 0.0078125
  %v4182 = vadd.f32 %v4181, 1e-05
  %v4183 = vrsqrt.pop %v4182
  %v4184 = vmul.f32 %v4018, %v4183
  %v4185 = vmul.f32 %v4075, %v4184
  %v4186 = vsub.f32 %v4019, %v4185
  %v4188 = vlaneseq
  %v4189 = vshrl.u32 %v4188, 7
  %v4190 = vsub.s32 0, %v4189
  %v4191 = vrot.slane %v4184, %v4190
  %v4193 = vmul.f32 %v3917, %v4191
  %v4194 = vmul.f32 %v3920, %v4191
  %v4195 = vmul.f32 %v3925, %v4191
  %v4196 = vmul.f32 %v3928, %v4191
  %v4197 = vmul.f32 %v3933, %v4191
  %v4198 = vmul.f32 %v3936, %v4191
  %v4199 = vmul.f32 %v3941, %v4191
  %v4200 = vmul.f32 %v3944, %v4191
  %v4201 = vmul.f32 %v3949, %v4191
  %v4202 = vmul.f32 %v3952, %v4191
  %v4203 = vmul.f32 %v3957, %v4191
  %v4204 = vmul.f32 %v3960, %v4191
  %v4205 = vmul.f32 %v3965, %v4191
  %v4206 = vmul.f32 %v3968, %v4191
  %v4207 = vmul.f32 %v3973, %v4191
  %v4208 = vmul.f32 %v3976, %v4191
  %v4209 = vmul.f32 %v3981, %v4191
  %v4210 = vmul.f32 %v3984, %v4191
  %v4211 = vmul.f32 %v3989, %v4191
  %v4212 = vmul.f32 %v3992, %v4191
  %v4213 = vmul.f32 %v3997, %v4191
  %v4214 = vmul.f32 %v4000, %v4191
  %v4215 = vmul.f32 %v4005, %v4191
  %v4216 = vmul.f32 %v4008, %v4191
  %v4217 = vmul.f32 %v4013, %v4191
  %v4219 = vlaneseq
  %v4220 = vshrl.u32 %v4219, 7
  %v4221 = vsub.s32 0, %v4220
  %v4222 = vrot.slane %v4186, %v4221
  %v4224 = vadd.f32 %v4193, %v4222
  %v4225 = vadd.f32 %v4194, %v4222
  %v4226 = vadd.f32 %v4195, %v4222
  %v4227 = vadd.f32 %v4196, %v4222
  %v4228 = vadd.f32 %v4197, %v4222
  %v4229 = vadd.f32 %v4198, %v4222
  %v4230 = vadd.f32 %v4199, %v4222
  %v4231 = vadd.f32 %v4200, %v4222
  %v4232 = vadd.f32 %v4201, %v4222
  %v4233 = vadd.f32 %v4202, %v4222
  %v4234 = vadd.f32 %v4203, %v4222
  %v4235 = vadd.f32 %v4204, %v4222
  %v4236 = vadd.f32 %v4205, %v4222
  %v4237 = vadd.f32 %v4206, %v4222
  %v4238 = vadd.f32 %v4207, %v4222
  %v4239 = vadd.f32 %v4208, %v4222
  %v4240 = vadd.f32 %v4209, %v4222
  %v4241 = vadd.f32 %v4210, %v4222
  %v4242 = vadd.f32 %v4211, %v4222
  %v4243 = vadd.f32 %v4212, %v4222
  %v4244 = vadd.f32 %v4213, %v4222
  %v4245 = vadd.f32 %v4214, %v4222
  %v4246 = vadd.f32 %v4215, %v4222
  %v4247 = vadd.f32 %v4216, %v4222
  %v4248 = vadd.f32 %v4217, %v4222
  %v4249 = vld [vmem:[%s2] sm:$0xf]
  %v4252 = vunpack.c.l.s4 1983009808
  %v4253 = vunpack.c.0.s8 %v4252
  %v4254 = vlaneseq
  %v4255 = vshrl.u32 %v4254, 7
  %v4256 = vsub.s32 %v4253, %v4255
  %v4257 = vrot.slane %v4249, %v4256
  %v4258 = vcombine.high %v4257, %v4257
  %vm4260 = vcmask 588800
  %v4261 = vsel %vm4260, %v4258, 0
  %4263 = vmatprep.subr.mxu0 0.0
  %4264 = vmatpush1.msra.mxu0 %v4239
  %4265 = vmatprep.subr.mxu0 0.0
  %4266 = vmatpush1.msra.mxu0 %v4238
  %4267 = vmatprep.subr.mxu0 0.0
  %4268 = vmatpush1.msra.mxu0 %v4237
  %4269 = vmatprep.subr.mxu0 0.0
  %4270 = vmatpush1.msra.mxu0 %v4236
  %4271 = vmatprep.subr.mxu0 0.0
  %4272 = vmatpush1.msra.mxu0 %v4235
  %4273 = vmatprep.subr.mxu0 0.0
  %4274 = vmatpush1.msra.mxu0 %v4234
  %4275 = vmatprep.subr.mxu0 0.0
  %4276 = vmatpush1.msra.mxu0 %v4233
  %4277 = vmatprep.subr.mxu0 0.0
  %4278 = vmatpush1.msra.mxu0 %v4232
  %4279 = vmatprep.subr.mxu0 0.0
  %4280 = vmatpush1.msra.mxu0 %v4231
  %4281 = vmatprep.subr.mxu0 0.0
  %4282 = vmatpush1.msra.mxu0 %v4230
  %4283 = vmatprep.subr.mxu0 0.0
  %4284 = vmatpush1.msra.mxu0 %v4229
  %4285 = vmatprep.subr.mxu0 0.0
  %4286 = vmatpush1.msra.mxu0 %v4228
  %4287 = vmatprep.subr.mxu0 0.0
  %4288 = vmatpush1.msra.mxu0 %v4227
  %4289 = vmatprep.subr.mxu0 0.0
  %4290 = vmatpush1.msra.mxu0 %v4226
  %4291 = vmatprep.subr.mxu0 0.0
  %4292 = vmatpush1.msra.mxu0 %v4225
  %4293 = vmatprep.subr.mxu0 0.0
  %4294 = vmatpush1.msra.mxu0 %v4224
  %4295 = vmatprep.subr.mxu0 0.0
  %4296 = vmatpush2.msra.mxu0 0.0
  %4297 = vmatprep.subr.mxu0 0.0
  %4298 = vmatpush2.msra.mxu0 0.0
  %4299 = vmatprep.subr.mxu0 0.0
  %4300 = vmatpush2.msra.mxu0 0.0
  %4301 = vmatprep.subr.mxu0 0.0
  %4302 = vmatpush2.msra.mxu0 0.0
  %4303 = vmatprep.subr.mxu0 0.0
  %4304 = vmatpush2.msra.mxu0 0.0
  %4305 = vmatprep.subr.mxu0 0.0
  %4306 = vmatpush2.msra.mxu0 0.0
  %4307 = vmatprep.subr.mxu0 0.0
  %4308 = vmatpush2.msra.mxu0 0.0
  %4309 = vmatprep.subr.mxu0 0.0
  %4310 = vmatpush2.msra.mxu0 %v4248
  %4311 = vmatprep.subr.mxu0 0.0
  %4312 = vmatpush2.msra.mxu0 %v4247
  %4313 = vmatprep.subr.mxu0 0.0
  %4314 = vmatpush2.msra.mxu0 %v4246
  %4315 = vmatprep.subr.mxu0 0.0
  %4316 = vmatpush2.msra.mxu0 %v4245
  %4317 = vmatprep.subr.mxu0 0.0
  %4318 = vmatpush2.msra.mxu0 %v4244
  %4319 = vmatprep.subr.mxu0 0.0
  %4320 = vmatpush2.msra.mxu0 %v4243
  %4321 = vmatprep.subr.mxu0 0.0
  %4322 = vmatpush2.msra.mxu0 %v4242
  %4323 = vmatprep.subr.mxu0 0.0
  %4324 = vmatpush2.msra.mxu0 %v4241
  %4325 = vmatprep.subr.mxu0 0.0
  %4326 = vmatpush2.msra.mxu0 %v4240
  %4327 = vmatprep.mubr.f32.mxu0 %v4261
  %4328 = vmatmul.mubr.f32.gmra.mxu0 %v4257
  %v4329 = vpop.f32.mrf.mxu0
  %v4330 = vadd.f32 0.0, %v4329
  %v4331 = vpop.f32.mrf.mxu0
  %4332 = vdwg.mxu0
  %v4333 = vld [vmem:[%s13] sm:$0xff]
  %v4334 = vld [vmem:[%s13 + $0x8] sm:$0xff]
  %v4335 = vld [vmem:[%s13 + $0x10] sm:$0xff]
  %v4336 = vld [vmem:[%s13 + $0x18] sm:$0xff]
  %v4337 = vld [vmem:[%s13 + $0x20] sm:$0xff]
  %v4338 = vld [vmem:[%s13 + $0x28] sm:$0xff]
  %v4339 = vld [vmem:[%s13 + $0x30] sm:$0xff]
  %v4340 = vld [vmem:[%s13 + $0x38] sm:$0xff]
  %v4341 = vld [vmem:[%s13 + $0x40] sm:$0xff]
  %v4342 = vld [vmem:[%s13 + $0x48] sm:$0xff]
  %v4343 = vld [vmem:[%s13 + $0x50] sm:$0xff]
  %v4344 = vld [vmem:[%s13 + $0x58] sm:$0xff]
  %v4345 = vld [vmem:[%s13 + $0x60] sm:$0xff]
  %v4346 = vld [vmem:[%s13 + $0x68] sm:$0xff]
  %v4347 = vld [vmem:[%s13 + $0x70] sm:$0xff]
  %v4348 = vld [vmem:[%s13 + $0x78] sm:$0xff]
  %4349 = vmatprep.subr.mxu0 0.0
  %4350 = vmatpush1.msra.mxu0 %v4348
  %4351 = vmatprep.subr.mxu0 0.0
  %4352 = vmatpush1.msra.mxu0 %v4347
  %4353 = vmatprep.subr.mxu0 0.0
  %4354 = vmatpush1.msra.mxu0 %v4346
  %4355 = vmatprep.subr.mxu0 0.0
  %4356 = vmatpush1.msra.mxu0 %v4345
  %4357 = vmatprep.subr.mxu0 0.0
  %4358 = vmatpush1.msra.mxu0 %v4344
  %4359 = vmatprep.subr.mxu0 0.0
  %4360 = vmatpush1.msra.mxu0 %v4343
  %4361 = vmatprep.subr.mxu0 0.0
  %4362 = vmatpush1.msra.mxu0 %v4342
  %4363 = vmatprep.subr.mxu0 0.0
  %4364 = vmatpush1.msra.mxu0 %v4341
  %4365 = vmatprep.subr.mxu0 0.0
  %4366 = vmatpush1.msra.mxu0 %v4340
  %4367 = vmatprep.subr.mxu0 0.0
  %4368 = vmatpush1.msra.mxu0 %v4339
  %4369 = vmatprep.subr.mxu0 0.0
  %4370 = vmatpush1.msra.mxu0 %v4338
  %4371 = vmatprep.subr.mxu0 0.0
  %4372 = vmatpush1.msra.mxu0 %v4337
  %4373 = vmatprep.subr.mxu0 0.0
  %4374 = vmatpush1.msra.mxu0 %v4336
  %4375 = vmatprep.subr.mxu0 0.0
  %4376 = vmatpush1.msra.mxu0 %v4335
  %4377 = vmatprep.subr.mxu0 0.0
  %4378 = vmatpush1.msra.mxu0 %v4334
  %4379 = vmatprep.subr.mxu0 0.0
  %4380 = vmatpush1.msra.mxu0 %v4333
  %4381 = vmatprep.subr.mxu0 0.0
  %4382 = vmatpush2.msra.mxu0 0.0
  %4383 = vmatprep.subr.mxu0 0.0
  %4384 = vmatpush2.msra.mxu0 0.0
  %4385 = vmatprep.subr.mxu0 0.0
  %4386 = vmatpush2.msra.mxu0 0.0
  %4387 = vmatprep.subr.mxu0 0.0
  %4388 = vmatpush2.msra.mxu0 0.0
  %4389 = vmatprep.subr.mxu0 0.0
  %4390 = vmatpush2.msra.mxu0 0.0
  %4391 = vmatprep.subr.mxu0 0.0
  %4392 = vmatpush2.msra.mxu0 0.0
  %4393 = vmatprep.subr.mxu0 0.0
  %4394 = vmatpush2.msra.mxu0 0.0
  %4395 = vmatprep.subr.mxu0 0.0
  %4396 = vmatpush2.msra.mxu0 0.0
  %4397 = vmatprep.subr.mxu0 0.0
  %4398 = vmatpush2.msra.mxu0 0.0
  %4399 = vmatprep.subr.mxu0 0.0
  %4400 = vmatpush2.msra.mxu0 0.0
  %4401 = vmatprep.subr.mxu0 0.0
  %4402 = vmatpush2.msra.mxu0 0.0
  %4403 = vmatprep.subr.mxu0 0.0
  %4404 = vmatpush2.msra.mxu0 0.0
  %4405 = vmatprep.subr.mxu0 0.0
  %4406 = vmatpush2.msra.mxu0 0.0
  %4407 = vmatprep.subr.mxu0 0.0
  %4408 = vmatpush2.msra.mxu0 0.0
  %4409 = vmatprep.subr.mxu0 0.0
  %4410 = vmatpush2.msra.mxu0 0.0
  %4411 = vmatprep.subr.mxu0 0.0
  %4412 = vmatpush2.msra.mxu0 0.0
  %4413 = vmatprep.mubr.f32.mxu0 0.0
  %4414 = vmatmul.mubr.f32.gmra.mxu0 %v4330
  %v4415 = vpop.f32.mrf.mxu0
  %v4416 = vadd.f32 0.0, %v4415
  %v4417 = vpop.f32.mrf.mxu0
  %4418 = vdwg.mxu0
  %v4419 = vmax.f32 %v4416, 0.0
  %v4420 = vld [vmem:[%s14] sm:$0xff]
  %v4421 = vld [vmem:[%s14 + $0x8] sm:$0xff]
  %v4422 = vld [vmem:[%s14 + $0x10] sm:$0xff]
  %v4423 = vld [vmem:[%s14 + $0x18] sm:$0xff]
  %v4424 = vld [vmem:[%s14 + $0x20] sm:$0xff]
  %v4425 = vld [vmem:[%s14 + $0x28] sm:$0xff]
  %v4426 = vld [vmem:[%s14 + $0x30] sm:$0xff]
  %v4427 = vld [vmem:[%s14 + $0x38] sm:$0xff]
  %v4428 = vld [vmem:[%s14 + $0x40] sm:$0xff]
  %v4429 = vld [vmem:[%s14 + $0x48] sm:$0xff]
  %v4430 = vld [vmem:[%s14 + $0x50] sm:$0xff]
  %v4431 = vld [vmem:[%s14 + $0x58] sm:$0xff]
  %v4432 = vld [vmem:[%s14 + $0x60] sm:$0xff]
  %v4433 = vld [vmem:[%s14 + $0x68] sm:$0xff]
  %v4434 = vld [vmem:[%s14 + $0x70] sm:$0xff]
  %v4435 = vld [vmem:[%s14 + $0x78] sm:$0xff]
  %4436 = vmatprep.subr.mxu0 0.0
  %4437 = vmatpush1.msra.mxu0 %v4435
  %4438 = vmatprep.subr.mxu0 0.0
  %4439 = vmatpush1.msra.mxu0 %v4434
  %4440 = vmatprep.subr.mxu0 0.0
  %4441 = vmatpush1.msra.mxu0 %v4433
  %4442 = vmatprep.subr.mxu0 0.0
  %4443 = vmatpush1.msra.mxu0 %v4432
  %4444 = vmatprep.subr.mxu0 0.0
  %4445 = vmatpush1.msra.mxu0 %v4431
  %4446 = vmatprep.subr.mxu0 0.0
  %4447 = vmatpush1.msra.mxu0 %v4430
  %4448 = vmatprep.subr.mxu0 0.0
  %4449 = vmatpush1.msra.mxu0 %v4429
  %4450 = vmatprep.subr.mxu0 0.0
  %4451 = vmatpush1.msra.mxu0 %v4428
  %4452 = vmatprep.subr.mxu0 0.0
  %4453 = vmatpush1.msra.mxu0 %v4427
  %4454 = vmatprep.subr.mxu0 0.0
  %4455 = vmatpush1.msra.mxu0 %v4426
  %4456 = vmatprep.subr.mxu0 0.0
  %4457 = vmatpush1.msra.mxu0 %v4425
  %4458 = vmatprep.subr.mxu0 0.0
  %4459 = vmatpush1.msra.mxu0 %v4424
  %4460 = vmatprep.subr.mxu0 0.0
  %4461 = vmatpush1.msra.mxu0 %v4423
  %4462 = vmatprep.subr.mxu0 0.0
  %4463 = vmatpush1.msra.mxu0 %v4422
  %4464 = vmatprep.subr.mxu0 0.0
  %4465 = vmatpush1.msra.mxu0 %v4421
  %4466 = vmatprep.subr.mxu0 0.0
  %4467 = vmatpush1.msra.mxu0 %v4420
  %4468 = vmatprep.subr.mxu0 0.0
  %4469 = vmatpush2.msra.mxu0 0.0
  %4470 = vmatprep.subr.mxu0 0.0
  %4471 = vmatpush2.msra.mxu0 0.0
  %4472 = vmatprep.subr.mxu0 0.0
  %4473 = vmatpush2.msra.mxu0 0.0
  %4474 = vmatprep.subr.mxu0 0.0
  %4475 = vmatpush2.msra.mxu0 0.0
  %4476 = vmatprep.subr.mxu0 0.0
  %4477 = vmatpush2.msra.mxu0 0.0
  %4478 = vmatprep.subr.mxu0 0.0
  %4479 = vmatpush2.msra.mxu0 0.0
  %4480 = vmatprep.subr.mxu0 0.0
  %4481 = vmatpush2.msra.mxu0 0.0
  %4482 = vmatprep.subr.mxu0 0.0
  %4483 = vmatpush2.msra.mxu0 0.0
  %4484 = vmatprep.subr.mxu0 0.0
  %4485 = vmatpush2.msra.mxu0 0.0
  %4486 = vmatprep.subr.mxu0 0.0
  %4487 = vmatpush2.msra.mxu0 0.0
  %4488 = vmatprep.subr.mxu0 0.0
  %4489 = vmatpush2.msra.mxu0 0.0
  %4490 = vmatprep.subr.mxu0 0.0
  %4491 = vmatpush2.msra.mxu0 0.0
  %4492 = vmatprep.subr.mxu0 0.0
  %4493 = vmatpush2.msra.mxu0 0.0
  %4494 = vmatprep.subr.mxu0 0.0
  %4495 = vmatpush2.msra.mxu0 0.0
  %4496 = vmatprep.subr.mxu0 0.0
  %4497 = vmatpush2.msra.mxu0 0.0
  %4498 = vmatprep.subr.mxu0 0.0
  %4499 = vmatpush2.msra.mxu0 0.0
  %4500 = vmatprep.mubr.f32.mxu0 0.0
  %4501 = vmatmul.mubr.f32.gmra.mxu0 %v4419
  %v4502 = vpop.f32.mrf.mxu0
  %v4503 = vadd.f32 0.0, %v4502
  %v4504 = vpop.f32.mrf.mxu0
  %4505 = vdwg.mxu0
  %v4506 = vxor.u32 %v4503, 2147483648
  %v4507 = vmul.f32 %v4506, 1.442695
  %v4508 = vpow.pop %v4507
  %v4509 = vadd.f32 %v4508, 1.0
  %v4510 = vrcp.pop %v4509
  %v4511 = vmul.f32 1.0, %v4510
  %v4512 = vld [vmem:[%s3] sm:$0xff]
  %v4513 = vld [vmem:[%s3 + $0x8] sm:$0xff]
  %v4514 = vld [vmem:[%s3 + $0x10] sm:$0xff]
  %v4515 = vld [vmem:[%s3 + $0x18] sm:$0xff]
  %v4516 = vld [vmem:[%s3 + $0x20] sm:$0xff]
  %v4517 = vld [vmem:[%s3 + $0x28] sm:$0xff]
  %v4518 = vld [vmem:[%s3 + $0x30] sm:$0xff]
  %v4519 = vld [vmem:[%s3 + $0x38] sm:$0xff]
  %v4520 = vld [vmem:[%s3 + $0x40] sm:$0xff]
  %v4521 = vld [vmem:[%s3 + $0x48] sm:$0xff]
  %v4522 = vld [vmem:[%s3 + $0x50] sm:$0xff]
  %v4523 = vld [vmem:[%s3 + $0x58] sm:$0xff]
  %v4524 = vld [vmem:[%s3 + $0x60] sm:$0xff]
  %v4525 = vld [vmem:[%s3 + $0x68] sm:$0xff]
  %v4526 = vld [vmem:[%s3 + $0x70] sm:$0xff]
  %v4527 = vld [vmem:[%s3 + $0x78] sm:$0xff]
  %v4528 = vld [vmem:[%s3 + $0x80] sm:$0xff]
  %v4529 = vld [vmem:[%s3 + $0x88] sm:$0xff]
  %v4530 = vld [vmem:[%s3 + $0x90] sm:$0xff]
  %v4531 = vld [vmem:[%s3 + $0x98] sm:$0xff]
  %v4532 = vld [vmem:[%s3 + $0xa0] sm:$0xff]
  %v4533 = vld [vmem:[%s3 + $0xa8] sm:$0xff]
  %v4534 = vld [vmem:[%s3 + $0xb0] sm:$0xff]
  %v4535 = vld [vmem:[%s3 + $0xb8] sm:$0xff]
  %v4536 = vld [vmem:[%s3 + $0xc0] sm:$0xff]
  %vm4537 = vcmask 15360
  %v4539 = vsel %vm4537, %v4512, 0
  %v4542 = vsel %vm4537, %v4513, 0
  %v4545 = vsel %vm4537, %v4514, 0
  %v4548 = vsel %vm4537, %v4515, 0
  %v4551 = vsel %vm4537, %v4516, 0
  %v4554 = vsel %vm4537, %v4517, 0
  %v4557 = vsel %vm4537, %v4518, 0
  %v4560 = vsel %vm4537, %v4519, 0
  %v4563 = vsel %vm4537, %v4520, 0
  %v4566 = vsel %vm4537, %v4521, 0
  %v4569 = vsel %vm4537, %v4522, 0
  %v4572 = vsel %vm4537, %v4523, 0
  %v4575 = vsel %vm4537, %v4524, 0
  %v4578 = vsel %vm4537, %v4525, 0
  %v4581 = vsel %vm4537, %v4526, 0
  %v4584 = vsel %vm4537, %v4527, 0
  %v4587 = vsel %vm4537, %v4528, 0
  %v4590 = vsel %vm4537, %v4529, 0
  %v4593 = vsel %vm4537, %v4530, 0
  %v4596 = vsel %vm4537, %v4531, 0
  %v4599 = vsel %vm4537, %v4532, 0
  %v4602 = vsel %vm4537, %v4533, 0
  %v4605 = vsel %vm4537, %v4534, 0
  %v4608 = vsel %vm4537, %v4535, 0
  %v4611 = vsel %vm4537, %v4536, 0
  %vm4613 = vcmask 1041408
  %v4615 = vsel %vm4613, %v4511, 0
  %4617 = vmatprep.subr.mxu0 0.0
  %4618 = vmatpush1.msra.mxu0 0.0
  %4619 = vmatprep.subr.mxu0 0.0
  %4620 = vmatpush1.msra.mxu0 0.0
  %4621 = vmatprep.subr.mxu0 0.0
  %4622 = vmatpush1.msra.mxu0 0.0
  %4623 = vmatprep.subr.mxu0 0.0
  %4624 = vmatpush1.msra.mxu0 0.0
  %4625 = vmatprep.subr.mxu0 0.0
  %4626 = vmatpush1.msra.mxu0 0.0
  %4627 = vmatprep.subr.mxu0 0.0
  %4628 = vmatpush1.msra.mxu0 0.0
  %4629 = vmatprep.subr.mxu0 0.0
  %4630 = vmatpush1.msra.mxu0 0.0
  %4631 = vmatprep.subr.mxu0 0.0
  %4632 = vmatpush1.msra.mxu0 0.0
  %4633 = vmatprep.subr.mxu0 0.0
  %4634 = vmatpush1.msra.mxu0 0.0
  %4635 = vmatprep.subr.mxu0 0.0
  %4636 = vmatpush1.msra.mxu0 0.0
  %4637 = vmatprep.subr.mxu0 0.0
  %4638 = vmatpush1.msra.mxu0 0.0
  %4639 = vmatprep.subr.mxu0 0.0
  %4640 = vmatpush1.msra.mxu0 0.0
  %4641 = vmatprep.subr.mxu0 0.0
  %4642 = vmatpush1.msra.mxu0 0.0
  %4643 = vmatprep.subr.mxu0 0.0
  %4644 = vmatpush1.msra.mxu0 0.0
  %4645 = vmatprep.subr.mxu0 0.0
  %4646 = vmatpush1.msra.mxu0 0.0
  %4647 = vmatprep.subr.mxu0 0.0
  %4648 = vmatpush1.msra.mxu0 %v4615
  %4649 = vmatprep.subr.mxu0 0.0
  %4650 = vmatpush2.msra.mxu0 0.0
  %4651 = vmatprep.subr.mxu0 0.0
  %4652 = vmatpush2.msra.mxu0 0.0
  %4653 = vmatprep.subr.mxu0 0.0
  %4654 = vmatpush2.msra.mxu0 0.0
  %4655 = vmatprep.subr.mxu0 0.0
  %4656 = vmatpush2.msra.mxu0 0.0
  %4657 = vmatprep.subr.mxu0 0.0
  %4658 = vmatpush2.msra.mxu0 0.0
  %4659 = vmatprep.subr.mxu0 0.0
  %4660 = vmatpush2.msra.mxu0 0.0
  %4661 = vmatprep.subr.mxu0 0.0
  %4662 = vmatpush2.msra.mxu0 0.0
  %4663 = vmatprep.subr.mxu0 0.0
  %4664 = vmatpush2.msra.mxu0 0.0
  %4665 = vmatprep.subr.mxu0 0.0
  %4666 = vmatpush2.msra.mxu0 0.0
  %4667 = vmatprep.subr.mxu0 0.0
  %4668 = vmatpush2.msra.mxu0 0.0
  %4669 = vmatprep.subr.mxu0 0.0
  %4670 = vmatpush2.msra.mxu0 0.0
  %4671 = vmatprep.subr.mxu0 0.0
  %4672 = vmatpush2.msra.mxu0 0.0
  %4673 = vmatprep.subr.mxu0 0.0
  %4674 = vmatpush2.msra.mxu0 0.0
  %4675 = vmatprep.subr.mxu0 0.0
  %4676 = vmatpush2.msra.mxu0 0.0
  %4677 = vmatprep.subr.mxu0 0.0
  %4678 = vmatpush2.msra.mxu0 0.0
  %4679 = vmatprep.subr.mxu0 0.0
  %4680 = vmatpush2.msra.mxu0 0.0
  %4681 = vmatprep.mubr.f32.mxu0 0.0
  %4682 = vmatmul.mubr.f32.gmra.mxu0 %v4539
  %v4683 = vpop.f32.mrf.mxu0
  %v4684 = vadd.f32 0.0, %v4683
  %v4685 = vpop.f32.mrf.mxu0
  %4686 = vmatprep.mubr.f32.mxu0 0.0
  %4687 = vmatmul.mubr.f32.gmra.mxu0 %v4542
  %v4688 = vpop.f32.mrf.mxu0
  %v4689 = vadd.f32 0.0, %v4688
  %v4690 = vpop.f32.mrf.mxu0
  %4691 = vmatprep.mubr.f32.mxu0 0.0
  %4692 = vmatmul.mubr.f32.gmra.mxu0 %v4545
  %v4693 = vpop.f32.mrf.mxu0
  %v4694 = vadd.f32 0.0, %v4693
  %v4695 = vpop.f32.mrf.mxu0
  %4696 = vmatprep.mubr.f32.mxu0 0.0
  %4697 = vmatmul.mubr.f32.gmra.mxu0 %v4548
  %v4698 = vpop.f32.mrf.mxu0
  %v4699 = vadd.f32 0.0, %v4698
  %v4700 = vpop.f32.mrf.mxu0
  %4701 = vmatprep.mubr.f32.mxu0 0.0
  %4702 = vmatmul.mubr.f32.gmra.mxu0 %v4551
  %v4703 = vpop.f32.mrf.mxu0
  %v4704 = vadd.f32 0.0, %v4703
  %v4705 = vpop.f32.mrf.mxu0
  %4706 = vmatprep.mubr.f32.mxu0 0.0
  %4707 = vmatmul.mubr.f32.gmra.mxu0 %v4554
  %v4708 = vpop.f32.mrf.mxu0
  %v4709 = vadd.f32 0.0, %v4708
  %v4710 = vpop.f32.mrf.mxu0
  %4711 = vmatprep.mubr.f32.mxu0 0.0
  %4712 = vmatmul.mubr.f32.gmra.mxu0 %v4557
  %v4713 = vpop.f32.mrf.mxu0
  %v4714 = vadd.f32 0.0, %v4713
  %v4715 = vpop.f32.mrf.mxu0
  %4716 = vmatprep.mubr.f32.mxu0 0.0
  %4717 = vmatmul.mubr.f32.gmra.mxu0 %v4560
  %v4718 = vpop.f32.mrf.mxu0
  %v4719 = vadd.f32 0.0, %v4718
  %v4720 = vpop.f32.mrf.mxu0
  %4721 = vmatprep.mubr.f32.mxu0 0.0
  %4722 = vmatmul.mubr.f32.gmra.mxu0 %v4563
  %v4723 = vpop.f32.mrf.mxu0
  %v4724 = vadd.f32 0.0, %v4723
  %v4725 = vpop.f32.mrf.mxu0
  %4726 = vmatprep.mubr.f32.mxu0 0.0
  %4727 = vmatmul.mubr.f32.gmra.mxu0 %v4566
  %v4728 = vpop.f32.mrf.mxu0
  %v4729 = vadd.f32 0.0, %v4728
  %v4730 = vpop.f32.mrf.mxu0
  %4731 = vmatprep.mubr.f32.mxu0 0.0
  %4732 = vmatmul.mubr.f32.gmra.mxu0 %v4569
  %v4733 = vpop.f32.mrf.mxu0
  %v4734 = vadd.f32 0.0, %v4733
  %v4735 = vpop.f32.mrf.mxu0
  %4736 = vmatprep.mubr.f32.mxu0 0.0
  %4737 = vmatmul.mubr.f32.gmra.mxu0 %v4572
  %v4738 = vpop.f32.mrf.mxu0
  %v4739 = vadd.f32 0.0, %v4738
  %v4740 = vpop.f32.mrf.mxu0
  %4741 = vmatprep.mubr.f32.mxu0 0.0
  %4742 = vmatmul.mubr.f32.gmra.mxu0 %v4575
  %v4743 = vpop.f32.mrf.mxu0
  %v4744 = vadd.f32 0.0, %v4743
  %v4745 = vpop.f32.mrf.mxu0
  %4746 = vmatprep.mubr.f32.mxu0 0.0
  %4747 = vmatmul.mubr.f32.gmra.mxu0 %v4578
  %v4748 = vpop.f32.mrf.mxu0
  %v4749 = vadd.f32 0.0, %v4748
  %v4750 = vpop.f32.mrf.mxu0
  %4751 = vmatprep.mubr.f32.mxu0 0.0
  %4752 = vmatmul.mubr.f32.gmra.mxu0 %v4581
  %v4753 = vpop.f32.mrf.mxu0
  %v4754 = vadd.f32 0.0, %v4753
  %v4755 = vpop.f32.mrf.mxu0
  %4756 = vmatprep.mubr.f32.mxu0 0.0
  %4757 = vmatmul.mubr.f32.gmra.mxu0 %v4584
  %v4758 = vpop.f32.mrf.mxu0
  %v4759 = vadd.f32 0.0, %v4758
  %v4760 = vpop.f32.mrf.mxu0
  %4761 = vmatprep.mubr.f32.mxu0 0.0
  %4762 = vmatmul.mubr.f32.gmra.mxu0 %v4587
  %v4763 = vpop.f32.mrf.mxu0
  %v4764 = vadd.f32 0.0, %v4763
  %v4765 = vpop.f32.mrf.mxu0
  %4766 = vmatprep.mubr.f32.mxu0 0.0
  %4767 = vmatmul.mubr.f32.gmra.mxu0 %v4590
  %v4768 = vpop.f32.mrf.mxu0
  %v4769 = vadd.f32 0.0, %v4768
  %v4770 = vpop.f32.mrf.mxu0
  %4771 = vmatprep.mubr.f32.mxu0 0.0
  %4772 = vmatmul.mubr.f32.gmra.mxu0 %v4593
  %v4773 = vpop.f32.mrf.mxu0
  %v4774 = vadd.f32 0.0, %v4773
  %v4775 = vpop.f32.mrf.mxu0
  %4776 = vmatprep.mubr.f32.mxu0 0.0
  %4777 = vmatmul.mubr.f32.gmra.mxu0 %v4596
  %v4778 = vpop.f32.mrf.mxu0
  %v4779 = vadd.f32 0.0, %v4778
  %v4780 = vpop.f32.mrf.mxu0
  %4781 = vmatprep.mubr.f32.mxu0 0.0
  %4782 = vmatmul.mubr.f32.gmra.mxu0 %v4599
  %v4783 = vpop.f32.mrf.mxu0
  %v4784 = vadd.f32 0.0, %v4783
  %v4785 = vpop.f32.mrf.mxu0
  %4786 = vmatprep.mubr.f32.mxu0 0.0
  %4787 = vmatmul.mubr.f32.gmra.mxu0 %v4602
  %v4788 = vpop.f32.mrf.mxu0
  %v4789 = vadd.f32 0.0, %v4788
  %v4790 = vpop.f32.mrf.mxu0
  %4791 = vmatprep.mubr.f32.mxu0 0.0
  %4792 = vmatmul.mubr.f32.gmra.mxu0 %v4605
  %v4793 = vpop.f32.mrf.mxu0
  %v4794 = vadd.f32 0.0, %v4793
  %v4795 = vpop.f32.mrf.mxu0
  %4796 = vmatprep.mubr.f32.mxu0 0.0
  %4797 = vmatmul.mubr.f32.gmra.mxu0 %v4608
  %v4798 = vpop.f32.mrf.mxu0
  %v4799 = vadd.f32 0.0, %v4798
  %v4800 = vpop.f32.mrf.mxu0
  %4801 = vmatprep.mubr.f32.mxu0 0.0
  %4802 = vmatmul.mubr.f32.gmra.mxu0 %v4611
  %v4803 = vpop.f32.mrf.mxu0
  %v4804 = vadd.f32 0.0, %v4803
  %v4805 = vpop.f32.mrf.mxu0
  %4806 = vdwg.mxu0
  %v4807 = vmul.f32 %v4224, %v4684
  %v4808 = vmul.f32 %v4225, %v4689
  %v4809 = vmul.f32 %v4226, %v4694
  %v4810 = vmul.f32 %v4227, %v4699
  %v4811 = vmul.f32 %v4228, %v4704
  %v4812 = vmul.f32 %v4229, %v4709
  %v4813 = vmul.f32 %v4230, %v4714
  %v4814 = vmul.f32 %v4231, %v4719
  %v4815 = vmul.f32 %v4232, %v4724
  %v4816 = vmul.f32 %v4233, %v4729
  %v4817 = vmul.f32 %v4234, %v4734
  %v4818 = vmul.f32 %v4235, %v4739
  %v4819 = vmul.f32 %v4236, %v4744
  %v4820 = vmul.f32 %v4237, %v4749
  %v4821 = vmul.f32 %v4238, %v4754
  %v4822 = vmul.f32 %v4239, %v4759
  %v4823 = vmul.f32 %v4240, %v4764
  %v4824 = vmul.f32 %v4241, %v4769
  %v4825 = vmul.f32 %v4242, %v4774
  %v4826 = vmul.f32 %v4243, %v4779
  %v4827 = vmul.f32 %v4244, %v4784
  %v4828 = vmul.f32 %v4245, %v4789
  %v4829 = vmul.f32 %v4246, %v4794
  %v4830 = vmul.f32 %v4247, %v4799
  %v4831 = vmul.f32 %v4248, %v4804
  %v4832 = vadd.f32 %v4807, %v76
  %v4833 = vadd.f32 %v4808, %v77
  %v4834 = vadd.f32 %v4809, %v78
  %v4835 = vadd.f32 %v4810, %v79
  %v4836 = vadd.f32 %v4811, %v80
  %v4837 = vadd.f32 %v4812, %v81
  %v4838 = vadd.f32 %v4813, %v82
  %v4839 = vadd.f32 %v4814, %v83
  %v4840 = vadd.f32 %v4815, %v84
  %v4841 = vadd.f32 %v4816, %v85
  %v4842 = vadd.f32 %v4817, %v86
  %v4843 = vadd.f32 %v4818, %v87
  %v4844 = vadd.f32 %v4819, %v88
  %v4845 = vadd.f32 %v4820, %v89
  %v4846 = vadd.f32 %v4821, %v90
  %v4847 = vadd.f32 %v4822, %v91
  %v4848 = vadd.f32 %v4823, %v92
  %v4849 = vadd.f32 %v4824, %v93
  %v4850 = vadd.f32 %v4825, %v94
  %v4851 = vadd.f32 %v4826, %v95
  %v4852 = vadd.f32 %v4827, %v96
  %v4853 = vadd.f32 %v4828, %v97
  %v4854 = vadd.f32 %v4829, %v98
  %v4855 = vadd.f32 %v4830, %v99
  %v4856 = vadd.f32 %v4831, %v100
  %v4857 = vmax.f32 %v4832, 0.0
  %v4858 = vmax.f32 %v4833, 0.0
  %v4859 = vmax.f32 %v4834, 0.0
  %v4860 = vmax.f32 %v4835, 0.0
  %v4861 = vmax.f32 %v4836, 0.0
  %v4862 = vmax.f32 %v4837, 0.0
  %v4863 = vmax.f32 %v4838, 0.0
  %v4864 = vmax.f32 %v4839, 0.0
  %v4865 = vmax.f32 %v4840, 0.0
  %v4866 = vmax.f32 %v4841, 0.0
  %v4867 = vmax.f32 %v4842, 0.0
  %v4868 = vmax.f32 %v4843, 0.0
  %v4869 = vmax.f32 %v4844, 0.0
  %v4870 = vmax.f32 %v4845, 0.0
  %v4871 = vmax.f32 %v4846, 0.0
  %v4872 = vmax.f32 %v4847, 0.0
  %v4873 = vmax.f32 %v4848, 0.0
  %v4874 = vmax.f32 %v4849, 0.0
  %v4875 = vmax.f32 %v4850, 0.0
  %v4876 = vmax.f32 %v4851, 0.0
  %v4877 = vmax.f32 %v4852, 0.0
  %v4878 = vmax.f32 %v4853, 0.0
  %v4879 = vmax.f32 %v4854, 0.0
  %v4880 = vmax.f32 %v4855, 0.0
  %v4881 = vmax.f32 %v4856, 0.0
  %v4882 = vmul.f32 %v4857, %v319
  %v4883 = vmul.f32 %v4858, %v324
  %v4884 = vmul.f32 %v4859, %v329
  %v4885 = vmul.f32 %v4860, %v334
  %v4886 = vmul.f32 %v4861, %v339
  %v4887 = vmul.f32 %v4862, %v344
  %v4888 = vmul.f32 %v4863, %v349
  %v4889 = vmul.f32 %v4864, %v354
  %v4890 = vmul.f32 %v4865, %v359
  %v4891 = vmul.f32 %v4866, %v364
  %v4892 = vmul.f32 %v4867, %v369
  %v4893 = vmul.f32 %v4868, %v374
  %v4894 = vmul.f32 %v4869, %v379
  %v4895 = vmul.f32 %v4870, %v384
  %v4896 = vmul.f32 %v4871, %v389
  %v4897 = vmul.f32 %v4872, %v394
  %v4898 = vmul.f32 %v4873, %v399
  %v4899 = vmul.f32 %v4874, %v404
  %v4900 = vmul.f32 %v4875, %v409
  %v4901 = vmul.f32 %v4876, %v414
  %v4902 = vmul.f32 %v4877, %v419
  %v4903 = vmul.f32 %v4878, %v424
  %v4904 = vmul.f32 %v4879, %v429
  %v4905 = vmul.f32 %v4880, %v434
  %v4906 = vmul.f32 %v4881, %v439
  %4907 = vst [vmem:[%s15] sm:$0xff] %v4882
  %4908 = vst [vmem:[%s15 + $0x8] sm:$0xff] %v4883
  %4909 = vst [vmem:[%s15 + $0x10] sm:$0xff] %v4884
  %4910 = vst [vmem:[%s15 + $0x18] sm:$0xff] %v4885
  %4911 = vst [vmem:[%s15 + $0x20] sm:$0xff] %v4886
  %4912 = vst [vmem:[%s15 + $0x28] sm:$0xff] %v4887
  %4913 = vst [vmem:[%s15 + $0x30] sm:$0xff] %v4888
  %4914 = vst [vmem:[%s15 + $0x38] sm:$0xff] %v4889
  %4915 = vst [vmem:[%s15 + $0x40] sm:$0xff] %v4890
  %4916 = vst [vmem:[%s15 + $0x48] sm:$0xff] %v4891
  %4917 = vst [vmem:[%s15 + $0x50] sm:$0xff] %v4892
  %4918 = vst [vmem:[%s15 + $0x58] sm:$0xff] %v4893
  %4919 = vst [vmem:[%s15 + $0x60] sm:$0xff] %v4894
  %4920 = vst [vmem:[%s15 + $0x68] sm:$0xff] %v4895
  %4921 = vst [vmem:[%s15 + $0x70] sm:$0xff] %v4896
  %4922 = vst [vmem:[%s15 + $0x78] sm:$0xff] %v4897
  %4923 = vst [vmem:[%s15 + $0x80] sm:$0xff] %v4898
  %4924 = vst [vmem:[%s15 + $0x88] sm:$0xff] %v4899
  %4925 = vst [vmem:[%s15 + $0x90] sm:$0xff] %v4900
  %4926 = vst [vmem:[%s15 + $0x98] sm:$0xff] %v4901
  %4927 = vst [vmem:[%s15 + $0xa0] sm:$0xff] %v4902
  %4928 = vst [vmem:[%s15 + $0xa8] sm:$0xff] %v4903
  %4929 = vst [vmem:[%s15 + $0xb0] sm:$0xff] %v4904
  %4930 = vst [vmem:[%s15 + $0xb8] sm:$0xff] %v4905
  %4931 = vst [vmem:[%s15 + $0xc0] sm:$0xff] %v4906
  // Predicated region
  $region62: #{stacked_bottleneck_block_se.3} parent=0 // pred_check
    _
  $region63: #{stacked_bottleneck_block_se.3} parent=0 // pred_check_branch
    %4933 = sbr.rel (0) target = $region65
  $region64: #{stacked_bottleneck_block_se.3} parent=0 // pred_region
    _
  $region65: #{stacked_bottleneck_block_se.3} parent=0 // pred_fallthru
    _
  // Predicated region
  $region66: #{stacked_bottleneck_block_se.3} parent=0 // pred_check
    _
  $region67: #{stacked_bottleneck_block_se.3} parent=0 // pred_check_branch
    %4935 = sbr.rel (0) target = $region69
  $region68: #{stacked_bottleneck_block_se.3} parent=0 // pred_region
    _
  $region69: #{stacked_bottleneck_block_se.3} parent=0 // pred_fallthru
    _

// kernel: stacked_bottleneck_block_se.2
$region0: #{stacked_bottleneck_block_se.2}
  #allocation0 [shape = 'u32[]', space=smem, size = 0x4, offset = 0x4, fixed_abs, tag = 'smem constant byte address 0x4 - core index']
  #allocation1 [shape = 'u32[144,128]{1,0:T(1,128)}', space=vmem, size = 0x12000, scoped, tag = 'internal scratch']
  #allocation2 [shape = 'f32[232,128]{1,0:T(8,128)}', space=vmem, size = 0x1d000, scoped, tag = 'scratch operand']
  #allocation3 [shape = 'f32[200,128]{1,0:T(8,128)}', space=vmem, size = 0x19000, scoped, tag = 'scratch operand']
  %s0 = inlined_call_operand.vmem [shape: f32[200,128], index: 0, kind: input, shape index: {}]
  %s1 = inlined_call_operand.vmem [shape: f32[200,1], index: 1, kind: input, shape index: {}]
  %s2 = inlined_call_operand.vmem [shape: f32[2,200], index: 2, kind: input, shape index: {}]
  %s3 = inlined_call_operand.vmem [shape: f32[200,2], index: 3, kind: input, shape index: {}]
  %s4 = inlined_call_operand.vmem [shape: bf16[128,128], index: 4, kind: input, shape index: {}]
  %s5 = inlined_call_operand.vmem [shape: f32[1,128], index: 5, kind: input, shape index: {}]
  %s6 = inlined_call_operand.vmem [shape: f32[1,128], index: 6, kind: input, shape index: {}]
  %s7 = inlined_call_operand.vmem [shape: bf16[9,128,128], index: 7, kind: input, shape index: {}]
  %s8 = inlined_call_operand.vmem [shape: f32[1,128], index: 8, kind: input, shape index: {}]
  %s9 = inlined_call_operand.vmem [shape: f32[1,128], index: 9, kind: input, shape index: {}]
  %s10 = inlined_call_operand.vmem [shape: bf16[128,128], index: 10, kind: input, shape index: {}]
  %s11 = inlined_call_operand.vmem [shape: f32[1,128], index: 11, kind: input, shape index: {}]
  %s12 = inlined_call_operand.vmem [shape: f32[1,128], index: 12, kind: input, shape index: {}]
  %s13 = inlined_call_operand.vmem [shape: f32[128,128], index: 13, kind: input, shape index: {}]
  %s14 = inlined_call_operand.vmem [shape: f32[128,128], index: 14, kind: input, shape index: {}]
  %s15 = inlined_call_operand.vmem [shape: bf16[128,128], index: 15, kind: input, shape index: {}]
  %s16 = inlined_call_operand.vmem [shape: f32[1,128], index: 16, kind: input, shape index: {}]
  %s17 = inlined_call_operand.vmem [shape: f32[1,128], index: 17, kind: input, shape index: {}]
  %s18 = inlined_call_operand.vmem [shape: f32[200,128], index: 18, kind: output, shape index: {}]
  %s19 = sld [smem:[#allocation0]]
  $region82: #{stacked_bottleneck_block_se.2} parent=0
    _
  %s21 = ssub.s32 1, %s19
  %s22 = scalar_select 0, %s21, %s19
  // Predicated region
  $region2: #{stacked_bottleneck_block_se.2} parent=0 // pred_check
    _
  $region3: #{stacked_bottleneck_block_se.2} parent=0 // pred_check_branch
    %24 = sbr.rel (0) target = $region5
  $region4: #{stacked_bottleneck_block_se.2} parent=0 // pred_region
    _
  $region5: #{stacked_bottleneck_block_se.2} parent=0 // pred_fallthru
    _
  // Predicated region
  $region6: #{stacked_bottleneck_block_se.2} parent=0 // pred_check
    _
  $region7: #{stacked_bottleneck_block_se.2} parent=0 // pred_check_branch
    %26 = sbr.rel (0) target = $region9
  $region8: #{stacked_bottleneck_block_se.2} parent=0 // pred_region
    _
  $region9: #{stacked_bottleneck_block_se.2} parent=0 // pred_fallthru
    _
  // Predicated region
  $region10: #{stacked_bottleneck_block_se.2} parent=0 // pred_check
    _
  $region11: #{stacked_bottleneck_block_se.2} parent=0 // pred_check_branch
    %28 = sbr.rel (0) target = $region13
  $region12: #{stacked_bottleneck_block_se.2} parent=0 // pred_region
    _
  $region13: #{stacked_bottleneck_block_se.2} parent=0 // pred_fallthru
    _
  // Predicated region
  $region14: #{stacked_bottleneck_block_se.2} parent=0 // pred_check
    _
  $region15: #{stacked_bottleneck_block_se.2} parent=0 // pred_check_branch
    %30 = sbr.rel (0) target = $region17
  $region16: #{stacked_bottleneck_block_se.2} parent=0 // pred_region
    _
  $region17: #{stacked_bottleneck_block_se.2} parent=0 // pred_fallthru
    _
  // Predicated region
  $region18: #{stacked_bottleneck_block_se.2} parent=0 // pred_check
    _
  $region19: #{stacked_bottleneck_block_se.2} parent=0 // pred_check_branch
    %32 = sbr.rel (0) target = $region21
  $region20: #{stacked_bottleneck_block_se.2} parent=0 // pred_region
    _
  $region21: #{stacked_bottleneck_block_se.2} parent=0 // pred_fallthru
    _
  // Predicated region
  $region22: #{stacked_bottleneck_block_se.2} parent=0 // pred_check
    _
  $region23: #{stacked_bottleneck_block_se.2} parent=0 // pred_check_branch
    %34 = sbr.rel (0) target = $region25
  $region24: #{stacked_bottleneck_block_se.2} parent=0 // pred_region
    _
  $region25: #{stacked_bottleneck_block_se.2} parent=0 // pred_fallthru
    _
  // Predicated region
  $region26: #{stacked_bottleneck_block_se.2} parent=0 // pred_check
    _
  $region27: #{stacked_bottleneck_block_se.2} parent=0 // pred_check_branch
    %36 = sbr.rel (0) target = $region29
  $region28: #{stacked_bottleneck_block_se.2} parent=0 // pred_region
    _
  $region29: #{stacked_bottleneck_block_se.2} parent=0 // pred_fallthru
    _
  // Predicated region
  $region30: #{stacked_bottleneck_block_se.2} parent=0 // pred_check
    _
  $region31: #{stacked_bottleneck_block_se.2} parent=0 // pred_check_branch
    %38 = sbr.rel (0) target = $region33
  $region32: #{stacked_bottleneck_block_se.2} parent=0 // pred_region
    _
  $region33: #{stacked_bottleneck_block_se.2} parent=0 // pred_fallthru
    _
  // Predicated region
  $region34: #{stacked_bottleneck_block_se.2} parent=0 // pred_check
    _
  $region35: #{stacked_bottleneck_block_se.2} parent=0 // pred_check_branch
    %40 = sbr.rel (0) target = $region37
  $region36: #{stacked_bottleneck_block_se.2} parent=0 // pred_region
    _
  $region37: #{stacked_bottleneck_block_se.2} parent=0 // pred_fallthru
    _
  // Predicated region
  $region38: #{stacked_bottleneck_block_se.2} parent=0 // pred_check
    _
  $region39: #{stacked_bottleneck_block_se.2} parent=0 // pred_check_branch
    %42 = sbr.rel (0) target = $region41
  $region40: #{stacked_bottleneck_block_se.2} parent=0 // pred_region
    _
  $region41: #{stacked_bottleneck_block_se.2} parent=0 // pred_fallthru
    _
  // Predicated region
  $region42: #{stacked_bottleneck_block_se.2} parent=0 // pred_check
    _
  $region43: #{stacked_bottleneck_block_se.2} parent=0 // pred_check_branch
    %44 = sbr.rel (0) target = $region45
  $region44: #{stacked_bottleneck_block_se.2} parent=0 // pred_region
    _
  $region45: #{stacked_bottleneck_block_se.2} parent=0 // pred_fallthru
    _
  // Predicated region
  $region46: #{stacked_bottleneck_block_se.2} parent=0 // pred_check
    _
  $region47: #{stacked_bottleneck_block_se.2} parent=0 // pred_check_branch
    %46 = sbr.rel (0) target = $region49
  $region48: #{stacked_bottleneck_block_se.2} parent=0 // pred_region
    _
  $region49: #{stacked_bottleneck_block_se.2} parent=0 // pred_fallthru
    _
  // Predicated region
  $region50: #{stacked_bottleneck_block_se.2} parent=0 // pred_check
    _
  $region51: #{stacked_bottleneck_block_se.2} parent=0 // pred_check_branch
    %48 = sbr.rel (0) target = $region53
  $region52: #{stacked_bottleneck_block_se.2} parent=0 // pred_region
    _
  $region53: #{stacked_bottleneck_block_se.2} parent=0 // pred_fallthru
    _
  // Predicated region
  $region54: #{stacked_bottleneck_block_se.2} parent=0 // pred_check
    _
  $region55: #{stacked_bottleneck_block_se.2} parent=0 // pred_check_branch
    %50 = sbr.rel (0) target = $region57
  $region56: #{stacked_bottleneck_block_se.2} parent=0 // pred_region
    _
  $region57: #{stacked_bottleneck_block_se.2} parent=0 // pred_fallthru
    _
  // Predicated region
  $region58: #{stacked_bottleneck_block_se.2} parent=0 // pred_check
    _
  $region59: #{stacked_bottleneck_block_se.2} parent=0 // pred_check_branch
    %52 = sbr.rel (0) target = $region61
  $region60: #{stacked_bottleneck_block_se.2} parent=0 // pred_region
    _
  $region61: #{stacked_bottleneck_block_se.2} parent=0 // pred_fallthru
    _
  // Predicated region
  $region62: #{stacked_bottleneck_block_se.2} parent=0 // pred_check
    _
  $region63: #{stacked_bottleneck_block_se.2} parent=0 // pred_check_branch
    %54 = sbr.rel (0) target = $region65
  $region64: #{stacked_bottleneck_block_se.2} parent=0 // pred_region
    _
  $region65: #{stacked_bottleneck_block_se.2} parent=0 // pred_fallthru
    _
  // Predicated region
  $region66: #{stacked_bottleneck_block_se.2} parent=0 // pred_check
    _
  $region67: #{stacked_bottleneck_block_se.2} parent=0 // pred_check_branch
    %56 = sbr.rel (0) target = $region69
  $region68: #{stacked_bottleneck_block_se.2} parent=0 // pred_region
    _
  $region69: #{stacked_bottleneck_block_se.2} parent=0 // pred_fallthru
    _
  // Predicated region
  $region70: #{stacked_bottleneck_block_se.2} parent=0 // pred_check
    _
  $region71: #{stacked_bottleneck_block_se.2} parent=0 // pred_check_branch
    %58 = sbr.rel (0) target = $region73
  $region72: #{stacked_bottleneck_block_se.2} parent=0 // pred_region
    _
  $region73: #{stacked_bottleneck_block_se.2} parent=0 // pred_fallthru
    _
  %v60 = vld [vmem:[%s1] sm:$0xff]
  %v61 = vld [vmem:[%s1 + $0x8] sm:$0xff]
  %v62 = vld [vmem:[%s1 + $0x10] sm:$0xff]
  %v63 = vld [vmem:[%s1 + $0x18] sm:$0xff]
  %v64 = vld [vmem:[%s1 + $0x20] sm:$0xff]
  %v65 = vld [vmem:[%s1 + $0x28] sm:$0xff]
  %v66 = vld [vmem:[%s1 + $0x30] sm:$0xff]
  %v67 = vld [vmem:[%s1 + $0x38] sm:$0xff]
  %v68 = vld [vmem:[%s1 + $0x40] sm:$0xff]
  %v69 = vld [vmem:[%s1 + $0x48] sm:$0xff]
  %v70 = vld [vmem:[%s1 + $0x50] sm:$0xff]
  %v71 = vld [vmem:[%s1 + $0x58] sm:$0xff]
  %v72 = vld [vmem:[%s1 + $0x60] sm:$0xff]
  %v73 = vld [vmem:[%s1 + $0x68] sm:$0xff]
  %v74 = vld [vmem:[%s1 + $0x70] sm:$0xff]
  %v75 = vld [vmem:[%s1 + $0x78] sm:$0xff]
  %v76 = vld [vmem:[%s1 + $0x80] sm:$0xff]
  %v77 = vld [vmem:[%s1 + $0x88] sm:$0xff]
  %v78 = vld [vmem:[%s1 + $0x90] sm:$0xff]
  %v79 = vld [vmem:[%s1 + $0x98] sm:$0xff]
  %v80 = vld [vmem:[%s1 + $0xa0] sm:$0xff]
  %v81 = vld [vmem:[%s1 + $0xa8] sm:$0xff]
  %v82 = vld [vmem:[%s1 + $0xb0] sm:$0xff]
  %v83 = vld [vmem:[%s1 + $0xb8] sm:$0xff]
  %v84 = vld [vmem:[%s1 + $0xc0] sm:$0xff]
  %v85 = vld [vmem:[%s0] sm:$0xff]
  %v86 = vld [vmem:[%s0 + $0x8] sm:$0xff]
  %v87 = vld [vmem:[%s0 + $0x10] sm:$0xff]
  %v88 = vld [vmem:[%s0 + $0x18] sm:$0xff]
  %v89 = vld [vmem:[%s0 + $0x20] sm:$0xff]
  %v90 = vld [vmem:[%s0 + $0x28] sm:$0xff]
  %v91 = vld [vmem:[%s0 + $0x30] sm:$0xff]
  %v92 = vld [vmem:[%s0 + $0x38] sm:$0xff]
  %v93 = vld [vmem:[%s0 + $0x40] sm:$0xff]
  %v94 = vld [vmem:[%s0 + $0x48] sm:$0xff]
  %v95 = vld [vmem:[%s0 + $0x50] sm:$0xff]
  %v96 = vld [vmem:[%s0 + $0x58] sm:$0xff]
  %v97 = vld [vmem:[%s0 + $0x60] sm:$0xff]
  %v98 = vld [vmem:[%s0 + $0x68] sm:$0xff]
  %v99 = vld [vmem:[%s0 + $0x70] sm:$0xff]
  %v100 = vld [vmem:[%s0 + $0x78] sm:$0xff]
  %v101 = vld [vmem:[%s0 + $0x80] sm:$0xff]
  %v102 = vld [vmem:[%s0 + $0x88] sm:$0xff]
  %v103 = vld [vmem:[%s0 + $0x90] sm:$0xff]
  %v104 = vld [vmem:[%s0 + $0x98] sm:$0xff]
  %v105 = vld [vmem:[%s0 + $0xa0] sm:$0xff]
  %v106 = vld [vmem:[%s0 + $0xa8] sm:$0xff]
  %v107 = vld [vmem:[%s0 + $0xb0] sm:$0xff]
  %v108 = vld [vmem:[%s0 + $0xb8] sm:$0xff]
  %v109 = vld [vmem:[%s0 + $0xc0] sm:$0xff]
  %v110 = vpack.c.bf16 %v86, %v85
  %v111 = vpack.c.bf16 %v88, %v87
  %v112 = vpack.c.bf16 %v90, %v89
  %v113 = vpack.c.bf16 %v92, %v91
  %v114 = vpack.c.bf16 %v94, %v93
  %v115 = vpack.c.bf16 %v96, %v95
  %v116 = vpack.c.bf16 %v98, %v97
  %v117 = vpack.c.bf16 %v100, %v99
  %v118 = vpack.c.bf16 %v102, %v101
  %v119 = vpack.c.bf16 %v104, %v103
  %v120 = vpack.c.bf16 %v106, %v105
  %v121 = vpack.c.bf16 %v108, %v107
  %v122 = vpack.c.bf16 %v109, %v109
  %v123 = vld [vmem:[%s4] sm:$0xf]
  %v124 = vld [vmem:[%s4 + $0x4] sm:$0xf]
  %v125 = vld [vmem:[%s4 + $0x8] sm:$0xf]
  %v126 = vld [vmem:[%s4 + $0xc] sm:$0xf]
  %v127 = vld [vmem:[%s4 + $0x10] sm:$0xf]
  %v128 = vld [vmem:[%s4 + $0x14] sm:$0xf]
  %v129 = vld [vmem:[%s4 + $0x18] sm:$0xf]
  %v130 = vld [vmem:[%s4 + $0x1c] sm:$0xf]
  %v131 = vld [vmem:[%s4 + $0x20] sm:$0xf]
  %v132 = vld [vmem:[%s4 + $0x24] sm:$0xf]
  %v133 = vld [vmem:[%s4 + $0x28] sm:$0xf]
  %v134 = vld [vmem:[%s4 + $0x2c] sm:$0xf]
  %v135 = vld [vmem:[%s4 + $0x30] sm:$0xf]
  %v136 = vld [vmem:[%s4 + $0x34] sm:$0xf]
  %v137 = vld [vmem:[%s4 + $0x38] sm:$0xf]
  %v138 = vld [vmem:[%s4 + $0x3c] sm:$0xf]
  %v155 = vunpack.c.l.b16 %v123
  %v156 = vunpack.c.l.b16 %v124
  %v157 = vunpack.c.l.b16 %v125
  %v158 = vunpack.c.l.b16 %v126
  %v159 = vunpack.c.l.b16 %v127
  %v160 = vunpack.c.l.b16 %v128
  %v161 = vunpack.c.l.b16 %v129
  %v162 = vunpack.c.l.b16 %v130
  %v163 = vunpack.c.l.b16 %v131
  %v164 = vunpack.c.l.b16 %v132
  %v165 = vunpack.c.l.b16 %v133
  %v166 = vunpack.c.l.b16 %v134
  %v167 = vunpack.c.l.b16 %v135
  %v168 = vunpack.c.l.b16 %v136
  %v169 = vunpack.c.l.b16 %v137
  %v170 = vunpack.c.l.b16 %v138
  %v171 = vpack.c.b16 %v156, %v155
  %v172 = vpack.c.b16 %v158, %v157
  %v173 = vpack.c.b16 %v160, %v159
  %v174 = vpack.c.b16 %v162, %v161
  %v175 = vpack.c.b16 %v164, %v163
  %v176 = vpack.c.b16 %v166, %v165
  %v177 = vpack.c.b16 %v168, %v167
  %v178 = vpack.c.b16 %v170, %v169
  %187 = vmatprep.subr.bf16.mxu0 0
  %188 = vmatpush1.bf16.msra.mxu0 %v178
  %189 = vmatprep.subr.bf16.mxu0 0
  %190 = vmatpush1.bf16.msra.mxu0 %v177
  %191 = vmatprep.subr.bf16.mxu0 0
  %192 = vmatpush1.bf16.msra.mxu0 %v176
  %193 = vmatprep.subr.bf16.mxu0 0
  %194 = vmatpush1.bf16.msra.mxu0 %v175
  %195 = vmatprep.subr.bf16.mxu0 0
  %196 = vmatpush1.bf16.msra.mxu0 %v174
  %197 = vmatprep.subr.bf16.mxu0 0
  %198 = vmatpush1.bf16.msra.mxu0 %v173
  %199 = vmatprep.subr.bf16.mxu0 0
  %200 = vmatpush1.bf16.msra.mxu0 %v172
  %201 = vmatprep.subr.bf16.mxu0 0
  %202 = vmatpush1.bf16.msra.mxu0 %v171
  %203 = vmatprep.subr.bf16.mxu0 0
  %204 = vmatpush2.bf16.msra.mxu0 0
  %205 = vmatprep.subr.bf16.mxu0 0
  %206 = vmatpush2.bf16.msra.mxu0 0
  %207 = vmatprep.subr.bf16.mxu0 0
  %208 = vmatpush2.bf16.msra.mxu0 0
  %209 = vmatprep.subr.bf16.mxu0 0
  %210 = vmatpush2.bf16.msra.mxu0 0
  %211 = vmatprep.subr.bf16.mxu0 0
  %212 = vmatpush2.bf16.msra.mxu0 0
  %213 = vmatprep.subr.bf16.mxu0 0
  %214 = vmatpush2.bf16.msra.mxu0 0
  %215 = vmatprep.subr.bf16.mxu0 0
  %216 = vmatpush2.bf16.msra.mxu0 0
  %217 = vmatprep.subr.bf16.mxu0 0
  %218 = vmatpush2.bf16.msra.mxu0 0
  %219 = vmatprep.mubr.bf16.mxu0 0
  %220 = vmatmul.mubr.bf16.gmra.mxu0 %v110
  %v221 = vpop.f32.mrf.mxu0
  %v222 = vadd.f32 0.0, %v221
  %v223 = vpop.f32.mrf.mxu0
  %v224 = vpop.f32.mrf.mxu0
  %v225 = vadd.f32 0.0, %v224
  %v226 = vpop.f32.mrf.mxu0
  %227 = vmatprep.mubr.bf16.mxu0 0
  %228 = vmatmul.mubr.bf16.gmra.mxu0 %v111
  %v229 = vpop.f32.mrf.mxu0
  %v230 = vadd.f32 0.0, %v229
  %v231 = vpop.f32.mrf.mxu0
  %v232 = vpop.f32.mrf.mxu0
  %v233 = vadd.f32 0.0, %v232
  %v234 = vpop.f32.mrf.mxu0
  %235 = vmatprep.mubr.bf16.mxu0 0
  %236 = vmatmul.mubr.bf16.gmra.mxu0 %v112
  %v237 = vpop.f32.mrf.mxu0
  %v238 = vadd.f32 0.0, %v237
  %v239 = vpop.f32.mrf.mxu0
  %v240 = vpop.f32.mrf.mxu0
  %v241 = vadd.f32 0.0, %v240
  %v242 = vpop.f32.mrf.mxu0
  %243 = vmatprep.mubr.bf16.mxu0 0
  %244 = vmatmul.mubr.bf16.gmra.mxu0 %v113
  %v245 = vpop.f32.mrf.mxu0
  %v246 = vadd.f32 0.0, %v245
  %v247 = vpop.f32.mrf.mxu0
  %v248 = vpop.f32.mrf.mxu0
  %v249 = vadd.f32 0.0, %v248
  %v250 = vpop.f32.mrf.mxu0
  %251 = vmatprep.mubr.bf16.mxu0 0
  %252 = vmatmul.mubr.bf16.gmra.mxu0 %v114
  %v253 = vpop.f32.mrf.mxu0
  %v254 = vadd.f32 0.0, %v253
  %v255 = vpop.f32.mrf.mxu0
  %v256 = vpop.f32.mrf.mxu0
  %v257 = vadd.f32 0.0, %v256
  %v258 = vpop.f32.mrf.mxu0
  %259 = vmatprep.mubr.bf16.mxu0 0
  %260 = vmatmul.mubr.bf16.gmra.mxu0 %v115
  %v261 = vpop.f32.mrf.mxu0
  %v262 = vadd.f32 0.0, %v261
  %v263 = vpop.f32.mrf.mxu0
  %v264 = vpop.f32.mrf.mxu0
  %v265 = vadd.f32 0.0, %v264
  %v266 = vpop.f32.mrf.mxu0
  %267 = vmatprep.mubr.bf16.mxu0 0
  %268 = vmatmul.mubr.bf16.gmra.mxu0 %v116
  %v269 = vpop.f32.mrf.mxu0
  %v270 = vadd.f32 0.0, %v269
  %v271 = vpop.f32.mrf.mxu0
  %v272 = vpop.f32.mrf.mxu0
  %v273 = vadd.f32 0.0, %v272
  %v274 = vpop.f32.mrf.mxu0
  %275 = vmatprep.mubr.bf16.mxu0 0
  %276 = vmatmul.mubr.bf16.gmra.mxu0 %v117
  %v277 = vpop.f32.mrf.mxu0
  %v278 = vadd.f32 0.0, %v277
  %v279 = vpop.f32.mrf.mxu0
  %v280 = vpop.f32.mrf.mxu0
  %v281 = vadd.f32 0.0, %v280
  %v282 = vpop.f32.mrf.mxu0
  %283 = vmatprep.mubr.bf16.mxu0 0
  %284 = vmatmul.mubr.bf16.gmra.mxu0 %v118
  %v285 = vpop.f32.mrf.mxu0
  %v286 = vadd.f32 0.0, %v285
  %v287 = vpop.f32.mrf.mxu0
  %v288 = vpop.f32.mrf.mxu0
  %v289 = vadd.f32 0.0, %v288
  %v290 = vpop.f32.mrf.mxu0
  %291 = vmatprep.mubr.bf16.mxu0 0
  %292 = vmatmul.mubr.bf16.gmra.mxu0 %v119
  %v293 = vpop.f32.mrf.mxu0
  %v294 = vadd.f32 0.0, %v293
  %v295 = vpop.f32.mrf.mxu0
  %v296 = vpop.f32.mrf.mxu0
  %v297 = vadd.f32 0.0, %v296
  %v298 = vpop.f32.mrf.mxu0
  %299 = vmatprep.mubr.bf16.mxu0 0
  %300 = vmatmul.mubr.bf16.gmra.mxu0 %v120
  %v301 = vpop.f32.mrf.mxu0
  %v302 = vadd.f32 0.0, %v301
  %v303 = vpop.f32.mrf.mxu0
  %v304 = vpop.f32.mrf.mxu0
  %v305 = vadd.f32 0.0, %v304
  %v306 = vpop.f32.mrf.mxu0
  %307 = vmatprep.mubr.bf16.mxu0 0
  %308 = vmatmul.mubr.bf16.gmra.mxu0 %v121
  %v309 = vpop.f32.mrf.mxu0
  %v310 = vadd.f32 0.0, %v309
  %v311 = vpop.f32.mrf.mxu0
  %v312 = vpop.f32.mrf.mxu0
  %v313 = vadd.f32 0.0, %v312
  %v314 = vpop.f32.mrf.mxu0
  %315 = vmatprep.mubr.bf16.mxu0 0
  %316 = vmatmul.mubr.bf16.gmra.mxu0 %v122
  %v317 = vpop.f32.mrf.mxu0
  %v318 = vadd.f32 0.0, %v317
  %v319 = vpop.f32.mrf.mxu0
  %v320 = vpop.f32.mrf.mxu0
  %v321 = vpop.f32.mrf.mxu0
  %322 = vdwg.mxu0
  %v323 = vld [vmem:[%s5] sm:$0x1]
  %v324 = vld [vmem:[%s6] sm:$0x1]
  %326 = vset.pattern.permute.xlu0 0
  %327 = vperm.xlu0 %326, %v60
  %v328 = vpop.permute.xlu0 %327
  %331 = vset.pattern.permute.xlu0 0
  %332 = vperm.xlu0 %331, %v61
  %v333 = vpop.permute.xlu0 %332
  %336 = vset.pattern.permute.xlu0 0
  %337 = vperm.xlu0 %336, %v62
  %v338 = vpop.permute.xlu0 %337
  %341 = vset.pattern.permute.xlu0 0
  %342 = vperm.xlu0 %341, %v63
  %v343 = vpop.permute.xlu0 %342
  %346 = vset.pattern.permute.xlu0 0
  %347 = vperm.xlu0 %346, %v64
  %v348 = vpop.permute.xlu0 %347
  %351 = vset.pattern.permute.xlu0 0
  %352 = vperm.xlu0 %351, %v65
  %v353 = vpop.permute.xlu0 %352
  %356 = vset.pattern.permute.xlu0 0
  %357 = vperm.xlu0 %356, %v66
  %v358 = vpop.permute.xlu0 %357
  %361 = vset.pattern.permute.xlu0 0
  %362 = vperm.xlu0 %361, %v67
  %v363 = vpop.permute.xlu0 %362
  %366 = vset.pattern.permute.xlu0 0
  %367 = vperm.xlu0 %366, %v68
  %v368 = vpop.permute.xlu0 %367
  %371 = vset.pattern.permute.xlu0 0
  %372 = vperm.xlu0 %371, %v69
  %v373 = vpop.permute.xlu0 %372
  %376 = vset.pattern.permute.xlu0 0
  %377 = vperm.xlu0 %376, %v70
  %v378 = vpop.permute.xlu0 %377
  %381 = vset.pattern.permute.xlu0 0
  %382 = vperm.xlu0 %381, %v71
  %v383 = vpop.permute.xlu0 %382
  %386 = vset.pattern.permute.xlu0 0
  %387 = vperm.xlu0 %386, %v72
  %v388 = vpop.permute.xlu0 %387
  %391 = vset.pattern.permute.xlu0 0
  %392 = vperm.xlu0 %391, %v73
  %v393 = vpop.permute.xlu0 %392
  %396 = vset.pattern.permute.xlu0 0
  %397 = vperm.xlu0 %396, %v74
  %v398 = vpop.permute.xlu0 %397
  %401 = vset.pattern.permute.xlu0 0
  %402 = vperm.xlu0 %401, %v75
  %v403 = vpop.permute.xlu0 %402
  %406 = vset.pattern.permute.xlu0 0
  %407 = vperm.xlu0 %406, %v76
  %v408 = vpop.permute.xlu0 %407
  %411 = vset.pattern.permute.xlu0 0
  %412 = vperm.xlu0 %411, %v77
  %v413 = vpop.permute.xlu0 %412
  %416 = vset.pattern.permute.xlu0 0
  %417 = vperm.xlu0 %416, %v78
  %v418 = vpop.permute.xlu0 %417
  %421 = vset.pattern.permute.xlu0 0
  %422 = vperm.xlu0 %421, %v79
  %v423 = vpop.permute.xlu0 %422
  %426 = vset.pattern.permute.xlu0 0
  %427 = vperm.xlu0 %426, %v80
  %v428 = vpop.permute.xlu0 %427
  %431 = vset.pattern.permute.xlu0 0
  %432 = vperm.xlu0 %431, %v81
  %v433 = vpop.permute.xlu0 %432
  %436 = vset.pattern.permute.xlu0 0
  %437 = vperm.xlu0 %436, %v82
  %v438 = vpop.permute.xlu0 %437
  %441 = vset.pattern.permute.xlu0 0
  %442 = vperm.xlu0 %441, %v83
  %v443 = vpop.permute.xlu0 %442
  %446 = vset.pattern.permute.xlu0 0
  %447 = vperm.xlu0 %446, %v84
  %v448 = vpop.permute.xlu0 %447
  %v450 = vmul.f32 %v222, %v328
  %v451 = vmul.f32 %v225, %v333
  %v452 = vmul.f32 %v230, %v338
  %v453 = vmul.f32 %v233, %v343
  %v454 = vmul.f32 %v238, %v348
  %v455 = vmul.f32 %v241, %v353
  %v456 = vmul.f32 %v246, %v358
  %v457 = vmul.f32 %v249, %v363
  %v458 = vmul.f32 %v254, %v368
  %v459 = vmul.f32 %v257, %v373
  %v460 = vmul.f32 %v262, %v378
  %v461 = vmul.f32 %v265, %v383
  %v462 = vmul.f32 %v270, %v388
  %v463 = vmul.f32 %v273, %v393
  %v464 = vmul.f32 %v278, %v398
  %v465 = vmul.f32 %v281, %v403
  %v466 = vmul.f32 %v286, %v408
  %v467 = vmul.f32 %v289, %v413
  %v468 = vmul.f32 %v294, %v418
  %v469 = vmul.f32 %v297, %v423
  %v470 = vmul.f32 %v302, %v428
  %v471 = vmul.f32 %v305, %v433
  %v472 = vmul.f32 %v310, %v438
  %v473 = vmul.f32 %v313, %v443
  %v474 = vmul.f32 %v318, %v448
  %v475 = vadd.f32 %v450, %v451
  %v476 = vadd.f32 %v475, %v452
  %v477 = vadd.f32 %v476, %v453
  %v478 = vadd.f32 %v477, %v454
  %v479 = vadd.f32 %v478, %v455
  %v480 = vadd.f32 %v479, %v456
  %v481 = vadd.f32 %v480, %v457
  %v482 = vadd.f32 %v481, %v458
  %v483 = vadd.f32 %v482, %v459
  %v484 = vadd.f32 %v483, %v460
  %v485 = vadd.f32 %v484, %v461
  %v486 = vadd.f32 %v485, %v462
  %v487 = vadd.f32 %v486, %v463
  %v488 = vadd.f32 %v487, %v464
  %v489 = vadd.f32 %v488, %v465
  %v490 = vadd.f32 %v489, %v466
  %v491 = vadd.f32 %v490, %v467
  %v492 = vadd.f32 %v491, %v468
  %v493 = vadd.f32 %v492, %v469
  %v494 = vadd.f32 %v493, %v470
  %v495 = vadd.f32 %v494, %v471
  %v496 = vadd.f32 %v495, %v472
  %v497 = vadd.f32 %v496, %v473
  %v498 = vadd.f32 %v497, %v474
  %v499 = vrot.slane %v498, 4
  %v500 = vadd.f32 %v498, %v499
  %v501 = vrot.slane %v500, 2
  %v502 = vadd.f32 %v500, %v501
  %v503 = vrot.slane %v502, 1
  %v504 = vadd.f32 %v502, %v503
  %v505 = vmul.f32 %v504, 0.0078125
  %v506 = vsub.f32 %v222, %v505
  %v507 = vsub.f32 %v225, %v505
  %v508 = vsub.f32 %v230, %v505
  %v509 = vsub.f32 %v233, %v505
  %v510 = vsub.f32 %v238, %v505
  %v511 = vsub.f32 %v241, %v505
  %v512 = vsub.f32 %v246, %v505
  %v513 = vsub.f32 %v249, %v505
  %v514 = vsub.f32 %v254, %v505
  %v515 = vsub.f32 %v257, %v505
  %v516 = vsub.f32 %v262, %v505
  %v517 = vsub.f32 %v265, %v505
  %v518 = vsub.f32 %v270, %v505
  %v519 = vsub.f32 %v273, %v505
  %v520 = vsub.f32 %v278, %v505
  %v521 = vsub.f32 %v281, %v505
  %v522 = vsub.f32 %v286, %v505
  %v523 = vsub.f32 %v289, %v505
  %v524 = vsub.f32 %v294, %v505
  %v525 = vsub.f32 %v297, %v505
  %v526 = vsub.f32 %v302, %v505
  %v527 = vsub.f32 %v305, %v505
  %v528 = vsub.f32 %v310, %v505
  %v529 = vsub.f32 %v313, %v505
  %v530 = vsub.f32 %v318, %v505
  %v531 = vmul.f32 %v506, %v328
  %v532 = vmul.f32 %v507, %v333
  %v533 = vmul.f32 %v508, %v338
  %v534 = vmul.f32 %v509, %v343
  %v535 = vmul.f32 %v510, %v348
  %v536 = vmul.f32 %v511, %v353
  %v537 = vmul.f32 %v512, %v358
  %v538 = vmul.f32 %v513, %v363
  %v539 = vmul.f32 %v514, %v368
  %v540 = vmul.f32 %v515, %v373
  %v541 = vmul.f32 %v516, %v378
  %v542 = vmul.f32 %v517, %v383
  %v543 = vmul.f32 %v518, %v388
  %v544 = vmul.f32 %v519, %v393
  %v545 = vmul.f32 %v520, %v398
  %v546 = vmul.f32 %v521, %v403
  %v547 = vmul.f32 %v522, %v408
  %v548 = vmul.f32 %v523, %v413
  %v549 = vmul.f32 %v524, %v418
  %v550 = vmul.f32 %v525, %v423
  %v551 = vmul.f32 %v526, %v428
  %v552 = vmul.f32 %v527, %v433
  %v553 = vmul.f32 %v528, %v438
  %v554 = vmul.f32 %v529, %v443
  %v555 = vmul.f32 %v530, %v448
  %v556 = vmul.f32 %v531, %v531
  %v557 = vmul.f32 %v532, %v532
  %v558 = vmul.f32 %v533, %v533
  %v559 = vmul.f32 %v534, %v534
  %v560 = vmul.f32 %v535, %v535
  %v561 = vmul.f32 %v536, %v536
  %v562 = vmul.f32 %v537, %v537
  %v563 = vmul.f32 %v538, %v538
  %v564 = vmul.f32 %v539, %v539
  %v565 = vmul.f32 %v540, %v540
  %v566 = vmul.f32 %v541, %v541
  %v567 = vmul.f32 %v542, %v542
  %v568 = vmul.f32 %v543, %v543
  %v569 = vmul.f32 %v544, %v544
  %v570 = vmul.f32 %v545, %v545
  %v571 = vmul.f32 %v546, %v546
  %v572 = vmul.f32 %v547, %v547
  %v573 = vmul.f32 %v548, %v548
  %v574 = vmul.f32 %v549, %v549
  %v575 = vmul.f32 %v550, %v550
  %v576 = vmul.f32 %v551, %v551
  %v577 = vmul.f32 %v552, %v552
  %v578 = vmul.f32 %v553, %v553
  %v579 = vmul.f32 %v554, %v554
  %v580 = vmul.f32 %v555, %v555
  %v581 = vadd.f32 %v556, %v557
  %v582 = vadd.f32 %v581, %v558
  %v583 = vadd.f32 %v582, %v559
  %v584 = vadd.f32 %v583, %v560
  %v585 = vadd.f32 %v584, %v561
  %v586 = vadd.f32 %v585, %v562
  %v587 = vadd.f32 %v586, %v563
  %v588 = vadd.f32 %v587, %v564
  %v589 = vadd.f32 %v588, %v565
  %v590 = vadd.f32 %v589, %v566
  %v591 = vadd.f32 %v590, %v567
  %v592 = vadd.f32 %v591, %v568
  %v593 = vadd.f32 %v592, %v569
  %v594 = vadd.f32 %v593, %v570
  %v595 = vadd.f32 %v594, %v571
  %v596 = vadd.f32 %v595, %v572
  %v597 = vadd.f32 %v596, %v573
  %v598 = vadd.f32 %v597, %v574
  %v599 = vadd.f32 %v598, %v575
  %v600 = vadd.f32 %v599, %v576
  %v601 = vadd.f32 %v600, %v577
  %v602 = vadd.f32 %v601, %v578
  %v603 = vadd.f32 %v602, %v579
  %v604 = vadd.f32 %v603, %v580
  %v605 = vrot.slane %v604, 4
  %v606 = vadd.f32 %v604, %v605
  %v607 = vrot.slane %v606, 2
  %v608 = vadd.f32 %v606, %v607
  %v609 = vrot.slane %v608, 1
  %v610 = vadd.f32 %v608, %v609
  %v611 = vmul.f32 %v610, 0.0078125
  %v612 = vadd.f32 %v611, 1e-05
  %v613 = vrsqrt.pop %v612
  %v614 = vmul.f32 %v323, %v613
  %v615 = vmul.f32 %v505, %v614
  %v616 = vsub.f32 %v324, %v615
  %v618 = vlaneseq
  %v619 = vshrl.u32 %v618, 7
  %v620 = vsub.s32 0, %v619
  %v621 = vrot.slane %v614, %v620
  %v623 = vmul.f32 %v222, %v621
  %v624 = vmul.f32 %v225, %v621
  %v625 = vmul.f32 %v230, %v621
  %v626 = vmul.f32 %v233, %v621
  %v627 = vmul.f32 %v238, %v621
  %v628 = vmul.f32 %v241, %v621
  %v629 = vmul.f32 %v246, %v621
  %v630 = vmul.f32 %v249, %v621
  %v631 = vmul.f32 %v254, %v621
  %v632 = vmul.f32 %v257, %v621
  %v633 = vmul.f32 %v262, %v621
  %v634 = vmul.f32 %v265, %v621
  %v635 = vmul.f32 %v270, %v621
  %v636 = vmul.f32 %v273, %v621
  %v637 = vmul.f32 %v278, %v621
  %v638 = vmul.f32 %v281, %v621
  %v639 = vmul.f32 %v286, %v621
  %v640 = vmul.f32 %v289, %v621
  %v641 = vmul.f32 %v294, %v621
  %v642 = vmul.f32 %v297, %v621
  %v643 = vmul.f32 %v302, %v621
  %v644 = vmul.f32 %v305, %v621
  %v645 = vmul.f32 %v310, %v621
  %v646 = vmul.f32 %v313, %v621
  %v647 = vmul.f32 %v318, %v621
  %v649 = vlaneseq
  %v650 = vshrl.u32 %v649, 7
  %v651 = vsub.s32 0, %v650
  %v652 = vrot.slane %v616, %v651
  %v654 = vadd.f32 %v623, %v652
  %v655 = vadd.f32 %v624, %v652
  %v656 = vadd.f32 %v625, %v652
  %v657 = vadd.f32 %v626, %v652
  %v658 = vadd.f32 %v627, %v652
  %v659 = vadd.f32 %v628, %v652
  %v660 = vadd.f32 %v629, %v652
  %v661 = vadd.f32 %v630, %v652
  %v662 = vadd.f32 %v631, %v652
  %v663 = vadd.f32 %v632, %v652
  %v664 = vadd.f32 %v633, %v652
  %v665 = vadd.f32 %v634, %v652
  %v666 = vadd.f32 %v635, %v652
  %v667 = vadd.f32 %v636, %v652
  %v668 = vadd.f32 %v637, %v652
  %v669 = vadd.f32 %v638, %v652
  %v670 = vadd.f32 %v639, %v652
  %v671 = vadd.f32 %v640, %v652
  %v672 = vadd.f32 %v641, %v652
  %v673 = vadd.f32 %v642, %v652
  %v674 = vadd.f32 %v643, %v652
  %v675 = vadd.f32 %v644, %v652
  %v676 = vadd.f32 %v645, %v652
  %v677 = vadd.f32 %v646, %v652
  %v678 = vadd.f32 %v647, %v652
  %v679 = vmax.f32 %v654, 0.0
  %v680 = vmax.f32 %v655, 0.0
  %v681 = vmax.f32 %v656, 0.0
  %v682 = vmax.f32 %v657, 0.0
  %v683 = vmax.f32 %v658, 0.0
  %v684 = vmax.f32 %v659, 0.0
  %v685 = vmax.f32 %v660, 0.0
  %v686 = vmax.f32 %v661, 0.0
  %v687 = vmax.f32 %v662, 0.0
  %v688 = vmax.f32 %v663, 0.0
  %v689 = vmax.f32 %v664, 0.0
  %v690 = vmax.f32 %v665, 0.0
  %v691 = vmax.f32 %v666, 0.0
  %v692 = vmax.f32 %v667, 0.0
  %v693 = vmax.f32 %v668, 0.0
  %v694 = vmax.f32 %v669, 0.0
  %v695 = vmax.f32 %v670, 0.0
  %v696 = vmax.f32 %v671, 0.0
  %v697 = vmax.f32 %v672, 0.0
  %v698 = vmax.f32 %v673, 0.0
  %v699 = vmax.f32 %v674, 0.0
  %v700 = vmax.f32 %v675, 0.0
  %v701 = vmax.f32 %v676, 0.0
  %v702 = vmax.f32 %v677, 0.0
  %v703 = vmax.f32 %v678, 0.0
  %v704 = vmul.f32 %v679, %v328
  %v705 = vmul.f32 %v680, %v333
  %v706 = vmul.f32 %v681, %v338
  %v707 = vmul.f32 %v682, %v343
  %v708 = vmul.f32 %v683, %v348
  %v709 = vmul.f32 %v684, %v353
  %v710 = vmul.f32 %v685, %v358
  %v711 = vmul.f32 %v686, %v363
  %v712 = vmul.f32 %v687, %v368
  %v713 = vmul.f32 %v688, %v373
  %v714 = vmul.f32 %v689, %v378
  %v715 = vmul.f32 %v690, %v383
  %v716 = vmul.f32 %v691, %v388
  %v717 = vmul.f32 %v692, %v393
  %v718 = vmul.f32 %v693, %v398
  %v719 = vmul.f32 %v694, %v403
  %v720 = vmul.f32 %v695, %v408
  %v721 = vmul.f32 %v696, %v413
  %v722 = vmul.f32 %v697, %v418
  %v723 = vmul.f32 %v698, %v423
  %v724 = vmul.f32 %v699, %v428
  %v725 = vmul.f32 %v700, %v433
  %v726 = vmul.f32 %v701, %v438
  %v727 = vmul.f32 %v702, %v443
  %v728 = vmul.f32 %v703, %v448
  %v729 = vld [vmem:[%s15] sm:$0xf]
  %v730 = vld [vmem:[%s15 + $0x4] sm:$0xf]
  %v731 = vld [vmem:[%s15 + $0x8] sm:$0xf]
  %v732 = vld [vmem:[%s15 + $0xc] sm:$0xf]
  %v733 = vld [vmem:[%s15 + $0x10] sm:$0xf]
  %v734 = vld [vmem:[%s15 + $0x14] sm:$0xf]
  %v735 = vld [vmem:[%s15 + $0x18] sm:$0xf]
  %v736 = vld [vmem:[%s15 + $0x1c] sm:$0xf]
  %v737 = vld [vmem:[%s15 + $0x20] sm:$0xf]
  %v738 = vld [vmem:[%s15 + $0x24] sm:$0xf]
  %v739 = vld [vmem:[%s15 + $0x28] sm:$0xf]
  %v740 = vld [vmem:[%s15 + $0x2c] sm:$0xf]
  %v741 = vld [vmem:[%s15 + $0x30] sm:$0xf]
  %v742 = vld [vmem:[%s15 + $0x34] sm:$0xf]
  %v743 = vld [vmem:[%s15 + $0x38] sm:$0xf]
  %v744 = vld [vmem:[%s15 + $0x3c] sm:$0xf]
  %v761 = vunpack.c.l.b16 %v729
  %v762 = vunpack.c.l.b16 %v730
  %v763 = vunpack.c.l.b16 %v731
  %v764 = vunpack.c.l.b16 %v732
  %v765 = vunpack.c.l.b16 %v733
  %v766 = vunpack.c.l.b16 %v734
  %v767 = vunpack.c.l.b16 %v735
  %v768 = vunpack.c.l.b16 %v736
  %v769 = vunpack.c.l.b16 %v737
  %v770 = vunpack.c.l.b16 %v738
  %v771 = vunpack.c.l.b16 %v739
  %v772 = vunpack.c.l.b16 %v740
  %v773 = vunpack.c.l.b16 %v741
  %v774 = vunpack.c.l.b16 %v742
  %v775 = vunpack.c.l.b16 %v743
  %v776 = vunpack.c.l.b16 %v744
  %v777 = vpack.c.b16 %v762, %v761
  %v778 = vpack.c.b16 %v764, %v763
  %v779 = vpack.c.b16 %v766, %v765
  %v780 = vpack.c.b16 %v768, %v767
  %v781 = vpack.c.b16 %v770, %v769
  %v782 = vpack.c.b16 %v772, %v771
  %v783 = vpack.c.b16 %v774, %v773
  %v784 = vpack.c.b16 %v776, %v775
  %793 = vmatprep.subr.bf16.mxu0 0
  %794 = vmatpush1.bf16.msra.mxu0 %v784
  %795 = vmatprep.subr.bf16.mxu0 0
  %796 = vmatpush1.bf16.msra.mxu0 %v783
  %797 = vmatprep.subr.bf16.mxu0 0
  %798 = vmatpush1.bf16.msra.mxu0 %v782
  %799 = vmatprep.subr.bf16.mxu0 0
  %800 = vmatpush1.bf16.msra.mxu0 %v781
  %801 = vmatprep.subr.bf16.mxu0 0
  %802 = vmatpush1.bf16.msra.mxu0 %v780
  %803 = vmatprep.subr.bf16.mxu0 0
  %804 = vmatpush1.bf16.msra.mxu0 %v779
  %805 = vmatprep.subr.bf16.mxu0 0
  %806 = vmatpush1.bf16.msra.mxu0 %v778
  %807 = vmatprep.subr.bf16.mxu0 0
  %808 = vmatpush1.bf16.msra.mxu0 %v777
  %809 = vmatprep.subr.bf16.mxu0 0
  %810 = vmatpush2.bf16.msra.mxu0 0
  %811 = vmatprep.subr.bf16.mxu0 0
  %812 = vmatpush2.bf16.msra.mxu0 0
  %813 = vmatprep.subr.bf16.mxu0 0
  %814 = vmatpush2.bf16.msra.mxu0 0
  %815 = vmatprep.subr.bf16.mxu0 0
  %816 = vmatpush2.bf16.msra.mxu0 0
  %817 = vmatprep.subr.bf16.mxu0 0
  %818 = vmatpush2.bf16.msra.mxu0 0
  %819 = vmatprep.subr.bf16.mxu0 0
  %820 = vmatpush2.bf16.msra.mxu0 0
  %821 = vmatprep.subr.bf16.mxu0 0
  %822 = vmatpush2.bf16.msra.mxu0 0
  %823 = vmatprep.subr.bf16.mxu0 0
  %824 = vmatpush2.bf16.msra.mxu0 0
  %825 = vmatprep.mubr.bf16.mxu0 0
  %826 = vmatmul.mubr.bf16.gmra.mxu0 %v110
  %v827 = vpop.f32.mrf.mxu0
  %v828 = vadd.f32 0.0, %v827
  %v829 = vpop.f32.mrf.mxu0
  %v830 = vpop.f32.mrf.mxu0
  %v831 = vadd.f32 0.0, %v830
  %v832 = vpop.f32.mrf.mxu0
  %833 = vmatprep.mubr.bf16.mxu0 0
  %834 = vmatmul.mubr.bf16.gmra.mxu0 %v111
  %v835 = vpop.f32.mrf.mxu0
  %v836 = vadd.f32 0.0, %v835
  %v837 = vpop.f32.mrf.mxu0
  %v838 = vpop.f32.mrf.mxu0
  %v839 = vadd.f32 0.0, %v838
  %v840 = vpop.f32.mrf.mxu0
  %841 = vmatprep.mubr.bf16.mxu0 0
  %842 = vmatmul.mubr.bf16.gmra.mxu0 %v112
  %v843 = vpop.f32.mrf.mxu0
  %v844 = vadd.f32 0.0, %v843
  %v845 = vpop.f32.mrf.mxu0
  %v846 = vpop.f32.mrf.mxu0
  %v847 = vadd.f32 0.0, %v846
  %v848 = vpop.f32.mrf.mxu0
  %849 = vmatprep.mubr.bf16.mxu0 0
  %850 = vmatmul.mubr.bf16.gmra.mxu0 %v113
  %v851 = vpop.f32.mrf.mxu0
  %v852 = vadd.f32 0.0, %v851
  %v853 = vpop.f32.mrf.mxu0
  %v854 = vpop.f32.mrf.mxu0
  %v855 = vadd.f32 0.0, %v854
  %v856 = vpop.f32.mrf.mxu0
  %857 = vmatprep.mubr.bf16.mxu0 0
  %858 = vmatmul.mubr.bf16.gmra.mxu0 %v114
  %v859 = vpop.f32.mrf.mxu0
  %v860 = vadd.f32 0.0, %v859
  %v861 = vpop.f32.mrf.mxu0
  %v862 = vpop.f32.mrf.mxu0
  %v863 = vadd.f32 0.0, %v862
  %v864 = vpop.f32.mrf.mxu0
  %865 = vmatprep.mubr.bf16.mxu0 0
  %866 = vmatmul.mubr.bf16.gmra.mxu0 %v115
  %v867 = vpop.f32.mrf.mxu0
  %v868 = vadd.f32 0.0, %v867
  %v869 = vpop.f32.mrf.mxu0
  %v870 = vpop.f32.mrf.mxu0
  %v871 = vadd.f32 0.0, %v870
  %v872 = vpop.f32.mrf.mxu0
  %873 = vmatprep.mubr.bf16.mxu0 0
  %874 = vmatmul.mubr.bf16.gmra.mxu0 %v116
  %v875 = vpop.f32.mrf.mxu0
  %v876 = vadd.f32 0.0, %v875
  %v877 = vpop.f32.mrf.mxu0
  %v878 = vpop.f32.mrf.mxu0
  %v879 = vadd.f32 0.0, %v878
  %v880 = vpop.f32.mrf.mxu0
  %881 = vmatprep.mubr.bf16.mxu0 0
  %882 = vmatmul.mubr.bf16.gmra.mxu0 %v117
  %v883 = vpop.f32.mrf.mxu0
  %v884 = vadd.f32 0.0, %v883
  %v885 = vpop.f32.mrf.mxu0
  %v886 = vpop.f32.mrf.mxu0
  %v887 = vadd.f32 0.0, %v886
  %v888 = vpop.f32.mrf.mxu0
  %889 = vmatprep.mubr.bf16.mxu0 0
  %890 = vmatmul.mubr.bf16.gmra.mxu0 %v118
  %v891 = vpop.f32.mrf.mxu0
  %v892 = vadd.f32 0.0, %v891
  %v893 = vpop.f32.mrf.mxu0
  %v894 = vpop.f32.mrf.mxu0
  %v895 = vadd.f32 0.0, %v894
  %v896 = vpop.f32.mrf.mxu0
  %897 = vmatprep.mubr.bf16.mxu0 0
  %898 = vmatmul.mubr.bf16.gmra.mxu0 %v119
  %v899 = vpop.f32.mrf.mxu0
  %v900 = vadd.f32 0.0, %v899
  %v901 = vpop.f32.mrf.mxu0
  %v902 = vpop.f32.mrf.mxu0
  %v903 = vadd.f32 0.0, %v902
  %v904 = vpop.f32.mrf.mxu0
  %905 = vmatprep.mubr.bf16.mxu0 0
  %906 = vmatmul.mubr.bf16.gmra.mxu0 %v120
  %v907 = vpop.f32.mrf.mxu0
  %v908 = vadd.f32 0.0, %v907
  %v909 = vpop.f32.mrf.mxu0
  %v910 = vpop.f32.mrf.mxu0
  %v911 = vadd.f32 0.0, %v910
  %v912 = vpop.f32.mrf.mxu0
  %913 = vmatprep.mubr.bf16.mxu0 0
  %914 = vmatmul.mubr.bf16.gmra.mxu0 %v121
  %v915 = vpop.f32.mrf.mxu0
  %v916 = vadd.f32 0.0, %v915
  %v917 = vpop.f32.mrf.mxu0
  %v918 = vpop.f32.mrf.mxu0
  %v919 = vadd.f32 0.0, %v918
  %v920 = vpop.f32.mrf.mxu0
  %921 = vmatprep.mubr.bf16.mxu0 0
  %922 = vmatmul.mubr.bf16.gmra.mxu0 %v122
  %v923 = vpop.f32.mrf.mxu0
  %v924 = vadd.f32 0.0, %v923
  %v925 = vpop.f32.mrf.mxu0
  %v926 = vpop.f32.mrf.mxu0
  %v927 = vpop.f32.mrf.mxu0
  %928 = vdwg.mxu0
  %v929 = vld [vmem:[%s16] sm:$0x1]
  %v930 = vld [vmem:[%s17] sm:$0x1]
  %v931 = vmul.f32 %v828, %v328
  %v932 = vmul.f32 %v831, %v333
  %v933 = vmul.f32 %v836, %v338
  %v934 = vmul.f32 %v839, %v343
  %v935 = vmul.f32 %v844, %v348
  %v936 = vmul.f32 %v847, %v353
  %v937 = vmul.f32 %v852, %v358
  %v938 = vmul.f32 %v855, %v363
  %v939 = vmul.f32 %v860, %v368
  %v940 = vmul.f32 %v863, %v373
  %v941 = vmul.f32 %v868, %v378
  %v942 = vmul.f32 %v871, %v383
  %v943 = vmul.f32 %v876, %v388
  %v944 = vmul.f32 %v879, %v393
  %v945 = vmul.f32 %v884, %v398
  %v946 = vmul.f32 %v887, %v403
  %v947 = vmul.f32 %v892, %v408
  %v948 = vmul.f32 %v895, %v413
  %v949 = vmul.f32 %v900, %v418
  %v950 = vmul.f32 %v903, %v423
  %v951 = vmul.f32 %v908, %v428
  %v952 = vmul.f32 %v911, %v433
  %v953 = vmul.f32 %v916, %v438
  %v954 = vmul.f32 %v919, %v443
  %v955 = vmul.f32 %v924, %v448
  %v956 = vadd.f32 %v931, %v932
  %v957 = vadd.f32 %v956, %v933
  %v958 = vadd.f32 %v957, %v934
  %v959 = vadd.f32 %v958, %v935
  %v960 = vadd.f32 %v959, %v936
  %v961 = vadd.f32 %v960, %v937
  %v962 = vadd.f32 %v961, %v938
  %v963 = vadd.f32 %v962, %v939
  %v964 = vadd.f32 %v963, %v940
  %v965 = vadd.f32 %v964, %v941
  %v966 = vadd.f32 %v965, %v942
  %v967 = vadd.f32 %v966, %v943
  %v968 = vadd.f32 %v967, %v944
  %v969 = vadd.f32 %v968, %v945
  %v970 = vadd.f32 %v969, %v946
  %v971 = vadd.f32 %v970, %v947
  %v972 = vadd.f32 %v971, %v948
  %v973 = vadd.f32 %v972, %v949
  %v974 = vadd.f32 %v973, %v950
  %v975 = vadd.f32 %v974, %v951
  %v976 = vadd.f32 %v975, %v952
  %v977 = vadd.f32 %v976, %v953
  %v978 = vadd.f32 %v977, %v954
  %v979 = vadd.f32 %v978, %v955
  %v980 = vrot.slane %v979, 4
  %v981 = vadd.f32 %v979, %v980
  %v982 = vrot.slane %v981, 2
  %v983 = vadd.f32 %v981, %v982
  %v984 = vrot.slane %v983, 1
  %v985 = vadd.f32 %v983, %v984
  %v986 = vmul.f32 %v985, 0.0078125
  %v987 = vsub.f32 %v828, %v986
  %v988 = vsub.f32 %v831, %v986
  %v989 = vsub.f32 %v836, %v986
  %v990 = vsub.f32 %v839, %v986
  %v991 = vsub.f32 %v844, %v986
  %v992 = vsub.f32 %v847, %v986
  %v993 = vsub.f32 %v852, %v986
  %v994 = vsub.f32 %v855, %v986
  %v995 = vsub.f32 %v860, %v986
  %v996 = vsub.f32 %v863, %v986
  %v997 = vsub.f32 %v868, %v986
  %v998 = vsub.f32 %v871, %v986
  %v999 = vsub.f32 %v876, %v986
  %v1000 = vsub.f32 %v879, %v986
  %v1001 = vsub.f32 %v884, %v986
  %v1002 = vsub.f32 %v887, %v986
  %v1003 = vsub.f32 %v892, %v986
  %v1004 = vsub.f32 %v895, %v986
  %v1005 = vsub.f32 %v900, %v986
  %v1006 = vsub.f32 %v903, %v986
  %v1007 = vsub.f32 %v908, %v986
  %v1008 = vsub.f32 %v911, %v986
  %v1009 = vsub.f32 %v916, %v986
  %v1010 = vsub.f32 %v919, %v986
  %v1011 = vsub.f32 %v924, %v986
  %v1012 = vmul.f32 %v987, %v328
  %v1013 = vmul.f32 %v988, %v333
  %v1014 = vmul.f32 %v989, %v338
  %v1015 = vmul.f32 %v990, %v343
  %v1016 = vmul.f32 %v991, %v348
  %v1017 = vmul.f32 %v992, %v353
  %v1018 = vmul.f32 %v993, %v358
  %v1019 = vmul.f32 %v994, %v363
  %v1020 = vmul.f32 %v995, %v368
  %v1021 = vmul.f32 %v996, %v373
  %v1022 = vmul.f32 %v997, %v378
  %v1023 = vmul.f32 %v998, %v383
  %v1024 = vmul.f32 %v999, %v388
  %v1025 = vmul.f32 %v1000, %v393
  %v1026 = vmul.f32 %v1001, %v398
  %v1027 = vmul.f32 %v1002, %v403
  %v1028 = vmul.f32 %v1003, %v408
  %v1029 = vmul.f32 %v1004, %v413
  %v1030 = vmul.f32 %v1005, %v418
  %v1031 = vmul.f32 %v1006, %v423
  %v1032 = vmul.f32 %v1007, %v428
  %v1033 = vmul.f32 %v1008, %v433
  %v1034 = vmul.f32 %v1009, %v438
  %v1035 = vmul.f32 %v1010, %v443
  %v1036 = vmul.f32 %v1011, %v448
  %v1037 = vmul.f32 %v1012, %v1012
  %v1038 = vmul.f32 %v1013, %v1013
  %v1039 = vmul.f32 %v1014, %v1014
  %v1040 = vmul.f32 %v1015, %v1015
  %v1041 = vmul.f32 %v1016, %v1016
  %v1042 = vmul.f32 %v1017, %v1017
  %v1043 = vmul.f32 %v1018, %v1018
  %v1044 = vmul.f32 %v1019, %v1019
  %v1045 = vmul.f32 %v1020, %v1020
  %v1046 = vmul.f32 %v1021, %v1021
  %v1047 = vmul.f32 %v1022, %v1022
  %v1048 = vmul.f32 %v1023, %v1023
  %v1049 = vmul.f32 %v1024, %v1024
  %v1050 = vmul.f32 %v1025, %v1025
  %v1051 = vmul.f32 %v1026, %v1026
  %v1052 = vmul.f32 %v1027, %v1027
  %v1053 = vmul.f32 %v1028, %v1028
  %v1054 = vmul.f32 %v1029, %v1029
  %v1055 = vmul.f32 %v1030, %v1030
  %v1056 = vmul.f32 %v1031, %v1031
  %v1057 = vmul.f32 %v1032, %v1032
  %v1058 = vmul.f32 %v1033, %v1033
  %v1059 = vmul.f32 %v1034, %v1034
  %v1060 = vmul.f32 %v1035, %v1035
  %v1061 = vmul.f32 %v1036, %v1036
  %v1062 = vadd.f32 %v1037, %v1038
  %v1063 = vadd.f32 %v1062, %v1039
  %v1064 = vadd.f32 %v1063, %v1040
  %v1065 = vadd.f32 %v1064, %v1041
  %v1066 = vadd.f32 %v1065, %v1042
  %v1067 = vadd.f32 %v1066, %v1043
  %v1068 = vadd.f32 %v1067, %v1044
  %v1069 = vadd.f32 %v1068, %v1045
  %v1070 = vadd.f32 %v1069, %v1046
  %v1071 = vadd.f32 %v1070, %v1047
  %v1072 = vadd.f32 %v1071, %v1048
  %v1073 = vadd.f32 %v1072, %v1049
  %v1074 = vadd.f32 %v1073, %v1050
  %v1075 = vadd.f32 %v1074, %v1051
  %v1076 = vadd.f32 %v1075, %v1052
  %v1077 = vadd.f32 %v1076, %v1053
  %v1078 = vadd.f32 %v1077, %v1054
  %v1079 = vadd.f32 %v1078, %v1055
  %v1080 = vadd.f32 %v1079, %v1056
  %v1081 = vadd.f32 %v1080, %v1057
  %v1082 = vadd.f32 %v1081, %v1058
  %v1083 = vadd.f32 %v1082, %v1059
  %v1084 = vadd.f32 %v1083, %v1060
  %v1085 = vadd.f32 %v1084, %v1061
  %v1086 = vrot.slane %v1085, 4
  %v1087 = vadd.f32 %v1085, %v1086
  %v1088 = vrot.slane %v1087, 2
  %v1089 = vadd.f32 %v1087, %v1088
  %v1090 = vrot.slane %v1089, 1
  %v1091 = vadd.f32 %v1089, %v1090
  %v1092 = vmul.f32 %v1091, 0.0078125
  %v1093 = vadd.f32 %v1092, 1e-05
  %v1094 = vrsqrt.pop %v1093
  %v1095 = vmul.f32 %v929, %v1094
  %v1096 = vmul.f32 %v986, %v1095
  %v1097 = vsub.f32 %v930, %v1096
  %v1099 = vlaneseq
  %v1100 = vshrl.u32 %v1099, 7
  %v1101 = vsub.s32 0, %v1100
  %v1102 = vrot.slane %v1095, %v1101
  %v1104 = vmul.f32 %v828, %v1102
  %v1105 = vmul.f32 %v831, %v1102
  %v1106 = vmul.f32 %v836, %v1102
  %v1107 = vmul.f32 %v839, %v1102
  %v1108 = vmul.f32 %v844, %v1102
  %v1109 = vmul.f32 %v847, %v1102
  %v1110 = vmul.f32 %v852, %v1102
  %v1111 = vmul.f32 %v855, %v1102
  %v1112 = vmul.f32 %v860, %v1102
  %v1113 = vmul.f32 %v863, %v1102
  %v1114 = vmul.f32 %v868, %v1102
  %v1115 = vmul.f32 %v871, %v1102
  %v1116 = vmul.f32 %v876, %v1102
  %v1117 = vmul.f32 %v879, %v1102
  %v1118 = vmul.f32 %v884, %v1102
  %v1119 = vmul.f32 %v887, %v1102
  %v1120 = vmul.f32 %v892, %v1102
  %v1121 = vmul.f32 %v895, %v1102
  %v1122 = vmul.f32 %v900, %v1102
  %v1123 = vmul.f32 %v903, %v1102
  %v1124 = vmul.f32 %v908, %v1102
  %v1125 = vmul.f32 %v911, %v1102
  %v1126 = vmul.f32 %v916, %v1102
  %v1127 = vmul.f32 %v919, %v1102
  %v1128 = vmul.f32 %v924, %v1102
  %v1130 = vlaneseq
  %v1131 = vshrl.u32 %v1130, 7
  %v1132 = vsub.s32 0, %v1131
  %v1133 = vrot.slane %v1097, %v1132
  %v1135 = vadd.f32 %v1104, %v1133
  %v1136 = vadd.f32 %v1105, %v1133
  %v1137 = vadd.f32 %v1106, %v1133
  %v1138 = vadd.f32 %v1107, %v1133
  %v1139 = vadd.f32 %v1108, %v1133
  %v1140 = vadd.f32 %v1109, %v1133
  %v1141 = vadd.f32 %v1110, %v1133
  %v1142 = vadd.f32 %v1111, %v1133
  %v1143 = vadd.f32 %v1112, %v1133
  %v1144 = vadd.f32 %v1113, %v1133
  %v1145 = vadd.f32 %v1114, %v1133
  %v1146 = vadd.f32 %v1115, %v1133
  %v1147 = vadd.f32 %v1116, %v1133
  %v1148 = vadd.f32 %v1117, %v1133
  %v1149 = vadd.f32 %v1118, %v1133
  %v1150 = vadd.f32 %v1119, %v1133
  %v1151 = vadd.f32 %v1120, %v1133
  %v1152 = vadd.f32 %v1121, %v1133
  %v1153 = vadd.f32 %v1122, %v1133
  %v1154 = vadd.f32 %v1123, %v1133
  %v1155 = vadd.f32 %v1124, %v1133
  %v1156 = vadd.f32 %v1125, %v1133
  %v1157 = vadd.f32 %v1126, %v1133
  %v1158 = vadd.f32 %v1127, %v1133
  %v1159 = vadd.f32 %v1128, %v1133
  %1160 = vst [vmem:[#allocation2] sm:$0xff] 0.0
  %1161 = vst [vmem:[#allocation2 + $0x8] sm:$0xff] 0.0
  %1162 = vst [vmem:[#allocation2 + $0xd8] sm:$0xff] 0.0
  %1163 = vst [vmem:[#allocation2 + $0xe0] sm:$0xff] 0.0
  %1164 = vst [vmem:[#allocation2 + $0x10] sm:$0xff] %v704
  %1165 = vst [vmem:[#allocation2 + $0x18] sm:$0xff] %v705
  %1166 = vst [vmem:[#allocation2 + $0x20] sm:$0xff] %v706
  %1167 = vst [vmem:[#allocation2 + $0x28] sm:$0xff] %v707
  %1168 = vst [vmem:[#allocation2 + $0x30] sm:$0xff] %v708
  %1169 = vst [vmem:[#allocation2 + $0x38] sm:$0xff] %v709
  %1170 = vst [vmem:[#allocation2 + $0x40] sm:$0xff] %v710
  %1171 = vst [vmem:[#allocation2 + $0x48] sm:$0xff] %v711
  %1172 = vst [vmem:[#allocation2 + $0x50] sm:$0xff] %v712
  %1173 = vst [vmem:[#allocation2 + $0x58] sm:$0xff] %v713
  %1174 = vst [vmem:[#allocation2 + $0x60] sm:$0xff] %v714
  %1175 = vst [vmem:[#allocation2 + $0x68] sm:$0xff] %v715
  %1176 = vst [vmem:[#allocation2 + $0x70] sm:$0xff] %v716
  %1177 = vst [vmem:[#allocation2 + $0x78] sm:$0xff] %v717
  %1178 = vst [vmem:[#allocation2 + $0x80] sm:$0xff] %v718
  %1179 = vst [vmem:[#allocation2 + $0x88] sm:$0xff] %v719
  %1180 = vst [vmem:[#allocation2 + $0x90] sm:$0xff] %v720
  %1181 = vst [vmem:[#allocation2 + $0x98] sm:$0xff] %v721
  %1182 = vst [vmem:[#allocation2 + $0xa0] sm:$0xff] %v722
  %1183 = vst [vmem:[#allocation2 + $0xa8] sm:$0xff] %v723
  %1184 = vst [vmem:[#allocation2 + $0xb0] sm:$0xff] %v724
  %1185 = vst [vmem:[#allocation2 + $0xb8] sm:$0xff] %v725
  %1186 = vst [vmem:[#allocation2 + $0xc0] sm:$0xff] %v726
  %1187 = vst [vmem:[#allocation2 + $0xc8] sm:$0xff] %v727
  %1188 = vst [vmem:[#allocation2 + $0xd0] sm:$0xff] %v728
  %v1189 = vld [vmem:[#allocation2 + $0x5] sm:$0xff]
  %v1190 = vld [vmem:[#allocation2 + $0xd] sm:$0xff]
  %v1191 = vld [vmem:[#allocation2 + $0x15] sm:$0xff]
  %v1192 = vld [vmem:[#allocation2 + $0x1d] sm:$0xff]
  %v1193 = vld [vmem:[#allocation2 + $0x25] sm:$0xff]
  %v1194 = vld [vmem:[#allocation2 + $0x2d] sm:$0xff]
  %v1195 = vld [vmem:[#allocation2 + $0x35] sm:$0xff]
  %v1196 = vld [vmem:[#allocation2 + $0x3d] sm:$0xff]
  %v1197 = vld [vmem:[#allocation2 + $0x45] sm:$0xff]
  %v1198 = vld [vmem:[#allocation2 + $0x4d] sm:$0xff]
  %v1199 = vld [vmem:[#allocation2 + $0x55] sm:$0xff]
  %v1200 = vld [vmem:[#allocation2 + $0x5d] sm:$0xff]
  %v1201 = vld [vmem:[#allocation2 + $0x65] sm:$0xff]
  %v1202 = vld [vmem:[#allocation2 + $0x6d] sm:$0xff]
  %v1203 = vld [vmem:[#allocation2 + $0x75] sm:$0xff]
  %v1204 = vld [vmem:[#allocation2 + $0x7d] sm:$0xff]
  %v1205 = vld [vmem:[#allocation2 + $0x85] sm:$0xff]
  %v1206 = vld [vmem:[#allocation2 + $0x8d] sm:$0xff]
  %v1207 = vld [vmem:[#allocation2 + $0x95] sm:$0xff]
  %v1208 = vld [vmem:[#allocation2 + $0x9d] sm:$0xff]
  %v1209 = vld [vmem:[#allocation2 + $0xa5] sm:$0xff]
  %v1210 = vld [vmem:[#allocation2 + $0xad] sm:$0xff]
  %v1211 = vld [vmem:[#allocation2 + $0xb5] sm:$0xff]
  %v1212 = vld [vmem:[#allocation2 + $0xbd] sm:$0xff]
  %v1213 = vld [vmem:[#allocation2 + $0xc5] sm:$0xff]
  %v1214 = vpack.c.bf16 %v1190, %v1189
  %v1215 = vpack.c.bf16 %v1192, %v1191
  %v1216 = vpack.c.bf16 %v1194, %v1193
  %v1217 = vpack.c.bf16 %v1196, %v1195
  %v1218 = vpack.c.bf16 %v1198, %v1197
  %v1219 = vpack.c.bf16 %v1200, %v1199
  %v1220 = vpack.c.bf16 %v1202, %v1201
  %v1221 = vpack.c.bf16 %v1204, %v1203
  %v1222 = vpack.c.bf16 %v1206, %v1205
  %v1223 = vpack.c.bf16 %v1208, %v1207
  %v1224 = vpack.c.bf16 %v1210, %v1209
  %v1225 = vpack.c.bf16 %v1212, %v1211
  %v1226 = vpack.c.bf16 %v1213, %v1213
  %v1227 = vld [vmem:[%s7] sm:$0xf]
  %v1228 = vld [vmem:[%s7 + $0x4] sm:$0xf]
  %v1229 = vld [vmem:[%s7 + $0x8] sm:$0xf]
  %v1230 = vld [vmem:[%s7 + $0xc] sm:$0xf]
  %v1231 = vld [vmem:[%s7 + $0x10] sm:$0xf]
  %v1232 = vld [vmem:[%s7 + $0x14] sm:$0xf]
  %v1233 = vld [vmem:[%s7 + $0x18] sm:$0xf]
  %v1234 = vld [vmem:[%s7 + $0x1c] sm:$0xf]
  %v1235 = vld [vmem:[%s7 + $0x20] sm:$0xf]
  %v1236 = vld [vmem:[%s7 + $0x24] sm:$0xf]
  %v1237 = vld [vmem:[%s7 + $0x28] sm:$0xf]
  %v1238 = vld [vmem:[%s7 + $0x2c] sm:$0xf]
  %v1239 = vld [vmem:[%s7 + $0x30] sm:$0xf]
  %v1240 = vld [vmem:[%s7 + $0x34] sm:$0xf]
  %v1241 = vld [vmem:[%s7 + $0x38] sm:$0xf]
  %v1242 = vld [vmem:[%s7 + $0x3c] sm:$0xf]
  %v1259 = vunpack.c.l.b16 %v1227
  %v1260 = vunpack.c.l.b16 %v1228
  %v1261 = vunpack.c.l.b16 %v1229
  %v1262 = vunpack.c.l.b16 %v1230
  %v1263 = vunpack.c.l.b16 %v1231
  %v1264 = vunpack.c.l.b16 %v1232
  %v1265 = vunpack.c.l.b16 %v1233
  %v1266 = vunpack.c.l.b16 %v1234
  %v1267 = vunpack.c.l.b16 %v1235
  %v1268 = vunpack.c.l.b16 %v1236
  %v1269 = vunpack.c.l.b16 %v1237
  %v1270 = vunpack.c.l.b16 %v1238
  %v1271 = vunpack.c.l.b16 %v1239
  %v1272 = vunpack.c.l.b16 %v1240
  %v1273 = vunpack.c.l.b16 %v1241
  %v1274 = vunpack.c.l.b16 %v1242
  %v1275 = vpack.c.b16 %v1260, %v1259
  %v1276 = vpack.c.b16 %v1262, %v1261
  %v1277 = vpack.c.b16 %v1264, %v1263
  %v1278 = vpack.c.b16 %v1266, %v1265
  %v1279 = vpack.c.b16 %v1268, %v1267
  %v1280 = vpack.c.b16 %v1270, %v1269
  %v1281 = vpack.c.b16 %v1272, %v1271
  %v1282 = vpack.c.b16 %v1274, %v1273
  %1291 = vmatprep.subr.bf16.mxu0 0
  %1292 = vmatpush1.bf16.msra.mxu0 %v1282
  %1293 = vmatprep.subr.bf16.mxu0 0
  %1294 = vmatpush1.bf16.msra.mxu0 %v1281
  %1295 = vmatprep.subr.bf16.mxu0 0
  %1296 = vmatpush1.bf16.msra.mxu0 %v1280
  %1297 = vmatprep.subr.bf16.mxu0 0
  %1298 = vmatpush1.bf16.msra.mxu0 %v1279
  %1299 = vmatprep.subr.bf16.mxu0 0
  %1300 = vmatpush1.bf16.msra.mxu0 %v1278
  %1301 = vmatprep.subr.bf16.mxu0 0
  %1302 = vmatpush1.bf16.msra.mxu0 %v1277
  %1303 = vmatprep.subr.bf16.mxu0 0
  %1304 = vmatpush1.bf16.msra.mxu0 %v1276
  %1305 = vmatprep.subr.bf16.mxu0 0
  %1306 = vmatpush1.bf16.msra.mxu0 %v1275
  %1307 = vmatprep.subr.bf16.mxu0 0
  %1308 = vmatpush2.bf16.msra.mxu0 0
  %1309 = vmatprep.subr.bf16.mxu0 0
  %1310 = vmatpush2.bf16.msra.mxu0 0
  %1311 = vmatprep.subr.bf16.mxu0 0
  %1312 = vmatpush2.bf16.msra.mxu0 0
  %1313 = vmatprep.subr.bf16.mxu0 0
  %1314 = vmatpush2.bf16.msra.mxu0 0
  %1315 = vmatprep.subr.bf16.mxu0 0
  %1316 = vmatpush2.bf16.msra.mxu0 0
  %1317 = vmatprep.subr.bf16.mxu0 0
  %1318 = vmatpush2.bf16.msra.mxu0 0
  %1319 = vmatprep.subr.bf16.mxu0 0
  %1320 = vmatpush2.bf16.msra.mxu0 0
  %1321 = vmatprep.subr.bf16.mxu0 0
  %1322 = vmatpush2.bf16.msra.mxu0 0
  %1323 = vmatprep.mubr.bf16.mxu0 0
  %1324 = vmatmul.mubr.bf16.gmra.mxu0 %v1214
  %v1325 = vpop.f32.mrf.mxu0
  %v1326 = vadd.f32 0.0, %v1325
  %v1327 = vpop.f32.mrf.mxu0
  %v1328 = vpop.f32.mrf.mxu0
  %v1329 = vadd.f32 0.0, %v1328
  %v1330 = vpop.f32.mrf.mxu0
  %1331 = vmatprep.mubr.bf16.mxu0 0
  %1332 = vmatmul.mubr.bf16.gmra.mxu0 %v1215
  %v1333 = vpop.f32.mrf.mxu0
  %v1334 = vadd.f32 0.0, %v1333
  %v1335 = vpop.f32.mrf.mxu0
  %v1336 = vpop.f32.mrf.mxu0
  %v1337 = vadd.f32 0.0, %v1336
  %v1338 = vpop.f32.mrf.mxu0
  %1339 = vmatprep.mubr.bf16.mxu0 0
  %1340 = vmatmul.mubr.bf16.gmra.mxu0 %v1216
  %v1341 = vpop.f32.mrf.mxu0
  %v1342 = vadd.f32 0.0, %v1341
  %v1343 = vpop.f32.mrf.mxu0
  %v1344 = vpop.f32.mrf.mxu0
  %v1345 = vadd.f32 0.0, %v1344
  %v1346 = vpop.f32.mrf.mxu0
  %1347 = vmatprep.mubr.bf16.mxu0 0
  %1348 = vmatmul.mubr.bf16.gmra.mxu0 %v1217
  %v1349 = vpop.f32.mrf.mxu0
  %v1350 = vadd.f32 0.0, %v1349
  %v1351 = vpop.f32.mrf.mxu0
  %v1352 = vpop.f32.mrf.mxu0
  %v1353 = vadd.f32 0.0, %v1352
  %v1354 = vpop.f32.mrf.mxu0
  %1355 = vmatprep.mubr.bf16.mxu0 0
  %1356 = vmatmul.mubr.bf16.gmra.mxu0 %v1218
  %v1357 = vpop.f32.mrf.mxu0
  %v1358 = vadd.f32 0.0, %v1357
  %v1359 = vpop.f32.mrf.mxu0
  %v1360 = vpop.f32.mrf.mxu0
  %v1361 = vadd.f32 0.0, %v1360
  %v1362 = vpop.f32.mrf.mxu0
  %1363 = vmatprep.mubr.bf16.mxu0 0
  %1364 = vmatmul.mubr.bf16.gmra.mxu0 %v1219
  %v1365 = vpop.f32.mrf.mxu0
  %v1366 = vadd.f32 0.0, %v1365
  %v1367 = vpop.f32.mrf.mxu0
  %v1368 = vpop.f32.mrf.mxu0
  %v1369 = vadd.f32 0.0, %v1368
  %v1370 = vpop.f32.mrf.mxu0
  %1371 = vmatprep.mubr.bf16.mxu0 0
  %1372 = vmatmul.mubr.bf16.gmra.mxu0 %v1220
  %v1373 = vpop.f32.mrf.mxu0
  %v1374 = vadd.f32 0.0, %v1373
  %v1375 = vpop.f32.mrf.mxu0
  %v1376 = vpop.f32.mrf.mxu0
  %v1377 = vadd.f32 0.0, %v1376
  %v1378 = vpop.f32.mrf.mxu0
  %1379 = vmatprep.mubr.bf16.mxu0 0
  %1380 = vmatmul.mubr.bf16.gmra.mxu0 %v1221
  %v1381 = vpop.f32.mrf.mxu0
  %v1382 = vadd.f32 0.0, %v1381
  %v1383 = vpop.f32.mrf.mxu0
  %v1384 = vpop.f32.mrf.mxu0
  %v1385 = vadd.f32 0.0, %v1384
  %v1386 = vpop.f32.mrf.mxu0
  %1387 = vmatprep.mubr.bf16.mxu0 0
  %1388 = vmatmul.mubr.bf16.gmra.mxu0 %v1222
  %v1389 = vpop.f32.mrf.mxu0
  %v1390 = vadd.f32 0.0, %v1389
  %v1391 = vpop.f32.mrf.mxu0
  %v1392 = vpop.f32.mrf.mxu0
  %v1393 = vadd.f32 0.0, %v1392
  %v1394 = vpop.f32.mrf.mxu0
  %1395 = vmatprep.mubr.bf16.mxu0 0
  %1396 = vmatmul.mubr.bf16.gmra.mxu0 %v1223
  %v1397 = vpop.f32.mrf.mxu0
  %v1398 = vadd.f32 0.0, %v1397
  %v1399 = vpop.f32.mrf.mxu0
  %v1400 = vpop.f32.mrf.mxu0
  %v1401 = vadd.f32 0.0, %v1400
  %v1402 = vpop.f32.mrf.mxu0
  %1403 = vmatprep.mubr.bf16.mxu0 0
  %1404 = vmatmul.mubr.bf16.gmra.mxu0 %v1224
  %v1405 = vpop.f32.mrf.mxu0
  %v1406 = vadd.f32 0.0, %v1405
  %v1407 = vpop.f32.mrf.mxu0
  %v1408 = vpop.f32.mrf.mxu0
  %v1409 = vadd.f32 0.0, %v1408
  %v1410 = vpop.f32.mrf.mxu0
  %1411 = vmatprep.mubr.bf16.mxu0 0
  %1412 = vmatmul.mubr.bf16.gmra.mxu0 %v1225
  %v1413 = vpop.f32.mrf.mxu0
  %v1414 = vadd.f32 0.0, %v1413
  %v1415 = vpop.f32.mrf.mxu0
  %v1416 = vpop.f32.mrf.mxu0
  %v1417 = vadd.f32 0.0, %v1416
  %v1418 = vpop.f32.mrf.mxu0
  %1419 = vmatprep.mubr.bf16.mxu0 0
  %1420 = vmatmul.mubr.bf16.gmra.mxu0 %v1226
  %v1421 = vpop.f32.mrf.mxu0
  %v1422 = vadd.f32 0.0, %v1421
  %v1423 = vpop.f32.mrf.mxu0
  %v1424 = vpop.f32.mrf.mxu0
  %v1425 = vpop.f32.mrf.mxu0
  %1426 = vdwg.mxu0
  %1427 = vst [vmem:[#allocation3] sm:$0xff] %v1326
  %1428 = vst [vmem:[#allocation3 + $0x8] sm:$0xff] %v1329
  %1429 = vst [vmem:[#allocation3 + $0x10] sm:$0xff] %v1334
  %1430 = vst [vmem:[#allocation3 + $0x18] sm:$0xff] %v1337
  %1431 = vst [vmem:[#allocation3 + $0x20] sm:$0xff] %v1342
  %1432 = vst [vmem:[#allocation3 + $0x28] sm:$0xff] %v1345
  %1433 = vst [vmem:[#allocation3 + $0x30] sm:$0xff] %v1350
  %1434 = vst [vmem:[#allocation3 + $0x38] sm:$0xff] %v1353
  %1435 = vst [vmem:[#allocation3 + $0x40] sm:$0xff] %v1358
  %1436 = vst [vmem:[#allocation3 + $0x48] sm:$0xff] %v1361
  %1437 = vst [vmem:[#allocation3 + $0x50] sm:$0xff] %v1366
  %1438 = vst [vmem:[#allocation3 + $0x58] sm:$0xff] %v1369
  %1439 = vst [vmem:[#allocation3 + $0x60] sm:$0xff] %v1374
  %1440 = vst [vmem:[#allocation3 + $0x68] sm:$0xff] %v1377
  %1441 = vst [vmem:[#allocation3 + $0x70] sm:$0xff] %v1382
  %1442 = vst [vmem:[#allocation3 + $0x78] sm:$0xff] %v1385
  %1443 = vst [vmem:[#allocation3 + $0x80] sm:$0xff] %v1390
  %1444 = vst [vmem:[#allocation3 + $0x88] sm:$0xff] %v1393
  %1445 = vst [vmem:[#allocation3 + $0x90] sm:$0xff] %v1398
  %1446 = vst [vmem:[#allocation3 + $0x98] sm:$0xff] %v1401
  %1447 = vst [vmem:[#allocation3 + $0xa0] sm:$0xff] %v1406
  %1448 = vst [vmem:[#allocation3 + $0xa8] sm:$0xff] %v1409
  %1449 = vst [vmem:[#allocation3 + $0xb0] sm:$0xff] %v1414
  %1450 = vst [vmem:[#allocation3 + $0xb8] sm:$0xff] %v1417
  %1451 = vst [vmem:[#allocation3 + $0xc0] sm:$0xff] %v1422
  %v1452 = vld [vmem:[#allocation2 + $0x6] sm:$0xff]
  %v1453 = vld [vmem:[#allocation2 + $0xe] sm:$0xff]
  %v1454 = vld [vmem:[#allocation2 + $0x16] sm:$0xff]
  %v1455 = vld [vmem:[#allocation2 + $0x1e] sm:$0xff]
  %v1456 = vld [vmem:[#allocation2 + $0x26] sm:$0xff]
  %v1457 = vld [vmem:[#allocation2 + $0x2e] sm:$0xff]
  %v1458 = vld [vmem:[#allocation2 + $0x36] sm:$0xff]
  %v1459 = vld [vmem:[#allocation2 + $0x3e] sm:$0xff]
  %v1460 = vld [vmem:[#allocation2 + $0x46] sm:$0xff]
  %v1461 = vld [vmem:[#allocation2 + $0x4e] sm:$0xff]
  %v1462 = vld [vmem:[#allocation2 + $0x56] sm:$0xff]
  %v1463 = vld [vmem:[#allocation2 + $0x5e] sm:$0xff]
  %v1464 = vld [vmem:[#allocation2 + $0x66] sm:$0xff]
  %v1465 = vld [vmem:[#allocation2 + $0x6e] sm:$0xff]
  %v1466 = vld [vmem:[#allocation2 + $0x76] sm:$0xff]
  %v1467 = vld [vmem:[#allocation2 + $0x7e] sm:$0xff]
  %v1468 = vld [vmem:[#allocation2 + $0x86] sm:$0xff]
  %v1469 = vld [vmem:[#allocation2 + $0x8e] sm:$0xff]
  %v1470 = vld [vmem:[#allocation2 + $0x96] sm:$0xff]
  %v1471 = vld [vmem:[#allocation2 + $0x9e] sm:$0xff]
  %v1472 = vld [vmem:[#allocation2 + $0xa6] sm:$0xff]
  %v1473 = vld [vmem:[#allocation2 + $0xae] sm:$0xff]
  %v1474 = vld [vmem:[#allocation2 + $0xb6] sm:$0xff]
  %v1475 = vld [vmem:[#allocation2 + $0xbe] sm:$0xff]
  %v1476 = vld [vmem:[#allocation2 + $0xc6] sm:$0xff]
  %v1477 = vpack.c.bf16 %v1453, %v1452
  %v1478 = vpack.c.bf16 %v1455, %v1454
  %v1479 = vpack.c.bf16 %v1457, %v1456
  %v1480 = vpack.c.bf16 %v1459, %v1458
  %v1481 = vpack.c.bf16 %v1461, %v1460
  %v1482 = vpack.c.bf16 %v1463, %v1462
  %v1483 = vpack.c.bf16 %v1465, %v1464
  %v1484 = vpack.c.bf16 %v1467, %v1466
  %v1485 = vpack.c.bf16 %v1469, %v1468
  %v1486 = vpack.c.bf16 %v1471, %v1470
  %v1487 = vpack.c.bf16 %v1473, %v1472
  %v1488 = vpack.c.bf16 %v1475, %v1474
  %v1489 = vpack.c.bf16 %v1476, %v1476
  %s1490 = scalar_lea.vmem %s7, 64
  %v1491 = vld [vmem:[%s1490] sm:$0xf]
  %v1492 = vld [vmem:[%s1490 + $0x4] sm:$0xf]
  %v1493 = vld [vmem:[%s1490 + $0x8] sm:$0xf]
  %v1494 = vld [vmem:[%s1490 + $0xc] sm:$0xf]
  %v1495 = vld [vmem:[%s1490 + $0x10] sm:$0xf]
  %v1496 = vld [vmem:[%s1490 + $0x14] sm:$0xf]
  %v1497 = vld [vmem:[%s1490 + $0x18] sm:$0xf]
  %v1498 = vld [vmem:[%s1490 + $0x1c] sm:$0xf]
  %v1499 = vld [vmem:[%s1490 + $0x20] sm:$0xf]
  %v1500 = vld [vmem:[%s1490 + $0x24] sm:$0xf]
  %v1501 = vld [vmem:[%s1490 + $0x28] sm:$0xf]
  %v1502 = vld [vmem:[%s1490 + $0x2c] sm:$0xf]
  %v1503 = vld [vmem:[%s1490 + $0x30] sm:$0xf]
  %v1504 = vld [vmem:[%s1490 + $0x34] sm:$0xf]
  %v1505 = vld [vmem:[%s1490 + $0x38] sm:$0xf]
  %v1506 = vld [vmem:[%s1490 + $0x3c] sm:$0xf]
  %v1523 = vunpack.c.l.b16 %v1491
  %v1524 = vunpack.c.l.b16 %v1492
  %v1525 = vunpack.c.l.b16 %v1493
  %v1526 = vunpack.c.l.b16 %v1494
  %v1527 = vunpack.c.l.b16 %v1495
  %v1528 = vunpack.c.l.b16 %v1496
  %v1529 = vunpack.c.l.b16 %v1497
  %v1530 = vunpack.c.l.b16 %v1498
  %v1531 = vunpack.c.l.b16 %v1499
  %v1532 = vunpack.c.l.b16 %v1500
  %v1533 = vunpack.c.l.b16 %v1501
  %v1534 = vunpack.c.l.b16 %v1502
  %v1535 = vunpack.c.l.b16 %v1503
  %v1536 = vunpack.c.l.b16 %v1504
  %v1537 = vunpack.c.l.b16 %v1505
  %v1538 = vunpack.c.l.b16 %v1506
  %v1539 = vpack.c.b16 %v1524, %v1523
  %v1540 = vpack.c.b16 %v1526, %v1525
  %v1541 = vpack.c.b16 %v1528, %v1527
  %v1542 = vpack.c.b16 %v1530, %v1529
  %v1543 = vpack.c.b16 %v1532, %v1531
  %v1544 = vpack.c.b16 %v1534, %v1533
  %v1545 = vpack.c.b16 %v1536, %v1535
  %v1546 = vpack.c.b16 %v1538, %v1537
  %1555 = vmatprep.subr.bf16.mxu0 0
  %1556 = vmatpush1.bf16.msra.mxu0 %v1546
  %1557 = vmatprep.subr.bf16.mxu0 0
  %1558 = vmatpush1.bf16.msra.mxu0 %v1545
  %1559 = vmatprep.subr.bf16.mxu0 0
  %1560 = vmatpush1.bf16.msra.mxu0 %v1544
  %1561 = vmatprep.subr.bf16.mxu0 0
  %1562 = vmatpush1.bf16.msra.mxu0 %v1543
  %1563 = vmatprep.subr.bf16.mxu0 0
  %1564 = vmatpush1.bf16.msra.mxu0 %v1542
  %1565 = vmatprep.subr.bf16.mxu0 0
  %1566 = vmatpush1.bf16.msra.mxu0 %v1541
  %1567 = vmatprep.subr.bf16.mxu0 0
  %1568 = vmatpush1.bf16.msra.mxu0 %v1540
  %1569 = vmatprep.subr.bf16.mxu0 0
  %1570 = vmatpush1.bf16.msra.mxu0 %v1539
  %1571 = vmatprep.subr.bf16.mxu0 0
  %1572 = vmatpush2.bf16.msra.mxu0 0
  %1573 = vmatprep.subr.bf16.mxu0 0
  %1574 = vmatpush2.bf16.msra.mxu0 0
  %1575 = vmatprep.subr.bf16.mxu0 0
  %1576 = vmatpush2.bf16.msra.mxu0 0
  %1577 = vmatprep.subr.bf16.mxu0 0
  %1578 = vmatpush2.bf16.msra.mxu0 0
  %1579 = vmatprep.subr.bf16.mxu0 0
  %1580 = vmatpush2.bf16.msra.mxu0 0
  %1581 = vmatprep.subr.bf16.mxu0 0
  %1582 = vmatpush2.bf16.msra.mxu0 0
  %1583 = vmatprep.subr.bf16.mxu0 0
  %1584 = vmatpush2.bf16.msra.mxu0 0
  %1585 = vmatprep.subr.bf16.mxu0 0
  %1586 = vmatpush2.bf16.msra.mxu0 0
  %1587 = vmatprep.mubr.bf16.mxu0 0
  %1588 = vmatmul.mubr.bf16.gmra.mxu0 %v1477
  %v1589 = vpop.f32.mrf.mxu0
  %v1590 = vadd.f32 0.0, %v1589
  %v1591 = vpop.f32.mrf.mxu0
  %v1592 = vpop.f32.mrf.mxu0
  %v1593 = vadd.f32 0.0, %v1592
  %v1594 = vpop.f32.mrf.mxu0
  %1595 = vmatprep.mubr.bf16.mxu0 0
  %1596 = vmatmul.mubr.bf16.gmra.mxu0 %v1478
  %v1597 = vpop.f32.mrf.mxu0
  %v1598 = vadd.f32 0.0, %v1597
  %v1599 = vpop.f32.mrf.mxu0
  %v1600 = vpop.f32.mrf.mxu0
  %v1601 = vadd.f32 0.0, %v1600
  %v1602 = vpop.f32.mrf.mxu0
  %1603 = vmatprep.mubr.bf16.mxu0 0
  %1604 = vmatmul.mubr.bf16.gmra.mxu0 %v1479
  %v1605 = vpop.f32.mrf.mxu0
  %v1606 = vadd.f32 0.0, %v1605
  %v1607 = vpop.f32.mrf.mxu0
  %v1608 = vpop.f32.mrf.mxu0
  %v1609 = vadd.f32 0.0, %v1608
  %v1610 = vpop.f32.mrf.mxu0
  %1611 = vmatprep.mubr.bf16.mxu0 0
  %1612 = vmatmul.mubr.bf16.gmra.mxu0 %v1480
  %v1613 = vpop.f32.mrf.mxu0
  %v1614 = vadd.f32 0.0, %v1613
  %v1615 = vpop.f32.mrf.mxu0
  %v1616 = vpop.f32.mrf.mxu0
  %v1617 = vadd.f32 0.0, %v1616
  %v1618 = vpop.f32.mrf.mxu0
  %1619 = vmatprep.mubr.bf16.mxu0 0
  %1620 = vmatmul.mubr.bf16.gmra.mxu0 %v1481
  %v1621 = vpop.f32.mrf.mxu0
  %v1622 = vadd.f32 0.0, %v1621
  %v1623 = vpop.f32.mrf.mxu0
  %v1624 = vpop.f32.mrf.mxu0
  %v1625 = vadd.f32 0.0, %v1624
  %v1626 = vpop.f32.mrf.mxu0
  %1627 = vmatprep.mubr.bf16.mxu0 0
  %1628 = vmatmul.mubr.bf16.gmra.mxu0 %v1482
  %v1629 = vpop.f32.mrf.mxu0
  %v1630 = vadd.f32 0.0, %v1629
  %v1631 = vpop.f32.mrf.mxu0
  %v1632 = vpop.f32.mrf.mxu0
  %v1633 = vadd.f32 0.0, %v1632
  %v1634 = vpop.f32.mrf.mxu0
  %1635 = vmatprep.mubr.bf16.mxu0 0
  %1636 = vmatmul.mubr.bf16.gmra.mxu0 %v1483
  %v1637 = vpop.f32.mrf.mxu0
  %v1638 = vadd.f32 0.0, %v1637
  %v1639 = vpop.f32.mrf.mxu0
  %v1640 = vpop.f32.mrf.mxu0
  %v1641 = vadd.f32 0.0, %v1640
  %v1642 = vpop.f32.mrf.mxu0
  %1643 = vmatprep.mubr.bf16.mxu0 0
  %1644 = vmatmul.mubr.bf16.gmra.mxu0 %v1484
  %v1645 = vpop.f32.mrf.mxu0
  %v1646 = vadd.f32 0.0, %v1645
  %v1647 = vpop.f32.mrf.mxu0
  %v1648 = vpop.f32.mrf.mxu0
  %v1649 = vadd.f32 0.0, %v1648
  %v1650 = vpop.f32.mrf.mxu0
  %1651 = vmatprep.mubr.bf16.mxu0 0
  %1652 = vmatmul.mubr.bf16.gmra.mxu0 %v1485
  %v1653 = vpop.f32.mrf.mxu0
  %v1654 = vadd.f32 0.0, %v1653
  %v1655 = vpop.f32.mrf.mxu0
  %v1656 = vpop.f32.mrf.mxu0
  %v1657 = vadd.f32 0.0, %v1656
  %v1658 = vpop.f32.mrf.mxu0
  %1659 = vmatprep.mubr.bf16.mxu0 0
  %1660 = vmatmul.mubr.bf16.gmra.mxu0 %v1486
  %v1661 = vpop.f32.mrf.mxu0
  %v1662 = vadd.f32 0.0, %v1661
  %v1663 = vpop.f32.mrf.mxu0
  %v1664 = vpop.f32.mrf.mxu0
  %v1665 = vadd.f32 0.0, %v1664
  %v1666 = vpop.f32.mrf.mxu0
  %1667 = vmatprep.mubr.bf16.mxu0 0
  %1668 = vmatmul.mubr.bf16.gmra.mxu0 %v1487
  %v1669 = vpop.f32.mrf.mxu0
  %v1670 = vadd.f32 0.0, %v1669
  %v1671 = vpop.f32.mrf.mxu0
  %v1672 = vpop.f32.mrf.mxu0
  %v1673 = vadd.f32 0.0, %v1672
  %v1674 = vpop.f32.mrf.mxu0
  %1675 = vmatprep.mubr.bf16.mxu0 0
  %1676 = vmatmul.mubr.bf16.gmra.mxu0 %v1488
  %v1677 = vpop.f32.mrf.mxu0
  %v1678 = vadd.f32 0.0, %v1677
  %v1679 = vpop.f32.mrf.mxu0
  %v1680 = vpop.f32.mrf.mxu0
  %v1681 = vadd.f32 0.0, %v1680
  %v1682 = vpop.f32.mrf.mxu0
  %1683 = vmatprep.mubr.bf16.mxu0 0
  %1684 = vmatmul.mubr.bf16.gmra.mxu0 %v1489
  %v1685 = vpop.f32.mrf.mxu0
  %v1686 = vadd.f32 0.0, %v1685
  %v1687 = vpop.f32.mrf.mxu0
  %v1688 = vpop.f32.mrf.mxu0
  %v1689 = vpop.f32.mrf.mxu0
  %1690 = vdwg.mxu0
  %v1691 = vld [vmem:[#allocation3] sm:$0xff]
  %v1692 = vld [vmem:[#allocation3 + $0x8] sm:$0xff]
  %v1693 = vld [vmem:[#allocation3 + $0x10] sm:$0xff]
  %v1694 = vld [vmem:[#allocation3 + $0x18] sm:$0xff]
  %v1695 = vld [vmem:[#allocation3 + $0x20] sm:$0xff]
  %v1696 = vld [vmem:[#allocation3 + $0x28] sm:$0xff]
  %v1697 = vld [vmem:[#allocation3 + $0x30] sm:$0xff]
  %v1698 = vld [vmem:[#allocation3 + $0x38] sm:$0xff]
  %v1699 = vld [vmem:[#allocation3 + $0x40] sm:$0xff]
  %v1700 = vld [vmem:[#allocation3 + $0x48] sm:$0xff]
  %v1701 = vld [vmem:[#allocation3 + $0x50] sm:$0xff]
  %v1702 = vld [vmem:[#allocation3 + $0x58] sm:$0xff]
  %v1703 = vld [vmem:[#allocation3 + $0x60] sm:$0xff]
  %v1704 = vld [vmem:[#allocation3 + $0x68] sm:$0xff]
  %v1705 = vld [vmem:[#allocation3 + $0x70] sm:$0xff]
  %v1706 = vld [vmem:[#allocation3 + $0x78] sm:$0xff]
  %v1707 = vld [vmem:[#allocation3 + $0x80] sm:$0xff]
  %v1708 = vld [vmem:[#allocation3 + $0x88] sm:$0xff]
  %v1709 = vld [vmem:[#allocation3 + $0x90] sm:$0xff]
  %v1710 = vld [vmem:[#allocation3 + $0x98] sm:$0xff]
  %v1711 = vld [vmem:[#allocation3 + $0xa0] sm:$0xff]
  %v1712 = vld [vmem:[#allocation3 + $0xa8] sm:$0xff]
  %v1713 = vld [vmem:[#allocation3 + $0xb0] sm:$0xff]
  %v1714 = vld [vmem:[#allocation3 + $0xb8] sm:$0xff]
  %v1715 = vld [vmem:[#allocation3 + $0xc0] sm:$0xff]
  %v1716 = vadd.f32 %v1691, %v1590
  %v1717 = vadd.f32 %v1692, %v1593
  %v1718 = vadd.f32 %v1693, %v1598
  %v1719 = vadd.f32 %v1694, %v1601
  %v1720 = vadd.f32 %v1695, %v1606
  %v1721 = vadd.f32 %v1696, %v1609
  %v1722 = vadd.f32 %v1697, %v1614
  %v1723 = vadd.f32 %v1698, %v1617
  %v1724 = vadd.f32 %v1699, %v1622
  %v1725 = vadd.f32 %v1700, %v1625
  %v1726 = vadd.f32 %v1701, %v1630
  %v1727 = vadd.f32 %v1702, %v1633
  %v1728 = vadd.f32 %v1703, %v1638
  %v1729 = vadd.f32 %v1704, %v1641
  %v1730 = vadd.f32 %v1705, %v1646
  %v1731 = vadd.f32 %v1706, %v1649
  %v1732 = vadd.f32 %v1707, %v1654
  %v1733 = vadd.f32 %v1708, %v1657
  %v1734 = vadd.f32 %v1709, %v1662
  %v1735 = vadd.f32 %v1710, %v1665
  %v1736 = vadd.f32 %v1711, %v1670
  %v1737 = vadd.f32 %v1712, %v1673
  %v1738 = vadd.f32 %v1713, %v1678
  %v1739 = vadd.f32 %v1714, %v1681
  %v1740 = vadd.f32 %v1715, %v1686
  %1741 = vst [vmem:[#allocation3] sm:$0xff] %v1716
  %1742 = vst [vmem:[#allocation3 + $0x8] sm:$0xff] %v1717
  %1743 = vst [vmem:[#allocation3 + $0x10] sm:$0xff] %v1718
  %1744 = vst [vmem:[#allocation3 + $0x18] sm:$0xff] %v1719
  %1745 = vst [vmem:[#allocation3 + $0x20] sm:$0xff] %v1720
  %1746 = vst [vmem:[#allocation3 + $0x28] sm:$0xff] %v1721
  %1747 = vst [vmem:[#allocation3 + $0x30] sm:$0xff] %v1722
  %1748 = vst [vmem:[#allocation3 + $0x38] sm:$0xff] %v1723
  %1749 = vst [vmem:[#allocation3 + $0x40] sm:$0xff] %v1724
  %1750 = vst [vmem:[#allocation3 + $0x48] sm:$0xff] %v1725
  %1751 = vst [vmem:[#allocation3 + $0x50] sm:$0xff] %v1726
  %1752 = vst [vmem:[#allocation3 + $0x58] sm:$0xff] %v1727
  %1753 = vst [vmem:[#allocation3 + $0x60] sm:$0xff] %v1728
  %1754 = vst [vmem:[#allocation3 + $0x68] sm:$0xff] %v1729
  %1755 = vst [vmem:[#allocation3 + $0x70] sm:$0xff] %v1730
  %1756 = vst [vmem:[#allocation3 + $0x78] sm:$0xff] %v1731
  %1757 = vst [vmem:[#allocation3 + $0x80] sm:$0xff] %v1732
  %1758 = vst [vmem:[#allocation3 + $0x88] sm:$0xff] %v1733
  %1759 = vst [vmem:[#allocation3 + $0x90] sm:$0xff] %v1734
  %1760 = vst [vmem:[#allocation3 + $0x98] sm:$0xff] %v1735
  %1761 = vst [vmem:[#allocation3 + $0xa0] sm:$0xff] %v1736
  %1762 = vst [vmem:[#allocation3 + $0xa8] sm:$0xff] %v1737
  %1763 = vst [vmem:[#allocation3 + $0xb0] sm:$0xff] %v1738
  %1764 = vst [vmem:[#allocation3 + $0xb8] sm:$0xff] %v1739
  %1765 = vst [vmem:[#allocation3 + $0xc0] sm:$0xff] %v1740
  %v1766 = vld [vmem:[#allocation2 + $0x7] sm:$0xff]
  %v1767 = vld [vmem:[#allocation2 + $0xf] sm:$0xff]
  %v1768 = vld [vmem:[#allocation2 + $0x17] sm:$0xff]
  %v1769 = vld [vmem:[#allocation2 + $0x1f] sm:$0xff]
  %v1770 = vld [vmem:[#allocation2 + $0x27] sm:$0xff]
  %v1771 = vld [vmem:[#allocation2 + $0x2f] sm:$0xff]
  %v1772 = vld [vmem:[#allocation2 + $0x37] sm:$0xff]
  %v1773 = vld [vmem:[#allocation2 + $0x3f] sm:$0xff]
  %v1774 = vld [vmem:[#allocation2 + $0x47] sm:$0xff]
  %v1775 = vld [vmem:[#allocation2 + $0x4f] sm:$0xff]
  %v1776 = vld [vmem:[#allocation2 + $0x57] sm:$0xff]
  %v1777 = vld [vmem:[#allocation2 + $0x5f] sm:$0xff]
  %v1778 = vld [vmem:[#allocation2 + $0x67] sm:$0xff]
  %v1779 = vld [vmem:[#allocation2 + $0x6f] sm:$0xff]
  %v1780 = vld [vmem:[#allocation2 + $0x77] sm:$0xff]
  %v1781 = vld [vmem:[#allocation2 + $0x7f] sm:$0xff]
  %v1782 = vld [vmem:[#allocation2 + $0x87] sm:$0xff]
  %v1783 = vld [vmem:[#allocation2 + $0x8f] sm:$0xff]
  %v1784 = vld [vmem:[#allocation2 + $0x97] sm:$0xff]
  %v1785 = vld [vmem:[#allocation2 + $0x9f] sm:$0xff]
  %v1786 = vld [vmem:[#allocation2 + $0xa7] sm:$0xff]
  %v1787 = vld [vmem:[#allocation2 + $0xaf] sm:$0xff]
  %v1788 = vld [vmem:[#allocation2 + $0xb7] sm:$0xff]
  %v1789 = vld [vmem:[#allocation2 + $0xbf] sm:$0xff]
  %v1790 = vld [vmem:[#allocation2 + $0xc7] sm:$0xff]
  %v1791 = vpack.c.bf16 %v1767, %v1766
  %v1792 = vpack.c.bf16 %v1769, %v1768
  %v1793 = vpack.c.bf16 %v1771, %v1770
  %v1794 = vpack.c.bf16 %v1773, %v1772
  %v1795 = vpack.c.bf16 %v1775, %v1774
  %v1796 = vpack.c.bf16 %v1777, %v1776
  %v1797 = vpack.c.bf16 %v1779, %v1778
  %v1798 = vpack.c.bf16 %v1781, %v1780
  %v1799 = vpack.c.bf16 %v1783, %v1782
  %v1800 = vpack.c.bf16 %v1785, %v1784
  %v1801 = vpack.c.bf16 %v1787, %v1786
  %v1802 = vpack.c.bf16 %v1789, %v1788
  %v1803 = vpack.c.bf16 %v1790, %v1790
  %s1804 = scalar_lea.vmem %s7, 128
  %v1805 = vld [vmem:[%s1804] sm:$0xf]
  %v1806 = vld [vmem:[%s1804 + $0x4] sm:$0xf]
  %v1807 = vld [vmem:[%s1804 + $0x8] sm:$0xf]
  %v1808 = vld [vmem:[%s1804 + $0xc] sm:$0xf]
  %v1809 = vld [vmem:[%s1804 + $0x10] sm:$0xf]
  %v1810 = vld [vmem:[%s1804 + $0x14] sm:$0xf]
  %v1811 = vld [vmem:[%s1804 + $0x18] sm:$0xf]
  %v1812 = vld [vmem:[%s1804 + $0x1c] sm:$0xf]
  %v1813 = vld [vmem:[%s1804 + $0x20] sm:$0xf]
  %v1814 = vld [vmem:[%s1804 + $0x24] sm:$0xf]
  %v1815 = vld [vmem:[%s1804 + $0x28] sm:$0xf]
  %v1816 = vld [vmem:[%s1804 + $0x2c] sm:$0xf]
  %v1817 = vld [vmem:[%s1804 + $0x30] sm:$0xf]
  %v1818 = vld [vmem:[%s1804 + $0x34] sm:$0xf]
  %v1819 = vld [vmem:[%s1804 + $0x38] sm:$0xf]
  %v1820 = vld [vmem:[%s1804 + $0x3c] sm:$0xf]
  %v1837 = vunpack.c.l.b16 %v1805
  %v1838 = vunpack.c.l.b16 %v1806
  %v1839 = vunpack.c.l.b16 %v1807
  %v1840 = vunpack.c.l.b16 %v1808
  %v1841 = vunpack.c.l.b16 %v1809
  %v1842 = vunpack.c.l.b16 %v1810
  %v1843 = vunpack.c.l.b16 %v1811
  %v1844 = vunpack.c.l.b16 %v1812
  %v1845 = vunpack.c.l.b16 %v1813
  %v1846 = vunpack.c.l.b16 %v1814
  %v1847 = vunpack.c.l.b16 %v1815
  %v1848 = vunpack.c.l.b16 %v1816
  %v1849 = vunpack.c.l.b16 %v1817
  %v1850 = vunpack.c.l.b16 %v1818
  %v1851 = vunpack.c.l.b16 %v1819
  %v1852 = vunpack.c.l.b16 %v1820
  %v1853 = vpack.c.b16 %v1838, %v1837
  %v1854 = vpack.c.b16 %v1840, %v1839
  %v1855 = vpack.c.b16 %v1842, %v1841
  %v1856 = vpack.c.b16 %v1844, %v1843
  %v1857 = vpack.c.b16 %v1846, %v1845
  %v1858 = vpack.c.b16 %v1848, %v1847
  %v1859 = vpack.c.b16 %v1850, %v1849
  %v1860 = vpack.c.b16 %v1852, %v1851
  %1869 = vmatprep.subr.bf16.mxu0 0
  %1870 = vmatpush1.bf16.msra.mxu0 %v1860
  %1871 = vmatprep.subr.bf16.mxu0 0
  %1872 = vmatpush1.bf16.msra.mxu0 %v1859
  %1873 = vmatprep.subr.bf16.mxu0 0
  %1874 = vmatpush1.bf16.msra.mxu0 %v1858
  %1875 = vmatprep.subr.bf16.mxu0 0
  %1876 = vmatpush1.bf16.msra.mxu0 %v1857
  %1877 = vmatprep.subr.bf16.mxu0 0
  %1878 = vmatpush1.bf16.msra.mxu0 %v1856
  %1879 = vmatprep.subr.bf16.mxu0 0
  %1880 = vmatpush1.bf16.msra.mxu0 %v1855
  %1881 = vmatprep.subr.bf16.mxu0 0
  %1882 = vmatpush1.bf16.msra.mxu0 %v1854
  %1883 = vmatprep.subr.bf16.mxu0 0
  %1884 = vmatpush1.bf16.msra.mxu0 %v1853
  %1885 = vmatprep.subr.bf16.mxu0 0
  %1886 = vmatpush2.bf16.msra.mxu0 0
  %1887 = vmatprep.subr.bf16.mxu0 0
  %1888 = vmatpush2.bf16.msra.mxu0 0
  %1889 = vmatprep.subr.bf16.mxu0 0
  %1890 = vmatpush2.bf16.msra.mxu0 0
  %1891 = vmatprep.subr.bf16.mxu0 0
  %1892 = vmatpush2.bf16.msra.mxu0 0
  %1893 = vmatprep.subr.bf16.mxu0 0
  %1894 = vmatpush2.bf16.msra.mxu0 0
  %1895 = vmatprep.subr.bf16.mxu0 0
  %1896 = vmatpush2.bf16.msra.mxu0 0
  %1897 = vmatprep.subr.bf16.mxu0 0
  %1898 = vmatpush2.bf16.msra.mxu0 0
  %1899 = vmatprep.subr.bf16.mxu0 0
  %1900 = vmatpush2.bf16.msra.mxu0 0
  %1901 = vmatprep.mubr.bf16.mxu0 0
  %1902 = vmatmul.mubr.bf16.gmra.mxu0 %v1791
  %v1903 = vpop.f32.mrf.mxu0
  %v1904 = vadd.f32 0.0, %v1903
  %v1905 = vpop.f32.mrf.mxu0
  %v1906 = vpop.f32.mrf.mxu0
  %v1907 = vadd.f32 0.0, %v1906
  %v1908 = vpop.f32.mrf.mxu0
  %1909 = vmatprep.mubr.bf16.mxu0 0
  %1910 = vmatmul.mubr.bf16.gmra.mxu0 %v1792
  %v1911 = vpop.f32.mrf.mxu0
  %v1912 = vadd.f32 0.0, %v1911
  %v1913 = vpop.f32.mrf.mxu0
  %v1914 = vpop.f32.mrf.mxu0
  %v1915 = vadd.f32 0.0, %v1914
  %v1916 = vpop.f32.mrf.mxu0
  %1917 = vmatprep.mubr.bf16.mxu0 0
  %1918 = vmatmul.mubr.bf16.gmra.mxu0 %v1793
  %v1919 = vpop.f32.mrf.mxu0
  %v1920 = vadd.f32 0.0, %v1919
  %v1921 = vpop.f32.mrf.mxu0
  %v1922 = vpop.f32.mrf.mxu0
  %v1923 = vadd.f32 0.0, %v1922
  %v1924 = vpop.f32.mrf.mxu0
  %1925 = vmatprep.mubr.bf16.mxu0 0
  %1926 = vmatmul.mubr.bf16.gmra.mxu0 %v1794
  %v1927 = vpop.f32.mrf.mxu0
  %v1928 = vadd.f32 0.0, %v1927
  %v1929 = vpop.f32.mrf.mxu0
  %v1930 = vpop.f32.mrf.mxu0
  %v1931 = vadd.f32 0.0, %v1930
  %v1932 = vpop.f32.mrf.mxu0
  %1933 = vmatprep.mubr.bf16.mxu0 0
  %1934 = vmatmul.mubr.bf16.gmra.mxu0 %v1795
  %v1935 = vpop.f32.mrf.mxu0
  %v1936 = vadd.f32 0.0, %v1935
  %v1937 = vpop.f32.mrf.mxu0
  %v1938 = vpop.f32.mrf.mxu0
  %v1939 = vadd.f32 0.0, %v1938
  %v1940 = vpop.f32.mrf.mxu0
  %1941 = vmatprep.mubr.bf16.mxu0 0
  %1942 = vmatmul.mubr.bf16.gmra.mxu0 %v1796
  %v1943 = vpop.f32.mrf.mxu0
  %v1944 = vadd.f32 0.0, %v1943
  %v1945 = vpop.f32.mrf.mxu0
  %v1946 = vpop.f32.mrf.mxu0
  %v1947 = vadd.f32 0.0, %v1946
  %v1948 = vpop.f32.mrf.mxu0
  %1949 = vmatprep.mubr.bf16.mxu0 0
  %1950 = vmatmul.mubr.bf16.gmra.mxu0 %v1797
  %v1951 = vpop.f32.mrf.mxu0
  %v1952 = vadd.f32 0.0, %v1951
  %v1953 = vpop.f32.mrf.mxu0
  %v1954 = vpop.f32.mrf.mxu0
  %v1955 = vadd.f32 0.0, %v1954
  %v1956 = vpop.f32.mrf.mxu0
  %1957 = vmatprep.mubr.bf16.mxu0 0
  %1958 = vmatmul.mubr.bf16.gmra.mxu0 %v1798
  %v1959 = vpop.f32.mrf.mxu0
  %v1960 = vadd.f32 0.0, %v1959
  %v1961 = vpop.f32.mrf.mxu0
  %v1962 = vpop.f32.mrf.mxu0
  %v1963 = vadd.f32 0.0, %v1962
  %v1964 = vpop.f32.mrf.mxu0
  %1965 = vmatprep.mubr.bf16.mxu0 0
  %1966 = vmatmul.mubr.bf16.gmra.mxu0 %v1799
  %v1967 = vpop.f32.mrf.mxu0
  %v1968 = vadd.f32 0.0, %v1967
  %v1969 = vpop.f32.mrf.mxu0
  %v1970 = vpop.f32.mrf.mxu0
  %v1971 = vadd.f32 0.0, %v1970
  %v1972 = vpop.f32.mrf.mxu0
  %1973 = vmatprep.mubr.bf16.mxu0 0
  %1974 = vmatmul.mubr.bf16.gmra.mxu0 %v1800
  %v1975 = vpop.f32.mrf.mxu0
  %v1976 = vadd.f32 0.0, %v1975
  %v1977 = vpop.f32.mrf.mxu0
  %v1978 = vpop.f32.mrf.mxu0
  %v1979 = vadd.f32 0.0, %v1978
  %v1980 = vpop.f32.mrf.mxu0
  %1981 = vmatprep.mubr.bf16.mxu0 0
  %1982 = vmatmul.mubr.bf16.gmra.mxu0 %v1801
  %v1983 = vpop.f32.mrf.mxu0
  %v1984 = vadd.f32 0.0, %v1983
  %v1985 = vpop.f32.mrf.mxu0
  %v1986 = vpop.f32.mrf.mxu0
  %v1987 = vadd.f32 0.0, %v1986
  %v1988 = vpop.f32.mrf.mxu0
  %1989 = vmatprep.mubr.bf16.mxu0 0
  %1990 = vmatmul.mubr.bf16.gmra.mxu0 %v1802
  %v1991 = vpop.f32.mrf.mxu0
  %v1992 = vadd.f32 0.0, %v1991
  %v1993 = vpop.f32.mrf.mxu0
  %v1994 = vpop.f32.mrf.mxu0
  %v1995 = vadd.f32 0.0, %v1994
  %v1996 = vpop.f32.mrf.mxu0
  %1997 = vmatprep.mubr.bf16.mxu0 0
  %1998 = vmatmul.mubr.bf16.gmra.mxu0 %v1803
  %v1999 = vpop.f32.mrf.mxu0
  %v2000 = vadd.f32 0.0, %v1999
  %v2001 = vpop.f32.mrf.mxu0
  %v2002 = vpop.f32.mrf.mxu0
  %v2003 = vpop.f32.mrf.mxu0
  %2004 = vdwg.mxu0
  %v2005 = vld [vmem:[#allocation3] sm:$0xff]
  %v2006 = vld [vmem:[#allocation3 + $0x8] sm:$0xff]
  %v2007 = vld [vmem:[#allocation3 + $0x10] sm:$0xff]
  %v2008 = vld [vmem:[#allocation3 + $0x18] sm:$0xff]
  %v2009 = vld [vmem:[#allocation3 + $0x20] sm:$0xff]
  %v2010 = vld [vmem:[#allocation3 + $0x28] sm:$0xff]
  %v2011 = vld [vmem:[#allocation3 + $0x30] sm:$0xff]
  %v2012 = vld [vmem:[#allocation3 + $0x38] sm:$0xff]
  %v2013 = vld [vmem:[#allocation3 + $0x40] sm:$0xff]
  %v2014 = vld [vmem:[#allocation3 + $0x48] sm:$0xff]
  %v2015 = vld [vmem:[#allocation3 + $0x50] sm:$0xff]
  %v2016 = vld [vmem:[#allocation3 + $0x58] sm:$0xff]
  %v2017 = vld [vmem:[#allocation3 + $0x60] sm:$0xff]
  %v2018 = vld [vmem:[#allocation3 + $0x68] sm:$0xff]
  %v2019 = vld [vmem:[#allocation3 + $0x70] sm:$0xff]
  %v2020 = vld [vmem:[#allocation3 + $0x78] sm:$0xff]
  %v2021 = vld [vmem:[#allocation3 + $0x80] sm:$0xff]
  %v2022 = vld [vmem:[#allocation3 + $0x88] sm:$0xff]
  %v2023 = vld [vmem:[#allocation3 + $0x90] sm:$0xff]
  %v2024 = vld [vmem:[#allocation3 + $0x98] sm:$0xff]
  %v2025 = vld [vmem:[#allocation3 + $0xa0] sm:$0xff]
  %v2026 = vld [vmem:[#allocation3 + $0xa8] sm:$0xff]
  %v2027 = vld [vmem:[#allocation3 + $0xb0] sm:$0xff]
  %v2028 = vld [vmem:[#allocation3 + $0xb8] sm:$0xff]
  %v2029 = vld [vmem:[#allocation3 + $0xc0] sm:$0xff]
  %v2030 = vadd.f32 %v2005, %v1904
  %v2031 = vadd.f32 %v2006, %v1907
  %v2032 = vadd.f32 %v2007, %v1912
  %v2033 = vadd.f32 %v2008, %v1915
  %v2034 = vadd.f32 %v2009, %v1920
  %v2035 = vadd.f32 %v2010, %v1923
  %v2036 = vadd.f32 %v2011, %v1928
  %v2037 = vadd.f32 %v2012, %v1931
  %v2038 = vadd.f32 %v2013, %v1936
  %v2039 = vadd.f32 %v2014, %v1939
  %v2040 = vadd.f32 %v2015, %v1944
  %v2041 = vadd.f32 %v2016, %v1947
  %v2042 = vadd.f32 %v2017, %v1952
  %v2043 = vadd.f32 %v2018, %v1955
  %v2044 = vadd.f32 %v2019, %v1960
  %v2045 = vadd.f32 %v2020, %v1963
  %v2046 = vadd.f32 %v2021, %v1968
  %v2047 = vadd.f32 %v2022, %v1971
  %v2048 = vadd.f32 %v2023, %v1976
  %v2049 = vadd.f32 %v2024, %v1979
  %v2050 = vadd.f32 %v2025, %v1984
  %v2051 = vadd.f32 %v2026, %v1987
  %v2052 = vadd.f32 %v2027, %v1992
  %v2053 = vadd.f32 %v2028, %v1995
  %v2054 = vadd.f32 %v2029, %v2000
  %2055 = vst [vmem:[#allocation3] sm:$0xff] %v2030
  %2056 = vst [vmem:[#allocation3 + $0x8] sm:$0xff] %v2031
  %2057 = vst [vmem:[#allocation3 + $0x10] sm:$0xff] %v2032
  %2058 = vst [vmem:[#allocation3 + $0x18] sm:$0xff] %v2033
  %2059 = vst [vmem:[#allocation3 + $0x20] sm:$0xff] %v2034
  %2060 = vst [vmem:[#allocation3 + $0x28] sm:$0xff] %v2035
  %2061 = vst [vmem:[#allocation3 + $0x30] sm:$0xff] %v2036
  %2062 = vst [vmem:[#allocation3 + $0x38] sm:$0xff] %v2037
  %2063 = vst [vmem:[#allocation3 + $0x40] sm:$0xff] %v2038
  %2064 = vst [vmem:[#allocation3 + $0x48] sm:$0xff] %v2039
  %2065 = vst [vmem:[#allocation3 + $0x50] sm:$0xff] %v2040
  %2066 = vst [vmem:[#allocation3 + $0x58] sm:$0xff] %v2041
  %2067 = vst [vmem:[#allocation3 + $0x60] sm:$0xff] %v2042
  %2068 = vst [vmem:[#allocation3 + $0x68] sm:$0xff] %v2043
  %2069 = vst [vmem:[#allocation3 + $0x70] sm:$0xff] %v2044
  %2070 = vst [vmem:[#allocation3 + $0x78] sm:$0xff] %v2045
  %2071 = vst [vmem:[#allocation3 + $0x80] sm:$0xff] %v2046
  %2072 = vst [vmem:[#allocation3 + $0x88] sm:$0xff] %v2047
  %2073 = vst [vmem:[#allocation3 + $0x90] sm:$0xff] %v2048
  %2074 = vst [vmem:[#allocation3 + $0x98] sm:$0xff] %v2049
  %2075 = vst [vmem:[#allocation3 + $0xa0] sm:$0xff] %v2050
  %2076 = vst [vmem:[#allocation3 + $0xa8] sm:$0xff] %v2051
  %2077 = vst [vmem:[#allocation3 + $0xb0] sm:$0xff] %v2052
  %2078 = vst [vmem:[#allocation3 + $0xb8] sm:$0xff] %v2053
  %2079 = vst [vmem:[#allocation3 + $0xc0] sm:$0xff] %v2054
  %v2080 = vld [vmem:[#allocation2 + $0xf] sm:$0xff]
  %v2081 = vld [vmem:[#allocation2 + $0x17] sm:$0xff]
  %v2082 = vld [vmem:[#allocation2 + $0x1f] sm:$0xff]
  %v2083 = vld [vmem:[#allocation2 + $0x27] sm:$0xff]
  %v2084 = vld [vmem:[#allocation2 + $0x2f] sm:$0xff]
  %v2085 = vld [vmem:[#allocation2 + $0x37] sm:$0xff]
  %v2086 = vld [vmem:[#allocation2 + $0x3f] sm:$0xff]
  %v2087 = vld [vmem:[#allocation2 + $0x47] sm:$0xff]
  %v2088 = vld [vmem:[#allocation2 + $0x4f] sm:$0xff]
  %v2089 = vld [vmem:[#allocation2 + $0x57] sm:$0xff]
  %v2090 = vld [vmem:[#allocation2 + $0x5f] sm:$0xff]
  %v2091 = vld [vmem:[#allocation2 + $0x67] sm:$0xff]
  %v2092 = vld [vmem:[#allocation2 + $0x6f] sm:$0xff]
  %v2093 = vld [vmem:[#allocation2 + $0x77] sm:$0xff]
  %v2094 = vld [vmem:[#allocation2 + $0x7f] sm:$0xff]
  %v2095 = vld [vmem:[#allocation2 + $0x87] sm:$0xff]
  %v2096 = vld [vmem:[#allocation2 + $0x8f] sm:$0xff]
  %v2097 = vld [vmem:[#allocation2 + $0x97] sm:$0xff]
  %v2098 = vld [vmem:[#allocation2 + $0x9f] sm:$0xff]
  %v2099 = vld [vmem:[#allocation2 + $0xa7] sm:$0xff]
  %v2100 = vld [vmem:[#allocation2 + $0xaf] sm:$0xff]
  %v2101 = vld [vmem:[#allocation2 + $0xb7] sm:$0xff]
  %v2102 = vld [vmem:[#allocation2 + $0xbf] sm:$0xff]
  %v2103 = vld [vmem:[#allocation2 + $0xc7] sm:$0xff]
  %v2104 = vld [vmem:[#allocation2 + $0xcf] sm:$0xff]
  %v2105 = vpack.c.bf16 %v2081, %v2080
  %v2106 = vpack.c.bf16 %v2083, %v2082
  %v2107 = vpack.c.bf16 %v2085, %v2084
  %v2108 = vpack.c.bf16 %v2087, %v2086
  %v2109 = vpack.c.bf16 %v2089, %v2088
  %v2110 = vpack.c.bf16 %v2091, %v2090
  %v2111 = vpack.c.bf16 %v2093, %v2092
  %v2112 = vpack.c.bf16 %v2095, %v2094
  %v2113 = vpack.c.bf16 %v2097, %v2096
  %v2114 = vpack.c.bf16 %v2099, %v2098
  %v2115 = vpack.c.bf16 %v2101, %v2100
  %v2116 = vpack.c.bf16 %v2103, %v2102
  %v2117 = vpack.c.bf16 %v2104, %v2104
  %s2118 = scalar_lea.vmem %s7, 192
  %v2119 = vld [vmem:[%s2118] sm:$0xf]
  %v2120 = vld [vmem:[%s2118 + $0x4] sm:$0xf]
  %v2121 = vld [vmem:[%s2118 + $0x8] sm:$0xf]
  %v2122 = vld [vmem:[%s2118 + $0xc] sm:$0xf]
  %v2123 = vld [vmem:[%s2118 + $0x10] sm:$0xf]
  %v2124 = vld [vmem:[%s2118 + $0x14] sm:$0xf]
  %v2125 = vld [vmem:[%s2118 + $0x18] sm:$0xf]
  %v2126 = vld [vmem:[%s2118 + $0x1c] sm:$0xf]
  %v2127 = vld [vmem:[%s2118 + $0x20] sm:$0xf]
  %v2128 = vld [vmem:[%s2118 + $0x24] sm:$0xf]
  %v2129 = vld [vmem:[%s2118 + $0x28] sm:$0xf]
  %v2130 = vld [vmem:[%s2118 + $0x2c] sm:$0xf]
  %v2131 = vld [vmem:[%s2118 + $0x30] sm:$0xf]
  %v2132 = vld [vmem:[%s2118 + $0x34] sm:$0xf]
  %v2133 = vld [vmem:[%s2118 + $0x38] sm:$0xf]
  %v2134 = vld [vmem:[%s2118 + $0x3c] sm:$0xf]
  %v2151 = vunpack.c.l.b16 %v2119
  %v2152 = vunpack.c.l.b16 %v2120
  %v2153 = vunpack.c.l.b16 %v2121
  %v2154 = vunpack.c.l.b16 %v2122
  %v2155 = vunpack.c.l.b16 %v2123
  %v2156 = vunpack.c.l.b16 %v2124
  %v2157 = vunpack.c.l.b16 %v2125
  %v2158 = vunpack.c.l.b16 %v2126
  %v2159 = vunpack.c.l.b16 %v2127
  %v2160 = vunpack.c.l.b16 %v2128
  %v2161 = vunpack.c.l.b16 %v2129
  %v2162 = vunpack.c.l.b16 %v2130
  %v2163 = vunpack.c.l.b16 %v2131
  %v2164 = vunpack.c.l.b16 %v2132
  %v2165 = vunpack.c.l.b16 %v2133
  %v2166 = vunpack.c.l.b16 %v2134
  %v2167 = vpack.c.b16 %v2152, %v2151
  %v2168 = vpack.c.b16 %v2154, %v2153
  %v2169 = vpack.c.b16 %v2156, %v2155
  %v2170 = vpack.c.b16 %v2158, %v2157
  %v2171 = vpack.c.b16 %v2160, %v2159
  %v2172 = vpack.c.b16 %v2162, %v2161
  %v2173 = vpack.c.b16 %v2164, %v2163
  %v2174 = vpack.c.b16 %v2166, %v2165
  %2183 = vmatprep.subr.bf16.mxu0 0
  %2184 = vmatpush1.bf16.msra.mxu0 %v2174
  %2185 = vmatprep.subr.bf16.mxu0 0
  %2186 = vmatpush1.bf16.msra.mxu0 %v2173
  %2187 = vmatprep.subr.bf16.mxu0 0
  %2188 = vmatpush1.bf16.msra.mxu0 %v2172
  %2189 = vmatprep.subr.bf16.mxu0 0
  %2190 = vmatpush1.bf16.msra.mxu0 %v2171
  %2191 = vmatprep.subr.bf16.mxu0 0
  %2192 = vmatpush1.bf16.msra.mxu0 %v2170
  %2193 = vmatprep.subr.bf16.mxu0 0
  %2194 = vmatpush1.bf16.msra.mxu0 %v2169
  %2195 = vmatprep.subr.bf16.mxu0 0
  %2196 = vmatpush1.bf16.msra.mxu0 %v2168
  %2197 = vmatprep.subr.bf16.mxu0 0
  %2198 = vmatpush1.bf16.msra.mxu0 %v2167
  %2199 = vmatprep.subr.bf16.mxu0 0
  %2200 = vmatpush2.bf16.msra.mxu0 0
  %2201 = vmatprep.subr.bf16.mxu0 0
  %2202 = vmatpush2.bf16.msra.mxu0 0
  %2203 = vmatprep.subr.bf16.mxu0 0
  %2204 = vmatpush2.bf16.msra.mxu0 0
  %2205 = vmatprep.subr.bf16.mxu0 0
  %2206 = vmatpush2.bf16.msra.mxu0 0
  %2207 = vmatprep.subr.bf16.mxu0 0
  %2208 = vmatpush2.bf16.msra.mxu0 0
  %2209 = vmatprep.subr.bf16.mxu0 0
  %2210 = vmatpush2.bf16.msra.mxu0 0
  %2211 = vmatprep.subr.bf16.mxu0 0
  %2212 = vmatpush2.bf16.msra.mxu0 0
  %2213 = vmatprep.subr.bf16.mxu0 0
  %2214 = vmatpush2.bf16.msra.mxu0 0
  %2215 = vmatprep.mubr.bf16.mxu0 0
  %2216 = vmatmul.mubr.bf16.gmra.mxu0 %v2105
  %v2217 = vpop.f32.mrf.mxu0
  %v2218 = vadd.f32 0.0, %v2217
  %v2219 = vpop.f32.mrf.mxu0
  %v2220 = vpop.f32.mrf.mxu0
  %v2221 = vadd.f32 0.0, %v2220
  %v2222 = vpop.f32.mrf.mxu0
  %2223 = vmatprep.mubr.bf16.mxu0 0
  %2224 = vmatmul.mubr.bf16.gmra.mxu0 %v2106
  %v2225 = vpop.f32.mrf.mxu0
  %v2226 = vadd.f32 0.0, %v2225
  %v2227 = vpop.f32.mrf.mxu0
  %v2228 = vpop.f32.mrf.mxu0
  %v2229 = vadd.f32 0.0, %v2228
  %v2230 = vpop.f32.mrf.mxu0
  %2231 = vmatprep.mubr.bf16.mxu0 0
  %2232 = vmatmul.mubr.bf16.gmra.mxu0 %v2107
  %v2233 = vpop.f32.mrf.mxu0
  %v2234 = vadd.f32 0.0, %v2233
  %v2235 = vpop.f32.mrf.mxu0
  %v2236 = vpop.f32.mrf.mxu0
  %v2237 = vadd.f32 0.0, %v2236
  %v2238 = vpop.f32.mrf.mxu0
  %2239 = vmatprep.mubr.bf16.mxu0 0
  %2240 = vmatmul.mubr.bf16.gmra.mxu0 %v2108
  %v2241 = vpop.f32.mrf.mxu0
  %v2242 = vadd.f32 0.0, %v2241
  %v2243 = vpop.f32.mrf.mxu0
  %v2244 = vpop.f32.mrf.mxu0
  %v2245 = vadd.f32 0.0, %v2244
  %v2246 = vpop.f32.mrf.mxu0
  %2247 = vmatprep.mubr.bf16.mxu0 0
  %2248 = vmatmul.mubr.bf16.gmra.mxu0 %v2109
  %v2249 = vpop.f32.mrf.mxu0
  %v2250 = vadd.f32 0.0, %v2249
  %v2251 = vpop.f32.mrf.mxu0
  %v2252 = vpop.f32.mrf.mxu0
  %v2253 = vadd.f32 0.0, %v2252
  %v2254 = vpop.f32.mrf.mxu0
  %2255 = vmatprep.mubr.bf16.mxu0 0
  %2256 = vmatmul.mubr.bf16.gmra.mxu0 %v2110
  %v2257 = vpop.f32.mrf.mxu0
  %v2258 = vadd.f32 0.0, %v2257
  %v2259 = vpop.f32.mrf.mxu0
  %v2260 = vpop.f32.mrf.mxu0
  %v2261 = vadd.f32 0.0, %v2260
  %v2262 = vpop.f32.mrf.mxu0
  %2263 = vmatprep.mubr.bf16.mxu0 0
  %2264 = vmatmul.mubr.bf16.gmra.mxu0 %v2111
  %v2265 = vpop.f32.mrf.mxu0
  %v2266 = vadd.f32 0.0, %v2265
  %v2267 = vpop.f32.mrf.mxu0
  %v2268 = vpop.f32.mrf.mxu0
  %v2269 = vadd.f32 0.0, %v2268
  %v2270 = vpop.f32.mrf.mxu0
  %2271 = vmatprep.mubr.bf16.mxu0 0
  %2272 = vmatmul.mubr.bf16.gmra.mxu0 %v2112
  %v2273 = vpop.f32.mrf.mxu0
  %v2274 = vadd.f32 0.0, %v2273
  %v2275 = vpop.f32.mrf.mxu0
  %v2276 = vpop.f32.mrf.mxu0
  %v2277 = vadd.f32 0.0, %v2276
  %v2278 = vpop.f32.mrf.mxu0
  %2279 = vmatprep.mubr.bf16.mxu0 0
  %2280 = vmatmul.mubr.bf16.gmra.mxu0 %v2113
  %v2281 = vpop.f32.mrf.mxu0
  %v2282 = vadd.f32 0.0, %v2281
  %v2283 = vpop.f32.mrf.mxu0
  %v2284 = vpop.f32.mrf.mxu0
  %v2285 = vadd.f32 0.0, %v2284
  %v2286 = vpop.f32.mrf.mxu0
  %2287 = vmatprep.mubr.bf16.mxu0 0
  %2288 = vmatmul.mubr.bf16.gmra.mxu0 %v2114
  %v2289 = vpop.f32.mrf.mxu0
  %v2290 = vadd.f32 0.0, %v2289
  %v2291 = vpop.f32.mrf.mxu0
  %v2292 = vpop.f32.mrf.mxu0
  %v2293 = vadd.f32 0.0, %v2292
  %v2294 = vpop.f32.mrf.mxu0
  %2295 = vmatprep.mubr.bf16.mxu0 0
  %2296 = vmatmul.mubr.bf16.gmra.mxu0 %v2115
  %v2297 = vpop.f32.mrf.mxu0
  %v2298 = vadd.f32 0.0, %v2297
  %v2299 = vpop.f32.mrf.mxu0
  %v2300 = vpop.f32.mrf.mxu0
  %v2301 = vadd.f32 0.0, %v2300
  %v2302 = vpop.f32.mrf.mxu0
  %2303 = vmatprep.mubr.bf16.mxu0 0
  %2304 = vmatmul.mubr.bf16.gmra.mxu0 %v2116
  %v2305 = vpop.f32.mrf.mxu0
  %v2306 = vadd.f32 0.0, %v2305
  %v2307 = vpop.f32.mrf.mxu0
  %v2308 = vpop.f32.mrf.mxu0
  %v2309 = vadd.f32 0.0, %v2308
  %v2310 = vpop.f32.mrf.mxu0
  %2311 = vmatprep.mubr.bf16.mxu0 0
  %2312 = vmatmul.mubr.bf16.gmra.mxu0 %v2117
  %v2313 = vpop.f32.mrf.mxu0
  %v2314 = vadd.f32 0.0, %v2313
  %v2315 = vpop.f32.mrf.mxu0
  %v2316 = vpop.f32.mrf.mxu0
  %v2317 = vpop.f32.mrf.mxu0
  %2318 = vdwg.mxu0
  %v2319 = vld [vmem:[#allocation3] sm:$0xff]
  %v2320 = vld [vmem:[#allocation3 + $0x8] sm:$0xff]
  %v2321 = vld [vmem:[#allocation3 + $0x10] sm:$0xff]
  %v2322 = vld [vmem:[#allocation3 + $0x18] sm:$0xff]
  %v2323 = vld [vmem:[#allocation3 + $0x20] sm:$0xff]
  %v2324 = vld [vmem:[#allocation3 + $0x28] sm:$0xff]
  %v2325 = vld [vmem:[#allocation3 + $0x30] sm:$0xff]
  %v2326 = vld [vmem:[#allocation3 + $0x38] sm:$0xff]
  %v2327 = vld [vmem:[#allocation3 + $0x40] sm:$0xff]
  %v2328 = vld [vmem:[#allocation3 + $0x48] sm:$0xff]
  %v2329 = vld [vmem:[#allocation3 + $0x50] sm:$0xff]
  %v2330 = vld [vmem:[#allocation3 + $0x58] sm:$0xff]
  %v2331 = vld [vmem:[#allocation3 + $0x60] sm:$0xff]
  %v2332 = vld [vmem:[#allocation3 + $0x68] sm:$0xff]
  %v2333 = vld [vmem:[#allocation3 + $0x70] sm:$0xff]
  %v2334 = vld [vmem:[#allocation3 + $0x78] sm:$0xff]
  %v2335 = vld [vmem:[#allocation3 + $0x80] sm:$0xff]
  %v2336 = vld [vmem:[#allocation3 + $0x88] sm:$0xff]
  %v2337 = vld [vmem:[#allocation3 + $0x90] sm:$0xff]
  %v2338 = vld [vmem:[#allocation3 + $0x98] sm:$0xff]
  %v2339 = vld [vmem:[#allocation3 + $0xa0] sm:$0xff]
  %v2340 = vld [vmem:[#allocation3 + $0xa8] sm:$0xff]
  %v2341 = vld [vmem:[#allocation3 + $0xb0] sm:$0xff]
  %v2342 = vld [vmem:[#allocation3 + $0xb8] sm:$0xff]
  %v2343 = vld [vmem:[#allocation3 + $0xc0] sm:$0xff]
  %v2344 = vadd.f32 %v2319, %v2218
  %v2345 = vadd.f32 %v2320, %v2221
  %v2346 = vadd.f32 %v2321, %v2226
  %v2347 = vadd.f32 %v2322, %v2229
  %v2348 = vadd.f32 %v2323, %v2234
  %v2349 = vadd.f32 %v2324, %v2237
  %v2350 = vadd.f32 %v2325, %v2242
  %v2351 = vadd.f32 %v2326, %v2245
  %v2352 = vadd.f32 %v2327, %v2250
  %v2353 = vadd.f32 %v2328, %v2253
  %v2354 = vadd.f32 %v2329, %v2258
  %v2355 = vadd.f32 %v2330, %v2261
  %v2356 = vadd.f32 %v2331, %v2266
  %v2357 = vadd.f32 %v2332, %v2269
  %v2358 = vadd.f32 %v2333, %v2274
  %v2359 = vadd.f32 %v2334, %v2277
  %v2360 = vadd.f32 %v2335, %v2282
  %v2361 = vadd.f32 %v2336, %v2285
  %v2362 = vadd.f32 %v2337, %v2290
  %v2363 = vadd.f32 %v2338, %v2293
  %v2364 = vadd.f32 %v2339, %v2298
  %v2365 = vadd.f32 %v2340, %v2301
  %v2366 = vadd.f32 %v2341, %v2306
  %v2367 = vadd.f32 %v2342, %v2309
  %v2368 = vadd.f32 %v2343, %v2314
  %2369 = vst [vmem:[#allocation3] sm:$0xff] %v2344
  %2370 = vst [vmem:[#allocation3 + $0x8] sm:$0xff] %v2345
  %2371 = vst [vmem:[#allocation3 + $0x10] sm:$0xff] %v2346
  %2372 = vst [vmem:[#allocation3 + $0x18] sm:$0xff] %v2347
  %2373 = vst [vmem:[#allocation3 + $0x20] sm:$0xff] %v2348
  %2374 = vst [vmem:[#allocation3 + $0x28] sm:$0xff] %v2349
  %2375 = vst [vmem:[#allocation3 + $0x30] sm:$0xff] %v2350
  %2376 = vst [vmem:[#allocation3 + $0x38] sm:$0xff] %v2351
  %2377 = vst [vmem:[#allocation3 + $0x40] sm:$0xff] %v2352
  %2378 = vst [vmem:[#allocation3 + $0x48] sm:$0xff] %v2353
  %2379 = vst [vmem:[#allocation3 + $0x50] sm:$0xff] %v2354
  %2380 = vst [vmem:[#allocation3 + $0x58] sm:$0xff] %v2355
  %2381 = vst [vmem:[#allocation3 + $0x60] sm:$0xff] %v2356
  %2382 = vst [vmem:[#allocation3 + $0x68] sm:$0xff] %v2357
  %2383 = vst [vmem:[#allocation3 + $0x70] sm:$0xff] %v2358
  %2384 = vst [vmem:[#allocation3 + $0x78] sm:$0xff] %v2359
  %2385 = vst [vmem:[#allocation3 + $0x80] sm:$0xff] %v2360
  %2386 = vst [vmem:[#allocation3 + $0x88] sm:$0xff] %v2361
  %2387 = vst [vmem:[#allocation3 + $0x90] sm:$0xff] %v2362
  %2388 = vst [vmem:[#allocation3 + $0x98] sm:$0xff] %v2363
  %2389 = vst [vmem:[#allocation3 + $0xa0] sm:$0xff] %v2364
  %2390 = vst [vmem:[#allocation3 + $0xa8] sm:$0xff] %v2365
  %2391 = vst [vmem:[#allocation3 + $0xb0] sm:$0xff] %v2366
  %2392 = vst [vmem:[#allocation3 + $0xb8] sm:$0xff] %v2367
  %2393 = vst [vmem:[#allocation3 + $0xc0] sm:$0xff] %v2368
  %v2394 = vld [vmem:[#allocation2 + $0x10] sm:$0xff]
  %v2395 = vld [vmem:[#allocation2 + $0x18] sm:$0xff]
  %v2396 = vld [vmem:[#allocation2 + $0x20] sm:$0xff]
  %v2397 = vld [vmem:[#allocation2 + $0x28] sm:$0xff]
  %v2398 = vld [vmem:[#allocation2 + $0x30] sm:$0xff]
  %v2399 = vld [vmem:[#allocation2 + $0x38] sm:$0xff]
  %v2400 = vld [vmem:[#allocation2 + $0x40] sm:$0xff]
  %v2401 = vld [vmem:[#allocation2 + $0x48] sm:$0xff]
  %v2402 = vld [vmem:[#allocation2 + $0x50] sm:$0xff]
  %v2403 = vld [vmem:[#allocation2 + $0x58] sm:$0xff]
  %v2404 = vld [vmem:[#allocation2 + $0x60] sm:$0xff]
  %v2405 = vld [vmem:[#allocation2 + $0x68] sm:$0xff]
  %v2406 = vld [vmem:[#allocation2 + $0x70] sm:$0xff]
  %v2407 = vld [vmem:[#allocation2 + $0x78] sm:$0xff]
  %v2408 = vld [vmem:[#allocation2 + $0x80] sm:$0xff]
  %v2409 = vld [vmem:[#allocation2 + $0x88] sm:$0xff]
  %v2410 = vld [vmem:[#allocation2 + $0x90] sm:$0xff]
  %v2411 = vld [vmem:[#allocation2 + $0x98] sm:$0xff]
  %v2412 = vld [vmem:[#allocation2 + $0xa0] sm:$0xff]
  %v2413 = vld [vmem:[#allocation2 + $0xa8] sm:$0xff]
  %v2414 = vld [vmem:[#allocation2 + $0xb0] sm:$0xff]
  %v2415 = vld [vmem:[#allocation2 + $0xb8] sm:$0xff]
  %v2416 = vld [vmem:[#allocation2 + $0xc0] sm:$0xff]
  %v2417 = vld [vmem:[#allocation2 + $0xc8] sm:$0xff]
  %v2418 = vld [vmem:[#allocation2 + $0xd0] sm:$0xff]
  %v2419 = vpack.c.bf16 %v2395, %v2394
  %v2420 = vpack.c.bf16 %v2397, %v2396
  %v2421 = vpack.c.bf16 %v2399, %v2398
  %v2422 = vpack.c.bf16 %v2401, %v2400
  %v2423 = vpack.c.bf16 %v2403, %v2402
  %v2424 = vpack.c.bf16 %v2405, %v2404
  %v2425 = vpack.c.bf16 %v2407, %v2406
  %v2426 = vpack.c.bf16 %v2409, %v2408
  %v2427 = vpack.c.bf16 %v2411, %v2410
  %v2428 = vpack.c.bf16 %v2413, %v2412
  %v2429 = vpack.c.bf16 %v2415, %v2414
  %v2430 = vpack.c.bf16 %v2417, %v2416
  %v2431 = vpack.c.bf16 %v2418, %v2418
  %s2432 = scalar_lea.vmem %s7, 256
  %v2433 = vld [vmem:[%s2432] sm:$0xf]
  %v2434 = vld [vmem:[%s2432 + $0x4] sm:$0xf]
  %v2435 = vld [vmem:[%s2432 + $0x8] sm:$0xf]
  %v2436 = vld [vmem:[%s2432 + $0xc] sm:$0xf]
  %v2437 = vld [vmem:[%s2432 + $0x10] sm:$0xf]
  %v2438 = vld [vmem:[%s2432 + $0x14] sm:$0xf]
  %v2439 = vld [vmem:[%s2432 + $0x18] sm:$0xf]
  %v2440 = vld [vmem:[%s2432 + $0x1c] sm:$0xf]
  %v2441 = vld [vmem:[%s2432 + $0x20] sm:$0xf]
  %v2442 = vld [vmem:[%s2432 + $0x24] sm:$0xf]
  %v2443 = vld [vmem:[%s2432 + $0x28] sm:$0xf]
  %v2444 = vld [vmem:[%s2432 + $0x2c] sm:$0xf]
  %v2445 = vld [vmem:[%s2432 + $0x30] sm:$0xf]
  %v2446 = vld [vmem:[%s2432 + $0x34] sm:$0xf]
  %v2447 = vld [vmem:[%s2432 + $0x38] sm:$0xf]
  %v2448 = vld [vmem:[%s2432 + $0x3c] sm:$0xf]
  %v2465 = vunpack.c.l.b16 %v2433
  %v2466 = vunpack.c.l.b16 %v2434
  %v2467 = vunpack.c.l.b16 %v2435
  %v2468 = vunpack.c.l.b16 %v2436
  %v2469 = vunpack.c.l.b16 %v2437
  %v2470 = vunpack.c.l.b16 %v2438
  %v2471 = vunpack.c.l.b16 %v2439
  %v2472 = vunpack.c.l.b16 %v2440
  %v2473 = vunpack.c.l.b16 %v2441
  %v2474 = vunpack.c.l.b16 %v2442
  %v2475 = vunpack.c.l.b16 %v2443
  %v2476 = vunpack.c.l.b16 %v2444
  %v2477 = vunpack.c.l.b16 %v2445
  %v2478 = vunpack.c.l.b16 %v2446
  %v2479 = vunpack.c.l.b16 %v2447
  %v2480 = vunpack.c.l.b16 %v2448
  %v2481 = vpack.c.b16 %v2466, %v2465
  %v2482 = vpack.c.b16 %v2468, %v2467
  %v2483 = vpack.c.b16 %v2470, %v2469
  %v2484 = vpack.c.b16 %v2472, %v2471
  %v2485 = vpack.c.b16 %v2474, %v2473
  %v2486 = vpack.c.b16 %v2476, %v2475
  %v2487 = vpack.c.b16 %v2478, %v2477
  %v2488 = vpack.c.b16 %v2480, %v2479
  %2497 = vmatprep.subr.bf16.mxu0 0
  %2498 = vmatpush1.bf16.msra.mxu0 %v2488
  %2499 = vmatprep.subr.bf16.mxu0 0
  %2500 = vmatpush1.bf16.msra.mxu0 %v2487
  %2501 = vmatprep.subr.bf16.mxu0 0
  %2502 = vmatpush1.bf16.msra.mxu0 %v2486
  %2503 = vmatprep.subr.bf16.mxu0 0
  %2504 = vmatpush1.bf16.msra.mxu0 %v2485
  %2505 = vmatprep.subr.bf16.mxu0 0
  %2506 = vmatpush1.bf16.msra.mxu0 %v2484
  %2507 = vmatprep.subr.bf16.mxu0 0
  %2508 = vmatpush1.bf16.msra.mxu0 %v2483
  %2509 = vmatprep.subr.bf16.mxu0 0
  %2510 = vmatpush1.bf16.msra.mxu0 %v2482
  %2511 = vmatprep.subr.bf16.mxu0 0
  %2512 = vmatpush1.bf16.msra.mxu0 %v2481
  %2513 = vmatprep.subr.bf16.mxu0 0
  %2514 = vmatpush2.bf16.msra.mxu0 0
  %2515 = vmatprep.subr.bf16.mxu0 0
  %2516 = vmatpush2.bf16.msra.mxu0 0
  %2517 = vmatprep.subr.bf16.mxu0 0
  %2518 = vmatpush2.bf16.msra.mxu0 0
  %2519 = vmatprep.subr.bf16.mxu0 0
  %2520 = vmatpush2.bf16.msra.mxu0 0
  %2521 = vmatprep.subr.bf16.mxu0 0
  %2522 = vmatpush2.bf16.msra.mxu0 0
  %2523 = vmatprep.subr.bf16.mxu0 0
  %2524 = vmatpush2.bf16.msra.mxu0 0
  %2525 = vmatprep.subr.bf16.mxu0 0
  %2526 = vmatpush2.bf16.msra.mxu0 0
  %2527 = vmatprep.subr.bf16.mxu0 0
  %2528 = vmatpush2.bf16.msra.mxu0 0
  %2529 = vmatprep.mubr.bf16.mxu0 0
  %2530 = vmatmul.mubr.bf16.gmra.mxu0 %v2419
  %v2531 = vpop.f32.mrf.mxu0
  %v2532 = vadd.f32 0.0, %v2531
  %v2533 = vpop.f32.mrf.mxu0
  %v2534 = vpop.f32.mrf.mxu0
  %v2535 = vadd.f32 0.0, %v2534
  %v2536 = vpop.f32.mrf.mxu0
  %2537 = vmatprep.mubr.bf16.mxu0 0
  %2538 = vmatmul.mubr.bf16.gmra.mxu0 %v2420
  %v2539 = vpop.f32.mrf.mxu0
  %v2540 = vadd.f32 0.0, %v2539
  %v2541 = vpop.f32.mrf.mxu0
  %v2542 = vpop.f32.mrf.mxu0
  %v2543 = vadd.f32 0.0, %v2542
  %v2544 = vpop.f32.mrf.mxu0
  %2545 = vmatprep.mubr.bf16.mxu0 0
  %2546 = vmatmul.mubr.bf16.gmra.mxu0 %v2421
  %v2547 = vpop.f32.mrf.mxu0
  %v2548 = vadd.f32 0.0, %v2547
  %v2549 = vpop.f32.mrf.mxu0
  %v2550 = vpop.f32.mrf.mxu0
  %v2551 = vadd.f32 0.0, %v2550
  %v2552 = vpop.f32.mrf.mxu0
  %2553 = vmatprep.mubr.bf16.mxu0 0
  %2554 = vmatmul.mubr.bf16.gmra.mxu0 %v2422
  %v2555 = vpop.f32.mrf.mxu0
  %v2556 = vadd.f32 0.0, %v2555
  %v2557 = vpop.f32.mrf.mxu0
  %v2558 = vpop.f32.mrf.mxu0
  %v2559 = vadd.f32 0.0, %v2558
  %v2560 = vpop.f32.mrf.mxu0
  %2561 = vmatprep.mubr.bf16.mxu0 0
  %2562 = vmatmul.mubr.bf16.gmra.mxu0 %v2423
  %v2563 = vpop.f32.mrf.mxu0
  %v2564 = vadd.f32 0.0, %v2563
  %v2565 = vpop.f32.mrf.mxu0
  %v2566 = vpop.f32.mrf.mxu0
  %v2567 = vadd.f32 0.0, %v2566
  %v2568 = vpop.f32.mrf.mxu0
  %2569 = vmatprep.mubr.bf16.mxu0 0
  %2570 = vmatmul.mubr.bf16.gmra.mxu0 %v2424
  %v2571 = vpop.f32.mrf.mxu0
  %v2572 = vadd.f32 0.0, %v2571
  %v2573 = vpop.f32.mrf.mxu0
  %v2574 = vpop.f32.mrf.mxu0
  %v2575 = vadd.f32 0.0, %v2574
  %v2576 = vpop.f32.mrf.mxu0
  %2577 = vmatprep.mubr.bf16.mxu0 0
  %2578 = vmatmul.mubr.bf16.gmra.mxu0 %v2425
  %v2579 = vpop.f32.mrf.mxu0
  %v2580 = vadd.f32 0.0, %v2579
  %v2581 = vpop.f32.mrf.mxu0
  %v2582 = vpop.f32.mrf.mxu0
  %v2583 = vadd.f32 0.0, %v2582
  %v2584 = vpop.f32.mrf.mxu0
  %2585 = vmatprep.mubr.bf16.mxu0 0
  %2586 = vmatmul.mubr.bf16.gmra.mxu0 %v2426
  %v2587 = vpop.f32.mrf.mxu0
  %v2588 = vadd.f32 0.0, %v2587
  %v2589 = vpop.f32.mrf.mxu0
  %v2590 = vpop.f32.mrf.mxu0
  %v2591 = vadd.f32 0.0, %v2590
  %v2592 = vpop.f32.mrf.mxu0
  %2593 = vmatprep.mubr.bf16.mxu0 0
  %2594 = vmatmul.mubr.bf16.gmra.mxu0 %v2427
  %v2595 = vpop.f32.mrf.mxu0
  %v2596 = vadd.f32 0.0, %v2595
  %v2597 = vpop.f32.mrf.mxu0
  %v2598 = vpop.f32.mrf.mxu0
  %v2599 = vadd.f32 0.0, %v2598
  %v2600 = vpop.f32.mrf.mxu0
  %2601 = vmatprep.mubr.bf16.mxu0 0
  %2602 = vmatmul.mubr.bf16.gmra.mxu0 %v2428
  %v2603 = vpop.f32.mrf.mxu0
  %v2604 = vadd.f32 0.0, %v2603
  %v2605 = vpop.f32.mrf.mxu0
  %v2606 = vpop.f32.mrf.mxu0
  %v2607 = vadd.f32 0.0, %v2606
  %v2608 = vpop.f32.mrf.mxu0
  %2609 = vmatprep.mubr.bf16.mxu0 0
  %2610 = vmatmul.mubr.bf16.gmra.mxu0 %v2429
  %v2611 = vpop.f32.mrf.mxu0
  %v2612 = vadd.f32 0.0, %v2611
  %v2613 = vpop.f32.mrf.mxu0
  %v2614 = vpop.f32.mrf.mxu0
  %v2615 = vadd.f32 0.0, %v2614
  %v2616 = vpop.f32.mrf.mxu0
  %2617 = vmatprep.mubr.bf16.mxu0 0
  %2618 = vmatmul.mubr.bf16.gmra.mxu0 %v2430
  %v2619 = vpop.f32.mrf.mxu0
  %v2620 = vadd.f32 0.0, %v2619
  %v2621 = vpop.f32.mrf.mxu0
  %v2622 = vpop.f32.mrf.mxu0
  %v2623 = vadd.f32 0.0, %v2622
  %v2624 = vpop.f32.mrf.mxu0
  %2625 = vmatprep.mubr.bf16.mxu0 0
  %2626 = vmatmul.mubr.bf16.gmra.mxu0 %v2431
  %v2627 = vpop.f32.mrf.mxu0
  %v2628 = vadd.f32 0.0, %v2627
  %v2629 = vpop.f32.mrf.mxu0
  %v2630 = vpop.f32.mrf.mxu0
  %v2631 = vpop.f32.mrf.mxu0
  %2632 = vdwg.mxu0
  %v2633 = vld [vmem:[#allocation3] sm:$0xff]
  %v2634 = vld [vmem:[#allocation3 + $0x8] sm:$0xff]
  %v2635 = vld [vmem:[#allocation3 + $0x10] sm:$0xff]
  %v2636 = vld [vmem:[#allocation3 + $0x18] sm:$0xff]
  %v2637 = vld [vmem:[#allocation3 + $0x20] sm:$0xff]
  %v2638 = vld [vmem:[#allocation3 + $0x28] sm:$0xff]
  %v2639 = vld [vmem:[#allocation3 + $0x30] sm:$0xff]
  %v2640 = vld [vmem:[#allocation3 + $0x38] sm:$0xff]
  %v2641 = vld [vmem:[#allocation3 + $0x40] sm:$0xff]
  %v2642 = vld [vmem:[#allocation3 + $0x48] sm:$0xff]
  %v2643 = vld [vmem:[#allocation3 + $0x50] sm:$0xff]
  %v2644 = vld [vmem:[#allocation3 + $0x58] sm:$0xff]
  %v2645 = vld [vmem:[#allocation3 + $0x60] sm:$0xff]
  %v2646 = vld [vmem:[#allocation3 + $0x68] sm:$0xff]
  %v2647 = vld [vmem:[#allocation3 + $0x70] sm:$0xff]
  %v2648 = vld [vmem:[#allocation3 + $0x78] sm:$0xff]
  %v2649 = vld [vmem:[#allocation3 + $0x80] sm:$0xff]
  %v2650 = vld [vmem:[#allocation3 + $0x88] sm:$0xff]
  %v2651 = vld [vmem:[#allocation3 + $0x90] sm:$0xff]
  %v2652 = vld [vmem:[#allocation3 + $0x98] sm:$0xff]
  %v2653 = vld [vmem:[#allocation3 + $0xa0] sm:$0xff]
  %v2654 = vld [vmem:[#allocation3 + $0xa8] sm:$0xff]
  %v2655 = vld [vmem:[#allocation3 + $0xb0] sm:$0xff]
  %v2656 = vld [vmem:[#allocation3 + $0xb8] sm:$0xff]
  %v2657 = vld [vmem:[#allocation3 + $0xc0] sm:$0xff]
  %v2658 = vadd.f32 %v2633, %v2532
  %v2659 = vadd.f32 %v2634, %v2535
  %v2660 = vadd.f32 %v2635, %v2540
  %v2661 = vadd.f32 %v2636, %v2543
  %v2662 = vadd.f32 %v2637, %v2548
  %v2663 = vadd.f32 %v2638, %v2551
  %v2664 = vadd.f32 %v2639, %v2556
  %v2665 = vadd.f32 %v2640, %v2559
  %v2666 = vadd.f32 %v2641, %v2564
  %v2667 = vadd.f32 %v2642, %v2567
  %v2668 = vadd.f32 %v2643, %v2572
  %v2669 = vadd.f32 %v2644, %v2575
  %v2670 = vadd.f32 %v2645, %v2580
  %v2671 = vadd.f32 %v2646, %v2583
  %v2672 = vadd.f32 %v2647, %v2588
  %v2673 = vadd.f32 %v2648, %v2591
  %v2674 = vadd.f32 %v2649, %v2596
  %v2675 = vadd.f32 %v2650, %v2599
  %v2676 = vadd.f32 %v2651, %v2604
  %v2677 = vadd.f32 %v2652, %v2607
  %v2678 = vadd.f32 %v2653, %v2612
  %v2679 = vadd.f32 %v2654, %v2615
  %v2680 = vadd.f32 %v2655, %v2620
  %v2681 = vadd.f32 %v2656, %v2623
  %v2682 = vadd.f32 %v2657, %v2628
  %2683 = vst [vmem:[#allocation3] sm:$0xff] %v2658
  %2684 = vst [vmem:[#allocation3 + $0x8] sm:$0xff] %v2659
  %2685 = vst [vmem:[#allocation3 + $0x10] sm:$0xff] %v2660
  %2686 = vst [vmem:[#allocation3 + $0x18] sm:$0xff] %v2661
  %2687 = vst [vmem:[#allocation3 + $0x20] sm:$0xff] %v2662
  %2688 = vst [vmem:[#allocation3 + $0x28] sm:$0xff] %v2663
  %2689 = vst [vmem:[#allocation3 + $0x30] sm:$0xff] %v2664
  %2690 = vst [vmem:[#allocation3 + $0x38] sm:$0xff] %v2665
  %2691 = vst [vmem:[#allocation3 + $0x40] sm:$0xff] %v2666
  %2692 = vst [vmem:[#allocation3 + $0x48] sm:$0xff] %v2667
  %2693 = vst [vmem:[#allocation3 + $0x50] sm:$0xff] %v2668
  %2694 = vst [vmem:[#allocation3 + $0x58] sm:$0xff] %v2669
  %2695 = vst [vmem:[#allocation3 + $0x60] sm:$0xff] %v2670
  %2696 = vst [vmem:[#allocation3 + $0x68] sm:$0xff] %v2671
  %2697 = vst [vmem:[#allocation3 + $0x70] sm:$0xff] %v2672
  %2698 = vst [vmem:[#allocation3 + $0x78] sm:$0xff] %v2673
  %2699 = vst [vmem:[#allocation3 + $0x80] sm:$0xff] %v2674
  %2700 = vst [vmem:[#allocation3 + $0x88] sm:$0xff] %v2675
  %2701 = vst [vmem:[#allocation3 + $0x90] sm:$0xff] %v2676
  %2702 = vst [vmem:[#allocation3 + $0x98] sm:$0xff] %v2677
  %2703 = vst [vmem:[#allocation3 + $0xa0] sm:$0xff] %v2678
  %2704 = vst [vmem:[#allocation3 + $0xa8] sm:$0xff] %v2679
  %2705 = vst [vmem:[#allocation3 + $0xb0] sm:$0xff] %v2680
  %2706 = vst [vmem:[#allocation3 + $0xb8] sm:$0xff] %v2681
  %2707 = vst [vmem:[#allocation3 + $0xc0] sm:$0xff] %v2682
  %v2708 = vld [vmem:[#allocation2 + $0x11] sm:$0xff]
  %v2709 = vld [vmem:[#allocation2 + $0x19] sm:$0xff]
  %v2710 = vld [vmem:[#allocation2 + $0x21] sm:$0xff]
  %v2711 = vld [vmem:[#allocation2 + $0x29] sm:$0xff]
  %v2712 = vld [vmem:[#allocation2 + $0x31] sm:$0xff]
  %v2713 = vld [vmem:[#allocation2 + $0x39] sm:$0xff]
  %v2714 = vld [vmem:[#allocation2 + $0x41] sm:$0xff]
  %v2715 = vld [vmem:[#allocation2 + $0x49] sm:$0xff]
  %v2716 = vld [vmem:[#allocation2 + $0x51] sm:$0xff]
  %v2717 = vld [vmem:[#allocation2 + $0x59] sm:$0xff]
  %v2718 = vld [vmem:[#allocation2 + $0x61] sm:$0xff]
  %v2719 = vld [vmem:[#allocation2 + $0x69] sm:$0xff]
  %v2720 = vld [vmem:[#allocation2 + $0x71] sm:$0xff]
  %v2721 = vld [vmem:[#allocation2 + $0x79] sm:$0xff]
  %v2722 = vld [vmem:[#allocation2 + $0x81] sm:$0xff]
  %v2723 = vld [vmem:[#allocation2 + $0x89] sm:$0xff]
  %v2724 = vld [vmem:[#allocation2 + $0x91] sm:$0xff]
  %v2725 = vld [vmem:[#allocation2 + $0x99] sm:$0xff]
  %v2726 = vld [vmem:[#allocation2 + $0xa1] sm:$0xff]
  %v2727 = vld [vmem:[#allocation2 + $0xa9] sm:$0xff]
  %v2728 = vld [vmem:[#allocation2 + $0xb1] sm:$0xff]
  %v2729 = vld [vmem:[#allocation2 + $0xb9] sm:$0xff]
  %v2730 = vld [vmem:[#allocation2 + $0xc1] sm:$0xff]
  %v2731 = vld [vmem:[#allocation2 + $0xc9] sm:$0xff]
  %v2732 = vld [vmem:[#allocation2 + $0xd1] sm:$0xff]
  %v2733 = vpack.c.bf16 %v2709, %v2708
  %v2734 = vpack.c.bf16 %v2711, %v2710
  %v2735 = vpack.c.bf16 %v2713, %v2712
  %v2736 = vpack.c.bf16 %v2715, %v2714
  %v2737 = vpack.c.bf16 %v2717, %v2716
  %v2738 = vpack.c.bf16 %v2719, %v2718
  %v2739 = vpack.c.bf16 %v2721, %v2720
  %v2740 = vpack.c.bf16 %v2723, %v2722
  %v2741 = vpack.c.bf16 %v2725, %v2724
  %v2742 = vpack.c.bf16 %v2727, %v2726
  %v2743 = vpack.c.bf16 %v2729, %v2728
  %v2744 = vpack.c.bf16 %v2731, %v2730
  %v2745 = vpack.c.bf16 %v2732, %v2732
  %s2746 = scalar_lea.vmem %s7, 320
  %v2747 = vld [vmem:[%s2746] sm:$0xf]
  %v2748 = vld [vmem:[%s2746 + $0x4] sm:$0xf]
  %v2749 = vld [vmem:[%s2746 + $0x8] sm:$0xf]
  %v2750 = vld [vmem:[%s2746 + $0xc] sm:$0xf]
  %v2751 = vld [vmem:[%s2746 + $0x10] sm:$0xf]
  %v2752 = vld [vmem:[%s2746 + $0x14] sm:$0xf]
  %v2753 = vld [vmem:[%s2746 + $0x18] sm:$0xf]
  %v2754 = vld [vmem:[%s2746 + $0x1c] sm:$0xf]
  %v2755 = vld [vmem:[%s2746 + $0x20] sm:$0xf]
  %v2756 = vld [vmem:[%s2746 + $0x24] sm:$0xf]
  %v2757 = vld [vmem:[%s2746 + $0x28] sm:$0xf]
  %v2758 = vld [vmem:[%s2746 + $0x2c] sm:$0xf]
  %v2759 = vld [vmem:[%s2746 + $0x30] sm:$0xf]
  %v2760 = vld [vmem:[%s2746 + $0x34] sm:$0xf]
  %v2761 = vld [vmem:[%s2746 + $0x38] sm:$0xf]
  %v2762 = vld [vmem:[%s2746 + $0x3c] sm:$0xf]
  %v2779 = vunpack.c.l.b16 %v2747
  %v2780 = vunpack.c.l.b16 %v2748
  %v2781 = vunpack.c.l.b16 %v2749
  %v2782 = vunpack.c.l.b16 %v2750
  %v2783 = vunpack.c.l.b16 %v2751
  %v2784 = vunpack.c.l.b16 %v2752
  %v2785 = vunpack.c.l.b16 %v2753
  %v2786 = vunpack.c.l.b16 %v2754
  %v2787 = vunpack.c.l.b16 %v2755
  %v2788 = vunpack.c.l.b16 %v2756
  %v2789 = vunpack.c.l.b16 %v2757
  %v2790 = vunpack.c.l.b16 %v2758
  %v2791 = vunpack.c.l.b16 %v2759
  %v2792 = vunpack.c.l.b16 %v2760
  %v2793 = vunpack.c.l.b16 %v2761
  %v2794 = vunpack.c.l.b16 %v2762
  %v2795 = vpack.c.b16 %v2780, %v2779
  %v2796 = vpack.c.b16 %v2782, %v2781
  %v2797 = vpack.c.b16 %v2784, %v2783
  %v2798 = vpack.c.b16 %v2786, %v2785
  %v2799 = vpack.c.b16 %v2788, %v2787
  %v2800 = vpack.c.b16 %v2790, %v2789
  %v2801 = vpack.c.b16 %v2792, %v2791
  %v2802 = vpack.c.b16 %v2794, %v2793
  %2811 = vmatprep.subr.bf16.mxu0 0
  %2812 = vmatpush1.bf16.msra.mxu0 %v2802
  %2813 = vmatprep.subr.bf16.mxu0 0
  %2814 = vmatpush1.bf16.msra.mxu0 %v2801
  %2815 = vmatprep.subr.bf16.mxu0 0
  %2816 = vmatpush1.bf16.msra.mxu0 %v2800
  %2817 = vmatprep.subr.bf16.mxu0 0
  %2818 = vmatpush1.bf16.msra.mxu0 %v2799
  %2819 = vmatprep.subr.bf16.mxu0 0
  %2820 = vmatpush1.bf16.msra.mxu0 %v2798
  %2821 = vmatprep.subr.bf16.mxu0 0
  %2822 = vmatpush1.bf16.msra.mxu0 %v2797
  %2823 = vmatprep.subr.bf16.mxu0 0
  %2824 = vmatpush1.bf16.msra.mxu0 %v2796
  %2825 = vmatprep.subr.bf16.mxu0 0
  %2826 = vmatpush1.bf16.msra.mxu0 %v2795
  %2827 = vmatprep.subr.bf16.mxu0 0
  %2828 = vmatpush2.bf16.msra.mxu0 0
  %2829 = vmatprep.subr.bf16.mxu0 0
  %2830 = vmatpush2.bf16.msra.mxu0 0
  %2831 = vmatprep.subr.bf16.mxu0 0
  %2832 = vmatpush2.bf16.msra.mxu0 0
  %2833 = vmatprep.subr.bf16.mxu0 0
  %2834 = vmatpush2.bf16.msra.mxu0 0
  %2835 = vmatprep.subr.bf16.mxu0 0
  %2836 = vmatpush2.bf16.msra.mxu0 0
  %2837 = vmatprep.subr.bf16.mxu0 0
  %2838 = vmatpush2.bf16.msra.mxu0 0
  %2839 = vmatprep.subr.bf16.mxu0 0
  %2840 = vmatpush2.bf16.msra.mxu0 0
  %2841 = vmatprep.subr.bf16.mxu0 0
  %2842 = vmatpush2.bf16.msra.mxu0 0
  %2843 = vmatprep.mubr.bf16.mxu0 0
  %2844 = vmatmul.mubr.bf16.gmra.mxu0 %v2733
  %v2845 = vpop.f32.mrf.mxu0
  %v2846 = vadd.f32 0.0, %v2845
  %v2847 = vpop.f32.mrf.mxu0
  %v2848 = vpop.f32.mrf.mxu0
  %v2849 = vadd.f32 0.0, %v2848
  %v2850 = vpop.f32.mrf.mxu0
  %2851 = vmatprep.mubr.bf16.mxu0 0
  %2852 = vmatmul.mubr.bf16.gmra.mxu0 %v2734
  %v2853 = vpop.f32.mrf.mxu0
  %v2854 = vadd.f32 0.0, %v2853
  %v2855 = vpop.f32.mrf.mxu0
  %v2856 = vpop.f32.mrf.mxu0
  %v2857 = vadd.f32 0.0, %v2856
  %v2858 = vpop.f32.mrf.mxu0
  %2859 = vmatprep.mubr.bf16.mxu0 0
  %2860 = vmatmul.mubr.bf16.gmra.mxu0 %v2735
  %v2861 = vpop.f32.mrf.mxu0
  %v2862 = vadd.f32 0.0, %v2861
  %v2863 = vpop.f32.mrf.mxu0
  %v2864 = vpop.f32.mrf.mxu0
  %v2865 = vadd.f32 0.0, %v2864
  %v2866 = vpop.f32.mrf.mxu0
  %2867 = vmatprep.mubr.bf16.mxu0 0
  %2868 = vmatmul.mubr.bf16.gmra.mxu0 %v2736
  %v2869 = vpop.f32.mrf.mxu0
  %v2870 = vadd.f32 0.0, %v2869
  %v2871 = vpop.f32.mrf.mxu0
  %v2872 = vpop.f32.mrf.mxu0
  %v2873 = vadd.f32 0.0, %v2872
  %v2874 = vpop.f32.mrf.mxu0
  %2875 = vmatprep.mubr.bf16.mxu0 0
  %2876 = vmatmul.mubr.bf16.gmra.mxu0 %v2737
  %v2877 = vpop.f32.mrf.mxu0
  %v2878 = vadd.f32 0.0, %v2877
  %v2879 = vpop.f32.mrf.mxu0
  %v2880 = vpop.f32.mrf.mxu0
  %v2881 = vadd.f32 0.0, %v2880
  %v2882 = vpop.f32.mrf.mxu0
  %2883 = vmatprep.mubr.bf16.mxu0 0
  %2884 = vmatmul.mubr.bf16.gmra.mxu0 %v2738
  %v2885 = vpop.f32.mrf.mxu0
  %v2886 = vadd.f32 0.0, %v2885
  %v2887 = vpop.f32.mrf.mxu0
  %v2888 = vpop.f32.mrf.mxu0
  %v2889 = vadd.f32 0.0, %v2888
  %v2890 = vpop.f32.mrf.mxu0
  %2891 = vmatprep.mubr.bf16.mxu0 0
  %2892 = vmatmul.mubr.bf16.gmra.mxu0 %v2739
  %v2893 = vpop.f32.mrf.mxu0
  %v2894 = vadd.f32 0.0, %v2893
  %v2895 = vpop.f32.mrf.mxu0
  %v2896 = vpop.f32.mrf.mxu0
  %v2897 = vadd.f32 0.0, %v2896
  %v2898 = vpop.f32.mrf.mxu0
  %2899 = vmatprep.mubr.bf16.mxu0 0
  %2900 = vmatmul.mubr.bf16.gmra.mxu0 %v2740
  %v2901 = vpop.f32.mrf.mxu0
  %v2902 = vadd.f32 0.0, %v2901
  %v2903 = vpop.f32.mrf.mxu0
  %v2904 = vpop.f32.mrf.mxu0
  %v2905 = vadd.f32 0.0, %v2904
  %v2906 = vpop.f32.mrf.mxu0
  %2907 = vmatprep.mubr.bf16.mxu0 0
  %2908 = vmatmul.mubr.bf16.gmra.mxu0 %v2741
  %v2909 = vpop.f32.mrf.mxu0
  %v2910 = vadd.f32 0.0, %v2909
  %v2911 = vpop.f32.mrf.mxu0
  %v2912 = vpop.f32.mrf.mxu0
  %v2913 = vadd.f32 0.0, %v2912
  %v2914 = vpop.f32.mrf.mxu0
  %2915 = vmatprep.mubr.bf16.mxu0 0
  %2916 = vmatmul.mubr.bf16.gmra.mxu0 %v2742
  %v2917 = vpop.f32.mrf.mxu0
  %v2918 = vadd.f32 0.0, %v2917
  %v2919 = vpop.f32.mrf.mxu0
  %v2920 = vpop.f32.mrf.mxu0
  %v2921 = vadd.f32 0.0, %v2920
  %v2922 = vpop.f32.mrf.mxu0
  %2923 = vmatprep.mubr.bf16.mxu0 0
  %2924 = vmatmul.mubr.bf16.gmra.mxu0 %v2743
  %v2925 = vpop.f32.mrf.mxu0
  %v2926 = vadd.f32 0.0, %v2925
  %v2927 = vpop.f32.mrf.mxu0
  %v2928 = vpop.f32.mrf.mxu0
  %v2929 = vadd.f32 0.0, %v2928
  %v2930 = vpop.f32.mrf.mxu0
  %2931 = vmatprep.mubr.bf16.mxu0 0
  %2932 = vmatmul.mubr.bf16.gmra.mxu0 %v2744
  %v2933 = vpop.f32.mrf.mxu0
  %v2934 = vadd.f32 0.0, %v2933
  %v2935 = vpop.f32.mrf.mxu0
  %v2936 = vpop.f32.mrf.mxu0
  %v2937 = vadd.f32 0.0, %v2936
  %v2938 = vpop.f32.mrf.mxu0
  %2939 = vmatprep.mubr.bf16.mxu0 0
  %2940 = vmatmul.mubr.bf16.gmra.mxu0 %v2745
  %v2941 = vpop.f32.mrf.mxu0
  %v2942 = vadd.f32 0.0, %v2941
  %v2943 = vpop.f32.mrf.mxu0
  %v2944 = vpop.f32.mrf.mxu0
  %v2945 = vpop.f32.mrf.mxu0
  %2946 = vdwg.mxu0
  %v2947 = vld [vmem:[#allocation3] sm:$0xff]
  %v2948 = vld [vmem:[#allocation3 + $0x8] sm:$0xff]
  %v2949 = vld [vmem:[#allocation3 + $0x10] sm:$0xff]
  %v2950 = vld [vmem:[#allocation3 + $0x18] sm:$0xff]
  %v2951 = vld [vmem:[#allocation3 + $0x20] sm:$0xff]
  %v2952 = vld [vmem:[#allocation3 + $0x28] sm:$0xff]
  %v2953 = vld [vmem:[#allocation3 + $0x30] sm:$0xff]
  %v2954 = vld [vmem:[#allocation3 + $0x38] sm:$0xff]
  %v2955 = vld [vmem:[#allocation3 + $0x40] sm:$0xff]
  %v2956 = vld [vmem:[#allocation3 + $0x48] sm:$0xff]
  %v2957 = vld [vmem:[#allocation3 + $0x50] sm:$0xff]
  %v2958 = vld [vmem:[#allocation3 + $0x58] sm:$0xff]
  %v2959 = vld [vmem:[#allocation3 + $0x60] sm:$0xff]
  %v2960 = vld [vmem:[#allocation3 + $0x68] sm:$0xff]
  %v2961 = vld [vmem:[#allocation3 + $0x70] sm:$0xff]
  %v2962 = vld [vmem:[#allocation3 + $0x78] sm:$0xff]
  %v2963 = vld [vmem:[#allocation3 + $0x80] sm:$0xff]
  %v2964 = vld [vmem:[#allocation3 + $0x88] sm:$0xff]
  %v2965 = vld [vmem:[#allocation3 + $0x90] sm:$0xff]
  %v2966 = vld [vmem:[#allocation3 + $0x98] sm:$0xff]
  %v2967 = vld [vmem:[#allocation3 + $0xa0] sm:$0xff]
  %v2968 = vld [vmem:[#allocation3 + $0xa8] sm:$0xff]
  %v2969 = vld [vmem:[#allocation3 + $0xb0] sm:$0xff]
  %v2970 = vld [vmem:[#allocation3 + $0xb8] sm:$0xff]
  %v2971 = vld [vmem:[#allocation3 + $0xc0] sm:$0xff]
  %v2972 = vadd.f32 %v2947, %v2846
  %v2973 = vadd.f32 %v2948, %v2849
  %v2974 = vadd.f32 %v2949, %v2854
  %v2975 = vadd.f32 %v2950, %v2857
  %v2976 = vadd.f32 %v2951, %v2862
  %v2977 = vadd.f32 %v2952, %v2865
  %v2978 = vadd.f32 %v2953, %v2870
  %v2979 = vadd.f32 %v2954, %v2873
  %v2980 = vadd.f32 %v2955, %v2878
  %v2981 = vadd.f32 %v2956, %v2881
  %v2982 = vadd.f32 %v2957, %v2886
  %v2983 = vadd.f32 %v2958, %v2889
  %v2984 = vadd.f32 %v2959, %v2894
  %v2985 = vadd.f32 %v2960, %v2897
  %v2986 = vadd.f32 %v2961, %v2902
  %v2987 = vadd.f32 %v2962, %v2905
  %v2988 = vadd.f32 %v2963, %v2910
  %v2989 = vadd.f32 %v2964, %v2913
  %v2990 = vadd.f32 %v2965, %v2918
  %v2991 = vadd.f32 %v2966, %v2921
  %v2992 = vadd.f32 %v2967, %v2926
  %v2993 = vadd.f32 %v2968, %v2929
  %v2994 = vadd.f32 %v2969, %v2934
  %v2995 = vadd.f32 %v2970, %v2937
  %v2996 = vadd.f32 %v2971, %v2942
  %2997 = vst [vmem:[#allocation3] sm:$0xff] %v2972
  %2998 = vst [vmem:[#allocation3 + $0x8] sm:$0xff] %v2973
  %2999 = vst [vmem:[#allocation3 + $0x10] sm:$0xff] %v2974
  %3000 = vst [vmem:[#allocation3 + $0x18] sm:$0xff] %v2975
  %3001 = vst [vmem:[#allocation3 + $0x20] sm:$0xff] %v2976
  %3002 = vst [vmem:[#allocation3 + $0x28] sm:$0xff] %v2977
  %3003 = vst [vmem:[#allocation3 + $0x30] sm:$0xff] %v2978
  %3004 = vst [vmem:[#allocation3 + $0x38] sm:$0xff] %v2979
  %3005 = vst [vmem:[#allocation3 + $0x40] sm:$0xff] %v2980
  %3006 = vst [vmem:[#allocation3 + $0x48] sm:$0xff] %v2981
  %3007 = vst [vmem:[#allocation3 + $0x50] sm:$0xff] %v2982
  %3008 = vst [vmem:[#allocation3 + $0x58] sm:$0xff] %v2983
  %3009 = vst [vmem:[#allocation3 + $0x60] sm:$0xff] %v2984
  %3010 = vst [vmem:[#allocation3 + $0x68] sm:$0xff] %v2985
  %3011 = vst [vmem:[#allocation3 + $0x70] sm:$0xff] %v2986
  %3012 = vst [vmem:[#allocation3 + $0x78] sm:$0xff] %v2987
  %3013 = vst [vmem:[#allocation3 + $0x80] sm:$0xff] %v2988
  %3014 = vst [vmem:[#allocation3 + $0x88] sm:$0xff] %v2989
  %3015 = vst [vmem:[#allocation3 + $0x90] sm:$0xff] %v2990
  %3016 = vst [vmem:[#allocation3 + $0x98] sm:$0xff] %v2991
  %3017 = vst [vmem:[#allocation3 + $0xa0] sm:$0xff] %v2992
  %3018 = vst [vmem:[#allocation3 + $0xa8] sm:$0xff] %v2993
  %3019 = vst [vmem:[#allocation3 + $0xb0] sm:$0xff] %v2994
  %3020 = vst [vmem:[#allocation3 + $0xb8] sm:$0xff] %v2995
  %3021 = vst [vmem:[#allocation3 + $0xc0] sm:$0xff] %v2996
  %v3022 = vld [vmem:[#allocation2 + $0x19] sm:$0xff]
  %v3023 = vld [vmem:[#allocation2 + $0x21] sm:$0xff]
  %v3024 = vld [vmem:[#allocation2 + $0x29] sm:$0xff]
  %v3025 = vld [vmem:[#allocation2 + $0x31] sm:$0xff]
  %v3026 = vld [vmem:[#allocation2 + $0x39] sm:$0xff]
  %v3027 = vld [vmem:[#allocation2 + $0x41] sm:$0xff]
  %v3028 = vld [vmem:[#allocation2 + $0x49] sm:$0xff]
  %v3029 = vld [vmem:[#allocation2 + $0x51] sm:$0xff]
  %v3030 = vld [vmem:[#allocation2 + $0x59] sm:$0xff]
  %v3031 = vld [vmem:[#allocation2 + $0x61] sm:$0xff]
  %v3032 = vld [vmem:[#allocation2 + $0x69] sm:$0xff]
  %v3033 = vld [vmem:[#allocation2 + $0x71] sm:$0xff]
  %v3034 = vld [vmem:[#allocation2 + $0x79] sm:$0xff]
  %v3035 = vld [vmem:[#allocation2 + $0x81] sm:$0xff]
  %v3036 = vld [vmem:[#allocation2 + $0x89] sm:$0xff]
  %v3037 = vld [vmem:[#allocation2 + $0x91] sm:$0xff]
  %v3038 = vld [vmem:[#allocation2 + $0x99] sm:$0xff]
  %v3039 = vld [vmem:[#allocation2 + $0xa1] sm:$0xff]
  %v3040 = vld [vmem:[#allocation2 + $0xa9] sm:$0xff]
  %v3041 = vld [vmem:[#allocation2 + $0xb1] sm:$0xff]
  %v3042 = vld [vmem:[#allocation2 + $0xb9] sm:$0xff]
  %v3043 = vld [vmem:[#allocation2 + $0xc1] sm:$0xff]
  %v3044 = vld [vmem:[#allocation2 + $0xc9] sm:$0xff]
  %v3045 = vld [vmem:[#allocation2 + $0xd1] sm:$0xff]
  %v3046 = vld [vmem:[#allocation2 + $0xd9] sm:$0xff]
  %v3047 = vpack.c.bf16 %v3023, %v3022
  %v3048 = vpack.c.bf16 %v3025, %v3024
  %v3049 = vpack.c.bf16 %v3027, %v3026
  %v3050 = vpack.c.bf16 %v3029, %v3028
  %v3051 = vpack.c.bf16 %v3031, %v3030
  %v3052 = vpack.c.bf16 %v3033, %v3032
  %v3053 = vpack.c.bf16 %v3035, %v3034
  %v3054 = vpack.c.bf16 %v3037, %v3036
  %v3055 = vpack.c.bf16 %v3039, %v3038
  %v3056 = vpack.c.bf16 %v3041, %v3040
  %v3057 = vpack.c.bf16 %v3043, %v3042
  %v3058 = vpack.c.bf16 %v3045, %v3044
  %v3059 = vpack.c.bf16 %v3046, %v3046
  %s3060 = scalar_lea.vmem %s7, 384
  %v3061 = vld [vmem:[%s3060] sm:$0xf]
  %v3062 = vld [vmem:[%s3060 + $0x4] sm:$0xf]
  %v3063 = vld [vmem:[%s3060 + $0x8] sm:$0xf]
  %v3064 = vld [vmem:[%s3060 + $0xc] sm:$0xf]
  %v3065 = vld [vmem:[%s3060 + $0x10] sm:$0xf]
  %v3066 = vld [vmem:[%s3060 + $0x14] sm:$0xf]
  %v3067 = vld [vmem:[%s3060 + $0x18] sm:$0xf]
  %v3068 = vld [vmem:[%s3060 + $0x1c] sm:$0xf]
  %v3069 = vld [vmem:[%s3060 + $0x20] sm:$0xf]
  %v3070 = vld [vmem:[%s3060 + $0x24] sm:$0xf]
  %v3071 = vld [vmem:[%s3060 + $0x28] sm:$0xf]
  %v3072 = vld [vmem:[%s3060 + $0x2c] sm:$0xf]
  %v3073 = vld [vmem:[%s3060 + $0x30] sm:$0xf]
  %v3074 = vld [vmem:[%s3060 + $0x34] sm:$0xf]
  %v3075 = vld [vmem:[%s3060 + $0x38] sm:$0xf]
  %v3076 = vld [vmem:[%s3060 + $0x3c] sm:$0xf]
  %v3093 = vunpack.c.l.b16 %v3061
  %v3094 = vunpack.c.l.b16 %v3062
  %v3095 = vunpack.c.l.b16 %v3063
  %v3096 = vunpack.c.l.b16 %v3064
  %v3097 = vunpack.c.l.b16 %v3065
  %v3098 = vunpack.c.l.b16 %v3066
  %v3099 = vunpack.c.l.b16 %v3067
  %v3100 = vunpack.c.l.b16 %v3068
  %v3101 = vunpack.c.l.b16 %v3069
  %v3102 = vunpack.c.l.b16 %v3070
  %v3103 = vunpack.c.l.b16 %v3071
  %v3104 = vunpack.c.l.b16 %v3072
  %v3105 = vunpack.c.l.b16 %v3073
  %v3106 = vunpack.c.l.b16 %v3074
  %v3107 = vunpack.c.l.b16 %v3075
  %v3108 = vunpack.c.l.b16 %v3076
  %v3109 = vpack.c.b16 %v3094, %v3093
  %v3110 = vpack.c.b16 %v3096, %v3095
  %v3111 = vpack.c.b16 %v3098, %v3097
  %v3112 = vpack.c.b16 %v3100, %v3099
  %v3113 = vpack.c.b16 %v3102, %v3101
  %v3114 = vpack.c.b16 %v3104, %v3103
  %v3115 = vpack.c.b16 %v3106, %v3105
  %v3116 = vpack.c.b16 %v3108, %v3107
  %3125 = vmatprep.subr.bf16.mxu0 0
  %3126 = vmatpush1.bf16.msra.mxu0 %v3116
  %3127 = vmatprep.subr.bf16.mxu0 0
  %3128 = vmatpush1.bf16.msra.mxu0 %v3115
  %3129 = vmatprep.subr.bf16.mxu0 0
  %3130 = vmatpush1.bf16.msra.mxu0 %v3114
  %3131 = vmatprep.subr.bf16.mxu0 0
  %3132 = vmatpush1.bf16.msra.mxu0 %v3113
  %3133 = vmatprep.subr.bf16.mxu0 0
  %3134 = vmatpush1.bf16.msra.mxu0 %v3112
  %3135 = vmatprep.subr.bf16.mxu0 0
  %3136 = vmatpush1.bf16.msra.mxu0 %v3111
  %3137 = vmatprep.subr.bf16.mxu0 0
  %3138 = vmatpush1.bf16.msra.mxu0 %v3110
  %3139 = vmatprep.subr.bf16.mxu0 0
  %3140 = vmatpush1.bf16.msra.mxu0 %v3109
  %3141 = vmatprep.subr.bf16.mxu0 0
  %3142 = vmatpush2.bf16.msra.mxu0 0
  %3143 = vmatprep.subr.bf16.mxu0 0
  %3144 = vmatpush2.bf16.msra.mxu0 0
  %3145 = vmatprep.subr.bf16.mxu0 0
  %3146 = vmatpush2.bf16.msra.mxu0 0
  %3147 = vmatprep.subr.bf16.mxu0 0
  %3148 = vmatpush2.bf16.msra.mxu0 0
  %3149 = vmatprep.subr.bf16.mxu0 0
  %3150 = vmatpush2.bf16.msra.mxu0 0
  %3151 = vmatprep.subr.bf16.mxu0 0
  %3152 = vmatpush2.bf16.msra.mxu0 0
  %3153 = vmatprep.subr.bf16.mxu0 0
  %3154 = vmatpush2.bf16.msra.mxu0 0
  %3155 = vmatprep.subr.bf16.mxu0 0
  %3156 = vmatpush2.bf16.msra.mxu0 0
  %3157 = vmatprep.mubr.bf16.mxu0 0
  %3158 = vmatmul.mubr.bf16.gmra.mxu0 %v3047
  %v3159 = vpop.f32.mrf.mxu0
  %v3160 = vadd.f32 0.0, %v3159
  %v3161 = vpop.f32.mrf.mxu0
  %v3162 = vpop.f32.mrf.mxu0
  %v3163 = vadd.f32 0.0, %v3162
  %v3164 = vpop.f32.mrf.mxu0
  %3165 = vmatprep.mubr.bf16.mxu0 0
  %3166 = vmatmul.mubr.bf16.gmra.mxu0 %v3048
  %v3167 = vpop.f32.mrf.mxu0
  %v3168 = vadd.f32 0.0, %v3167
  %v3169 = vpop.f32.mrf.mxu0
  %v3170 = vpop.f32.mrf.mxu0
  %v3171 = vadd.f32 0.0, %v3170
  %v3172 = vpop.f32.mrf.mxu0
  %3173 = vmatprep.mubr.bf16.mxu0 0
  %3174 = vmatmul.mubr.bf16.gmra.mxu0 %v3049
  %v3175 = vpop.f32.mrf.mxu0
  %v3176 = vadd.f32 0.0, %v3175
  %v3177 = vpop.f32.mrf.mxu0
  %v3178 = vpop.f32.mrf.mxu0
  %v3179 = vadd.f32 0.0, %v3178
  %v3180 = vpop.f32.mrf.mxu0
  %3181 = vmatprep.mubr.bf16.mxu0 0
  %3182 = vmatmul.mubr.bf16.gmra.mxu0 %v3050
  %v3183 = vpop.f32.mrf.mxu0
  %v3184 = vadd.f32 0.0, %v3183
  %v3185 = vpop.f32.mrf.mxu0
  %v3186 = vpop.f32.mrf.mxu0
  %v3187 = vadd.f32 0.0, %v3186
  %v3188 = vpop.f32.mrf.mxu0
  %3189 = vmatprep.mubr.bf16.mxu0 0
  %3190 = vmatmul.mubr.bf16.gmra.mxu0 %v3051
  %v3191 = vpop.f32.mrf.mxu0
  %v3192 = vadd.f32 0.0, %v3191
  %v3193 = vpop.f32.mrf.mxu0
  %v3194 = vpop.f32.mrf.mxu0
  %v3195 = vadd.f32 0.0, %v3194
  %v3196 = vpop.f32.mrf.mxu0
  %3197 = vmatprep.mubr.bf16.mxu0 0
  %3198 = vmatmul.mubr.bf16.gmra.mxu0 %v3052
  %v3199 = vpop.f32.mrf.mxu0
  %v3200 = vadd.f32 0.0, %v3199
  %v3201 = vpop.f32.mrf.mxu0
  %v3202 = vpop.f32.mrf.mxu0
  %v3203 = vadd.f32 0.0, %v3202
  %v3204 = vpop.f32.mrf.mxu0
  %3205 = vmatprep.mubr.bf16.mxu0 0
  %3206 = vmatmul.mubr.bf16.gmra.mxu0 %v3053
  %v3207 = vpop.f32.mrf.mxu0
  %v3208 = vadd.f32 0.0, %v3207
  %v3209 = vpop.f32.mrf.mxu0
  %v3210 = vpop.f32.mrf.mxu0
  %v3211 = vadd.f32 0.0, %v3210
  %v3212 = vpop.f32.mrf.mxu0
  %3213 = vmatprep.mubr.bf16.mxu0 0
  %3214 = vmatmul.mubr.bf16.gmra.mxu0 %v3054
  %v3215 = vpop.f32.mrf.mxu0
  %v3216 = vadd.f32 0.0, %v3215
  %v3217 = vpop.f32.mrf.mxu0
  %v3218 = vpop.f32.mrf.mxu0
  %v3219 = vadd.f32 0.0, %v3218
  %v3220 = vpop.f32.mrf.mxu0
  %3221 = vmatprep.mubr.bf16.mxu0 0
  %3222 = vmatmul.mubr.bf16.gmra.mxu0 %v3055
  %v3223 = vpop.f32.mrf.mxu0
  %v3224 = vadd.f32 0.0, %v3223
  %v3225 = vpop.f32.mrf.mxu0
  %v3226 = vpop.f32.mrf.mxu0
  %v3227 = vadd.f32 0.0, %v3226
  %v3228 = vpop.f32.mrf.mxu0
  %3229 = vmatprep.mubr.bf16.mxu0 0
  %3230 = vmatmul.mubr.bf16.gmra.mxu0 %v3056
  %v3231 = vpop.f32.mrf.mxu0
  %v3232 = vadd.f32 0.0, %v3231
  %v3233 = vpop.f32.mrf.mxu0
  %v3234 = vpop.f32.mrf.mxu0
  %v3235 = vadd.f32 0.0, %v3234
  %v3236 = vpop.f32.mrf.mxu0
  %3237 = vmatprep.mubr.bf16.mxu0 0
  %3238 = vmatmul.mubr.bf16.gmra.mxu0 %v3057
  %v3239 = vpop.f32.mrf.mxu0
  %v3240 = vadd.f32 0.0, %v3239
  %v3241 = vpop.f32.mrf.mxu0
  %v3242 = vpop.f32.mrf.mxu0
  %v3243 = vadd.f32 0.0, %v3242
  %v3244 = vpop.f32.mrf.mxu0
  %3245 = vmatprep.mubr.bf16.mxu0 0
  %3246 = vmatmul.mubr.bf16.gmra.mxu0 %v3058
  %v3247 = vpop.f32.mrf.mxu0
  %v3248 = vadd.f32 0.0, %v3247
  %v3249 = vpop.f32.mrf.mxu0
  %v3250 = vpop.f32.mrf.mxu0
  %v3251 = vadd.f32 0.0, %v3250
  %v3252 = vpop.f32.mrf.mxu0
  %3253 = vmatprep.mubr.bf16.mxu0 0
  %3254 = vmatmul.mubr.bf16.gmra.mxu0 %v3059
  %v3255 = vpop.f32.mrf.mxu0
  %v3256 = vadd.f32 0.0, %v3255
  %v3257 = vpop.f32.mrf.mxu0
  %v3258 = vpop.f32.mrf.mxu0
  %v3259 = vpop.f32.mrf.mxu0
  %3260 = vdwg.mxu0
  %v3261 = vld [vmem:[#allocation3] sm:$0xff]
  %v3262 = vld [vmem:[#allocation3 + $0x8] sm:$0xff]
  %v3263 = vld [vmem:[#allocation3 + $0x10] sm:$0xff]
  %v3264 = vld [vmem:[#allocation3 + $0x18] sm:$0xff]
  %v3265 = vld [vmem:[#allocation3 + $0x20] sm:$0xff]
  %v3266 = vld [vmem:[#allocation3 + $0x28] sm:$0xff]
  %v3267 = vld [vmem:[#allocation3 + $0x30] sm:$0xff]
  %v3268 = vld [vmem:[#allocation3 + $0x38] sm:$0xff]
  %v3269 = vld [vmem:[#allocation3 + $0x40] sm:$0xff]
  %v3270 = vld [vmem:[#allocation3 + $0x48] sm:$0xff]
  %v3271 = vld [vmem:[#allocation3 + $0x50] sm:$0xff]
  %v3272 = vld [vmem:[#allocation3 + $0x58] sm:$0xff]
  %v3273 = vld [vmem:[#allocation3 + $0x60] sm:$0xff]
  %v3274 = vld [vmem:[#allocation3 + $0x68] sm:$0xff]
  %v3275 = vld [vmem:[#allocation3 + $0x70] sm:$0xff]
  %v3276 = vld [vmem:[#allocation3 + $0x78] sm:$0xff]
  %v3277 = vld [vmem:[#allocation3 + $0x80] sm:$0xff]
  %v3278 = vld [vmem:[#allocation3 + $0x88] sm:$0xff]
  %v3279 = vld [vmem:[#allocation3 + $0x90] sm:$0xff]
  %v3280 = vld [vmem:[#allocation3 + $0x98] sm:$0xff]
  %v3281 = vld [vmem:[#allocation3 + $0xa0] sm:$0xff]
  %v3282 = vld [vmem:[#allocation3 + $0xa8] sm:$0xff]
  %v3283 = vld [vmem:[#allocation3 + $0xb0] sm:$0xff]
  %v3284 = vld [vmem:[#allocation3 + $0xb8] sm:$0xff]
  %v3285 = vld [vmem:[#allocation3 + $0xc0] sm:$0xff]
  %v3286 = vadd.f32 %v3261, %v3160
  %v3287 = vadd.f32 %v3262, %v3163
  %v3288 = vadd.f32 %v3263, %v3168
  %v3289 = vadd.f32 %v3264, %v3171
  %v3290 = vadd.f32 %v3265, %v3176
  %v3291 = vadd.f32 %v3266, %v3179
  %v3292 = vadd.f32 %v3267, %v3184
  %v3293 = vadd.f32 %v3268, %v3187
  %v3294 = vadd.f32 %v3269, %v3192
  %v3295 = vadd.f32 %v3270, %v3195
  %v3296 = vadd.f32 %v3271, %v3200
  %v3297 = vadd.f32 %v3272, %v3203
  %v3298 = vadd.f32 %v3273, %v3208
  %v3299 = vadd.f32 %v3274, %v3211
  %v3300 = vadd.f32 %v3275, %v3216
  %v3301 = vadd.f32 %v3276, %v3219
  %v3302 = vadd.f32 %v3277, %v3224
  %v3303 = vadd.f32 %v3278, %v3227
  %v3304 = vadd.f32 %v3279, %v3232
  %v3305 = vadd.f32 %v3280, %v3235
  %v3306 = vadd.f32 %v3281, %v3240
  %v3307 = vadd.f32 %v3282, %v3243
  %v3308 = vadd.f32 %v3283, %v3248
  %v3309 = vadd.f32 %v3284, %v3251
  %v3310 = vadd.f32 %v3285, %v3256
  %3311 = vst [vmem:[#allocation3] sm:$0xff] %v3286
  %3312 = vst [vmem:[#allocation3 + $0x8] sm:$0xff] %v3287
  %3313 = vst [vmem:[#allocation3 + $0x10] sm:$0xff] %v3288
  %3314 = vst [vmem:[#allocation3 + $0x18] sm:$0xff] %v3289
  %3315 = vst [vmem:[#allocation3 + $0x20] sm:$0xff] %v3290
  %3316 = vst [vmem:[#allocation3 + $0x28] sm:$0xff] %v3291
  %3317 = vst [vmem:[#allocation3 + $0x30] sm:$0xff] %v3292
  %3318 = vst [vmem:[#allocation3 + $0x38] sm:$0xff] %v3293
  %3319 = vst [vmem:[#allocation3 + $0x40] sm:$0xff] %v3294
  %3320 = vst [vmem:[#allocation3 + $0x48] sm:$0xff] %v3295
  %3321 = vst [vmem:[#allocation3 + $0x50] sm:$0xff] %v3296
  %3322 = vst [vmem:[#allocation3 + $0x58] sm:$0xff] %v3297
  %3323 = vst [vmem:[#allocation3 + $0x60] sm:$0xff] %v3298
  %3324 = vst [vmem:[#allocation3 + $0x68] sm:$0xff] %v3299
  %3325 = vst [vmem:[#allocation3 + $0x70] sm:$0xff] %v3300
  %3326 = vst [vmem:[#allocation3 + $0x78] sm:$0xff] %v3301
  %3327 = vst [vmem:[#allocation3 + $0x80] sm:$0xff] %v3302
  %3328 = vst [vmem:[#allocation3 + $0x88] sm:$0xff] %v3303
  %3329 = vst [vmem:[#allocation3 + $0x90] sm:$0xff] %v3304
  %3330 = vst [vmem:[#allocation3 + $0x98] sm:$0xff] %v3305
  %3331 = vst [vmem:[#allocation3 + $0xa0] sm:$0xff] %v3306
  %3332 = vst [vmem:[#allocation3 + $0xa8] sm:$0xff] %v3307
  %3333 = vst [vmem:[#allocation3 + $0xb0] sm:$0xff] %v3308
  %3334 = vst [vmem:[#allocation3 + $0xb8] sm:$0xff] %v3309
  %3335 = vst [vmem:[#allocation3 + $0xc0] sm:$0xff] %v3310
  %v3336 = vld [vmem:[#allocation2 + $0x1a] sm:$0xff]
  %v3337 = vld [vmem:[#allocation2 + $0x22] sm:$0xff]
  %v3338 = vld [vmem:[#allocation2 + $0x2a] sm:$0xff]
  %v3339 = vld [vmem:[#allocation2 + $0x32] sm:$0xff]
  %v3340 = vld [vmem:[#allocation2 + $0x3a] sm:$0xff]
  %v3341 = vld [vmem:[#allocation2 + $0x42] sm:$0xff]
  %v3342 = vld [vmem:[#allocation2 + $0x4a] sm:$0xff]
  %v3343 = vld [vmem:[#allocation2 + $0x52] sm:$0xff]
  %v3344 = vld [vmem:[#allocation2 + $0x5a] sm:$0xff]
  %v3345 = vld [vmem:[#allocation2 + $0x62] sm:$0xff]
  %v3346 = vld [vmem:[#allocation2 + $0x6a] sm:$0xff]
  %v3347 = vld [vmem:[#allocation2 + $0x72] sm:$0xff]
  %v3348 = vld [vmem:[#allocation2 + $0x7a] sm:$0xff]
  %v3349 = vld [vmem:[#allocation2 + $0x82] sm:$0xff]
  %v3350 = vld [vmem:[#allocation2 + $0x8a] sm:$0xff]
  %v3351 = vld [vmem:[#allocation2 + $0x92] sm:$0xff]
  %v3352 = vld [vmem:[#allocation2 + $0x9a] sm:$0xff]
  %v3353 = vld [vmem:[#allocation2 + $0xa2] sm:$0xff]
  %v3354 = vld [vmem:[#allocation2 + $0xaa] sm:$0xff]
  %v3355 = vld [vmem:[#allocation2 + $0xb2] sm:$0xff]
  %v3356 = vld [vmem:[#allocation2 + $0xba] sm:$0xff]
  %v3357 = vld [vmem:[#allocation2 + $0xc2] sm:$0xff]
  %v3358 = vld [vmem:[#allocation2 + $0xca] sm:$0xff]
  %v3359 = vld [vmem:[#allocation2 + $0xd2] sm:$0xff]
  %v3360 = vld [vmem:[#allocation2 + $0xda] sm:$0xff]
  %v3361 = vpack.c.bf16 %v3337, %v3336
  %v3362 = vpack.c.bf16 %v3339, %v3338
  %v3363 = vpack.c.bf16 %v3341, %v3340
  %v3364 = vpack.c.bf16 %v3343, %v3342
  %v3365 = vpack.c.bf16 %v3345, %v3344
  %v3366 = vpack.c.bf16 %v3347, %v3346
  %v3367 = vpack.c.bf16 %v3349, %v3348
  %v3368 = vpack.c.bf16 %v3351, %v3350
  %v3369 = vpack.c.bf16 %v3353, %v3352
  %v3370 = vpack.c.bf16 %v3355, %v3354
  %v3371 = vpack.c.bf16 %v3357, %v3356
  %v3372 = vpack.c.bf16 %v3359, %v3358
  %v3373 = vpack.c.bf16 %v3360, %v3360
  %s3374 = scalar_lea.vmem %s7, 448
  %v3375 = vld [vmem:[%s3374] sm:$0xf]
  %v3376 = vld [vmem:[%s3374 + $0x4] sm:$0xf]
  %v3377 = vld [vmem:[%s3374 + $0x8] sm:$0xf]
  %v3378 = vld [vmem:[%s3374 + $0xc] sm:$0xf]
  %v3379 = vld [vmem:[%s3374 + $0x10] sm:$0xf]
  %v3380 = vld [vmem:[%s3374 + $0x14] sm:$0xf]
  %v3381 = vld [vmem:[%s3374 + $0x18] sm:$0xf]
  %v3382 = vld [vmem:[%s3374 + $0x1c] sm:$0xf]
  %v3383 = vld [vmem:[%s3374 + $0x20] sm:$0xf]
  %v3384 = vld [vmem:[%s3374 + $0x24] sm:$0xf]
  %v3385 = vld [vmem:[%s3374 + $0x28] sm:$0xf]
  %v3386 = vld [vmem:[%s3374 + $0x2c] sm:$0xf]
  %v3387 = vld [vmem:[%s3374 + $0x30] sm:$0xf]
  %v3388 = vld [vmem:[%s3374 + $0x34] sm:$0xf]
  %v3389 = vld [vmem:[%s3374 + $0x38] sm:$0xf]
  %v3390 = vld [vmem:[%s3374 + $0x3c] sm:$0xf]
  %v3407 = vunpack.c.l.b16 %v3375
  %v3408 = vunpack.c.l.b16 %v3376
  %v3409 = vunpack.c.l.b16 %v3377
  %v3410 = vunpack.c.l.b16 %v3378
  %v3411 = vunpack.c.l.b16 %v3379
  %v3412 = vunpack.c.l.b16 %v3380
  %v3413 = vunpack.c.l.b16 %v3381
  %v3414 = vunpack.c.l.b16 %v3382
  %v3415 = vunpack.c.l.b16 %v3383
  %v3416 = vunpack.c.l.b16 %v3384
  %v3417 = vunpack.c.l.b16 %v3385
  %v3418 = vunpack.c.l.b16 %v3386
  %v3419 = vunpack.c.l.b16 %v3387
  %v3420 = vunpack.c.l.b16 %v3388
  %v3421 = vunpack.c.l.b16 %v3389
  %v3422 = vunpack.c.l.b16 %v3390
  %v3423 = vpack.c.b16 %v3408, %v3407
  %v3424 = vpack.c.b16 %v3410, %v3409
  %v3425 = vpack.c.b16 %v3412, %v3411
  %v3426 = vpack.c.b16 %v3414, %v3413
  %v3427 = vpack.c.b16 %v3416, %v3415
  %v3428 = vpack.c.b16 %v3418, %v3417
  %v3429 = vpack.c.b16 %v3420, %v3419
  %v3430 = vpack.c.b16 %v3422, %v3421
  %3439 = vmatprep.subr.bf16.mxu0 0
  %3440 = vmatpush1.bf16.msra.mxu0 %v3430
  %3441 = vmatprep.subr.bf16.mxu0 0
  %3442 = vmatpush1.bf16.msra.mxu0 %v3429
  %3443 = vmatprep.subr.bf16.mxu0 0
  %3444 = vmatpush1.bf16.msra.mxu0 %v3428
  %3445 = vmatprep.subr.bf16.mxu0 0
  %3446 = vmatpush1.bf16.msra.mxu0 %v3427
  %3447 = vmatprep.subr.bf16.mxu0 0
  %3448 = vmatpush1.bf16.msra.mxu0 %v3426
  %3449 = vmatprep.subr.bf16.mxu0 0
  %3450 = vmatpush1.bf16.msra.mxu0 %v3425
  %3451 = vmatprep.subr.bf16.mxu0 0
  %3452 = vmatpush1.bf16.msra.mxu0 %v3424
  %3453 = vmatprep.subr.bf16.mxu0 0
  %3454 = vmatpush1.bf16.msra.mxu0 %v3423
  %3455 = vmatprep.subr.bf16.mxu0 0
  %3456 = vmatpush2.bf16.msra.mxu0 0
  %3457 = vmatprep.subr.bf16.mxu0 0
  %3458 = vmatpush2.bf16.msra.mxu0 0
  %3459 = vmatprep.subr.bf16.mxu0 0
  %3460 = vmatpush2.bf16.msra.mxu0 0
  %3461 = vmatprep.subr.bf16.mxu0 0
  %3462 = vmatpush2.bf16.msra.mxu0 0
  %3463 = vmatprep.subr.bf16.mxu0 0
  %3464 = vmatpush2.bf16.msra.mxu0 0
  %3465 = vmatprep.subr.bf16.mxu0 0
  %3466 = vmatpush2.bf16.msra.mxu0 0
  %3467 = vmatprep.subr.bf16.mxu0 0
  %3468 = vmatpush2.bf16.msra.mxu0 0
  %3469 = vmatprep.subr.bf16.mxu0 0
  %3470 = vmatpush2.bf16.msra.mxu0 0
  %3471 = vmatprep.mubr.bf16.mxu0 0
  %3472 = vmatmul.mubr.bf16.gmra.mxu0 %v3361
  %v3473 = vpop.f32.mrf.mxu0
  %v3474 = vadd.f32 0.0, %v3473
  %v3475 = vpop.f32.mrf.mxu0
  %v3476 = vpop.f32.mrf.mxu0
  %v3477 = vadd.f32 0.0, %v3476
  %v3478 = vpop.f32.mrf.mxu0
  %3479 = vmatprep.mubr.bf16.mxu0 0
  %3480 = vmatmul.mubr.bf16.gmra.mxu0 %v3362
  %v3481 = vpop.f32.mrf.mxu0
  %v3482 = vadd.f32 0.0, %v3481
  %v3483 = vpop.f32.mrf.mxu0
  %v3484 = vpop.f32.mrf.mxu0
  %v3485 = vadd.f32 0.0, %v3484
  %v3486 = vpop.f32.mrf.mxu0
  %3487 = vmatprep.mubr.bf16.mxu0 0
  %3488 = vmatmul.mubr.bf16.gmra.mxu0 %v3363
  %v3489 = vpop.f32.mrf.mxu0
  %v3490 = vadd.f32 0.0, %v3489
  %v3491 = vpop.f32.mrf.mxu0
  %v3492 = vpop.f32.mrf.mxu0
  %v3493 = vadd.f32 0.0, %v3492
  %v3494 = vpop.f32.mrf.mxu0
  %3495 = vmatprep.mubr.bf16.mxu0 0
  %3496 = vmatmul.mubr.bf16.gmra.mxu0 %v3364
  %v3497 = vpop.f32.mrf.mxu0
  %v3498 = vadd.f32 0.0, %v3497
  %v3499 = vpop.f32.mrf.mxu0
  %v3500 = vpop.f32.mrf.mxu0
  %v3501 = vadd.f32 0.0, %v3500
  %v3502 = vpop.f32.mrf.mxu0
  %3503 = vmatprep.mubr.bf16.mxu0 0
  %3504 = vmatmul.mubr.bf16.gmra.mxu0 %v3365
  %v3505 = vpop.f32.mrf.mxu0
  %v3506 = vadd.f32 0.0, %v3505
  %v3507 = vpop.f32.mrf.mxu0
  %v3508 = vpop.f32.mrf.mxu0
  %v3509 = vadd.f32 0.0, %v3508
  %v3510 = vpop.f32.mrf.mxu0
  %3511 = vmatprep.mubr.bf16.mxu0 0
  %3512 = vmatmul.mubr.bf16.gmra.mxu0 %v3366
  %v3513 = vpop.f32.mrf.mxu0
  %v3514 = vadd.f32 0.0, %v3513
  %v3515 = vpop.f32.mrf.mxu0
  %v3516 = vpop.f32.mrf.mxu0
  %v3517 = vadd.f32 0.0, %v3516
  %v3518 = vpop.f32.mrf.mxu0
  %3519 = vmatprep.mubr.bf16.mxu0 0
  %3520 = vmatmul.mubr.bf16.gmra.mxu0 %v3367
  %v3521 = vpop.f32.mrf.mxu0
  %v3522 = vadd.f32 0.0, %v3521
  %v3523 = vpop.f32.mrf.mxu0
  %v3524 = vpop.f32.mrf.mxu0
  %v3525 = vadd.f32 0.0, %v3524
  %v3526 = vpop.f32.mrf.mxu0
  %3527 = vmatprep.mubr.bf16.mxu0 0
  %3528 = vmatmul.mubr.bf16.gmra.mxu0 %v3368
  %v3529 = vpop.f32.mrf.mxu0
  %v3530 = vadd.f32 0.0, %v3529
  %v3531 = vpop.f32.mrf.mxu0
  %v3532 = vpop.f32.mrf.mxu0
  %v3533 = vadd.f32 0.0, %v3532
  %v3534 = vpop.f32.mrf.mxu0
  %3535 = vmatprep.mubr.bf16.mxu0 0
  %3536 = vmatmul.mubr.bf16.gmra.mxu0 %v3369
  %v3537 = vpop.f32.mrf.mxu0
  %v3538 = vadd.f32 0.0, %v3537
  %v3539 = vpop.f32.mrf.mxu0
  %v3540 = vpop.f32.mrf.mxu0
  %v3541 = vadd.f32 0.0, %v3540
  %v3542 = vpop.f32.mrf.mxu0
  %3543 = vmatprep.mubr.bf16.mxu0 0
  %3544 = vmatmul.mubr.bf16.gmra.mxu0 %v3370
  %v3545 = vpop.f32.mrf.mxu0
  %v3546 = vadd.f32 0.0, %v3545
  %v3547 = vpop.f32.mrf.mxu0
  %v3548 = vpop.f32.mrf.mxu0
  %v3549 = vadd.f32 0.0, %v3548
  %v3550 = vpop.f32.mrf.mxu0
  %3551 = vmatprep.mubr.bf16.mxu0 0
  %3552 = vmatmul.mubr.bf16.gmra.mxu0 %v3371
  %v3553 = vpop.f32.mrf.mxu0
  %v3554 = vadd.f32 0.0, %v3553
  %v3555 = vpop.f32.mrf.mxu0
  %v3556 = vpop.f32.mrf.mxu0
  %v3557 = vadd.f32 0.0, %v3556
  %v3558 = vpop.f32.mrf.mxu0
  %3559 = vmatprep.mubr.bf16.mxu0 0
  %3560 = vmatmul.mubr.bf16.gmra.mxu0 %v3372
  %v3561 = vpop.f32.mrf.mxu0
  %v3562 = vadd.f32 0.0, %v3561
  %v3563 = vpop.f32.mrf.mxu0
  %v3564 = vpop.f32.mrf.mxu0
  %v3565 = vadd.f32 0.0, %v3564
  %v3566 = vpop.f32.mrf.mxu0
  %3567 = vmatprep.mubr.bf16.mxu0 0
  %3568 = vmatmul.mubr.bf16.gmra.mxu0 %v3373
  %v3569 = vpop.f32.mrf.mxu0
  %v3570 = vadd.f32 0.0, %v3569
  %v3571 = vpop.f32.mrf.mxu0
  %v3572 = vpop.f32.mrf.mxu0
  %v3573 = vpop.f32.mrf.mxu0
  %3574 = vdwg.mxu0
  %v3575 = vld [vmem:[#allocation3] sm:$0xff]
  %v3576 = vld [vmem:[#allocation3 + $0x8] sm:$0xff]
  %v3577 = vld [vmem:[#allocation3 + $0x10] sm:$0xff]
  %v3578 = vld [vmem:[#allocation3 + $0x18] sm:$0xff]
  %v3579 = vld [vmem:[#allocation3 + $0x20] sm:$0xff]
  %v3580 = vld [vmem:[#allocation3 + $0x28] sm:$0xff]
  %v3581 = vld [vmem:[#allocation3 + $0x30] sm:$0xff]
  %v3582 = vld [vmem:[#allocation3 + $0x38] sm:$0xff]
  %v3583 = vld [vmem:[#allocation3 + $0x40] sm:$0xff]
  %v3584 = vld [vmem:[#allocation3 + $0x48] sm:$0xff]
  %v3585 = vld [vmem:[#allocation3 + $0x50] sm:$0xff]
  %v3586 = vld [vmem:[#allocation3 + $0x58] sm:$0xff]
  %v3587 = vld [vmem:[#allocation3 + $0x60] sm:$0xff]
  %v3588 = vld [vmem:[#allocation3 + $0x68] sm:$0xff]
  %v3589 = vld [vmem:[#allocation3 + $0x70] sm:$0xff]
  %v3590 = vld [vmem:[#allocation3 + $0x78] sm:$0xff]
  %v3591 = vld [vmem:[#allocation3 + $0x80] sm:$0xff]
  %v3592 = vld [vmem:[#allocation3 + $0x88] sm:$0xff]
  %v3593 = vld [vmem:[#allocation3 + $0x90] sm:$0xff]
  %v3594 = vld [vmem:[#allocation3 + $0x98] sm:$0xff]
  %v3595 = vld [vmem:[#allocation3 + $0xa0] sm:$0xff]
  %v3596 = vld [vmem:[#allocation3 + $0xa8] sm:$0xff]
  %v3597 = vld [vmem:[#allocation3 + $0xb0] sm:$0xff]
  %v3598 = vld [vmem:[#allocation3 + $0xb8] sm:$0xff]
  %v3599 = vld [vmem:[#allocation3 + $0xc0] sm:$0xff]
  %v3600 = vadd.f32 %v3575, %v3474
  %v3601 = vadd.f32 %v3576, %v3477
  %v3602 = vadd.f32 %v3577, %v3482
  %v3603 = vadd.f32 %v3578, %v3485
  %v3604 = vadd.f32 %v3579, %v3490
  %v3605 = vadd.f32 %v3580, %v3493
  %v3606 = vadd.f32 %v3581, %v3498
  %v3607 = vadd.f32 %v3582, %v3501
  %v3608 = vadd.f32 %v3583, %v3506
  %v3609 = vadd.f32 %v3584, %v3509
  %v3610 = vadd.f32 %v3585, %v3514
  %v3611 = vadd.f32 %v3586, %v3517
  %v3612 = vadd.f32 %v3587, %v3522
  %v3613 = vadd.f32 %v3588, %v3525
  %v3614 = vadd.f32 %v3589, %v3530
  %v3615 = vadd.f32 %v3590, %v3533
  %v3616 = vadd.f32 %v3591, %v3538
  %v3617 = vadd.f32 %v3592, %v3541
  %v3618 = vadd.f32 %v3593, %v3546
  %v3619 = vadd.f32 %v3594, %v3549
  %v3620 = vadd.f32 %v3595, %v3554
  %v3621 = vadd.f32 %v3596, %v3557
  %v3622 = vadd.f32 %v3597, %v3562
  %v3623 = vadd.f32 %v3598, %v3565
  %v3624 = vadd.f32 %v3599, %v3570
  %3625 = vst [vmem:[#allocation3] sm:$0xff] %v3600
  %3626 = vst [vmem:[#allocation3 + $0x8] sm:$0xff] %v3601
  %3627 = vst [vmem:[#allocation3 + $0x10] sm:$0xff] %v3602
  %3628 = vst [vmem:[#allocation3 + $0x18] sm:$0xff] %v3603
  %3629 = vst [vmem:[#allocation3 + $0x20] sm:$0xff] %v3604
  %3630 = vst [vmem:[#allocation3 + $0x28] sm:$0xff] %v3605
  %3631 = vst [vmem:[#allocation3 + $0x30] sm:$0xff] %v3606
  %3632 = vst [vmem:[#allocation3 + $0x38] sm:$0xff] %v3607
  %3633 = vst [vmem:[#allocation3 + $0x40] sm:$0xff] %v3608
  %3634 = vst [vmem:[#allocation3 + $0x48] sm:$0xff] %v3609
  %3635 = vst [vmem:[#allocation3 + $0x50] sm:$0xff] %v3610
  %3636 = vst [vmem:[#allocation3 + $0x58] sm:$0xff] %v3611
  %3637 = vst [vmem:[#allocation3 + $0x60] sm:$0xff] %v3612
  %3638 = vst [vmem:[#allocation3 + $0x68] sm:$0xff] %v3613
  %3639 = vst [vmem:[#allocation3 + $0x70] sm:$0xff] %v3614
  %3640 = vst [vmem:[#allocation3 + $0x78] sm:$0xff] %v3615
  %3641 = vst [vmem:[#allocation3 + $0x80] sm:$0xff] %v3616
  %3642 = vst [vmem:[#allocation3 + $0x88] sm:$0xff] %v3617
  %3643 = vst [vmem:[#allocation3 + $0x90] sm:$0xff] %v3618
  %3644 = vst [vmem:[#allocation3 + $0x98] sm:$0xff] %v3619
  %3645 = vst [vmem:[#allocation3 + $0xa0] sm:$0xff] %v3620
  %3646 = vst [vmem:[#allocation3 + $0xa8] sm:$0xff] %v3621
  %3647 = vst [vmem:[#allocation3 + $0xb0] sm:$0xff] %v3622
  %3648 = vst [vmem:[#allocation3 + $0xb8] sm:$0xff] %v3623
  %3649 = vst [vmem:[#allocation3 + $0xc0] sm:$0xff] %v3624
  %v3650 = vld [vmem:[#allocation2 + $0x1b] sm:$0xff]
  %v3651 = vld [vmem:[#allocation2 + $0x23] sm:$0xff]
  %v3652 = vld [vmem:[#allocation2 + $0x2b] sm:$0xff]
  %v3653 = vld [vmem:[#allocation2 + $0x33] sm:$0xff]
  %v3654 = vld [vmem:[#allocation2 + $0x3b] sm:$0xff]
  %v3655 = vld [vmem:[#allocation2 + $0x43] sm:$0xff]
  %v3656 = vld [vmem:[#allocation2 + $0x4b] sm:$0xff]
  %v3657 = vld [vmem:[#allocation2 + $0x53] sm:$0xff]
  %v3658 = vld [vmem:[#allocation2 + $0x5b] sm:$0xff]
  %v3659 = vld [vmem:[#allocation2 + $0x63] sm:$0xff]
  %v3660 = vld [vmem:[#allocation2 + $0x6b] sm:$0xff]
  %v3661 = vld [vmem:[#allocation2 + $0x73] sm:$0xff]
  %v3662 = vld [vmem:[#allocation2 + $0x7b] sm:$0xff]
  %v3663 = vld [vmem:[#allocation2 + $0x83] sm:$0xff]
  %v3664 = vld [vmem:[#allocation2 + $0x8b] sm:$0xff]
  %v3665 = vld [vmem:[#allocation2 + $0x93] sm:$0xff]
  %v3666 = vld [vmem:[#allocation2 + $0x9b] sm:$0xff]
  %v3667 = vld [vmem:[#allocation2 + $0xa3] sm:$0xff]
  %v3668 = vld [vmem:[#allocation2 + $0xab] sm:$0xff]
  %v3669 = vld [vmem:[#allocation2 + $0xb3] sm:$0xff]
  %v3670 = vld [vmem:[#allocation2 + $0xbb] sm:$0xff]
  %v3671 = vld [vmem:[#allocation2 + $0xc3] sm:$0xff]
  %v3672 = vld [vmem:[#allocation2 + $0xcb] sm:$0xff]
  %v3673 = vld [vmem:[#allocation2 + $0xd3] sm:$0xff]
  %v3674 = vld [vmem:[#allocation2 + $0xdb] sm:$0xff]
  %v3675 = vpack.c.bf16 %v3651, %v3650
  %v3676 = vpack.c.bf16 %v3653, %v3652
  %v3677 = vpack.c.bf16 %v3655, %v3654
  %v3678 = vpack.c.bf16 %v3657, %v3656
  %v3679 = vpack.c.bf16 %v3659, %v3658
  %v3680 = vpack.c.bf16 %v3661, %v3660
  %v3681 = vpack.c.bf16 %v3663, %v3662
  %v3682 = vpack.c.bf16 %v3665, %v3664
  %v3683 = vpack.c.bf16 %v3667, %v3666
  %v3684 = vpack.c.bf16 %v3669, %v3668
  %v3685 = vpack.c.bf16 %v3671, %v3670
  %v3686 = vpack.c.bf16 %v3673, %v3672
  %v3687 = vpack.c.bf16 %v3674, %v3674
  %s3688 = scalar_lea.vmem %s7, 512
  %v3689 = vld [vmem:[%s3688] sm:$0xf]
  %v3690 = vld [vmem:[%s3688 + $0x4] sm:$0xf]
  %v3691 = vld [vmem:[%s3688 + $0x8] sm:$0xf]
  %v3692 = vld [vmem:[%s3688 + $0xc] sm:$0xf]
  %v3693 = vld [vmem:[%s3688 + $0x10] sm:$0xf]
  %v3694 = vld [vmem:[%s3688 + $0x14] sm:$0xf]
  %v3695 = vld [vmem:[%s3688 + $0x18] sm:$0xf]
  %v3696 = vld [vmem:[%s3688 + $0x1c] sm:$0xf]
  %v3697 = vld [vmem:[%s3688 + $0x20] sm:$0xf]
  %v3698 = vld [vmem:[%s3688 + $0x24] sm:$0xf]
  %v3699 = vld [vmem:[%s3688 + $0x28] sm:$0xf]
  %v3700 = vld [vmem:[%s3688 + $0x2c] sm:$0xf]
  %v3701 = vld [vmem:[%s3688 + $0x30] sm:$0xf]
  %v3702 = vld [vmem:[%s3688 + $0x34] sm:$0xf]
  %v3703 = vld [vmem:[%s3688 + $0x38] sm:$0xf]
  %v3704 = vld [vmem:[%s3688 + $0x3c] sm:$0xf]
  %v3721 = vunpack.c.l.b16 %v3689
  %v3722 = vunpack.c.l.b16 %v3690
  %v3723 = vunpack.c.l.b16 %v3691
  %v3724 = vunpack.c.l.b16 %v3692
  %v3725 = vunpack.c.l.b16 %v3693
  %v3726 = vunpack.c.l.b16 %v3694
  %v3727 = vunpack.c.l.b16 %v3695
  %v3728 = vunpack.c.l.b16 %v3696
  %v3729 = vunpack.c.l.b16 %v3697
  %v3730 = vunpack.c.l.b16 %v3698
  %v3731 = vunpack.c.l.b16 %v3699
  %v3732 = vunpack.c.l.b16 %v3700
  %v3733 = vunpack.c.l.b16 %v3701
  %v3734 = vunpack.c.l.b16 %v3702
  %v3735 = vunpack.c.l.b16 %v3703
  %v3736 = vunpack.c.l.b16 %v3704
  %v3737 = vpack.c.b16 %v3722, %v3721
  %v3738 = vpack.c.b16 %v3724, %v3723
  %v3739 = vpack.c.b16 %v3726, %v3725
  %v3740 = vpack.c.b16 %v3728, %v3727
  %v3741 = vpack.c.b16 %v3730, %v3729
  %v3742 = vpack.c.b16 %v3732, %v3731
  %v3743 = vpack.c.b16 %v3734, %v3733
  %v3744 = vpack.c.b16 %v3736, %v3735
  %3753 = vmatprep.subr.bf16.mxu0 0
  %3754 = vmatpush1.bf16.msra.mxu0 %v3744
  %3755 = vmatprep.subr.bf16.mxu0 0
  %3756 = vmatpush1.bf16.msra.mxu0 %v3743
  %3757 = vmatprep.subr.bf16.mxu0 0
  %3758 = vmatpush1.bf16.msra.mxu0 %v3742
  %3759 = vmatprep.subr.bf16.mxu0 0
  %3760 = vmatpush1.bf16.msra.mxu0 %v3741
  %3761 = vmatprep.subr.bf16.mxu0 0
  %3762 = vmatpush1.bf16.msra.mxu0 %v3740
  %3763 = vmatprep.subr.bf16.mxu0 0
  %3764 = vmatpush1.bf16.msra.mxu0 %v3739
  %3765 = vmatprep.subr.bf16.mxu0 0
  %3766 = vmatpush1.bf16.msra.mxu0 %v3738
  %3767 = vmatprep.subr.bf16.mxu0 0
  %3768 = vmatpush1.bf16.msra.mxu0 %v3737
  %3769 = vmatprep.subr.bf16.mxu0 0
  %3770 = vmatpush2.bf16.msra.mxu0 0
  %3771 = vmatprep.subr.bf16.mxu0 0
  %3772 = vmatpush2.bf16.msra.mxu0 0
  %3773 = vmatprep.subr.bf16.mxu0 0
  %3774 = vmatpush2.bf16.msra.mxu0 0
  %3775 = vmatprep.subr.bf16.mxu0 0
  %3776 = vmatpush2.bf16.msra.mxu0 0
  %3777 = vmatprep.subr.bf16.mxu0 0
  %3778 = vmatpush2.bf16.msra.mxu0 0
  %3779 = vmatprep.subr.bf16.mxu0 0
  %3780 = vmatpush2.bf16.msra.mxu0 0
  %3781 = vmatprep.subr.bf16.mxu0 0
  %3782 = vmatpush2.bf16.msra.mxu0 0
  %3783 = vmatprep.subr.bf16.mxu0 0
  %3784 = vmatpush2.bf16.msra.mxu0 0
  %3785 = vmatprep.mubr.bf16.mxu0 0
  %3786 = vmatmul.mubr.bf16.gmra.mxu0 %v3675
  %v3787 = vpop.f32.mrf.mxu0
  %v3788 = vadd.f32 0.0, %v3787
  %v3789 = vpop.f32.mrf.mxu0
  %v3790 = vpop.f32.mrf.mxu0
  %v3791 = vadd.f32 0.0, %v3790
  %v3792 = vpop.f32.mrf.mxu0
  %3793 = vmatprep.mubr.bf16.mxu0 0
  %3794 = vmatmul.mubr.bf16.gmra.mxu0 %v3676
  %v3795 = vpop.f32.mrf.mxu0
  %v3796 = vadd.f32 0.0, %v3795
  %v3797 = vpop.f32.mrf.mxu0
  %v3798 = vpop.f32.mrf.mxu0
  %v3799 = vadd.f32 0.0, %v3798
  %v3800 = vpop.f32.mrf.mxu0
  %3801 = vmatprep.mubr.bf16.mxu0 0
  %3802 = vmatmul.mubr.bf16.gmra.mxu0 %v3677
  %v3803 = vpop.f32.mrf.mxu0
  %v3804 = vadd.f32 0.0, %v3803
  %v3805 = vpop.f32.mrf.mxu0
  %v3806 = vpop.f32.mrf.mxu0
  %v3807 = vadd.f32 0.0, %v3806
  %v3808 = vpop.f32.mrf.mxu0
  %3809 = vmatprep.mubr.bf16.mxu0 0
  %3810 = vmatmul.mubr.bf16.gmra.mxu0 %v3678
  %v3811 = vpop.f32.mrf.mxu0
  %v3812 = vadd.f32 0.0, %v3811
  %v3813 = vpop.f32.mrf.mxu0
  %v3814 = vpop.f32.mrf.mxu0
  %v3815 = vadd.f32 0.0, %v3814
  %v3816 = vpop.f32.mrf.mxu0
  %3817 = vmatprep.mubr.bf16.mxu0 0
  %3818 = vmatmul.mubr.bf16.gmra.mxu0 %v3679
  %v3819 = vpop.f32.mrf.mxu0
  %v3820 = vadd.f32 0.0, %v3819
  %v3821 = vpop.f32.mrf.mxu0
  %v3822 = vpop.f32.mrf.mxu0
  %v3823 = vadd.f32 0.0, %v3822
  %v3824 = vpop.f32.mrf.mxu0
  %3825 = vmatprep.mubr.bf16.mxu0 0
  %3826 = vmatmul.mubr.bf16.gmra.mxu0 %v3680
  %v3827 = vpop.f32.mrf.mxu0
  %v3828 = vadd.f32 0.0, %v3827
  %v3829 = vpop.f32.mrf.mxu0
  %v3830 = vpop.f32.mrf.mxu0
  %v3831 = vadd.f32 0.0, %v3830
  %v3832 = vpop.f32.mrf.mxu0
  %3833 = vmatprep.mubr.bf16.mxu0 0
  %3834 = vmatmul.mubr.bf16.gmra.mxu0 %v3681
  %v3835 = vpop.f32.mrf.mxu0
  %v3836 = vadd.f32 0.0, %v3835
  %v3837 = vpop.f32.mrf.mxu0
  %v3838 = vpop.f32.mrf.mxu0
  %v3839 = vadd.f32 0.0, %v3838
  %v3840 = vpop.f32.mrf.mxu0
  %3841 = vmatprep.mubr.bf16.mxu0 0
  %3842 = vmatmul.mubr.bf16.gmra.mxu0 %v3682
  %v3843 = vpop.f32.mrf.mxu0
  %v3844 = vadd.f32 0.0, %v3843
  %v3845 = vpop.f32.mrf.mxu0
  %v3846 = vpop.f32.mrf.mxu0
  %v3847 = vadd.f32 0.0, %v3846
  %v3848 = vpop.f32.mrf.mxu0
  %3849 = vmatprep.mubr.bf16.mxu0 0
  %3850 = vmatmul.mubr.bf16.gmra.mxu0 %v3683
  %v3851 = vpop.f32.mrf.mxu0
  %v3852 = vadd.f32 0.0, %v3851
  %v3853 = vpop.f32.mrf.mxu0
  %v3854 = vpop.f32.mrf.mxu0
  %v3855 = vadd.f32 0.0, %v3854
  %v3856 = vpop.f32.mrf.mxu0
  %3857 = vmatprep.mubr.bf16.mxu0 0
  %3858 = vmatmul.mubr.bf16.gmra.mxu0 %v3684
  %v3859 = vpop.f32.mrf.mxu0
  %v3860 = vadd.f32 0.0, %v3859
  %v3861 = vpop.f32.mrf.mxu0
  %v3862 = vpop.f32.mrf.mxu0
  %v3863 = vadd.f32 0.0, %v3862
  %v3864 = vpop.f32.mrf.mxu0
  %3865 = vmatprep.mubr.bf16.mxu0 0
  %3866 = vmatmul.mubr.bf16.gmra.mxu0 %v3685
  %v3867 = vpop.f32.mrf.mxu0
  %v3868 = vadd.f32 0.0, %v3867
  %v3869 = vpop.f32.mrf.mxu0
  %v3870 = vpop.f32.mrf.mxu0
  %v3871 = vadd.f32 0.0, %v3870
  %v3872 = vpop.f32.mrf.mxu0
  %3873 = vmatprep.mubr.bf16.mxu0 0
  %3874 = vmatmul.mubr.bf16.gmra.mxu0 %v3686
  %v3875 = vpop.f32.mrf.mxu0
  %v3876 = vadd.f32 0.0, %v3875
  %v3877 = vpop.f32.mrf.mxu0
  %v3878 = vpop.f32.mrf.mxu0
  %v3879 = vadd.f32 0.0, %v3878
  %v3880 = vpop.f32.mrf.mxu0
  %3881 = vmatprep.mubr.bf16.mxu0 0
  %3882 = vmatmul.mubr.bf16.gmra.mxu0 %v3687
  %v3883 = vpop.f32.mrf.mxu0
  %v3884 = vadd.f32 0.0, %v3883
  %v3885 = vpop.f32.mrf.mxu0
  %v3886 = vpop.f32.mrf.mxu0
  %v3887 = vpop.f32.mrf.mxu0
  %3888 = vdwg.mxu0
  %v3889 = vld [vmem:[#allocation3] sm:$0xff]
  %v3890 = vld [vmem:[#allocation3 + $0x8] sm:$0xff]
  %v3891 = vld [vmem:[#allocation3 + $0x10] sm:$0xff]
  %v3892 = vld [vmem:[#allocation3 + $0x18] sm:$0xff]
  %v3893 = vld [vmem:[#allocation3 + $0x20] sm:$0xff]
  %v3894 = vld [vmem:[#allocation3 + $0x28] sm:$0xff]
  %v3895 = vld [vmem:[#allocation3 + $0x30] sm:$0xff]
  %v3896 = vld [vmem:[#allocation3 + $0x38] sm:$0xff]
  %v3897 = vld [vmem:[#allocation3 + $0x40] sm:$0xff]
  %v3898 = vld [vmem:[#allocation3 + $0x48] sm:$0xff]
  %v3899 = vld [vmem:[#allocation3 + $0x50] sm:$0xff]
  %v3900 = vld [vmem:[#allocation3 + $0x58] sm:$0xff]
  %v3901 = vld [vmem:[#allocation3 + $0x60] sm:$0xff]
  %v3902 = vld [vmem:[#allocation3 + $0x68] sm:$0xff]
  %v3903 = vld [vmem:[#allocation3 + $0x70] sm:$0xff]
  %v3904 = vld [vmem:[#allocation3 + $0x78] sm:$0xff]
  %v3905 = vld [vmem:[#allocation3 + $0x80] sm:$0xff]
  %v3906 = vld [vmem:[#allocation3 + $0x88] sm:$0xff]
  %v3907 = vld [vmem:[#allocation3 + $0x90] sm:$0xff]
  %v3908 = vld [vmem:[#allocation3 + $0x98] sm:$0xff]
  %v3909 = vld [vmem:[#allocation3 + $0xa0] sm:$0xff]
  %v3910 = vld [vmem:[#allocation3 + $0xa8] sm:$0xff]
  %v3911 = vld [vmem:[#allocation3 + $0xb0] sm:$0xff]
  %v3912 = vld [vmem:[#allocation3 + $0xb8] sm:$0xff]
  %v3913 = vld [vmem:[#allocation3 + $0xc0] sm:$0xff]
  %v3914 = vadd.f32 %v3889, %v3788
  %v3915 = vadd.f32 %v3890, %v3791
  %v3916 = vadd.f32 %v3891, %v3796
  %v3917 = vadd.f32 %v3892, %v3799
  %v3918 = vadd.f32 %v3893, %v3804
  %v3919 = vadd.f32 %v3894, %v3807
  %v3920 = vadd.f32 %v3895, %v3812
  %v3921 = vadd.f32 %v3896, %v3815
  %v3922 = vadd.f32 %v3897, %v3820
  %v3923 = vadd.f32 %v3898, %v3823
  %v3924 = vadd.f32 %v3899, %v3828
  %v3925 = vadd.f32 %v3900, %v3831
  %v3926 = vadd.f32 %v3901, %v3836
  %v3927 = vadd.f32 %v3902, %v3839
  %v3928 = vadd.f32 %v3903, %v3844
  %v3929 = vadd.f32 %v3904, %v3847
  %v3930 = vadd.f32 %v3905, %v3852
  %v3931 = vadd.f32 %v3906, %v3855
  %v3932 = vadd.f32 %v3907, %v3860
  %v3933 = vadd.f32 %v3908, %v3863
  %v3934 = vadd.f32 %v3909, %v3868
  %v3935 = vadd.f32 %v3910, %v3871
  %v3936 = vadd.f32 %v3911, %v3876
  %v3937 = vadd.f32 %v3912, %v3879
  %v3938 = vadd.f32 %v3913, %v3884
  %3939 = vst [vmem:[#allocation3] sm:$0xff] %v3914
  %3940 = vst [vmem:[#allocation3 + $0x8] sm:$0xff] %v3915
  %3941 = vst [vmem:[#allocation3 + $0x10] sm:$0xff] %v3916
  %3942 = vst [vmem:[#allocation3 + $0x18] sm:$0xff] %v3917
  %3943 = vst [vmem:[#allocation3 + $0x20] sm:$0xff] %v3918
  %3944 = vst [vmem:[#allocation3 + $0x28] sm:$0xff] %v3919
  %3945 = vst [vmem:[#allocation3 + $0x30] sm:$0xff] %v3920
  %3946 = vst [vmem:[#allocation3 + $0x38] sm:$0xff] %v3921
  %3947 = vst [vmem:[#allocation3 + $0x40] sm:$0xff] %v3922
  %3948 = vst [vmem:[#allocation3 + $0x48] sm:$0xff] %v3923
  %3949 = vst [vmem:[#allocation3 + $0x50] sm:$0xff] %v3924
  %3950 = vst [vmem:[#allocation3 + $0x58] sm:$0xff] %v3925
  %3951 = vst [vmem:[#allocation3 + $0x60] sm:$0xff] %v3926
  %3952 = vst [vmem:[#allocation3 + $0x68] sm:$0xff] %v3927
  %3953 = vst [vmem:[#allocation3 + $0x70] sm:$0xff] %v3928
  %3954 = vst [vmem:[#allocation3 + $0x78] sm:$0xff] %v3929
  %3955 = vst [vmem:[#allocation3 + $0x80] sm:$0xff] %v3930
  %3956 = vst [vmem:[#allocation3 + $0x88] sm:$0xff] %v3931
  %3957 = vst [vmem:[#allocation3 + $0x90] sm:$0xff] %v3932
  %3958 = vst [vmem:[#allocation3 + $0x98] sm:$0xff] %v3933
  %3959 = vst [vmem:[#allocation3 + $0xa0] sm:$0xff] %v3934
  %3960 = vst [vmem:[#allocation3 + $0xa8] sm:$0xff] %v3935
  %3961 = vst [vmem:[#allocation3 + $0xb0] sm:$0xff] %v3936
  %3962 = vst [vmem:[#allocation3 + $0xb8] sm:$0xff] %v3937
  %3963 = vst [vmem:[#allocation3 + $0xc0] sm:$0xff] %v3938
  %v3964 = vld [vmem:[#allocation3] sm:$0xff]
  %v3965 = vld [vmem:[#allocation3 + $0x8] sm:$0xff]
  %v3966 = vld [vmem:[#allocation3 + $0x10] sm:$0xff]
  %v3967 = vld [vmem:[#allocation3 + $0x18] sm:$0xff]
  %v3968 = vld [vmem:[#allocation3 + $0x20] sm:$0xff]
  %v3969 = vld [vmem:[#allocation3 + $0x28] sm:$0xff]
  %v3970 = vld [vmem:[#allocation3 + $0x30] sm:$0xff]
  %v3971 = vld [vmem:[#allocation3 + $0x38] sm:$0xff]
  %v3972 = vld [vmem:[#allocation3 + $0x40] sm:$0xff]
  %v3973 = vld [vmem:[#allocation3 + $0x48] sm:$0xff]
  %v3974 = vld [vmem:[#allocation3 + $0x50] sm:$0xff]
  %v3975 = vld [vmem:[#allocation3 + $0x58] sm:$0xff]
  %v3976 = vld [vmem:[#allocation3 + $0x60] sm:$0xff]
  %v3977 = vld [vmem:[#allocation3 + $0x68] sm:$0xff]
  %v3978 = vld [vmem:[#allocation3 + $0x70] sm:$0xff]
  %v3979 = vld [vmem:[#allocation3 + $0x78] sm:$0xff]
  %v3980 = vld [vmem:[#allocation3 + $0x80] sm:$0xff]
  %v3981 = vld [vmem:[#allocation3 + $0x88] sm:$0xff]
  %v3982 = vld [vmem:[#allocation3 + $0x90] sm:$0xff]
  %v3983 = vld [vmem:[#allocation3 + $0x98] sm:$0xff]
  %v3984 = vld [vmem:[#allocation3 + $0xa0] sm:$0xff]
  %v3985 = vld [vmem:[#allocation3 + $0xa8] sm:$0xff]
  %v3986 = vld [vmem:[#allocation3 + $0xb0] sm:$0xff]
  %v3987 = vld [vmem:[#allocation3 + $0xb8] sm:$0xff]
  %v3988 = vld [vmem:[#allocation3 + $0xc0] sm:$0xff]
  %v3989 = vld [vmem:[%s8] sm:$0x1]
  %v3990 = vld [vmem:[%s9] sm:$0x1]
  %v3991 = vmul.f32 %v3964, %v328
  %v3992 = vmul.f32 %v3965, %v333
  %v3993 = vmul.f32 %v3966, %v338
  %v3994 = vmul.f32 %v3967, %v343
  %v3995 = vmul.f32 %v3968, %v348
  %v3996 = vmul.f32 %v3969, %v353
  %v3997 = vmul.f32 %v3970, %v358
  %v3998 = vmul.f32 %v3971, %v363
  %v3999 = vmul.f32 %v3972, %v368
  %v4000 = vmul.f32 %v3973, %v373
  %v4001 = vmul.f32 %v3974, %v378
  %v4002 = vmul.f32 %v3975, %v383
  %v4003 = vmul.f32 %v3976, %v388
  %v4004 = vmul.f32 %v3977, %v393
  %v4005 = vmul.f32 %v3978, %v398
  %v4006 = vmul.f32 %v3979, %v403
  %v4007 = vmul.f32 %v3980, %v408
  %v4008 = vmul.f32 %v3981, %v413
  %v4009 = vmul.f32 %v3982, %v418
  %v4010 = vmul.f32 %v3983, %v423
  %v4011 = vmul.f32 %v3984, %v428
  %v4012 = vmul.f32 %v3985, %v433
  %v4013 = vmul.f32 %v3986, %v438
  %v4014 = vmul.f32 %v3987, %v443
  %v4015 = vmul.f32 %v3988, %v448
  %v4016 = vadd.f32 %v3991, %v3992
  %v4017 = vadd.f32 %v4016, %v3993
  %v4018 = vadd.f32 %v4017, %v3994
  %v4019 = vadd.f32 %v4018, %v3995
  %v4020 = vadd.f32 %v4019, %v3996
  %v4021 = vadd.f32 %v4020, %v3997
  %v4022 = vadd.f32 %v4021, %v3998
  %v4023 = vadd.f32 %v4022, %v3999
  %v4024 = vadd.f32 %v4023, %v4000
  %v4025 = vadd.f32 %v4024, %v4001
  %v4026 = vadd.f32 %v4025, %v4002
  %v4027 = vadd.f32 %v4026, %v4003
  %v4028 = vadd.f32 %v4027, %v4004
  %v4029 = vadd.f32 %v4028, %v4005
  %v4030 = vadd.f32 %v4029, %v4006
  %v4031 = vadd.f32 %v4030, %v4007
  %v4032 = vadd.f32 %v4031, %v4008
  %v4033 = vadd.f32 %v4032, %v4009
  %v4034 = vadd.f32 %v4033, %v4010
  %v4035 = vadd.f32 %v4034, %v4011
  %v4036 = vadd.f32 %v4035, %v4012
  %v4037 = vadd.f32 %v4036, %v4013
  %v4038 = vadd.f32 %v4037, %v4014
  %v4039 = vadd.f32 %v4038, %v4015
  %v4040 = vrot.slane %v4039, 4
  %v4041 = vadd.f32 %v4039, %v4040
  %v4042 = vrot.slane %v4041, 2
  %v4043 = vadd.f32 %v4041, %v4042
  %v4044 = vrot.slane %v4043, 1
  %v4045 = vadd.f32 %v4043, %v4044
  %v4046 = vmul.f32 %v4045, 0.0078125
  %v4047 = vsub.f32 %v3964, %v4046
  %v4048 = vsub.f32 %v3965, %v4046
  %v4049 = vsub.f32 %v3966, %v4046
  %v4050 = vsub.f32 %v3967, %v4046
  %v4051 = vsub.f32 %v3968, %v4046
  %v4052 = vsub.f32 %v3969, %v4046
  %v4053 = vsub.f32 %v3970, %v4046
  %v4054 = vsub.f32 %v3971, %v4046
  %v4055 = vsub.f32 %v3972, %v4046
  %v4056 = vsub.f32 %v3973, %v4046
  %v4057 = vsub.f32 %v3974, %v4046
  %v4058 = vsub.f32 %v3975, %v4046
  %v4059 = vsub.f32 %v3976, %v4046
  %v4060 = vsub.f32 %v3977, %v4046
  %v4061 = vsub.f32 %v3978, %v4046
  %v4062 = vsub.f32 %v3979, %v4046
  %v4063 = vsub.f32 %v3980, %v4046
  %v4064 = vsub.f32 %v3981, %v4046
  %v4065 = vsub.f32 %v3982, %v4046
  %v4066 = vsub.f32 %v3983, %v4046
  %v4067 = vsub.f32 %v3984, %v4046
  %v4068 = vsub.f32 %v3985, %v4046
  %v4069 = vsub.f32 %v3986, %v4046
  %v4070 = vsub.f32 %v3987, %v4046
  %v4071 = vsub.f32 %v3988, %v4046
  %v4072 = vmul.f32 %v4047, %v328
  %v4073 = vmul.f32 %v4048, %v333
  %v4074 = vmul.f32 %v4049, %v338
  %v4075 = vmul.f32 %v4050, %v343
  %v4076 = vmul.f32 %v4051, %v348
  %v4077 = vmul.f32 %v4052, %v353
  %v4078 = vmul.f32 %v4053, %v358
  %v4079 = vmul.f32 %v4054, %v363
  %v4080 = vmul.f32 %v4055, %v368
  %v4081 = vmul.f32 %v4056, %v373
  %v4082 = vmul.f32 %v4057, %v378
  %v4083 = vmul.f32 %v4058, %v383
  %v4084 = vmul.f32 %v4059, %v388
  %v4085 = vmul.f32 %v4060, %v393
  %v4086 = vmul.f32 %v4061, %v398
  %v4087 = vmul.f32 %v4062, %v403
  %v4088 = vmul.f32 %v4063, %v408
  %v4089 = vmul.f32 %v4064, %v413
  %v4090 = vmul.f32 %v4065, %v418
  %v4091 = vmul.f32 %v4066, %v423
  %v4092 = vmul.f32 %v4067, %v428
  %v4093 = vmul.f32 %v4068, %v433
  %v4094 = vmul.f32 %v4069, %v438
  %v4095 = vmul.f32 %v4070, %v443
  %v4096 = vmul.f32 %v4071, %v448
  %v4097 = vmul.f32 %v4072, %v4072
  %v4098 = vmul.f32 %v4073, %v4073
  %v4099 = vmul.f32 %v4074, %v4074
  %v4100 = vmul.f32 %v4075, %v4075
  %v4101 = vmul.f32 %v4076, %v4076
  %v4102 = vmul.f32 %v4077, %v4077
  %v4103 = vmul.f32 %v4078, %v4078
  %v4104 = vmul.f32 %v4079, %v4079
  %v4105 = vmul.f32 %v4080, %v4080
  %v4106 = vmul.f32 %v4081, %v4081
  %v4107 = vmul.f32 %v4082, %v4082
  %v4108 = vmul.f32 %v4083, %v4083
  %v4109 = vmul.f32 %v4084, %v4084
  %v4110 = vmul.f32 %v4085, %v4085
  %v4111 = vmul.f32 %v4086, %v4086
  %v4112 = vmul.f32 %v4087, %v4087
  %v4113 = vmul.f32 %v4088, %v4088
  %v4114 = vmul.f32 %v4089, %v4089
  %v4115 = vmul.f32 %v4090, %v4090
  %v4116 = vmul.f32 %v4091, %v4091
  %v4117 = vmul.f32 %v4092, %v4092
  %v4118 = vmul.f32 %v4093, %v4093
  %v4119 = vmul.f32 %v4094, %v4094
  %v4120 = vmul.f32 %v4095, %v4095
  %v4121 = vmul.f32 %v4096, %v4096
  %v4122 = vadd.f32 %v4097, %v4098
  %v4123 = vadd.f32 %v4122, %v4099
  %v4124 = vadd.f32 %v4123, %v4100
  %v4125 = vadd.f32 %v4124, %v4101
  %v4126 = vadd.f32 %v4125, %v4102
  %v4127 = vadd.f32 %v4126, %v4103
  %v4128 = vadd.f32 %v4127, %v4104
  %v4129 = vadd.f32 %v4128, %v4105
  %v4130 = vadd.f32 %v4129, %v4106
  %v4131 = vadd.f32 %v4130, %v4107
  %v4132 = vadd.f32 %v4131, %v4108
  %v4133 = vadd.f32 %v4132, %v4109
  %v4134 = vadd.f32 %v4133, %v4110
  %v4135 = vadd.f32 %v4134, %v4111
  %v4136 = vadd.f32 %v4135, %v4112
  %v4137 = vadd.f32 %v4136, %v4113
  %v4138 = vadd.f32 %v4137, %v4114
  %v4139 = vadd.f32 %v4138, %v4115
  %v4140 = vadd.f32 %v4139, %v4116
  %v4141 = vadd.f32 %v4140, %v4117
  %v4142 = vadd.f32 %v4141, %v4118
  %v4143 = vadd.f32 %v4142, %v4119
  %v4144 = vadd.f32 %v4143, %v4120
  %v4145 = vadd.f32 %v4144, %v4121
  %v4146 = vrot.slane %v4145, 4
  %v4147 = vadd.f32 %v4145, %v4146
  %v4148 = vrot.slane %v4147, 2
  %v4149 = vadd.f32 %v4147, %v4148
  %v4150 = vrot.slane %v4149, 1
  %v4151 = vadd.f32 %v4149, %v4150
  %v4152 = vmul.f32 %v4151, 0.0078125
  %v4153 = vadd.f32 %v4152, 1e-05
  %v4154 = vrsqrt.pop %v4153
  %v4155 = vmul.f32 %v3989, %v4154
  %v4156 = vmul.f32 %v4046, %v4155
  %v4157 = vsub.f32 %v3990, %v4156
  %v4159 = vlaneseq
  %v4160 = vshrl.u32 %v4159, 7
  %v4161 = vsub.s32 0, %v4160
  %v4162 = vrot.slane %v4155, %v4161
  %v4164 = vmul.f32 %v3964, %v4162
  %v4165 = vmul.f32 %v3965, %v4162
  %v4166 = vmul.f32 %v3966, %v4162
  %v4167 = vmul.f32 %v3967, %v4162
  %v4168 = vmul.f32 %v3968, %v4162
  %v4169 = vmul.f32 %v3969, %v4162
  %v4170 = vmul.f32 %v3970, %v4162
  %v4171 = vmul.f32 %v3971, %v4162
  %v4172 = vmul.f32 %v3972, %v4162
  %v4173 = vmul.f32 %v3973, %v4162
  %v4174 = vmul.f32 %v3974, %v4162
  %v4175 = vmul.f32 %v3975, %v4162
  %v4176 = vmul.f32 %v3976, %v4162
  %v4177 = vmul.f32 %v3977, %v4162
  %v4178 = vmul.f32 %v3978, %v4162
  %v4179 = vmul.f32 %v3979, %v4162
  %v4180 = vmul.f32 %v3980, %v4162
  %v4181 = vmul.f32 %v3981, %v4162
  %v4182 = vmul.f32 %v3982, %v4162
  %v4183 = vmul.f32 %v3983, %v4162
  %v4184 = vmul.f32 %v3984, %v4162
  %v4185 = vmul.f32 %v3985, %v4162
  %v4186 = vmul.f32 %v3986, %v4162
  %v4187 = vmul.f32 %v3987, %v4162
  %v4188 = vmul.f32 %v3988, %v4162
  %v4190 = vlaneseq
  %v4191 = vshrl.u32 %v4190, 7
  %v4192 = vsub.s32 0, %v4191
  %v4193 = vrot.slane %v4157, %v4192
  %v4195 = vadd.f32 %v4164, %v4193
  %v4196 = vadd.f32 %v4165, %v4193
  %v4197 = vadd.f32 %v4166, %v4193
  %v4198 = vadd.f32 %v4167, %v4193
  %v4199 = vadd.f32 %v4168, %v4193
  %v4200 = vadd.f32 %v4169, %v4193
  %v4201 = vadd.f32 %v4170, %v4193
  %v4202 = vadd.f32 %v4171, %v4193
  %v4203 = vadd.f32 %v4172, %v4193
  %v4204 = vadd.f32 %v4173, %v4193
  %v4205 = vadd.f32 %v4174, %v4193
  %v4206 = vadd.f32 %v4175, %v4193
  %v4207 = vadd.f32 %v4176, %v4193
  %v4208 = vadd.f32 %v4177, %v4193
  %v4209 = vadd.f32 %v4178, %v4193
  %v4210 = vadd.f32 %v4179, %v4193
  %v4211 = vadd.f32 %v4180, %v4193
  %v4212 = vadd.f32 %v4181, %v4193
  %v4213 = vadd.f32 %v4182, %v4193
  %v4214 = vadd.f32 %v4183, %v4193
  %v4215 = vadd.f32 %v4184, %v4193
  %v4216 = vadd.f32 %v4185, %v4193
  %v4217 = vadd.f32 %v4186, %v4193
  %v4218 = vadd.f32 %v4187, %v4193
  %v4219 = vadd.f32 %v4188, %v4193
  %v4220 = vmax.f32 %v4195, 0.0
  %v4221 = vmax.f32 %v4196, 0.0
  %v4222 = vmax.f32 %v4197, 0.0
  %v4223 = vmax.f32 %v4198, 0.0
  %v4224 = vmax.f32 %v4199, 0.0
  %v4225 = vmax.f32 %v4200, 0.0
  %v4226 = vmax.f32 %v4201, 0.0
  %v4227 = vmax.f32 %v4202, 0.0
  %v4228 = vmax.f32 %v4203, 0.0
  %v4229 = vmax.f32 %v4204, 0.0
  %v4230 = vmax.f32 %v4205, 0.0
  %v4231 = vmax.f32 %v4206, 0.0
  %v4232 = vmax.f32 %v4207, 0.0
  %v4233 = vmax.f32 %v4208, 0.0
  %v4234 = vmax.f32 %v4209, 0.0
  %v4235 = vmax.f32 %v4210, 0.0
  %v4236 = vmax.f32 %v4211, 0.0
  %v4237 = vmax.f32 %v4212, 0.0
  %v4238 = vmax.f32 %v4213, 0.0
  %v4239 = vmax.f32 %v4214, 0.0
  %v4240 = vmax.f32 %v4215, 0.0
  %v4241 = vmax.f32 %v4216, 0.0
  %v4242 = vmax.f32 %v4217, 0.0
  %v4243 = vmax.f32 %v4218, 0.0
  %v4244 = vmax.f32 %v4219, 0.0
  %v4245 = vpack.c.bf16 %v4221, %v4220
  %v4246 = vpack.c.bf16 %v4223, %v4222
  %v4247 = vpack.c.bf16 %v4225, %v4224
  %v4248 = vpack.c.bf16 %v4227, %v4226
  %v4249 = vpack.c.bf16 %v4229, %v4228
  %v4250 = vpack.c.bf16 %v4231, %v4230
  %v4251 = vpack.c.bf16 %v4233, %v4232
  %v4252 = vpack.c.bf16 %v4235, %v4234
  %v4253 = vpack.c.bf16 %v4237, %v4236
  %v4254 = vpack.c.bf16 %v4239, %v4238
  %v4255 = vpack.c.bf16 %v4241, %v4240
  %v4256 = vpack.c.bf16 %v4243, %v4242
  %v4257 = vpack.c.bf16 %v4244, %v4244
  %v4258 = vld [vmem:[%s10] sm:$0xf]
  %v4259 = vld [vmem:[%s10 + $0x4] sm:$0xf]
  %v4260 = vld [vmem:[%s10 + $0x8] sm:$0xf]
  %v4261 = vld [vmem:[%s10 + $0xc] sm:$0xf]
  %v4262 = vld [vmem:[%s10 + $0x10] sm:$0xf]
  %v4263 = vld [vmem:[%s10 + $0x14] sm:$0xf]
  %v4264 = vld [vmem:[%s10 + $0x18] sm:$0xf]
  %v4265 = vld [vmem:[%s10 + $0x1c] sm:$0xf]
  %v4266 = vld [vmem:[%s10 + $0x20] sm:$0xf]
  %v4267 = vld [vmem:[%s10 + $0x24] sm:$0xf]
  %v4268 = vld [vmem:[%s10 + $0x28] sm:$0xf]
  %v4269 = vld [vmem:[%s10 + $0x2c] sm:$0xf]
  %v4270 = vld [vmem:[%s10 + $0x30] sm:$0xf]
  %v4271 = vld [vmem:[%s10 + $0x34] sm:$0xf]
  %v4272 = vld [vmem:[%s10 + $0x38] sm:$0xf]
  %v4273 = vld [vmem:[%s10 + $0x3c] sm:$0xf]
  %v4290 = vunpack.c.l.b16 %v4258
  %v4291 = vunpack.c.l.b16 %v4259
  %v4292 = vunpack.c.l.b16 %v4260
  %v4293 = vunpack.c.l.b16 %v4261
  %v4294 = vunpack.c.l.b16 %v4262
  %v4295 = vunpack.c.l.b16 %v4263
  %v4296 = vunpack.c.l.b16 %v4264
  %v4297 = vunpack.c.l.b16 %v4265
  %v4298 = vunpack.c.l.b16 %v4266
  %v4299 = vunpack.c.l.b16 %v4267
  %v4300 = vunpack.c.l.b16 %v4268
  %v4301 = vunpack.c.l.b16 %v4269
  %v4302 = vunpack.c.l.b16 %v4270
  %v4303 = vunpack.c.l.b16 %v4271
  %v4304 = vunpack.c.l.b16 %v4272
  %v4305 = vunpack.c.l.b16 %v4273
  %v4306 = vpack.c.b16 %v4291, %v4290
  %v4307 = vpack.c.b16 %v4293, %v4292
  %v4308 = vpack.c.b16 %v4295, %v4294
  %v4309 = vpack.c.b16 %v4297, %v4296
  %v4310 = vpack.c.b16 %v4299, %v4298
  %v4311 = vpack.c.b16 %v4301, %v4300
  %v4312 = vpack.c.b16 %v4303, %v4302
  %v4313 = vpack.c.b16 %v4305, %v4304
  %4322 = vmatprep.subr.bf16.mxu0 0
  %4323 = vmatpush1.bf16.msra.mxu0 %v4313
  %4324 = vmatprep.subr.bf16.mxu0 0
  %4325 = vmatpush1.bf16.msra.mxu0 %v4312
  %4326 = vmatprep.subr.bf16.mxu0 0
  %4327 = vmatpush1.bf16.msra.mxu0 %v4311
  %4328 = vmatprep.subr.bf16.mxu0 0
  %4329 = vmatpush1.bf16.msra.mxu0 %v4310
  %4330 = vmatprep.subr.bf16.mxu0 0
  %4331 = vmatpush1.bf16.msra.mxu0 %v4309
  %4332 = vmatprep.subr.bf16.mxu0 0
  %4333 = vmatpush1.bf16.msra.mxu0 %v4308
  %4334 = vmatprep.subr.bf16.mxu0 0
  %4335 = vmatpush1.bf16.msra.mxu0 %v4307
  %4336 = vmatprep.subr.bf16.mxu0 0
  %4337 = vmatpush1.bf16.msra.mxu0 %v4306
  %4338 = vmatprep.subr.bf16.mxu0 0
  %4339 = vmatpush2.bf16.msra.mxu0 0
  %4340 = vmatprep.subr.bf16.mxu0 0
  %4341 = vmatpush2.bf16.msra.mxu0 0
  %4342 = vmatprep.subr.bf16.mxu0 0
  %4343 = vmatpush2.bf16.msra.mxu0 0
  %4344 = vmatprep.subr.bf16.mxu0 0
  %4345 = vmatpush2.bf16.msra.mxu0 0
  %4346 = vmatprep.subr.bf16.mxu0 0
  %4347 = vmatpush2.bf16.msra.mxu0 0
  %4348 = vmatprep.subr.bf16.mxu0 0
  %4349 = vmatpush2.bf16.msra.mxu0 0
  %4350 = vmatprep.subr.bf16.mxu0 0
  %4351 = vmatpush2.bf16.msra.mxu0 0
  %4352 = vmatprep.subr.bf16.mxu0 0
  %4353 = vmatpush2.bf16.msra.mxu0 0
  %4354 = vmatprep.mubr.bf16.mxu0 0
  %4355 = vmatmul.mubr.bf16.gmra.mxu0 %v4245
  %v4356 = vpop.f32.mrf.mxu0
  %v4357 = vadd.f32 0.0, %v4356
  %v4358 = vpop.f32.mrf.mxu0
  %v4359 = vpop.f32.mrf.mxu0
  %v4360 = vadd.f32 0.0, %v4359
  %v4361 = vpop.f32.mrf.mxu0
  %4362 = vmatprep.mubr.bf16.mxu0 0
  %4363 = vmatmul.mubr.bf16.gmra.mxu0 %v4246
  %v4364 = vpop.f32.mrf.mxu0
  %v4365 = vadd.f32 0.0, %v4364
  %v4366 = vpop.f32.mrf.mxu0
  %v4367 = vpop.f32.mrf.mxu0
  %v4368 = vadd.f32 0.0, %v4367
  %v4369 = vpop.f32.mrf.mxu0
  %4370 = vmatprep.mubr.bf16.mxu0 0
  %4371 = vmatmul.mubr.bf16.gmra.mxu0 %v4247
  %v4372 = vpop.f32.mrf.mxu0
  %v4373 = vadd.f32 0.0, %v4372
  %v4374 = vpop.f32.mrf.mxu0
  %v4375 = vpop.f32.mrf.mxu0
  %v4376 = vadd.f32 0.0, %v4375
  %v4377 = vpop.f32.mrf.mxu0
  %4378 = vmatprep.mubr.bf16.mxu0 0
  %4379 = vmatmul.mubr.bf16.gmra.mxu0 %v4248
  %v4380 = vpop.f32.mrf.mxu0
  %v4381 = vadd.f32 0.0, %v4380
  %v4382 = vpop.f32.mrf.mxu0
  %v4383 = vpop.f32.mrf.mxu0
  %v4384 = vadd.f32 0.0, %v4383
  %v4385 = vpop.f32.mrf.mxu0
  %4386 = vmatprep.mubr.bf16.mxu0 0
  %4387 = vmatmul.mubr.bf16.gmra.mxu0 %v4249
  %v4388 = vpop.f32.mrf.mxu0
  %v4389 = vadd.f32 0.0, %v4388
  %v4390 = vpop.f32.mrf.mxu0
  %v4391 = vpop.f32.mrf.mxu0
  %v4392 = vadd.f32 0.0, %v4391
  %v4393 = vpop.f32.mrf.mxu0
  %4394 = vmatprep.mubr.bf16.mxu0 0
  %4395 = vmatmul.mubr.bf16.gmra.mxu0 %v4250
  %v4396 = vpop.f32.mrf.mxu0
  %v4397 = vadd.f32 0.0, %v4396
  %v4398 = vpop.f32.mrf.mxu0
  %v4399 = vpop.f32.mrf.mxu0
  %v4400 = vadd.f32 0.0, %v4399
  %v4401 = vpop.f32.mrf.mxu0
  %4402 = vmatprep.mubr.bf16.mxu0 0
  %4403 = vmatmul.mubr.bf16.gmra.mxu0 %v4251
  %v4404 = vpop.f32.mrf.mxu0
  %v4405 = vadd.f32 0.0, %v4404
  %v4406 = vpop.f32.mrf.mxu0
  %v4407 = vpop.f32.mrf.mxu0
  %v4408 = vadd.f32 0.0, %v4407
  %v4409 = vpop.f32.mrf.mxu0
  %4410 = vmatprep.mubr.bf16.mxu0 0
  %4411 = vmatmul.mubr.bf16.gmra.mxu0 %v4252
  %v4412 = vpop.f32.mrf.mxu0
  %v4413 = vadd.f32 0.0, %v4412
  %v4414 = vpop.f32.mrf.mxu0
  %v4415 = vpop.f32.mrf.mxu0
  %v4416 = vadd.f32 0.0, %v4415
  %v4417 = vpop.f32.mrf.mxu0
  %4418 = vmatprep.mubr.bf16.mxu0 0
  %4419 = vmatmul.mubr.bf16.gmra.mxu0 %v4253
  %v4420 = vpop.f32.mrf.mxu0
  %v4421 = vadd.f32 0.0, %v4420
  %v4422 = vpop.f32.mrf.mxu0
  %v4423 = vpop.f32.mrf.mxu0
  %v4424 = vadd.f32 0.0, %v4423
  %v4425 = vpop.f32.mrf.mxu0
  %4426 = vmatprep.mubr.bf16.mxu0 0
  %4427 = vmatmul.mubr.bf16.gmra.mxu0 %v4254
  %v4428 = vpop.f32.mrf.mxu0
  %v4429 = vadd.f32 0.0, %v4428
  %v4430 = vpop.f32.mrf.mxu0
  %v4431 = vpop.f32.mrf.mxu0
  %v4432 = vadd.f32 0.0, %v4431
  %v4433 = vpop.f32.mrf.mxu0
  %4434 = vmatprep.mubr.bf16.mxu0 0
  %4435 = vmatmul.mubr.bf16.gmra.mxu0 %v4255
  %v4436 = vpop.f32.mrf.mxu0
  %v4437 = vadd.f32 0.0, %v4436
  %v4438 = vpop.f32.mrf.mxu0
  %v4439 = vpop.f32.mrf.mxu0
  %v4440 = vadd.f32 0.0, %v4439
  %v4441 = vpop.f32.mrf.mxu0
  %4442 = vmatprep.mubr.bf16.mxu0 0
  %4443 = vmatmul.mubr.bf16.gmra.mxu0 %v4256
  %v4444 = vpop.f32.mrf.mxu0
  %v4445 = vadd.f32 0.0, %v4444
  %v4446 = vpop.f32.mrf.mxu0
  %v4447 = vpop.f32.mrf.mxu0
  %v4448 = vadd.f32 0.0, %v4447
  %v4449 = vpop.f32.mrf.mxu0
  %4450 = vmatprep.mubr.bf16.mxu0 0
  %4451 = vmatmul.mubr.bf16.gmra.mxu0 %v4257
  %v4452 = vpop.f32.mrf.mxu0
  %v4453 = vadd.f32 0.0, %v4452
  %v4454 = vpop.f32.mrf.mxu0
  %v4455 = vpop.f32.mrf.mxu0
  %v4456 = vpop.f32.mrf.mxu0
  %4457 = vdwg.mxu0
  %v4458 = vld [vmem:[%s11] sm:$0x1]
  %v4459 = vld [vmem:[%s12] sm:$0x1]
  %v4460 = vmul.f32 %v4357, %v328
  %v4461 = vmul.f32 %v4360, %v333
  %v4462 = vmul.f32 %v4365, %v338
  %v4463 = vmul.f32 %v4368, %v343
  %v4464 = vmul.f32 %v4373, %v348
  %v4465 = vmul.f32 %v4376, %v353
  %v4466 = vmul.f32 %v4381, %v358
  %v4467 = vmul.f32 %v4384, %v363
  %v4468 = vmul.f32 %v4389, %v368
  %v4469 = vmul.f32 %v4392, %v373
  %v4470 = vmul.f32 %v4397, %v378
  %v4471 = vmul.f32 %v4400, %v383
  %v4472 = vmul.f32 %v4405, %v388
  %v4473 = vmul.f32 %v4408, %v393
  %v4474 = vmul.f32 %v4413, %v398
  %v4475 = vmul.f32 %v4416, %v403
  %v4476 = vmul.f32 %v4421, %v408
  %v4477 = vmul.f32 %v4424, %v413
  %v4478 = vmul.f32 %v4429, %v418
  %v4479 = vmul.f32 %v4432, %v423
  %v4480 = vmul.f32 %v4437, %v428
  %v4481 = vmul.f32 %v4440, %v433
  %v4482 = vmul.f32 %v4445, %v438
  %v4483 = vmul.f32 %v4448, %v443
  %v4484 = vmul.f32 %v4453, %v448
  %v4485 = vadd.f32 %v4460, %v4461
  %v4486 = vadd.f32 %v4485, %v4462
  %v4487 = vadd.f32 %v4486, %v4463
  %v4488 = vadd.f32 %v4487, %v4464
  %v4489 = vadd.f32 %v4488, %v4465
  %v4490 = vadd.f32 %v4489, %v4466
  %v4491 = vadd.f32 %v4490, %v4467
  %v4492 = vadd.f32 %v4491, %v4468
  %v4493 = vadd.f32 %v4492, %v4469
  %v4494 = vadd.f32 %v4493, %v4470
  %v4495 = vadd.f32 %v4494, %v4471
  %v4496 = vadd.f32 %v4495, %v4472
  %v4497 = vadd.f32 %v4496, %v4473
  %v4498 = vadd.f32 %v4497, %v4474
  %v4499 = vadd.f32 %v4498, %v4475
  %v4500 = vadd.f32 %v4499, %v4476
  %v4501 = vadd.f32 %v4500, %v4477
  %v4502 = vadd.f32 %v4501, %v4478
  %v4503 = vadd.f32 %v4502, %v4479
  %v4504 = vadd.f32 %v4503, %v4480
  %v4505 = vadd.f32 %v4504, %v4481
  %v4506 = vadd.f32 %v4505, %v4482
  %v4507 = vadd.f32 %v4506, %v4483
  %v4508 = vadd.f32 %v4507, %v4484
  %v4509 = vrot.slane %v4508, 4
  %v4510 = vadd.f32 %v4508, %v4509
  %v4511 = vrot.slane %v4510, 2
  %v4512 = vadd.f32 %v4510, %v4511
  %v4513 = vrot.slane %v4512, 1
  %v4514 = vadd.f32 %v4512, %v4513
  %v4515 = vmul.f32 %v4514, 0.0078125
  %v4516 = vsub.f32 %v4357, %v4515
  %v4517 = vsub.f32 %v4360, %v4515
  %v4518 = vsub.f32 %v4365, %v4515
  %v4519 = vsub.f32 %v4368, %v4515
  %v4520 = vsub.f32 %v4373, %v4515
  %v4521 = vsub.f32 %v4376, %v4515
  %v4522 = vsub.f32 %v4381, %v4515
  %v4523 = vsub.f32 %v4384, %v4515
  %v4524 = vsub.f32 %v4389, %v4515
  %v4525 = vsub.f32 %v4392, %v4515
  %v4526 = vsub.f32 %v4397, %v4515
  %v4527 = vsub.f32 %v4400, %v4515
  %v4528 = vsub.f32 %v4405, %v4515
  %v4529 = vsub.f32 %v4408, %v4515
  %v4530 = vsub.f32 %v4413, %v4515
  %v4531 = vsub.f32 %v4416, %v4515
  %v4532 = vsub.f32 %v4421, %v4515
  %v4533 = vsub.f32 %v4424, %v4515
  %v4534 = vsub.f32 %v4429, %v4515
  %v4535 = vsub.f32 %v4432, %v4515
  %v4536 = vsub.f32 %v4437, %v4515
  %v4537 = vsub.f32 %v4440, %v4515
  %v4538 = vsub.f32 %v4445, %v4515
  %v4539 = vsub.f32 %v4448, %v4515
  %v4540 = vsub.f32 %v4453, %v4515
  %v4541 = vmul.f32 %v4516, %v328
  %v4542 = vmul.f32 %v4517, %v333
  %v4543 = vmul.f32 %v4518, %v338
  %v4544 = vmul.f32 %v4519, %v343
  %v4545 = vmul.f32 %v4520, %v348
  %v4546 = vmul.f32 %v4521, %v353
  %v4547 = vmul.f32 %v4522, %v358
  %v4548 = vmul.f32 %v4523, %v363
  %v4549 = vmul.f32 %v4524, %v368
  %v4550 = vmul.f32 %v4525, %v373
  %v4551 = vmul.f32 %v4526, %v378
  %v4552 = vmul.f32 %v4527, %v383
  %v4553 = vmul.f32 %v4528, %v388
  %v4554 = vmul.f32 %v4529, %v393
  %v4555 = vmul.f32 %v4530, %v398
  %v4556 = vmul.f32 %v4531, %v403
  %v4557 = vmul.f32 %v4532, %v408
  %v4558 = vmul.f32 %v4533, %v413
  %v4559 = vmul.f32 %v4534, %v418
  %v4560 = vmul.f32 %v4535, %v423
  %v4561 = vmul.f32 %v4536, %v428
  %v4562 = vmul.f32 %v4537, %v433
  %v4563 = vmul.f32 %v4538, %v438
  %v4564 = vmul.f32 %v4539, %v443
  %v4565 = vmul.f32 %v4540, %v448
  %v4566 = vmul.f32 %v4541, %v4541
  %v4567 = vmul.f32 %v4542, %v4542
  %v4568 = vmul.f32 %v4543, %v4543
  %v4569 = vmul.f32 %v4544, %v4544
  %v4570 = vmul.f32 %v4545, %v4545
  %v4571 = vmul.f32 %v4546, %v4546
  %v4572 = vmul.f32 %v4547, %v4547
  %v4573 = vmul.f32 %v4548, %v4548
  %v4574 = vmul.f32 %v4549, %v4549
  %v4575 = vmul.f32 %v4550, %v4550
  %v4576 = vmul.f32 %v4551, %v4551
  %v4577 = vmul.f32 %v4552, %v4552
  %v4578 = vmul.f32 %v4553, %v4553
  %v4579 = vmul.f32 %v4554, %v4554
  %v4580 = vmul.f32 %v4555, %v4555
  %v4581 = vmul.f32 %v4556, %v4556
  %v4582 = vmul.f32 %v4557, %v4557
  %v4583 = vmul.f32 %v4558, %v4558
  %v4584 = vmul.f32 %v4559, %v4559
  %v4585 = vmul.f32 %v4560, %v4560
  %v4586 = vmul.f32 %v4561, %v4561
  %v4587 = vmul.f32 %v4562, %v4562
  %v4588 = vmul.f32 %v4563, %v4563
  %v4589 = vmul.f32 %v4564, %v4564
  %v4590 = vmul.f32 %v4565, %v4565
  %v4591 = vadd.f32 %v4566, %v4567
  %v4592 = vadd.f32 %v4591, %v4568
  %v4593 = vadd.f32 %v4592, %v4569
  %v4594 = vadd.f32 %v4593, %v4570
  %v4595 = vadd.f32 %v4594, %v4571
  %v4596 = vadd.f32 %v4595, %v4572
  %v4597 = vadd.f32 %v4596, %v4573
  %v4598 = vadd.f32 %v4597, %v4574
  %v4599 = vadd.f32 %v4598, %v4575
  %v4600 = vadd.f32 %v4599, %v4576
  %v4601 = vadd.f32 %v4600, %v4577
  %v4602 = vadd.f32 %v4601, %v4578
  %v4603 = vadd.f32 %v4602, %v4579
  %v4604 = vadd.f32 %v4603, %v4580
  %v4605 = vadd.f32 %v4604, %v4581
  %v4606 = vadd.f32 %v4605, %v4582
  %v4607 = vadd.f32 %v4606, %v4583
  %v4608 = vadd.f32 %v4607, %v4584
  %v4609 = vadd.f32 %v4608, %v4585
  %v4610 = vadd.f32 %v4609, %v4586
  %v4611 = vadd.f32 %v4610, %v4587
  %v4612 = vadd.f32 %v4611, %v4588
  %v4613 = vadd.f32 %v4612, %v4589
  %v4614 = vadd.f32 %v4613, %v4590
  %v4615 = vrot.slane %v4614, 4
  %v4616 = vadd.f32 %v4614, %v4615
  %v4617 = vrot.slane %v4616, 2
  %v4618 = vadd.f32 %v4616, %v4617
  %v4619 = vrot.slane %v4618, 1
  %v4620 = vadd.f32 %v4618, %v4619
  %v4621 = vmul.f32 %v4620, 0.0078125
  %v4622 = vadd.f32 %v4621, 1e-05
  %v4623 = vrsqrt.pop %v4622
  %v4624 = vmul.f32 %v4458, %v4623
  %v4625 = vmul.f32 %v4515, %v4624
  %v4626 = vsub.f32 %v4459, %v4625
  %v4628 = vlaneseq
  %v4629 = vshrl.u32 %v4628, 7
  %v4630 = vsub.s32 0, %v4629
  %v4631 = vrot.slane %v4624, %v4630
  %v4633 = vmul.f32 %v4357, %v4631
  %v4634 = vmul.f32 %v4360, %v4631
  %v4635 = vmul.f32 %v4365, %v4631
  %v4636 = vmul.f32 %v4368, %v4631
  %v4637 = vmul.f32 %v4373, %v4631
  %v4638 = vmul.f32 %v4376, %v4631
  %v4639 = vmul.f32 %v4381, %v4631
  %v4640 = vmul.f32 %v4384, %v4631
  %v4641 = vmul.f32 %v4389, %v4631
  %v4642 = vmul.f32 %v4392, %v4631
  %v4643 = vmul.f32 %v4397, %v4631
  %v4644 = vmul.f32 %v4400, %v4631
  %v4645 = vmul.f32 %v4405, %v4631
  %v4646 = vmul.f32 %v4408, %v4631
  %v4647 = vmul.f32 %v4413, %v4631
  %v4648 = vmul.f32 %v4416, %v4631
  %v4649 = vmul.f32 %v4421, %v4631
  %v4650 = vmul.f32 %v4424, %v4631
  %v4651 = vmul.f32 %v4429, %v4631
  %v4652 = vmul.f32 %v4432, %v4631
  %v4653 = vmul.f32 %v4437, %v4631
  %v4654 = vmul.f32 %v4440, %v4631
  %v4655 = vmul.f32 %v4445, %v4631
  %v4656 = vmul.f32 %v4448, %v4631
  %v4657 = vmul.f32 %v4453, %v4631
  %v4659 = vlaneseq
  %v4660 = vshrl.u32 %v4659, 7
  %v4661 = vsub.s32 0, %v4660
  %v4662 = vrot.slane %v4626, %v4661
  %v4664 = vadd.f32 %v4633, %v4662
  %v4665 = vadd.f32 %v4634, %v4662
  %v4666 = vadd.f32 %v4635, %v4662
  %v4667 = vadd.f32 %v4636, %v4662
  %v4668 = vadd.f32 %v4637, %v4662
  %v4669 = vadd.f32 %v4638, %v4662
  %v4670 = vadd.f32 %v4639, %v4662
  %v4671 = vadd.f32 %v4640, %v4662
  %v4672 = vadd.f32 %v4641, %v4662
  %v4673 = vadd.f32 %v4642, %v4662
  %v4674 = vadd.f32 %v4643, %v4662
  %v4675 = vadd.f32 %v4644, %v4662
  %v4676 = vadd.f32 %v4645, %v4662
  %v4677 = vadd.f32 %v4646, %v4662
  %v4678 = vadd.f32 %v4647, %v4662
  %v4679 = vadd.f32 %v4648, %v4662
  %v4680 = vadd.f32 %v4649, %v4662
  %v4681 = vadd.f32 %v4650, %v4662
  %v4682 = vadd.f32 %v4651, %v4662
  %v4683 = vadd.f32 %v4652, %v4662
  %v4684 = vadd.f32 %v4653, %v4662
  %v4685 = vadd.f32 %v4654, %v4662
  %v4686 = vadd.f32 %v4655, %v4662
  %v4687 = vadd.f32 %v4656, %v4662
  %v4688 = vadd.f32 %v4657, %v4662
  %v4689 = vld [vmem:[%s2] sm:$0xf]
  %v4692 = vunpack.c.l.s4 1983009808
  %v4693 = vunpack.c.0.s8 %v4692
  %v4694 = vlaneseq
  %v4695 = vshrl.u32 %v4694, 7
  %v4696 = vsub.s32 %v4693, %v4695
  %v4697 = vrot.slane %v4689, %v4696
  %v4698 = vcombine.high %v4697, %v4697
  %vm4700 = vcmask 588800
  %v4701 = vsel %vm4700, %v4698, 0
  %4703 = vmatprep.subr.mxu0 0.0
  %4704 = vmatpush1.msra.mxu0 %v4679
  %4705 = vmatprep.subr.mxu0 0.0
  %4706 = vmatpush1.msra.mxu0 %v4678
  %4707 = vmatprep.subr.mxu0 0.0
  %4708 = vmatpush1.msra.mxu0 %v4677
  %4709 = vmatprep.subr.mxu0 0.0
  %4710 = vmatpush1.msra.mxu0 %v4676
  %4711 = vmatprep.subr.mxu0 0.0
  %4712 = vmatpush1.msra.mxu0 %v4675
  %4713 = vmatprep.subr.mxu0 0.0
  %4714 = vmatpush1.msra.mxu0 %v4674
  %4715 = vmatprep.subr.mxu0 0.0
  %4716 = vmatpush1.msra.mxu0 %v4673
  %4717 = vmatprep.subr.mxu0 0.0
  %4718 = vmatpush1.msra.mxu0 %v4672
  %4719 = vmatprep.subr.mxu0 0.0
  %4720 = vmatpush1.msra.mxu0 %v4671
  %4721 = vmatprep.subr.mxu0 0.0
  %4722 = vmatpush1.msra.mxu0 %v4670
  %4723 = vmatprep.subr.mxu0 0.0
  %4724 = vmatpush1.msra.mxu0 %v4669
  %4725 = vmatprep.subr.mxu0 0.0
  %4726 = vmatpush1.msra.mxu0 %v4668
  %4727 = vmatprep.subr.mxu0 0.0
  %4728 = vmatpush1.msra.mxu0 %v4667
  %4729 = vmatprep.subr.mxu0 0.0
  %4730 = vmatpush1.msra.mxu0 %v4666
  %4731 = vmatprep.subr.mxu0 0.0
  %4732 = vmatpush1.msra.mxu0 %v4665
  %4733 = vmatprep.subr.mxu0 0.0
  %4734 = vmatpush1.msra.mxu0 %v4664
  %4735 = vmatprep.subr.mxu0 0.0
  %4736 = vmatpush2.msra.mxu0 0.0
  %4737 = vmatprep.subr.mxu0 0.0
  %4738 = vmatpush2.msra.mxu0 0.0
  %4739 = vmatprep.subr.mxu0 0.0
  %4740 = vmatpush2.msra.mxu0 0.0
  %4741 = vmatprep.subr.mxu0 0.0
  %4742 = vmatpush2.msra.mxu0 0.0
  %4743 = vmatprep.subr.mxu0 0.0
  %4744 = vmatpush2.msra.mxu0 0.0
  %4745 = vmatprep.subr.mxu0 0.0
  %4746 = vmatpush2.msra.mxu0 0.0
  %4747 = vmatprep.subr.mxu0 0.0
  %4748 = vmatpush2.msra.mxu0 0.0
  %4749 = vmatprep.subr.mxu0 0.0
  %4750 = vmatpush2.msra.mxu0 %v4688
  %4751 = vmatprep.subr.mxu0 0.0
  %4752 = vmatpush2.msra.mxu0 %v4687
  %4753 = vmatprep.subr.mxu0 0.0
  %4754 = vmatpush2.msra.mxu0 %v4686
  %4755 = vmatprep.subr.mxu0 0.0
  %4756 = vmatpush2.msra.mxu0 %v4685
  %4757 = vmatprep.subr.mxu0 0.0
  %4758 = vmatpush2.msra.mxu0 %v4684
  %4759 = vmatprep.subr.mxu0 0.0
  %4760 = vmatpush2.msra.mxu0 %v4683
  %4761 = vmatprep.subr.mxu0 0.0
  %4762 = vmatpush2.msra.mxu0 %v4682
  %4763 = vmatprep.subr.mxu0 0.0
  %4764 = vmatpush2.msra.mxu0 %v4681
  %4765 = vmatprep.subr.mxu0 0.0
  %4766 = vmatpush2.msra.mxu0 %v4680
  %4767 = vmatprep.mubr.f32.mxu0 %v4701
  %4768 = vmatmul.mubr.f32.gmra.mxu0 %v4697
  %v4769 = vpop.f32.mrf.mxu0
  %v4770 = vadd.f32 0.0, %v4769
  %v4771 = vpop.f32.mrf.mxu0
  %4772 = vdwg.mxu0
  %v4773 = vld [vmem:[%s13] sm:$0xff]
  %v4774 = vld [vmem:[%s13 + $0x8] sm:$0xff]
  %v4775 = vld [vmem:[%s13 + $0x10] sm:$0xff]
  %v4776 = vld [vmem:[%s13 + $0x18] sm:$0xff]
  %v4777 = vld [vmem:[%s13 + $0x20] sm:$0xff]
  %v4778 = vld [vmem:[%s13 + $0x28] sm:$0xff]
  %v4779 = vld [vmem:[%s13 + $0x30] sm:$0xff]
  %v4780 = vld [vmem:[%s13 + $0x38] sm:$0xff]
  %v4781 = vld [vmem:[%s13 + $0x40] sm:$0xff]
  %v4782 = vld [vmem:[%s13 + $0x48] sm:$0xff]
  %v4783 = vld [vmem:[%s13 + $0x50] sm:$0xff]
  %v4784 = vld [vmem:[%s13 + $0x58] sm:$0xff]
  %v4785 = vld [vmem:[%s13 + $0x60] sm:$0xff]
  %v4786 = vld [vmem:[%s13 + $0x68] sm:$0xff]
  %v4787 = vld [vmem:[%s13 + $0x70] sm:$0xff]
  %v4788 = vld [vmem:[%s13 + $0x78] sm:$0xff]
  %4789 = vmatprep.subr.mxu0 0.0
  %4790 = vmatpush1.msra.mxu0 %v4788
  %4791 = vmatprep.subr.mxu0 0.0
  %4792 = vmatpush1.msra.mxu0 %v4787
  %4793 = vmatprep.subr.mxu0 0.0
  %4794 = vmatpush1.msra.mxu0 %v4786
  %4795 = vmatprep.subr.mxu0 0.0
  %4796 = vmatpush1.msra.mxu0 %v4785
  %4797 = vmatprep.subr.mxu0 0.0
  %4798 = vmatpush1.msra.mxu0 %v4784
  %4799 = vmatprep.subr.mxu0 0.0
  %4800 = vmatpush1.msra.mxu0 %v4783
  %4801 = vmatprep.subr.mxu0 0.0
  %4802 = vmatpush1.msra.mxu0 %v4782
  %4803 = vmatprep.subr.mxu0 0.0
  %4804 = vmatpush1.msra.mxu0 %v4781
  %4805 = vmatprep.subr.mxu0 0.0
  %4806 = vmatpush1.msra.mxu0 %v4780
  %4807 = vmatprep.subr.mxu0 0.0
  %4808 = vmatpush1.msra.mxu0 %v4779
  %4809 = vmatprep.subr.mxu0 0.0
  %4810 = vmatpush1.msra.mxu0 %v4778
  %4811 = vmatprep.subr.mxu0 0.0
  %4812 = vmatpush1.msra.mxu0 %v4777
  %4813 = vmatprep.subr.mxu0 0.0
  %4814 = vmatpush1.msra.mxu0 %v4776
  %4815 = vmatprep.subr.mxu0 0.0
  %4816 = vmatpush1.msra.mxu0 %v4775
  %4817 = vmatprep.subr.mxu0 0.0
  %4818 = vmatpush1.msra.mxu0 %v4774
  %4819 = vmatprep.subr.mxu0 0.0
  %4820 = vmatpush1.msra.mxu0 %v4773
  %4821 = vmatprep.subr.mxu0 0.0
  %4822 = vmatpush2.msra.mxu0 0.0
  %4823 = vmatprep.subr.mxu0 0.0
  %4824 = vmatpush2.msra.mxu0 0.0
  %4825 = vmatprep.subr.mxu0 0.0
  %4826 = vmatpush2.msra.mxu0 0.0
  %4827 = vmatprep.subr.mxu0 0.0
  %4828 = vmatpush2.msra.mxu0 0.0
  %4829 = vmatprep.subr.mxu0 0.0
  %4830 = vmatpush2.msra.mxu0 0.0
  %4831 = vmatprep.subr.mxu0 0.0
  %4832 = vmatpush2.msra.mxu0 0.0
  %4833 = vmatprep.subr.mxu0 0.0
  %4834 = vmatpush2.msra.mxu0 0.0
  %4835 = vmatprep.subr.mxu0 0.0
  %4836 = vmatpush2.msra.mxu0 0.0
  %4837 = vmatprep.subr.mxu0 0.0
  %4838 = vmatpush2.msra.mxu0 0.0
  %4839 = vmatprep.subr.mxu0 0.0
  %4840 = vmatpush2.msra.mxu0 0.0
  %4841 = vmatprep.subr.mxu0 0.0
  %4842 = vmatpush2.msra.mxu0 0.0
  %4843 = vmatprep.subr.mxu0 0.0
  %4844 = vmatpush2.msra.mxu0 0.0
  %4845 = vmatprep.subr.mxu0 0.0
  %4846 = vmatpush2.msra.mxu0 0.0
  %4847 = vmatprep.subr.mxu0 0.0
  %4848 = vmatpush2.msra.mxu0 0.0
  %4849 = vmatprep.subr.mxu0 0.0
  %4850 = vmatpush2.msra.mxu0 0.0
  %4851 = vmatprep.subr.mxu0 0.0
  %4852 = vmatpush2.msra.mxu0 0.0
  %4853 = vmatprep.mubr.f32.mxu0 0.0
  %4854 = vmatmul.mubr.f32.gmra.mxu0 %v4770
  %v4855 = vpop.f32.mrf.mxu0
  %v4856 = vadd.f32 0.0, %v4855
  %v4857 = vpop.f32.mrf.mxu0
  %4858 = vdwg.mxu0
  %v4859 = vmax.f32 %v4856, 0.0
  %v4860 = vld [vmem:[%s14] sm:$0xff]
  %v4861 = vld [vmem:[%s14 + $0x8] sm:$0xff]
  %v4862 = vld [vmem:[%s14 + $0x10] sm:$0xff]
  %v4863 = vld [vmem:[%s14 + $0x18] sm:$0xff]
  %v4864 = vld [vmem:[%s14 + $0x20] sm:$0xff]
  %v4865 = vld [vmem:[%s14 + $0x28] sm:$0xff]
  %v4866 = vld [vmem:[%s14 + $0x30] sm:$0xff]
  %v4867 = vld [vmem:[%s14 + $0x38] sm:$0xff]
  %v4868 = vld [vmem:[%s14 + $0x40] sm:$0xff]
  %v4869 = vld [vmem:[%s14 + $0x48] sm:$0xff]
  %v4870 = vld [vmem:[%s14 + $0x50] sm:$0xff]
  %v4871 = vld [vmem:[%s14 + $0x58] sm:$0xff]
  %v4872 = vld [vmem:[%s14 + $0x60] sm:$0xff]
  %v4873 = vld [vmem:[%s14 + $0x68] sm:$0xff]
  %v4874 = vld [vmem:[%s14 + $0x70] sm:$0xff]
  %v4875 = vld [vmem:[%s14 + $0x78] sm:$0xff]
  %4876 = vmatprep.subr.mxu0 0.0
  %4877 = vmatpush1.msra.mxu0 %v4875
  %4878 = vmatprep.subr.mxu0 0.0
  %4879 = vmatpush1.msra.mxu0 %v4874
  %4880 = vmatprep.subr.mxu0 0.0
  %4881 = vmatpush1.msra.mxu0 %v4873
  %4882 = vmatprep.subr.mxu0 0.0
  %4883 = vmatpush1.msra.mxu0 %v4872
  %4884 = vmatprep.subr.mxu0 0.0
  %4885 = vmatpush1.msra.mxu0 %v4871
  %4886 = vmatprep.subr.mxu0 0.0
  %4887 = vmatpush1.msra.mxu0 %v4870
  %4888 = vmatprep.subr.mxu0 0.0
  %4889 = vmatpush1.msra.mxu0 %v4869
  %4890 = vmatprep.subr.mxu0 0.0
  %4891 = vmatpush1.msra.mxu0 %v4868
  %4892 = vmatprep.subr.mxu0 0.0
  %4893 = vmatpush1.msra.mxu0 %v4867
  %4894 = vmatprep.subr.mxu0 0.0
  %4895 = vmatpush1.msra.mxu0 %v4866
  %4896 = vmatprep.subr.mxu0 0.0
  %4897 = vmatpush1.msra.mxu0 %v4865
  %4898 = vmatprep.subr.mxu0 0.0
  %4899 = vmatpush1.msra.mxu0 %v4864
  %4900 = vmatprep.subr.mxu0 0.0
  %4901 = vmatpush1.msra.mxu0 %v4863
  %4902 = vmatprep.subr.mxu0 0.0
  %4903 = vmatpush1.msra.mxu0 %v4862
  %4904 = vmatprep.subr.mxu0 0.0
  %4905 = vmatpush1.msra.mxu0 %v4861
  %4906 = vmatprep.subr.mxu0 0.0
  %4907 = vmatpush1.msra.mxu0 %v4860
  %4908 = vmatprep.subr.mxu0 0.0
  %4909 = vmatpush2.msra.mxu0 0.0
  %4910 = vmatprep.subr.mxu0 0.0
  %4911 = vmatpush2.msra.mxu0 0.0
  %4912 = vmatprep.subr.mxu0 0.0
  %4913 = vmatpush2.msra.mxu0 0.0
  %4914 = vmatprep.subr.mxu0 0.0
  %4915 = vmatpush2.msra.mxu0 0.0
  %4916 = vmatprep.subr.mxu0 0.0
  %4917 = vmatpush2.msra.mxu0 0.0
  %4918 = vmatprep.subr.mxu0 0.0
  %4919 = vmatpush2.msra.mxu0 0.0
  %4920 = vmatprep.subr.mxu0 0.0
  %4921 = vmatpush2.msra.mxu0 0.0
  %4922 = vmatprep.subr.mxu0 0.0
  %4923 = vmatpush2.msra.mxu0 0.0
  %4924 = vmatprep.subr.mxu0 0.0
  %4925 = vmatpush2.msra.mxu0 0.0
  %4926 = vmatprep.subr.mxu0 0.0
  %4927 = vmatpush2.msra.mxu0 0.0
  %4928 = vmatprep.subr.mxu0 0.0
  %4929 = vmatpush2.msra.mxu0 0.0
  %4930 = vmatprep.subr.mxu0 0.0
  %4931 = vmatpush2.msra.mxu0 0.0
  %4932 = vmatprep.subr.mxu0 0.0
  %4933 = vmatpush2.msra.mxu0 0.0
  %4934 = vmatprep.subr.mxu0 0.0
  %4935 = vmatpush2.msra.mxu0 0.0
  %4936 = vmatprep.subr.mxu0 0.0
  %4937 = vmatpush2.msra.mxu0 0.0
  %4938 = vmatprep.subr.mxu0 0.0
  %4939 = vmatpush2.msra.mxu0 0.0
  %4940 = vmatprep.mubr.f32.mxu0 0.0
  %4941 = vmatmul.mubr.f32.gmra.mxu0 %v4859
  %v4942 = vpop.f32.mrf.mxu0
  %v4943 = vadd.f32 0.0, %v4942
  %v4944 = vpop.f32.mrf.mxu0
  %4945 = vdwg.mxu0
  %v4946 = vxor.u32 %v4943, 2147483648
  %v4947 = vmul.f32 %v4946, 1.442695
  %v4948 = vpow.pop %v4947
  %v4949 = vadd.f32 %v4948, 1.0
  %v4950 = vrcp.pop %v4949
  %v4951 = vmul.f32 1.0, %v4950
  %v4952 = vld [vmem:[%s3] sm:$0xff]
  %v4953 = vld [vmem:[%s3 + $0x8] sm:$0xff]
  %v4954 = vld [vmem:[%s3 + $0x10] sm:$0xff]
  %v4955 = vld [vmem:[%s3 + $0x18] sm:$0xff]
  %v4956 = vld [vmem:[%s3 + $0x20] sm:$0xff]
  %v4957 = vld [vmem:[%s3 + $0x28] sm:$0xff]
  %v4958 = vld [vmem:[%s3 + $0x30] sm:$0xff]
  %v4959 = vld [vmem:[%s3 + $0x38] sm:$0xff]
  %v4960 = vld [vmem:[%s3 + $0x40] sm:$0xff]
  %v4961 = vld [vmem:[%s3 + $0x48] sm:$0xff]
  %v4962 = vld [vmem:[%s3 + $0x50] sm:$0xff]
  %v4963 = vld [vmem:[%s3 + $0x58] sm:$0xff]
  %v4964 = vld [vmem:[%s3 + $0x60] sm:$0xff]
  %v4965 = vld [vmem:[%s3 + $0x68] sm:$0xff]
  %v4966 = vld [vmem:[%s3 + $0x70] sm:$0xff]
  %v4967 = vld [vmem:[%s3 + $0x78] sm:$0xff]
  %v4968 = vld [vmem:[%s3 + $0x80] sm:$0xff]
  %v4969 = vld [vmem:[%s3 + $0x88] sm:$0xff]
  %v4970 = vld [vmem:[%s3 + $0x90] sm:$0xff]
  %v4971 = vld [vmem:[%s3 + $0x98] sm:$0xff]
  %v4972 = vld [vmem:[%s3 + $0xa0] sm:$0xff]
  %v4973 = vld [vmem:[%s3 + $0xa8] sm:$0xff]
  %v4974 = vld [vmem:[%s3 + $0xb0] sm:$0xff]
  %v4975 = vld [vmem:[%s3 + $0xb8] sm:$0xff]
  %v4976 = vld [vmem:[%s3 + $0xc0] sm:$0xff]
  %vm4977 = vcmask 15360
  %v4979 = vsel %vm4977, %v4952, 0
  %v4982 = vsel %vm4977, %v4953, 0
  %v4985 = vsel %vm4977, %v4954, 0
  %v4988 = vsel %vm4977, %v4955, 0
  %v4991 = vsel %vm4977, %v4956, 0
  %v4994 = vsel %vm4977, %v4957, 0
  %v4997 = vsel %vm4977, %v4958, 0
  %v5000 = vsel %vm4977, %v4959, 0
  %v5003 = vsel %vm4977, %v4960, 0
  %v5006 = vsel %vm4977, %v4961, 0
  %v5009 = vsel %vm4977, %v4962, 0
  %v5012 = vsel %vm4977, %v4963, 0
  %v5015 = vsel %vm4977, %v4964, 0
  %v5018 = vsel %vm4977, %v4965, 0
  %v5021 = vsel %vm4977, %v4966, 0
  %v5024 = vsel %vm4977, %v4967, 0
  %v5027 = vsel %vm4977, %v4968, 0
  %v5030 = vsel %vm4977, %v4969, 0
  %v5033 = vsel %vm4977, %v4970, 0
  %v5036 = vsel %vm4977, %v4971, 0
  %v5039 = vsel %vm4977, %v4972, 0
  %v5042 = vsel %vm4977, %v4973, 0
  %v5045 = vsel %vm4977, %v4974, 0
  %v5048 = vsel %vm4977, %v4975, 0
  %v5051 = vsel %vm4977, %v4976, 0
  %vm5053 = vcmask 1041408
  %v5055 = vsel %vm5053, %v4951, 0
  %5057 = vmatprep.subr.mxu0 0.0
  %5058 = vmatpush1.msra.mxu0 0.0
  %5059 = vmatprep.subr.mxu0 0.0
  %5060 = vmatpush1.msra.mxu0 0.0
  %5061 = vmatprep.subr.mxu0 0.0
  %5062 = vmatpush1.msra.mxu0 0.0
  %5063 = vmatprep.subr.mxu0 0.0
  %5064 = vmatpush1.msra.mxu0 0.0
  %5065 = vmatprep.subr.mxu0 0.0
  %5066 = vmatpush1.msra.mxu0 0.0
  %5067 = vmatprep.subr.mxu0 0.0
  %5068 = vmatpush1.msra.mxu0 0.0
  %5069 = vmatprep.subr.mxu0 0.0
  %5070 = vmatpush1.msra.mxu0 0.0
  %5071 = vmatprep.subr.mxu0 0.0
  %5072 = vmatpush1.msra.mxu0 0.0
  %5073 = vmatprep.subr.mxu0 0.0
  %5074 = vmatpush1.msra.mxu0 0.0
  %5075 = vmatprep.subr.mxu0 0.0
  %5076 = vmatpush1.msra.mxu0 0.0
  %5077 = vmatprep.subr.mxu0 0.0
  %5078 = vmatpush1.msra.mxu0 0.0
  %5079 = vmatprep.subr.mxu0 0.0
  %5080 = vmatpush1.msra.mxu0 0.0
  %5081 = vmatprep.subr.mxu0 0.0
  %5082 = vmatpush1.msra.mxu0 0.0
  %5083 = vmatprep.subr.mxu0 0.0
  %5084 = vmatpush1.msra.mxu0 0.0
  %5085 = vmatprep.subr.mxu0 0.0
  %5086 = vmatpush1.msra.mxu0 0.0
  %5087 = vmatprep.subr.mxu0 0.0
  %5088 = vmatpush1.msra.mxu0 %v5055
  %5089 = vmatprep.subr.mxu0 0.0
  %5090 = vmatpush2.msra.mxu0 0.0
  %5091 = vmatprep.subr.mxu0 0.0
  %5092 = vmatpush2.msra.mxu0 0.0
  %5093 = vmatprep.subr.mxu0 0.0
  %5094 = vmatpush2.msra.mxu0 0.0
  %5095 = vmatprep.subr.mxu0 0.0
  %5096 = vmatpush2.msra.mxu0 0.0
  %5097 = vmatprep.subr.mxu0 0.0
  %5098 = vmatpush2.msra.mxu0 0.0
  %5099 = vmatprep.subr.mxu0 0.0
  %5100 = vmatpush2.msra.mxu0 0.0
  %5101 = vmatprep.subr.mxu0 0.0
  %5102 = vmatpush2.msra.mxu0 0.0
  %5103 = vmatprep.subr.mxu0 0.0
  %5104 = vmatpush2.msra.mxu0 0.0
  %5105 = vmatprep.subr.mxu0 0.0
  %5106 = vmatpush2.msra.mxu0 0.0
  %5107 = vmatprep.subr.mxu0 0.0
  %5108 = vmatpush2.msra.mxu0 0.0
  %5109 = vmatprep.subr.mxu0 0.0
  %5110 = vmatpush2.msra.mxu0 0.0
  %5111 = vmatprep.subr.mxu0 0.0
  %5112 = vmatpush2.msra.mxu0 0.0
  %5113 = vmatprep.subr.mxu0 0.0
  %5114 = vmatpush2.msra.mxu0 0.0
  %5115 = vmatprep.subr.mxu0 0.0
  %5116 = vmatpush2.msra.mxu0 0.0
  %5117 = vmatprep.subr.mxu0 0.0
  %5118 = vmatpush2.msra.mxu0 0.0
  %5119 = vmatprep.subr.mxu0 0.0
  %5120 = vmatpush2.msra.mxu0 0.0
  %5121 = vmatprep.mubr.f32.mxu0 0.0
  %5122 = vmatmul.mubr.f32.gmra.mxu0 %v4979
  %v5123 = vpop.f32.mrf.mxu0
  %v5124 = vadd.f32 0.0, %v5123
  %v5125 = vpop.f32.mrf.mxu0
  %5126 = vmatprep.mubr.f32.mxu0 0.0
  %5127 = vmatmul.mubr.f32.gmra.mxu0 %v4982
  %v5128 = vpop.f32.mrf.mxu0
  %v5129 = vadd.f32 0.0, %v5128
  %v5130 = vpop.f32.mrf.mxu0
  %5131 = vmatprep.mubr.f32.mxu0 0.0
  %5132 = vmatmul.mubr.f32.gmra.mxu0 %v4985
  %v5133 = vpop.f32.mrf.mxu0
  %v5134 = vadd.f32 0.0, %v5133
  %v5135 = vpop.f32.mrf.mxu0
  %5136 = vmatprep.mubr.f32.mxu0 0.0
  %5137 = vmatmul.mubr.f32.gmra.mxu0 %v4988
  %v5138 = vpop.f32.mrf.mxu0
  %v5139 = vadd.f32 0.0, %v5138
  %v5140 = vpop.f32.mrf.mxu0
  %5141 = vmatprep.mubr.f32.mxu0 0.0
  %5142 = vmatmul.mubr.f32.gmra.mxu0 %v4991
  %v5143 = vpop.f32.mrf.mxu0
  %v5144 = vadd.f32 0.0, %v5143
  %v5145 = vpop.f32.mrf.mxu0
  %5146 = vmatprep.mubr.f32.mxu0 0.0
  %5147 = vmatmul.mubr.f32.gmra.mxu0 %v4994
  %v5148 = vpop.f32.mrf.mxu0
  %v5149 = vadd.f32 0.0, %v5148
  %v5150 = vpop.f32.mrf.mxu0
  %5151 = vmatprep.mubr.f32.mxu0 0.0
  %5152 = vmatmul.mubr.f32.gmra.mxu0 %v4997
  %v5153 = vpop.f32.mrf.mxu0
  %v5154 = vadd.f32 0.0, %v5153
  %v5155 = vpop.f32.mrf.mxu0
  %5156 = vmatprep.mubr.f32.mxu0 0.0
  %5157 = vmatmul.mubr.f32.gmra.mxu0 %v5000
  %v5158 = vpop.f32.mrf.mxu0
  %v5159 = vadd.f32 0.0, %v5158
  %v5160 = vpop.f32.mrf.mxu0
  %5161 = vmatprep.mubr.f32.mxu0 0.0
  %5162 = vmatmul.mubr.f32.gmra.mxu0 %v5003
  %v5163 = vpop.f32.mrf.mxu0
  %v5164 = vadd.f32 0.0, %v5163
  %v5165 = vpop.f32.mrf.mxu0
  %5166 = vmatprep.mubr.f32.mxu0 0.0
  %5167 = vmatmul.mubr.f32.gmra.mxu0 %v5006
  %v5168 = vpop.f32.mrf.mxu0
  %v5169 = vadd.f32 0.0, %v5168
  %v5170 = vpop.f32.mrf.mxu0
  %5171 = vmatprep.mubr.f32.mxu0 0.0
  %5172 = vmatmul.mubr.f32.gmra.mxu0 %v5009
  %v5173 = vpop.f32.mrf.mxu0
  %v5174 = vadd.f32 0.0, %v5173
  %v5175 = vpop.f32.mrf.mxu0
  %5176 = vmatprep.mubr.f32.mxu0 0.0
  %5177 = vmatmul.mubr.f32.gmra.mxu0 %v5012
  %v5178 = vpop.f32.mrf.mxu0
  %v5179 = vadd.f32 0.0, %v5178
  %v5180 = vpop.f32.mrf.mxu0
  %5181 = vmatprep.mubr.f32.mxu0 0.0
  %5182 = vmatmul.mubr.f32.gmra.mxu0 %v5015
  %v5183 = vpop.f32.mrf.mxu0
  %v5184 = vadd.f32 0.0, %v5183
  %v5185 = vpop.f32.mrf.mxu0
  %5186 = vmatprep.mubr.f32.mxu0 0.0
  %5187 = vmatmul.mubr.f32.gmra.mxu0 %v5018
  %v5188 = vpop.f32.mrf.mxu0
  %v5189 = vadd.f32 0.0, %v5188
  %v5190 = vpop.f32.mrf.mxu0
  %5191 = vmatprep.mubr.f32.mxu0 0.0
  %5192 = vmatmul.mubr.f32.gmra.mxu0 %v5021
  %v5193 = vpop.f32.mrf.mxu0
  %v5194 = vadd.f32 0.0, %v5193
  %v5195 = vpop.f32.mrf.mxu0
  %5196 = vmatprep.mubr.f32.mxu0 0.0
  %5197 = vmatmul.mubr.f32.gmra.mxu0 %v5024
  %v5198 = vpop.f32.mrf.mxu0
  %v5199 = vadd.f32 0.0, %v5198
  %v5200 = vpop.f32.mrf.mxu0
  %5201 = vmatprep.mubr.f32.mxu0 0.0
  %5202 = vmatmul.mubr.f32.gmra.mxu0 %v5027
  %v5203 = vpop.f32.mrf.mxu0
  %v5204 = vadd.f32 0.0, %v5203
  %v5205 = vpop.f32.mrf.mxu0
  %5206 = vmatprep.mubr.f32.mxu0 0.0
  %5207 = vmatmul.mubr.f32.gmra.mxu0 %v5030
  %v5208 = vpop.f32.mrf.mxu0
  %v5209 = vadd.f32 0.0, %v5208
  %v5210 = vpop.f32.mrf.mxu0
  %5211 = vmatprep.mubr.f32.mxu0 0.0
  %5212 = vmatmul.mubr.f32.gmra.mxu0 %v5033
  %v5213 = vpop.f32.mrf.mxu0
  %v5214 = vadd.f32 0.0, %v5213
  %v5215 = vpop.f32.mrf.mxu0
  %5216 = vmatprep.mubr.f32.mxu0 0.0
  %5217 = vmatmul.mubr.f32.gmra.mxu0 %v5036
  %v5218 = vpop.f32.mrf.mxu0
  %v5219 = vadd.f32 0.0, %v5218
  %v5220 = vpop.f32.mrf.mxu0
  %5221 = vmatprep.mubr.f32.mxu0 0.0
  %5222 = vmatmul.mubr.f32.gmra.mxu0 %v5039
  %v5223 = vpop.f32.mrf.mxu0
  %v5224 = vadd.f32 0.0, %v5223
  %v5225 = vpop.f32.mrf.mxu0
  %5226 = vmatprep.mubr.f32.mxu0 0.0
  %5227 = vmatmul.mubr.f32.gmra.mxu0 %v5042
  %v5228 = vpop.f32.mrf.mxu0
  %v5229 = vadd.f32 0.0, %v5228
  %v5230 = vpop.f32.mrf.mxu0
  %5231 = vmatprep.mubr.f32.mxu0 0.0
  %5232 = vmatmul.mubr.f32.gmra.mxu0 %v5045
  %v5233 = vpop.f32.mrf.mxu0
  %v5234 = vadd.f32 0.0, %v5233
  %v5235 = vpop.f32.mrf.mxu0
  %5236 = vmatprep.mubr.f32.mxu0 0.0
  %5237 = vmatmul.mubr.f32.gmra.mxu0 %v5048
  %v5238 = vpop.f32.mrf.mxu0
  %v5239 = vadd.f32 0.0, %v5238
  %v5240 = vpop.f32.mrf.mxu0
  %5241 = vmatprep.mubr.f32.mxu0 0.0
  %5242 = vmatmul.mubr.f32.gmra.mxu0 %v5051
  %v5243 = vpop.f32.mrf.mxu0
  %v5244 = vadd.f32 0.0, %v5243
  %v5245 = vpop.f32.mrf.mxu0
  %5246 = vdwg.mxu0
  %v5247 = vmul.f32 %v4664, %v5124
  %v5248 = vmul.f32 %v4665, %v5129
  %v5249 = vmul.f32 %v4666, %v5134
  %v5250 = vmul.f32 %v4667, %v5139
  %v5251 = vmul.f32 %v4668, %v5144
  %v5252 = vmul.f32 %v4669, %v5149
  %v5253 = vmul.f32 %v4670, %v5154
  %v5254 = vmul.f32 %v4671, %v5159
  %v5255 = vmul.f32 %v4672, %v5164
  %v5256 = vmul.f32 %v4673, %v5169
  %v5257 = vmul.f32 %v4674, %v5174
  %v5258 = vmul.f32 %v4675, %v5179
  %v5259 = vmul.f32 %v4676, %v5184
  %v5260 = vmul.f32 %v4677, %v5189
  %v5261 = vmul.f32 %v4678, %v5194
  %v5262 = vmul.f32 %v4679, %v5199
  %v5263 = vmul.f32 %v4680, %v5204
  %v5264 = vmul.f32 %v4681, %v5209
  %v5265 = vmul.f32 %v4682, %v5214
  %v5266 = vmul.f32 %v4683, %v5219
  %v5267 = vmul.f32 %v4684, %v5224
  %v5268 = vmul.f32 %v4685, %v5229
  %v5269 = vmul.f32 %v4686, %v5234
  %v5270 = vmul.f32 %v4687, %v5239
  %v5271 = vmul.f32 %v4688, %v5244
  %v5272 = vadd.f32 %v5247, %v1135
  %v5273 = vadd.f32 %v5248, %v1136
  %v5274 = vadd.f32 %v5249, %v1137
  %v5275 = vadd.f32 %v5250, %v1138
  %v5276 = vadd.f32 %v5251, %v1139
  %v5277 = vadd.f32 %v5252, %v1140
  %v5278 = vadd.f32 %v5253, %v1141
  %v5279 = vadd.f32 %v5254, %v1142
  %v5280 = vadd.f32 %v5255, %v1143
  %v5281 = vadd.f32 %v5256, %v1144
  %v5282 = vadd.f32 %v5257, %v1145
  %v5283 = vadd.f32 %v5258, %v1146
  %v5284 = vadd.f32 %v5259, %v1147
  %v5285 = vadd.f32 %v5260, %v1148
  %v5286 = vadd.f32 %v5261, %v1149
  %v5287 = vadd.f32 %v5262, %v1150
  %v5288 = vadd.f32 %v5263, %v1151
  %v5289 = vadd.f32 %v5264, %v1152
  %v5290 = vadd.f32 %v5265, %v1153
  %v5291 = vadd.f32 %v5266, %v1154
  %v5292 = vadd.f32 %v5267, %v1155
  %v5293 = vadd.f32 %v5268, %v1156
  %v5294 = vadd.f32 %v5269, %v1157
  %v5295 = vadd.f32 %v5270, %v1158
  %v5296 = vadd.f32 %v5271, %v1159
  %v5297 = vmax.f32 %v5272, 0.0
  %v5298 = vmax.f32 %v5273, 0.0
  %v5299 = vmax.f32 %v5274, 0.0
  %v5300 = vmax.f32 %v5275, 0.0
  %v5301 = vmax.f32 %v5276, 0.0
  %v5302 = vmax.f32 %v5277, 0.0
  %v5303 = vmax.f32 %v5278, 0.0
  %v5304 = vmax.f32 %v5279, 0.0
  %v5305 = vmax.f32 %v5280, 0.0
  %v5306 = vmax.f32 %v5281, 0.0
  %v5307 = vmax.f32 %v5282, 0.0
  %v5308 = vmax.f32 %v5283, 0.0
  %v5309 = vmax.f32 %v5284, 0.0
  %v5310 = vmax.f32 %v5285, 0.0
  %v5311 = vmax.f32 %v5286, 0.0
  %v5312 = vmax.f32 %v5287, 0.0
  %v5313 = vmax.f32 %v5288, 0.0
  %v5314 = vmax.f32 %v5289, 0.0
  %v5315 = vmax.f32 %v5290, 0.0
  %v5316 = vmax.f32 %v5291, 0.0
  %v5317 = vmax.f32 %v5292, 0.0
  %v5318 = vmax.f32 %v5293, 0.0
  %v5319 = vmax.f32 %v5294, 0.0
  %v5320 = vmax.f32 %v5295, 0.0
  %v5321 = vmax.f32 %v5296, 0.0
  %v5322 = vmul.f32 %v5297, %v328
  %v5323 = vmul.f32 %v5298, %v333
  %v5324 = vmul.f32 %v5299, %v338
  %v5325 = vmul.f32 %v5300, %v343
  %v5326 = vmul.f32 %v5301, %v348
  %v5327 = vmul.f32 %v5302, %v353
  %v5328 = vmul.f32 %v5303, %v358
  %v5329 = vmul.f32 %v5304, %v363
  %v5330 = vmul.f32 %v5305, %v368
  %v5331 = vmul.f32 %v5306, %v373
  %v5332 = vmul.f32 %v5307, %v378
  %v5333 = vmul.f32 %v5308, %v383
  %v5334 = vmul.f32 %v5309, %v388
  %v5335 = vmul.f32 %v5310, %v393
  %v5336 = vmul.f32 %v5311, %v398
  %v5337 = vmul.f32 %v5312, %v403
  %v5338 = vmul.f32 %v5313, %v408
  %v5339 = vmul.f32 %v5314, %v413
  %v5340 = vmul.f32 %v5315, %v418
  %v5341 = vmul.f32 %v5316, %v423
  %v5342 = vmul.f32 %v5317, %v428
  %v5343 = vmul.f32 %v5318, %v433
  %v5344 = vmul.f32 %v5319, %v438
  %v5345 = vmul.f32 %v5320, %v443
  %v5346 = vmul.f32 %v5321, %v448
  %5347 = vst [vmem:[%s18] sm:$0xff] %v5322
  %5348 = vst [vmem:[%s18 + $0x8] sm:$0xff] %v5323
  %5349 = vst [vmem:[%s18 + $0x10] sm:$0xff] %v5324
  %5350 = vst [vmem:[%s18 + $0x18] sm:$0xff] %v5325
  %5351 = vst [vmem:[%s18 + $0x20] sm:$0xff] %v5326
  %5352 = vst [vmem:[%s18 + $0x28] sm:$0xff] %v5327
  %5353 = vst [vmem:[%s18 + $0x30] sm:$0xff] %v5328
  %5354 = vst [vmem:[%s18 + $0x38] sm:$0xff] %v5329
  %5355 = vst [vmem:[%s18 + $0x40] sm:$0xff] %v5330
  %5356 = vst [vmem:[%s18 + $0x48] sm:$0xff] %v5331
  %5357 = vst [vmem:[%s18 + $0x50] sm:$0xff] %v5332
  %5358 = vst [vmem:[%s18 + $0x58] sm:$0xff] %v5333
  %5359 = vst [vmem:[%s18 + $0x60] sm:$0xff] %v5334
  %5360 = vst [vmem:[%s18 + $0x68] sm:$0xff] %v5335
  %5361 = vst [vmem:[%s18 + $0x70] sm:$0xff] %v5336
  %5362 = vst [vmem:[%s18 + $0x78] sm:$0xff] %v5337
  %5363 = vst [vmem:[%s18 + $0x80] sm:$0xff] %v5338
  %5364 = vst [vmem:[%s18 + $0x88] sm:$0xff] %v5339
  %5365 = vst [vmem:[%s18 + $0x90] sm:$0xff] %v5340
  %5366 = vst [vmem:[%s18 + $0x98] sm:$0xff] %v5341
  %5367 = vst [vmem:[%s18 + $0xa0] sm:$0xff] %v5342
  %5368 = vst [vmem:[%s18 + $0xa8] sm:$0xff] %v5343
  %5369 = vst [vmem:[%s18 + $0xb0] sm:$0xff] %v5344
  %5370 = vst [vmem:[%s18 + $0xb8] sm:$0xff] %v5345
  %5371 = vst [vmem:[%s18 + $0xc0] sm:$0xff] %v5346
  // Predicated region
  $region74: #{stacked_bottleneck_block_se.2} parent=0 // pred_check
    _
  $region75: #{stacked_bottleneck_block_se.2} parent=0 // pred_check_branch
    %5373 = sbr.rel (0) target = $region77
  $region76: #{stacked_bottleneck_block_se.2} parent=0 // pred_region
    _
  $region77: #{stacked_bottleneck_block_se.2} parent=0 // pred_fallthru
    _
  // Predicated region
  $region78: #{stacked_bottleneck_block_se.2} parent=0 // pred_check
    _
  $region79: #{stacked_bottleneck_block_se.2} parent=0 // pred_check_branch
    %5375 = sbr.rel (0) target = $region81
  $region80: #{stacked_bottleneck_block_se.2} parent=0 // pred_region
    _
  $region81: #{stacked_bottleneck_block_se.2} parent=0 // pred_fallthru
    _

</llo_original>
